<compile_context>
chip_gen: v7x
topology: tpu7x:2x2x1
jax: 0.10.0
libtpu: 0.0.40
codegen_flags: <defaults>
</compile_context>

<pallas_src>
import math
import functools

import jax
import jax.numpy as jnp
from jax import lax
from jax.experimental import pallas as pl
from jax.experimental.pallas import tpu as pltpu


def _fused_superres_kernel(x_ref, w1_ref, b1_ref, w2_ref, b2_ref, w3_ref, b3_ref,
                           o_ref, m1_ref, *, kh1, kw1, kh3, kw3, h, w, s, padl):
    """Fused conv1(9x9)+relu + conv2(1x1)+relu + conv3(5x5) on a pre-padded image.

    Layouts (channel-major, flattened spatial with row stride s = w + 2*pad1 on lanes):
      x_ref : (1, 8, L)    rows 0-3: zero-padded image channels (ch3 == 0),
                           rows 4-7: the same rows shifted by +1 lane
      w1_ref: (C1, K1)     conv1 weights, K1 = kh1 * npair * 8 (phantom tap/ch = 0)
      w2_ref: (C2, C1)     conv2 (1x1)
      w3_ref: (kh3*kw3*4, C2)   conv3 stacked per-tap rows (out-ch padded 3 -> 4)
      b*_ref: (C*, 1)
      o_ref : (1, 3, P)    lane-dense output slab, P = h * s (incl. garbage cols)
      m1_ref: (K1, P)      VMEM scratch for conv1's im2col slab
    """
    f32 = jnp.float32
    P = h * s
    npair = (kw1 + 1) // 2

    x8 = x_ref[0].astype(f32)                                     # (8, L)

    # ---- conv1: im2col slab, TWO taps per aligned (8, P) store (no masks: the
    # W padding is already baked into the stride-s layout).
    for dy in range(kh1):
        for pr in range(npair):
            g = dy * npair + pr
            off = dy * s + 2 * pr
            m1_ref[8 * g: 8 * (g + 1), :] = x8[:, off: off + P]

    o1 = lax.dot_general(w1_ref[...], m1_ref[...], (((1,), (0,)), ((), ())),
                         preferred_element_type=f32)              # (C1, P)
    o1 = jnp.maximum(o1 + b1_ref[...], 0.0)

    # ---- conv2 (1x1): a single matmul.
    o2 = lax.dot_general(w2_ref[...], o1, (((1,), (0,)), ((), ())),
                         preferred_element_type=f32)              # (C2, P)
    o2 = jnp.maximum(o2 + b2_ref[...], 0.0)

    # Zero the garbage band (columns x_off >= w) ONCE so those lanes act as
    # conv3's zero padding along W (band width 2*pad1 >= 2*pad3).
    colx = lax.broadcasted_iota(jnp.int32, o2.shape, 1) % s
    o2 = jnp.where(colx < w, o2, 0.0)

    # ---- conv3: one stacked matmul, then accumulate 25 lane-shifted 4-row
    # OUTPUT slices (shift outputs, not inputs).  The lane pad of `padl` zeros on
    # each side (padl is a multiple of 128 so the copy is lane-aligned) provides
    # the zero padding along H; the zeroed band above provides it along W.
    t = lax.dot_general(w3_ref[...], o2, (((1,), (0,)), ((), ())),
                        preferred_element_type=f32)               # (kh3*kw3*4, P)
    zp = jnp.zeros((t.shape[0], padl), f32)
    tpad = jnp.concatenate([zp, t, zp], axis=1)                   # (kh3*kw3*4, P + 2*padl)
    base = padl - ((kh3 // 2) * s + (kw3 // 2))
    acc = jnp.zeros((4, P), f32)
    for dy in range(kh3):
        for dx in range(kw3):
            tap = dy * kw3 + dx
            off = base + dy * s + dx
            acc = acc + tpad[4 * tap: 4 * tap + 4, off: off + P]

    c3 = o_ref.shape[1]
    o_ref[...] = (acc[:c3] + b3_ref[...])[None].astype(o_ref.dtype)


def _prep_weights(params):
    """Flatten PyTorch-style HWIO conv weights into the kernel's matmul layouts."""
    w1, b1 = params["conv1"]
    w2, b2 = params["conv2"]
    w3, b3 = params["conv3"]
    kh1, kw1, c0, c1 = w1.shape
    _, _, _, c2 = w2.shape
    kh3, kw3, _, c3 = w3.shape
    npair = (kw1 + 1) // 2

    # conv1: pad dx -> 2*npair (phantom tap) and cin -> 4 (phantom channel);
    # column order = ((dy*npair + pair)*2 + s)*4 + c, matching the slab rows.
    w1p = jnp.pad(w1, ((0, 0), (0, 2 * npair - kw1), (0, 4 - c0), (0, 0)))
    w1m = jnp.transpose(w1p.reshape(kh1 * npair * 2 * 4, c1))     # (C1, K1 = kh1*npair*8)

    w2m = jnp.transpose(w2.reshape(c1, c2))                       # (C2, C1)

    # conv3: stack taps along M with out-channels padded 3 -> 4 (row = 4*tap + o).
    w3p = jnp.pad(w3, ((0, 0), (0, 0), (0, 0), (0, 4 - c3)))      # (kh3, kw3, c2, 4)
    w3stack = jnp.transpose(w3p, (0, 1, 3, 2)).reshape(kh3 * kw3 * 4, c2)

    return (w1m, b1.reshape(c1, 1), w2m, b2.reshape(c2, 1),
            w3stack, b3.reshape(c3, 1))


@functools.partial(jax.jit, static_argnums=(2,))
def super_resolution_forward(params, x_nchw, upscale_factor=2):
    """NCHW in, NCHW out; matches SuperResolutionNet.forward (nearest upsample)."""
    N, C0, H0, W0 = x_nchw.shape
    up = upscale_factor
    H, W = H0 * up, W0 * up

    w1, _ = params["conv1"]
    w2, _ = params["conv2"]
    w3, _ = params["conv3"]
    KH1, KW1, _, C1 = w1.shape
    _, _, _, C2 = w2.shape
    KH3, KW3, _, C3 = w3.shape
    padh1, padw1 = KH1 // 2, KW1 // 2
    npair = (KW1 + 1) // 2
    K1 = KH1 * npair * 8
    K3 = KH3 * KW3 * 4

    S = W + 2 * padw1          # internal row stride (W padding baked in)
    P = H * S                  # flat positions per image (incl. garbage columns)
    padl = ((KH3 // 2) * S + (KW3 // 2) + 127) // 128 * 128

    w1m, b1c, w2m, b2c, w3stack, b3c = _prep_weights(params)

    # ---- wrapper-side prep (cheap XLA ops, ~50 KB/image of extra HBM):
    # nearest 2x upsample, channel pad 3 -> 4, spatial zero pad, flatten with
    # stride S, then stack a one-lane-shifted copy so each slab store covers
    # two adjacent taps as an aligned (8, P) block.
    x_up = jnp.repeat(jnp.repeat(x_nchw, up, axis=2), up, axis=3)           # (N,C0,H,W)
    xp = jnp.pad(x_up, ((0, 0), (0, 4 - C0), (padh1, padh1), (padw1, padw1)))
    Lraw = (H + 2 * padh1) * S
    Lneed = (KH1 - 1) * S + 2 * (npair - 1) + P + 2
    L = (max(Lraw, Lneed) + 127) // 128 * 128
    xflat = jnp.pad(xp.reshape(N, 4, Lraw), ((0, 0), (0, 0), (0, L - Lraw)))
    xshift = jnp.concatenate(
        [xflat[:, :, 1:], jnp.zeros((N, 4, 1), xflat.dtype)], axis=2)
    x8 = jnp.concatenate([xflat, xshift], axis=1)                           # (N, 8, L)

    kernel = functools.partial(
        _fused_superres_kernel, kh1=KH1, kw1=KW1, kh3=KH3, kw3=KW3,
        h=H, w=W, s=S, padl=padl)

    # TODO(synk): for real super-resolution image sizes, add a row-strip grid axis
    # with a halo (strip sized for v7x's 64 MiB VMEM: (K1 x strip_P x 4 B) slab +
    # double buffers <= ~16-24 MiB) instead of one full image per grid step.
    # TODO(synk): when N == 1 on v7x, add a second parallel split (spatial strips)
    # so both TensorCores are used; with N >= 2 the batch axis already covers it.
    out_flat = pl.pallas_call(
        kernel,
        out_shape=jax.ShapeDtypeStruct((N, C3, P), x_nchw.dtype),
        grid_spec=pltpu.PrefetchScalarGridSpec(
            num_scalar_prefetch=0,
            grid=(N,),  # one batch element per grid step
            in_specs=[
                pl.BlockSpec((1, 8, L), lambda n: (n, 0, 0)),
                pl.BlockSpec((C1, K1), lambda n: (0, 0)),
                pl.BlockSpec((C1, 1), lambda n: (0, 0)),
                pl.BlockSpec((C2, C1), lambda n: (0, 0)),
                pl.BlockSpec((C2, 1), lambda n: (0, 0)),
                pl.BlockSpec((K3, C2), lambda n: (0, 0)),
                pl.BlockSpec((C3, 1), lambda n: (0, 0)),
            ],
            out_specs=pl.BlockSpec((1, C3, P), lambda n: (n, 0, 0)),
            scratch_shapes=[pltpu.VMEM((K1, P), jnp.float32)],
        ),
        compiler_params=pltpu.CompilerParams(
            dimension_semantics=("parallel",),       # lets v7x use both TCs on the batch
            vmem_limit_bytes=32 * 1024 * 1024,       # explicit (v5e default is only 16 MiB)
        ),
    )(x8, w1m, b1c, w2m, b2c, w3stack, b3c)

    # Drop the garbage columns (x_off >= W) and return NCHW.
    return out_flat.reshape(N, C3, H, S)[..., :W]


def init_params(key):
    """Deterministic init mirroring PyTorch Conv2d default (uniform +/- 1/sqrt(fan_in))."""
    def conv_init(k, kh, kw, cin, cout):
        kw_, kb_ = jax.random.split(k)
        bound = 1.0 / math.sqrt(kh * kw * cin)
        w = jax.random.uniform(kw_, (kh, kw, cin, cout), jnp.float32, -bound, bound)
        b = jax.random.uniform(kb_, (cout,), jnp.float32, -bound, bound)
        return w, b

    k1, k2, k3 = jax.random.split(key, 3)
    return {
        "conv1": conv_init(k1, 9, 9, 3, 64),
        "conv2": conv_init(k2, 1, 1, 64, 32),
        "conv3": conv_init(k3, 5, 5, 32, 3),
    }


def _ref_forward(params, x_nchw, up):
    """Pure-JAX reference (nearest upsample + 3 convs) for correctness check."""
    x = jnp.repeat(jnp.repeat(x_nchw, up, axis=2), up, axis=3)

    def conv(h, w, b, relu):
        out = jax.lax.conv_general_dilated(
            h, w, window_strides=(1, 1), padding="SAME",
            dimension_numbers=("NCHW", "HWIO", "NCHW"))
        out = out + b.reshape(1, -1, 1, 1)
        return jnp.maximum(out, 0.0) if relu else out

    h = conv(x, *params["conv1"], True)
    h = conv(h, *params["conv2"], True)
    return conv(h, *params["conv3"], False)


if __name__ == "__main__":
    key = jax.random.PRNGKey(0)
    pkey, xkey = jax.random.split(key)
    params = init_params(pkey)

    # PyTorch-style NCHW input.
    x = jax.random.normal(xkey, (2, 3, 16, 16), jnp.float32)

    out = jax.block_until_ready(super_resolution_forward(params, x, 2))
    assert out.shape == (2, 3, 32, 32), out.shape

    ref = _ref_forward(params, x, 2)
    err = float(jnp.max(jnp.abs(out - ref)))
    assert err < 1e-3, err

    print("KERNEL_OK")
</pallas_src>

<mosaic_0001>
module attributes {stable_mosaic.version = 11 : i64} {
  func.func @_fused_superres_kernel(%arg0: i32, %arg1: memref<1x8x1664xf32, #tpu.memory_space<vmem>>, %arg2: memref<64x360xf32, #tpu.memory_space<vmem>>, %arg3: memref<64x1xf32, #tpu.memory_space<vmem>>, %arg4: memref<32x64xf32, #tpu.memory_space<vmem>>, %arg5: memref<32x1xf32, #tpu.memory_space<vmem>>, %arg6: memref<100x32xf32, #tpu.memory_space<vmem>>, %arg7: memref<3x1xf32, #tpu.memory_space<vmem>>, %arg8: memref<1x3x1280xf32, #tpu.memory_space<vmem>>, %arg9: memref<360x1280xf32, #tpu.memory_space<vmem>>) attributes {dimension_semantics = [#tpu.dimension_semantics<parallel>], iteration_bounds = array<i64: 2>, scalar_prefetch = 0 : i64, scratch_operands = 1 : i64, tpu.core_type = #tpu.core_type<tc>, window_params = [{transform_indices = @transform_0, window_bounds = array<i64: 1, 8, 1664>}, {pipeline_mode = #tpu.pipeline_mode<synchronous>, transform_indices = @transform_1, window_bounds = array<i64: 64, 360>}, {pipeline_mode = #tpu.pipeline_mode<synchronous>, transform_indices = @transform_2, window_bounds = array<i64: 64, 1>}, {pipeline_mode = #tpu.pipeline_mode<synchronous>, transform_indices = @transform_3, window_bounds = array<i64: 32, 64>}, {pipeline_mode = #tpu.pipeline_mode<synchronous>, transform_indices = @transform_4, window_bounds = array<i64: 32, 1>}, {pipeline_mode = #tpu.pipeline_mode<synchronous>, transform_indices = @transform_5, window_bounds = array<i64: 100, 32>}, {pipeline_mode = #tpu.pipeline_mode<synchronous>, transform_indices = @transform_6, window_bounds = array<i64: 3, 1>}, {transform_indices = @transform_7, window_bounds = array<i64: 1, 3, 1280>}]} {
    %c0 = arith.constant 0 : index
    %c0_0 = arith.constant 0 : index
    %c0_1 = arith.constant 0 : index
    %0 = vector.load %arg1[%c0, %c0_0, %c0_1] : memref<1x8x1664xf32, #tpu.memory_space<vmem>>, vector<1x8x1664xf32>
    %1 = vector.shape_cast %0 : vector<1x8x1664xf32> to vector<8x1664xf32>
    %2 = vector.extract_strided_slice %1 {offsets = [0, 0], sizes = [8, 1280], strides = [1, 1]} : vector<8x1664xf32> to vector<8x1280xf32>
    %c0_2 = arith.constant 0 : index
    %c0_3 = arith.constant 0 : index
    %3 = vector.load %arg9[%c0_2, %c0_3] : memref<360x1280xf32, #tpu.memory_space<vmem>>, vector<8x1280xf32>
    tpu.vector_store %arg9[%c0_2, %c0_3], %2 {strides = array<i32>} : memref<360x1280xf32, #tpu.memory_space<vmem>>, vector<8x1280xf32>,
    %4 = vector.extract_strided_slice %1 {offsets = [0, 2], sizes = [8, 1280], strides = [1, 1]} : vector<8x1664xf32> to vector<8x1280xf32>
    %c8 = arith.constant 8 : index
    %c0_4 = arith.constant 0 : index
    %5 = vector.load %arg9[%c8, %c0_4] : memref<360x1280xf32, #tpu.memory_space<vmem>>, vector<8x1280xf32>
    tpu.vector_store %arg9[%c8, %c0_4], %4 {strides = array<i32>} : memref<360x1280xf32, #tpu.memory_space<vmem>>, vector<8x1280xf32>,
    %6 = vector.extract_strided_slice %1 {offsets = [0, 4], sizes = [8, 1280], strides = [1, 1]} : vector<8x1664xf32> to vector<8x1280xf32>
    %c16 = arith.constant 16 : index
    %c0_5 = arith.constant 0 : index
    %7 = vector.load %arg9[%c16, %c0_5] : memref<360x1280xf32, #tpu.memory_space<vmem>>, vector<8x1280xf32>
    tpu.vector_store %arg9[%c16, %c0_5], %6 {strides = array<i32>} : memref<360x1280xf32, #tpu.memory_space<vmem>>, vector<8x1280xf32>,
    %8 = vector.extract_strided_slice %1 {offsets = [0, 6], sizes = [8, 1280], strides = [1, 1]} : vector<8x1664xf32> to vector<8x1280xf32>
    %c24 = arith.constant 24 : index
    %c0_6 = arith.constant 0 : index
    %9 = vector.load %arg9[%c24, %c0_6] : memref<360x1280xf32, #tpu.memory_space<vmem>>, vector<8x1280xf32>
    tpu.vector_store %arg9[%c24, %c0_6], %8 {strides = array<i32>} : memref<360x1280xf32, #tpu.memory_space<vmem>>, vector<8x1280xf32>,
    %10 = vector.extract_strided_slice %1 {offsets = [0, 8], sizes = [8, 1280], strides = [1, 1]} : vector<8x1664xf32> to vector<8x1280xf32>
    %c32 = arith.constant 32 : index
    %c0_7 = arith.constant 0 : index
    %11 = vector.load %arg9[%c32, %c0_7] : memref<360x1280xf32, #tpu.memory_space<vmem>>, vector<8x1280xf32>
    tpu.vector_store %arg9[%c32, %c0_7], %10 {strides = array<i32>} : memref<360x1280xf32, #tpu.memory_space<vmem>>, vector<8x1280xf32>,
    %12 = vector.extract_strided_slice %1 {offsets = [0, 40], sizes = [8, 1280], strides = [1, 1]} : vector<8x1664xf32> to vector<8x1280xf32>
    %c40 = arith.constant 40 : index
    %c0_8 = arith.constant 0 : index
    %13 = vector.load %arg9[%c40, %c0_8] : memref<360x1280xf32, #tpu.memory_space<vmem>>, vector<8x1280xf32>
    tpu.vector_store %arg9[%c40, %c0_8], %12 {strides = array<i32>} : memref<360x1280xf32, #tpu.memory_space<vmem>>, vector<8x1280xf32>,
    %14 = vector.extract_strided_slice %1 {offsets = [0, 42], sizes = [8, 1280], strides = [1, 1]} : vector<8x1664xf32> to vector<8x1280xf32>
    %c48 = arith.constant 48 : index
    %c0_9 = arith.constant 0 : index
    %15 = vector.load %arg9[%c48, %c0_9] : memref<360x1280xf32, #tpu.memory_space<vmem>>, vector<8x1280xf32>
    tpu.vector_store %arg9[%c48, %c0_9], %14 {strides = array<i32>} : memref<360x1280xf32, #tpu.memory_space<vmem>>, vector<8x1280xf32>,
    %16 = vector.extract_strided_slice %1 {offsets = [0, 44], sizes = [8, 1280], strides = [1, 1]} : vector<8x1664xf32> to vector<8x1280xf32>
    %c56 = arith.constant 56 : index
    %c0_10 = arith.constant 0 : index
    %17 = vector.load %arg9[%c56, %c0_10] : memref<360x1280xf32, #tpu.memory_space<vmem>>, vector<8x1280xf32>
    tpu.vector_store %arg9[%c56, %c0_10], %16 {strides = array<i32>} : memref<360x1280xf32, #tpu.memory_space<vmem>>, vector<8x1280xf32>,
    %18 = vector.extract_strided_slice %1 {offsets = [0, 46], sizes = [8, 1280], strides = [1, 1]} : vector<8x1664xf32> to vector<8x1280xf32>
    %c64 = arith.constant 64 : index
    %c0_11 = arith.constant 0 : index
    %19 = vector.load %arg9[%c64, %c0_11] : memref<360x1280xf32, #tpu.memory_space<vmem>>, vector<8x1280xf32>
    tpu.vector_store %arg9[%c64, %c0_11], %18 {strides = array<i32>} : memref<360x1280xf32, #tpu.memory_space<vmem>>, vector<8x1280xf32>,
    %20 = vector.extract_strided_slice %1 {offsets = [0, 48], sizes = [8, 1280], strides = [1, 1]} : vector<8x1664xf32> to vector<8x1280xf32>
    %c72 = arith.constant 72 : index
    %c0_12 = arith.constant 0 : index
    %21 = vector.load %arg9[%c72, %c0_12] : memref<360x1280xf32, #tpu.memory_space<vmem>>, vector<8x1280xf32>
    tpu.vector_store %arg9[%c72, %c0_12], %20 {strides = array<i32>} : memref<360x1280xf32, #tpu.memory_space<vmem>>, vector<8x1280xf32>,
    %22 = vector.extract_strided_slice %1 {offsets = [0, 80], sizes = [8, 1280], strides = [1, 1]} : vector<8x1664xf32> to vector<8x1280xf32>
    %c80 = arith.constant 80 : index
    %c0_13 = arith.constant 0 : index
    %23 = vector.load %arg9[%c80, %c0_13] : memref<360x1280xf32, #tpu.memory_space<vmem>>, vector<8x1280xf32>
    tpu.vector_store %arg9[%c80, %c0_13], %22 {strides = array<i32>} : memref<360x1280xf32, #tpu.memory_space<vmem>>, vector<8x1280xf32>,
    %24 = vector.extract_strided_slice %1 {offsets = [0, 82], sizes = [8, 1280], strides = [1, 1]} : vector<8x1664xf32> to vector<8x1280xf32>
    %c88 = arith.constant 88 : index
    %c0_14 = arith.constant 0 : index
    %25 = vector.load %arg9[%c88, %c0_14] : memref<360x1280xf32, #tpu.memory_space<vmem>>, vector<8x1280xf32>
    tpu.vector_store %arg9[%c88, %c0_14], %24 {strides = array<i32>} : memref<360x1280xf32, #tpu.memory_space<vmem>>, vector<8x1280xf32>,
    %26 = vector.extract_strided_slice %1 {offsets = [0, 84], sizes = [8, 1280], strides = [1, 1]} : vector<8x1664xf32> to vector<8x1280xf32>
    %c96 = arith.constant 96 : index
    %c0_15 = arith.constant 0 : index
    %27 = vector.load %arg9[%c96, %c0_15] : memref<360x1280xf32, #tpu.memory_space<vmem>>, vector<8x1280xf32>
    tpu.vector_store %arg9[%c96, %c0_15], %26 {strides = array<i32>} : memref<360x1280xf32, #tpu.memory_space<vmem>>, vector<8x1280xf32>,
    %28 = vector.extract_strided_slice %1 {offsets = [0, 86], sizes = [8, 1280], strides = [1, 1]} : vector<8x1664xf32> to vector<8x1280xf32>
    %c104 = arith.constant 104 : index
    %c0_16 = arith.constant 0 : index
    %29 = vector.load %arg9[%c104, %c0_16] : memref<360x1280xf32, #tpu.memory_space<vmem>>, vector<8x1280xf32>
    tpu.vector_store %arg9[%c104, %c0_16], %28 {strides = array<i32>} : memref<360x1280xf32, #tpu.memory_space<vmem>>, vector<8x1280xf32>,
    %30 = vector.extract_strided_slice %1 {offsets = [0, 88], sizes = [8, 1280], strides = [1, 1]} : vector<8x1664xf32> to vector<8x1280xf32>
    %c112 = arith.constant 112 : index
    %c0_17 = arith.constant 0 : index
    %31 = vector.load %arg9[%c112, %c0_17] : memref<360x1280xf32, #tpu.memory_space<vmem>>, vector<8x1280xf32>
    tpu.vector_store %arg9[%c112, %c0_17], %30 {strides = array<i32>} : memref<360x1280xf32, #tpu.memory_space<vmem>>, vector<8x1280xf32>,
    %32 = vector.extract_strided_slice %1 {offsets = [0, 120], sizes = [8, 1280], strides = [1, 1]} : vector<8x1664xf32> to vector<8x1280xf32>
    %c120 = arith.constant 120 : index
    %c0_18 = arith.constant 0 : index
    %33 = vector.load %arg9[%c120, %c0_18] : memref<360x1280xf32, #tpu.memory_space<vmem>>, vector<8x1280xf32>
    tpu.vector_store %arg9[%c120, %c0_18], %32 {strides = array<i32>} : memref<360x1280xf32, #tpu.memory_space<vmem>>, vector<8x1280xf32>,
    %34 = vector.extract_strided_slice %1 {offsets = [0, 122], sizes = [8, 1280], strides = [1, 1]} : vector<8x1664xf32> to vector<8x1280xf32>
    %c128 = arith.constant 128 : index
    %c0_19 = arith.constant 0 : index
    %35 = vector.load %arg9[%c128, %c0_19] : memref<360x1280xf32, #tpu.memory_space<vmem>>, vector<8x1280xf32>
    tpu.vector_store %arg9[%c128, %c0_19], %34 {strides = array<i32>} : memref<360x1280xf32, #tpu.memory_space<vmem>>, vector<8x1280xf32>,
    %36 = vector.extract_strided_slice %1 {offsets = [0, 124], sizes = [8, 1280], strides = [1, 1]} : vector<8x1664xf32> to vector<8x1280xf32>
    %c136 = arith.constant 136 : index
    %c0_20 = arith.constant 0 : index
    %37 = vector.load %arg9[%c136, %c0_20] : memref<360x1280xf32, #tpu.memory_space<vmem>>, vector<8x1280xf32>
    tpu.vector_store %arg9[%c136, %c0_20], %36 {strides = array<i32>} : memref<360x1280xf32, #tpu.memory_space<vmem>>, vector<8x1280xf32>,
    %38 = vector.extract_strided_slice %1 {offsets = [0, 126], sizes = [8, 1280], strides = [1, 1]} : vector<8x1664xf32> to vector<8x1280xf32>
    %c144 = arith.constant 144 : index
    %c0_21 = arith.constant 0 : index
    %39 = vector.load %arg9[%c144, %c0_21] : memref<360x1280xf32, #tpu.memory_space<vmem>>, vector<8x1280xf32>
    tpu.vector_store %arg9[%c144, %c0_21], %38 {strides = array<i32>} : memref<360x1280xf32, #tpu.memory_space<vmem>>, vector<8x1280xf32>,
    %40 = vector.extract_strided_slice %1 {offsets = [0, 128], sizes = [8, 1280], strides = [1, 1]} : vector<8x1664xf32> to vector<8x1280xf32>
    %c152 = arith.constant 152 : index
    %c0_22 = arith.constant 0 : index
    %41 = vector.load %arg9[%c152, %c0_22] : memref<360x1280xf32, #tpu.memory_space<vmem>>, vector<8x1280xf32>
    tpu.vector_store %arg9[%c152, %c0_22], %40 {strides = array<i32>} : memref<360x1280xf32, #tpu.memory_space<vmem>>, vector<8x1280xf32>,
    %42 = vector.extract_strided_slice %1 {offsets = [0, 160], sizes = [8, 1280], strides = [1, 1]} : vector<8x1664xf32> to vector<8x1280xf32>
    %c160 = arith.constant 160 : index
    %c0_23 = arith.constant 0 : index
    %43 = vector.load %arg9[%c160, %c0_23] : memref<360x1280xf32, #tpu.memory_space<vmem>>, vector<8x1280xf32>
    tpu.vector_store %arg9[%c160, %c0_23], %42 {strides = array<i32>} : memref<360x1280xf32, #tpu.memory_space<vmem>>, vector<8x1280xf32>,
    %44 = vector.extract_strided_slice %1 {offsets = [0, 162], sizes = [8, 1280], strides = [1, 1]} : vector<8x1664xf32> to vector<8x1280xf32>
    %c168 = arith.constant 168 : index
    %c0_24 = arith.constant 0 : index
    %45 = vector.load %arg9[%c168, %c0_24] : memref<360x1280xf32, #tpu.memory_space<vmem>>, vector<8x1280xf32>
    tpu.vector_store %arg9[%c168, %c0_24], %44 {strides = array<i32>} : memref<360x1280xf32, #tpu.memory_space<vmem>>, vector<8x1280xf32>,
    %46 = vector.extract_strided_slice %1 {offsets = [0, 164], sizes = [8, 1280], strides = [1, 1]} : vector<8x1664xf32> to vector<8x1280xf32>
    %c176 = arith.constant 176 : index
    %c0_25 = arith.constant 0 : index
    %47 = vector.load %arg9[%c176, %c0_25] : memref<360x1280xf32, #tpu.memory_space<vmem>>, vector<8x1280xf32>
    tpu.vector_store %arg9[%c176, %c0_25], %46 {strides = array<i32>} : memref<360x1280xf32, #tpu.memory_space<vmem>>, vector<8x1280xf32>,
    %48 = vector.extract_strided_slice %1 {offsets = [0, 166], sizes = [8, 1280], strides = [1, 1]} : vector<8x1664xf32> to vector<8x1280xf32>
    %c184 = arith.constant 184 : index
    %c0_26 = arith.constant 0 : index
    %49 = vector.load %arg9[%c184, %c0_26] : memref<360x1280xf32, #tpu.memory_space<vmem>>, vector<8x1280xf32>
    tpu.vector_store %arg9[%c184, %c0_26], %48 {strides = array<i32>} : memref<360x1280xf32, #tpu.memory_space<vmem>>, vector<8x1280xf32>,
    %50 = vector.extract_strided_slice %1 {offsets = [0, 168], sizes = [8, 1280], strides = [1, 1]} : vector<8x1664xf32> to vector<8x1280xf32>
    %c192 = arith.constant 192 : index
    %c0_27 = arith.constant 0 : index
    %51 = vector.load %arg9[%c192, %c0_27] : memref<360x1280xf32, #tpu.memory_space<vmem>>, vector<8x1280xf32>
    tpu.vector_store %arg9[%c192, %c0_27], %50 {strides = array<i32>} : memref<360x1280xf32, #tpu.memory_space<vmem>>, vector<8x1280xf32>,
    %52 = vector.extract_strided_slice %1 {offsets = [0, 200], sizes = [8, 1280], strides = [1, 1]} : vector<8x1664xf32> to vector<8x1280xf32>
    %c200 = arith.constant 200 : index
    %c0_28 = arith.constant 0 : index
    %53 = vector.load %arg9[%c200, %c0_28] : memref<360x1280xf32, #tpu.memory_space<vmem>>, vector<8x1280xf32>
    tpu.vector_store %arg9[%c200, %c0_28], %52 {strides = array<i32>} : memref<360x1280xf32, #tpu.memory_space<vmem>>, vector<8x1280xf32>,
    %54 = vector.extract_strided_slice %1 {offsets = [0, 202], sizes = [8, 1280], strides = [1, 1]} : vector<8x1664xf32> to vector<8x1280xf32>
    %c208 = arith.constant 208 : index
    %c0_29 = arith.constant 0 : index
    %55 = vector.load %arg9[%c208, %c0_29] : memref<360x1280xf32, #tpu.memory_space<vmem>>, vector<8x1280xf32>
    tpu.vector_store %arg9[%c208, %c0_29], %54 {strides = array<i32>} : memref<360x1280xf32, #tpu.memory_space<vmem>>, vector<8x1280xf32>,
    %56 = vector.extract_strided_slice %1 {offsets = [0, 204], sizes = [8, 1280], strides = [1, 1]} : vector<8x1664xf32> to vector<8x1280xf32>
    %c216 = arith.constant 216 : index
    %c0_30 = arith.constant 0 : index
    %57 = vector.load %arg9[%c216, %c0_30] : memref<360x1280xf32, #tpu.memory_space<vmem>>, vector<8x1280xf32>
    tpu.vector_store %arg9[%c216, %c0_30], %56 {strides = array<i32>} : memref<360x1280xf32, #tpu.memory_space<vmem>>, vector<8x1280xf32>,
    %58 = vector.extract_strided_slice %1 {offsets = [0, 206], sizes = [8, 1280], strides = [1, 1]} : vector<8x1664xf32> to vector<8x1280xf32>
    %c224 = arith.constant 224 : index
    %c0_31 = arith.constant 0 : index
    %59 = vector.load %arg9[%c224, %c0_31] : memref<360x1280xf32, #tpu.memory_space<vmem>>, vector<8x1280xf32>
    tpu.vector_store %arg9[%c224, %c0_31], %58 {strides = array<i32>} : memref<360x1280xf32, #tpu.memory_space<vmem>>, vector<8x1280xf32>,
    %60 = vector.extract_strided_slice %1 {offsets = [0, 208], sizes = [8, 1280], strides = [1, 1]} : vector<8x1664xf32> to vector<8x1280xf32>
    %c232 = arith.constant 232 : index
    %c0_32 = arith.constant 0 : index
    %61 = vector.load %arg9[%c232, %c0_32] : memref<360x1280xf32, #tpu.memory_space<vmem>>, vector<8x1280xf32>
    tpu.vector_store %arg9[%c232, %c0_32], %60 {strides = array<i32>} : memref<360x1280xf32, #tpu.memory_space<vmem>>, vector<8x1280xf32>,
    %62 = vector.extract_strided_slice %1 {offsets = [0, 240], sizes = [8, 1280], strides = [1, 1]} : vector<8x1664xf32> to vector<8x1280xf32>
    %c240 = arith.constant 240 : index
    %c0_33 = arith.constant 0 : index
    %63 = vector.load %arg9[%c240, %c0_33] : memref<360x1280xf32, #tpu.memory_space<vmem>>, vector<8x1280xf32>
    tpu.vector_store %arg9[%c240, %c0_33], %62 {strides = array<i32>} : memref<360x1280xf32, #tpu.memory_space<vmem>>, vector<8x1280xf32>,
    %64 = vector.extract_strided_slice %1 {offsets = [0, 242], sizes = [8, 1280], strides = [1, 1]} : vector<8x1664xf32> to vector<8x1280xf32>
    %c248 = arith.constant 248 : index
    %c0_34 = arith.constant 0 : index
    %65 = vector.load %arg9[%c248, %c0_34] : memref<360x1280xf32, #tpu.memory_space<vmem>>, vector<8x1280xf32>
    tpu.vector_store %arg9[%c248, %c0_34], %64 {strides = array<i32>} : memref<360x1280xf32, #tpu.memory_space<vmem>>, vector<8x1280xf32>,
    %66 = vector.extract_strided_slice %1 {offsets = [0, 244], sizes = [8, 1280], strides = [1, 1]} : vector<8x1664xf32> to vector<8x1280xf32>
    %c256 = arith.constant 256 : index
    %c0_35 = arith.constant 0 : index
    %67 = vector.load %arg9[%c256, %c0_35] : memref<360x1280xf32, #tpu.memory_space<vmem>>, vector<8x1280xf32>
    tpu.vector_store %arg9[%c256, %c0_35], %66 {strides = array<i32>} : memref<360x1280xf32, #tpu.memory_space<vmem>>, vector<8x1280xf32>,
    %68 = vector.extract_strided_slice %1 {offsets = [0, 246], sizes = [8, 1280], strides = [1, 1]} : vector<8x1664xf32> to vector<8x1280xf32>
    %c264 = arith.constant 264 : index
    %c0_36 = arith.constant 0 : index
    %69 = vector.load %arg9[%c264, %c0_36] : memref<360x1280xf32, #tpu.memory_space<vmem>>, vector<8x1280xf32>
    tpu.vector_store %arg9[%c264, %c0_36], %68 {strides = array<i32>} : memref<360x1280xf32, #tpu.memory_space<vmem>>, vector<8x1280xf32>,
    %70 = vector.extract_strided_slice %1 {offsets = [0, 248], sizes = [8, 1280], strides = [1, 1]} : vector<8x1664xf32> to vector<8x1280xf32>
    %c272 = arith.constant 272 : index
    %c0_37 = arith.constant 0 : index
    %71 = vector.load %arg9[%c272, %c0_37] : memref<360x1280xf32, #tpu.memory_space<vmem>>, vector<8x1280xf32>
    tpu.vector_store %arg9[%c272, %c0_37], %70 {strides = array<i32>} : memref<360x1280xf32, #tpu.memory_space<vmem>>, vector<8x1280xf32>,
    %72 = vector.extract_strided_slice %1 {offsets = [0, 280], sizes = [8, 1280], strides = [1, 1]} : vector<8x1664xf32> to vector<8x1280xf32>
    %c280 = arith.constant 280 : index
    %c0_38 = arith.constant 0 : index
    %73 = vector.load %arg9[%c280, %c0_38] : memref<360x1280xf32, #tpu.memory_space<vmem>>, vector<8x1280xf32>
    tpu.vector_store %arg9[%c280, %c0_38], %72 {strides = array<i32>} : memref<360x1280xf32, #tpu.memory_space<vmem>>, vector<8x1280xf32>,
    %74 = vector.extract_strided_slice %1 {offsets = [0, 282], sizes = [8, 1280], strides = [1, 1]} : vector<8x1664xf32> to vector<8x1280xf32>
    %c288 = arith.constant 288 : index
    %c0_39 = arith.constant 0 : index
    %75 = vector.load %arg9[%c288, %c0_39] : memref<360x1280xf32, #tpu.memory_space<vmem>>, vector<8x1280xf32>
    tpu.vector_store %arg9[%c288, %c0_39], %74 {strides = array<i32>} : memref<360x1280xf32, #tpu.memory_space<vmem>>, vector<8x1280xf32>,
    %76 = vector.extract_strided_slice %1 {offsets = [0, 284], sizes = [8, 1280], strides = [1, 1]} : vector<8x1664xf32> to vector<8x1280xf32>
    %c296 = arith.constant 296 : index
    %c0_40 = arith.constant 0 : index
    %77 = vector.load %arg9[%c296, %c0_40] : memref<360x1280xf32, #tpu.memory_space<vmem>>, vector<8x1280xf32>
    tpu.vector_store %arg9[%c296, %c0_40], %76 {strides = array<i32>} : memref<360x1280xf32, #tpu.memory_space<vmem>>, vector<8x1280xf32>,
    %78 = vector.extract_strided_slice %1 {offsets = [0, 286], sizes = [8, 1280], strides = [1, 1]} : vector<8x1664xf32> to vector<8x1280xf32>
    %c304 = arith.constant 304 : index
    %c0_41 = arith.constant 0 : index
    %79 = vector.load %arg9[%c304, %c0_41] : memref<360x1280xf32, #tpu.memory_space<vmem>>, vector<8x1280xf32>
    tpu.vector_store %arg9[%c304, %c0_41], %78 {strides = array<i32>} : memref<360x1280xf32, #tpu.memory_space<vmem>>, vector<8x1280xf32>,
    %80 = vector.extract_strided_slice %1 {offsets = [0, 288], sizes = [8, 1280], strides = [1, 1]} : vector<8x1664xf32> to vector<8x1280xf32>
    %c312 = arith.constant 312 : index
    %c0_42 = arith.constant 0 : index
    %81 = vector.load %arg9[%c312, %c0_42] : memref<360x1280xf32, #tpu.memory_space<vmem>>, vector<8x1280xf32>
    tpu.vector_store %arg9[%c312, %c0_42], %80 {strides = array<i32>} : memref<360x1280xf32, #tpu.memory_space<vmem>>, vector<8x1280xf32>,
    %82 = vector.extract_strided_slice %1 {offsets = [0, 320], sizes = [8, 1280], strides = [1, 1]} : vector<8x1664xf32> to vector<8x1280xf32>
    %c320 = arith.constant 320 : index
    %c0_43 = arith.constant 0 : index
    %83 = vector.load %arg9[%c320, %c0_43] : memref<360x1280xf32, #tpu.memory_space<vmem>>, vector<8x1280xf32>
    tpu.vector_store %arg9[%c320, %c0_43], %82 {strides = array<i32>} : memref<360x1280xf32, #tpu.memory_space<vmem>>, vector<8x1280xf32>,
    %84 = vector.extract_strided_slice %1 {offsets = [0, 322], sizes = [8, 1280], strides = [1, 1]} : vector<8x1664xf32> to vector<8x1280xf32>
    %c328 = arith.constant 328 : index
    %c0_44 = arith.constant 0 : index
    %85 = vector.load %arg9[%c328, %c0_44] : memref<360x1280xf32, #tpu.memory_space<vmem>>, vector<8x1280xf32>
    tpu.vector_store %arg9[%c328, %c0_44], %84 {strides = array<i32>} : memref<360x1280xf32, #tpu.memory_space<vmem>>, vector<8x1280xf32>,
    %86 = vector.extract_strided_slice %1 {offsets = [0, 324], sizes = [8, 1280], strides = [1, 1]} : vector<8x1664xf32> to vector<8x1280xf32>
    %c336 = arith.constant 336 : index
    %c0_45 = arith.constant 0 : index
    %87 = vector.load %arg9[%c336, %c0_45] : memref<360x1280xf32, #tpu.memory_space<vmem>>, vector<8x1280xf32>
    tpu.vector_store %arg9[%c336, %c0_45], %86 {strides = array<i32>} : memref<360x1280xf32, #tpu.memory_space<vmem>>, vector<8x1280xf32>,
    %88 = vector.extract_strided_slice %1 {offsets = [0, 326], sizes = [8, 1280], strides = [1, 1]} : vector<8x1664xf32> to vector<8x1280xf32>
    %c344 = arith.constant 344 : index
    %c0_46 = arith.constant 0 : index
    %89 = vector.load %arg9[%c344, %c0_46] : memref<360x1280xf32, #tpu.memory_space<vmem>>, vector<8x1280xf32>
    tpu.vector_store %arg9[%c344, %c0_46], %88 {strides = array<i32>} : memref<360x1280xf32, #tpu.memory_space<vmem>>, vector<8x1280xf32>,
    %90 = vector.extract_strided_slice %1 {offsets = [0, 328], sizes = [8, 1280], strides = [1, 1]} : vector<8x1664xf32> to vector<8x1280xf32>
    %c352 = arith.constant 352 : index
    %c0_47 = arith.constant 0 : index
    %91 = vector.load %arg9[%c352, %c0_47] : memref<360x1280xf32, #tpu.memory_space<vmem>>, vector<8x1280xf32>
    tpu.vector_store %arg9[%c352, %c0_47], %90 {strides = array<i32>} : memref<360x1280xf32, #tpu.memory_space<vmem>>, vector<8x1280xf32>,
    %c0_48 = arith.constant 0 : index
    %c0_49 = arith.constant 0 : index
    %92 = vector.load %arg2[%c0_48, %c0_49] : memref<64x360xf32, #tpu.memory_space<vmem>>, vector<64x360xf32>
    %c0_50 = arith.constant 0 : index
    %c0_51 = arith.constant 0 : index
    %93 = vector.load %arg9[%c0_50, %c0_51] : memref<360x1280xf32, #tpu.memory_space<vmem>>, vector<360x1280xf32>
    %cst = arith.constant dense<0.000000e+00> : vector<64x1280xf32>
    %94 = tpu.matmul %92, %93, %cst {dimension_numbers = #tpu.dot_dimension_numbers<[1], [0], [0], [1], [0, 0, 1, 1], [], []>} : vector<64x360xf32>, vector<360x1280xf32>, vector<64x1280xf32> -> vector<64x1280xf32>
    %c0_52 = arith.constant 0 : index
    %c0_53 = arith.constant 0 : index
    %95 = vector.load %arg3[%c0_52, %c0_53] : memref<64x1xf32, #tpu.memory_space<vmem>>, vector<64x1xf32>
    %96 = vector.broadcast %95 : vector<64x1xf32> to vector<64x1280xf32>
    %97 = arith.addf %94, %96 : vector<64x1280xf32>
    %cst_54 = arith.constant 0.000000e+00 : f32
    %98 = vector.broadcast %cst_54 : f32 to vector<64x1280xf32>
    %99 = arith.maximumf %97, %98 : vector<64x1280xf32>
    %c0_55 = arith.constant 0 : index
    %c0_56 = arith.constant 0 : index
    %100 = vector.load %arg4[%c0_55, %c0_56] : memref<32x64xf32, #tpu.memory_space<vmem>>, vector<32x64xf32>
    %cst_57 = arith.constant dense<0.000000e+00> : vector<32x1280xf32>
    %101 = tpu.matmul %100, %99, %cst_57 {dimension_numbers = #tpu.dot_dimension_numbers<[1], [0], [0], [1], [0, 0, 1, 1], [], []>} : vector<32x64xf32>, vector<64x1280xf32>, vector<32x1280xf32> -> vector<32x1280xf32>
    %c0_58 = arith.constant 0 : index
    %c0_59 = arith.constant 0 : index
    %102 = vector.load %arg5[%c0_58, %c0_59] : memref<32x1xf32, #tpu.memory_space<vmem>>, vector<32x1xf32>
    %103 = vector.broadcast %102 : vector<32x1xf32> to vector<32x1280xf32>
    %104 = arith.addf %101, %103 : vector<32x1280xf32>
    %cst_60 = arith.constant 0.000000e+00 : f32
    %105 = vector.broadcast %cst_60 : f32 to vector<32x1280xf32>
    %106 = arith.maximumf %104, %105 : vector<32x1280xf32>
    %107 = tpu.iota {dimensions = array<i32: 1>} : vector<32x1280xi32>
    %c40_i32 = arith.constant 40 : i32
    %c0_i32 = arith.constant 0 : i32
    %108 = arith.cmpi eq, %c40_i32, %c0_i32 : i32
    %c1_i32 = arith.constant 1 : i32
    %109 = arith.select %108, %c1_i32, %c40_i32 : i32
    %110 = vector.broadcast %109 : i32 to vector<32x1280xi32>
    %111 = arith.remsi %107, %110 : vector<32x1280xi32>
    %c0_i32_61 = arith.constant 0 : i32
    %112 = vector.broadcast %c0_i32_61 : i32 to vector<32x1280xi32>
    %113 = arith.cmpi ne, %111, %112 : vector<32x1280xi32>
    %c0_i32_62 = arith.constant 0 : i32
    %114 = vector.broadcast %c0_i32_62 : i32 to vector<32x1280xi32>
    %115 = arith.cmpi slt, %111, %114 : vector<32x1280xi32>
    %c0_i32_63 = arith.constant 0 : i32
    %116 = arith.cmpi slt, %109, %c0_i32_63 : i32
    %117 = vector.broadcast %116 : i1 to vector<32x1280xi1>
    %118 = vector.broadcast %117 : vector<32x1280xi1> to vector<32x1280xi1>
    %119 = arith.xori %115, %118 : vector<32x1280xi1>
    %120 = arith.andi %119, %113 : vector<32x1280xi1>
    %121 = vector.broadcast %109 : i32 to vector<32x1280xi32>
    %122 = arith.addi %111, %121 : vector<32x1280xi32>
    %123 = arith.select %120, %122, %111 : vector<32x1280xi1>, vector<32x1280xi32>
    %c32_i32 = arith.constant 32 : i32
    %124 = vector.broadcast %c32_i32 : i32 to vector<32x1280xi32>
    %125 = arith.cmpi slt, %123, %124 : vector<32x1280xi32>
    %cst_64 = arith.constant 0.000000e+00 : f32
    %126 = vector.broadcast %cst_64 : f32 to vector<32x1280xf32>
    %127 = arith.select %125, %106, %126 : vector<32x1280xi1>, vector<32x1280xf32>
    %c0_65 = arith.constant 0 : index
    %c0_66 = arith.constant 0 : index
    %128 = vector.load %arg6[%c0_65, %c0_66] : memref<100x32xf32, #tpu.memory_space<vmem>>, vector<100x32xf32>
    %cst_67 = arith.constant dense<0.000000e+00> : vector<100x1280xf32>
    %129 = tpu.matmul %128, %127, %cst_67 {dimension_numbers = #tpu.dot_dimension_numbers<[1], [0], [0], [1], [0, 0, 1, 1], [], []>} : vector<100x32xf32>, vector<32x1280xf32>, vector<100x1280xf32> -> vector<100x1280xf32>
    %cst_68 = arith.constant 0.000000e+00 : f32
    %130 = vector.broadcast %cst_68 : f32 to vector<100x128xf32>
    %131 = tpu.concatenate %130, %129, %130 in 1 : vector<100x128xf32>, vector<100x1280xf32>, vector<100x128xf32> -> vector<100x1536xf32>
    %cst_69 = arith.constant 0.000000e+00 : f32
    %132 = vector.broadcast %cst_69 : f32 to vector<4x1280xf32>
    %133 = vector.extract_strided_slice %131 {offsets = [0, 46], sizes = [4, 1280], strides = [1, 1]} : vector<100x1536xf32> to vector<4x1280xf32>
    %134 = arith.addf %132, %133 : vector<4x1280xf32>
    %135 = vector.extract_strided_slice %131 {offsets = [4, 47], sizes = [4, 1280], strides = [1, 1]} : vector<100x1536xf32> to vector<4x1280xf32>
    %136 = arith.addf %134, %135 : vector<4x1280xf32>
    %137 = vector.extract_strided_slice %131 {offsets = [8, 48], sizes = [4, 1280], strides = [1, 1]} : vector<100x1536xf32> to vector<4x1280xf32>
    %138 = arith.addf %136, %137 : vector<4x1280xf32>
    %139 = vector.extract_strided_slice %131 {offsets = [12, 49], sizes = [4, 1280], strides = [1, 1]} : vector<100x1536xf32> to vector<4x1280xf32>
    %140 = arith.addf %138, %139 : vector<4x1280xf32>
    %141 = vector.extract_strided_slice %131 {offsets = [16, 50], sizes = [4, 1280], strides = [1, 1]} : vector<100x1536xf32> to vector<4x1280xf32>
    %142 = arith.addf %140, %141 : vector<4x1280xf32>
    %143 = vector.extract_strided_slice %131 {offsets = [20, 86], sizes = [4, 1280], strides = [1, 1]} : vector<100x1536xf32> to vector<4x1280xf32>
    %144 = arith.addf %142, %143 : vector<4x1280xf32>
    %145 = vector.extract_strided_slice %131 {offsets = [24, 87], sizes = [4, 1280], strides = [1, 1]} : vector<100x1536xf32> to vector<4x1280xf32>
    %146 = arith.addf %144, %145 : vector<4x1280xf32>
    %147 = vector.extract_strided_slice %131 {offsets = [28, 88], sizes = [4, 1280], strides = [1, 1]} : vector<100x1536xf32> to vector<4x1280xf32>
    %148 = arith.addf %146, %147 : vector<4x1280xf32>
    %149 = vector.extract_strided_slice %131 {offsets = [32, 89], sizes = [4, 1280], strides = [1, 1]} : vector<100x1536xf32> to vector<4x1280xf32>
    %150 = arith.addf %148, %149 : vector<4x1280xf32>
    %151 = vector.extract_strided_slice %131 {offsets = [36, 90], sizes = [4, 1280], strides = [1, 1]} : vector<100x1536xf32> to vector<4x1280xf32>
    %152 = arith.addf %150, %151 : vector<4x1280xf32>
    %153 = vector.extract_strided_slice %131 {offsets = [40, 126], sizes = [4, 1280], strides = [1, 1]} : vector<100x1536xf32> to vector<4x1280xf32>
    %154 = arith.addf %152, %153 : vector<4x1280xf32>
    %155 = vector.extract_strided_slice %131 {offsets = [44, 127], sizes = [4, 1280], strides = [1, 1]} : vector<100x1536xf32> to vector<4x1280xf32>
    %156 = arith.addf %154, %155 : vector<4x1280xf32>
    %157 = vector.extract_strided_slice %131 {offsets = [48, 128], sizes = [4, 1280], strides = [1, 1]} : vector<100x1536xf32> to vector<4x1280xf32>
    %158 = arith.addf %156, %157 : vector<4x1280xf32>
    %159 = vector.extract_strided_slice %131 {offsets = [52, 129], sizes = [4, 1280], strides = [1, 1]} : vector<100x1536xf32> to vector<4x1280xf32>
    %160 = arith.addf %158, %159 : vector<4x1280xf32>
    %161 = vector.extract_strided_slice %131 {offsets = [56, 130], sizes = [4, 1280], strides = [1, 1]} : vector<100x1536xf32> to vector<4x1280xf32>
    %162 = arith.addf %160, %161 : vector<4x1280xf32>
    %163 = vector.extract_strided_slice %131 {offsets = [60, 166], sizes = [4, 1280], strides = [1, 1]} : vector<100x1536xf32> to vector<4x1280xf32>
    %164 = arith.addf %162, %163 : vector<4x1280xf32>
    %165 = vector.extract_strided_slice %131 {offsets = [64, 167], sizes = [4, 1280], strides = [1, 1]} : vector<100x1536xf32> to vector<4x1280xf32>
    %166 = arith.addf %164, %165 : vector<4x1280xf32>
    %167 = vector.extract_strided_slice %131 {offsets = [68, 168], sizes = [4, 1280], strides = [1, 1]} : vector<100x1536xf32> to vector<4x1280xf32>
    %168 = arith.addf %166, %167 : vector<4x1280xf32>
    %169 = vector.extract_strided_slice %131 {offsets = [72, 169], sizes = [4, 1280], strides = [1, 1]} : vector<100x1536xf32> to vector<4x1280xf32>
    %170 = arith.addf %168, %169 : vector<4x1280xf32>
    %171 = vector.extract_strided_slice %131 {offsets = [76, 170], sizes = [4, 1280], strides = [1, 1]} : vector<100x1536xf32> to vector<4x1280xf32>
    %172 = arith.addf %170, %171 : vector<4x1280xf32>
    %173 = vector.extract_strided_slice %131 {offsets = [80, 206], sizes = [4, 1280], strides = [1, 1]} : vector<100x1536xf32> to vector<4x1280xf32>
    %174 = arith.addf %172, %173 : vector<4x1280xf32>
    %175 = vector.extract_strided_slice %131 {offsets = [84, 207], sizes = [4, 1280], strides = [1, 1]} : vector<100x1536xf32> to vector<4x1280xf32>
    %176 = arith.addf %174, %175 : vector<4x1280xf32>
    %177 = vector.extract_strided_slice %131 {offsets = [88, 208], sizes = [4, 1280], strides = [1, 1]} : vector<100x1536xf32> to vector<4x1280xf32>
    %178 = arith.addf %176, %177 : vector<4x1280xf32>
    %179 = vector.extract_strided_slice %131 {offsets = [92, 209], sizes = [4, 1280], strides = [1, 1]} : vector<100x1536xf32> to vector<4x1280xf32>
    %180 = arith.addf %178, %179 : vector<4x1280xf32>
    %181 = vector.extract_strided_slice %131 {offsets = [96, 210], sizes = [4, 1280], strides = [1, 1]} : vector<100x1536xf32> to vector<4x1280xf32>
    %182 = arith.addf %180, %181 : vector<4x1280xf32>
    %183 = vector.extract_strided_slice %182 {offsets = [0, 0], sizes = [3, 1280], strides = [1, 1]} : vector<4x1280xf32> to vector<3x1280xf32>
    %c0_70 = arith.constant 0 : index
    %c0_71 = arith.constant 0 : index
    %184 = vector.load %arg7[%c0_70, %c0_71] : memref<3x1xf32, #tpu.memory_space<vmem>>, vector<3x1xf32>
    %185 = vector.broadcast %184 : vector<3x1xf32> to vector<3x1280xf32>
    %186 = arith.addf %183, %185 : vector<3x1280xf32>
    %187 = vector.shape_cast %186 : vector<3x1280xf32> to vector<1x3x1280xf32>
    %c0_72 = arith.constant 0 : index
    %c0_73 = arith.constant 0 : index
    %c0_74 = arith.constant 0 : index
    %188 = vector.load %arg8[%c0_72, %c0_73, %c0_74] : memref<1x3x1280xf32, #tpu.memory_space<vmem>>, vector<1x3x1280xf32>
    tpu.vector_store %arg8[%c0_72, %c0_73, %c0_74], %187 {strides = array<i32>} : memref<1x3x1280xf32, #tpu.memory_space<vmem>>, vector<1x3x1280xf32>,
    return
  }
  func.func @transform_0(%arg0: i32) -> (i32, i32, i32) {
    %c0_i32 = arith.constant 0 : i32
    %c0_i32_0 = arith.constant 0 : i32
    %c0_i32_1 = arith.constant 0 : i32
    return %arg0, %c0_i32, %c0_i32_0 : i32, i32, i32
  }
  func.func @transform_1(%arg0: i32) -> (i32, i32) {
    %c0_i32 = arith.constant 0 : i32
    %c0_i32_0 = arith.constant 0 : i32
    %c0_i32_1 = arith.constant 0 : i32
    return %c0_i32, %c0_i32_0 : i32, i32
  }
  func.func @transform_2(%arg0: i32) -> (i32, i32) {
    %c0_i32 = arith.constant 0 : i32
    %c0_i32_0 = arith.constant 0 : i32
    %c0_i32_1 = arith.constant 0 : i32
    return %c0_i32, %c0_i32_0 : i32, i32
  }
  func.func @transform_3(%arg0: i32) -> (i32, i32) {
    %c0_i32 = arith.constant 0 : i32
    %c0_i32_0 = arith.constant 0 : i32
    %c0_i32_1 = arith.constant 0 : i32
    return %c0_i32, %c0_i32_0 : i32, i32
  }
  func.func @transform_4(%arg0: i32) -> (i32, i32) {
    %c0_i32 = arith.constant 0 : i32
    %c0_i32_0 = arith.constant 0 : i32
    %c0_i32_1 = arith.constant 0 : i32
    return %c0_i32, %c0_i32_0 : i32, i32
  }
  func.func @transform_5(%arg0: i32) -> (i32, i32) {
    %c0_i32 = arith.constant 0 : i32
    %c0_i32_0 = arith.constant 0 : i32
    %c0_i32_1 = arith.constant 0 : i32
    return %c0_i32, %c0_i32_0 : i32, i32
  }
  func.func @transform_6(%arg0: i32) -> (i32, i32) {
    %c0_i32 = arith.constant 0 : i32
    %c0_i32_0 = arith.constant 0 : i32
    %c0_i32_1 = arith.constant 0 : i32
    return %c0_i32, %c0_i32_0 : i32, i32
  }
  func.func @transform_7(%arg0: i32) -> (i32, i32, i32) {
    %c0_i32 = arith.constant 0 : i32
    %c0_i32_0 = arith.constant 0 : i32
    %c0_i32_1 = arith.constant 0 : i32
    return %arg0, %c0_i32, %c0_i32_0 : i32, i32, i32
  }
}

</mosaic_0001>

<llo_original>
// kernel: super_resolution_forward.1
$region0: #{super_resolution_forward.1}
  #allocation0 [shape = 'u32[]', space=smem, size = 0x4, offset = 0x4, fixed_abs, tag = 'smem constant byte address 0x4 - core index']
  #allocation1 [shape = 'u32[144,128]{1,0:T(1,128)}', space=vmem, size = 0x12000, scoped, tag = 'internal scratch']
  #allocation2 [shape = 'f32[360,1280]{1,0:T(8,128)}', space=vmem, size = 0x1c2000, scoped, tag = 'scratch operand']
  %s0 = inlined_call_operand.vmem [shape: f32[2,8,1664], index: 0, kind: input, shape index: {}]
  %s1 = inlined_call_operand.vmem [shape: f32[64,360], index: 1, kind: input, shape index: {}]
  %s2 = inlined_call_operand.vmem [shape: f32[64,1], index: 2, kind: input, shape index: {}]
  %s3 = inlined_call_operand.vmem [shape: f32[32,64], index: 3, kind: input, shape index: {}]
  %s4 = inlined_call_operand.vmem [shape: f32[32,1], index: 4, kind: input, shape index: {}]
  %s5 = inlined_call_operand.vmem [shape: f32[100,32], index: 5, kind: input, shape index: {}]
  %s6 = inlined_call_operand.vmem [shape: f32[3,1], index: 6, kind: input, shape index: {}]
  %s7 = inlined_call_operand.vmem [shape: f32[2,3,1280], index: 7, kind: output, shape index: {}]
  %s8 = sld [smem:[#allocation0]]
  $region61: #{super_resolution_forward.1} parent=0
    _
  %s10 = ssub.s32 1, %s8
  %s11 = scalar_select 0, %s10, %s8
  loop: start=0, step=1, limit=4
  $region2: #{super_resolution_forward.1} parent=0 // loop_pre_header
    _
  $region3: #{super_resolution_forward.1} parent=0 // loop_header
    %s13 = sphi 0, %s17
    %p14 = scmp.ge.s32.totalorder %s13, 4
    %s23 = sphi 0, %s25
    %s26 = sphi 0, %s23
    %s27 = sphi 0, %s26
    %s43 = sphi 0, %s27
    %s47 = sphi 0, %s47
    %s49 = sphi 0, %s47
    %s50 = sphi 0, %s49
    %s64 = sphi 0, %s50
    %s68 = sphi 0, %s68
    %s70 = sphi 0, %s68
    %s71 = sphi 0, %s70
    %s85 = sphi 0, %s71
    %s89 = sphi 0, %s89
    %s91 = sphi 0, %s89
    %s92 = sphi 0, %s91
    %s106 = sphi 0, %s92
    %s110 = sphi 0, %s110
    %s112 = sphi 0, %s110
    %s113 = sphi 0, %s112
    %s127 = sphi 0, %s113
    %s131 = sphi 0, %s131
    %s133 = sphi 0, %s131
    %s134 = sphi 0, %s133
    %s148 = sphi 0, %s134
    %s152 = sphi 0, %s152
    %s154 = sphi 0, %s152
    %s155 = sphi 0, %s154
    %s169 = sphi 0, %s155
    %s175 = sphi 0, %s177
    %s178 = sphi 0, %s175
    %s179 = sphi 0, %s178
    %s195 = sphi 0, %s179
  $region4: #{super_resolution_forward.1} parent=0 // loop_header_branch
    %16 = sbr.rel (%p14) target = $region8
  $region5: #{super_resolution_forward.1} parent=0 // loop_body
    %s18 = ssub.s32 %s13, 1
    %s19 = ssub.s32 %s13, 2
    %s20 = sadd.s32 %s13, 1
    %s21 = ssub.s32 %s13, %s20
    %p22 = scmp.eq.s32.totalorder %s21, 0
    %s24 = sadd.s32 %s23, 1
    %s25 = scalar_select %p22, %s23, %s24
    %p28 = pneg %p22
    %p29 = scmp.eq.s32.totalorder %s13, 1
    %p30 = por %p28, %p29
    %p31 = scmp.ne.s32.totalorder %s23, %s26
    %p32 = scmp.eq.s32.totalorder %s13, 0
    %p33 = por %p31, %p32
    %p34 = scmp.ne.s32.totalorder %s23, %s26
    %p35 = scmp.eq.s32.totalorder %s18, 1
    %p36 = por %p34, %p35
    %p37 = scmp.ne.s32.totalorder %s26, %s27
    %p38 = scmp.eq.s32.totalorder %s18, 0
    %p39 = por %p37, %p38
    %p40 = scmp.ne.s32.totalorder %s26, %s27
    %p41 = scmp.eq.s32.totalorder %s19, 1
    %p42 = por %p40, %p41
    %p44 = scmp.ne.s32.totalorder %s27, %s43
    %p45 = scmp.eq.s32.totalorder %s19, 0
    %p46 = por %p44, %p45
    %s48 = sadd.s32 %s47, 1
    %p51 = scmp.eq.s32.totalorder %s13, 1
    %p52 = scmp.ne.s32.totalorder %s47, %s49
    %p53 = scmp.eq.s32.totalorder %s13, 0
    %p54 = por %p52, %p53
    %p55 = scmp.ne.s32.totalorder %s47, %s49
    %p56 = scmp.eq.s32.totalorder %s18, 1
    %p57 = por %p55, %p56
    %p58 = scmp.ne.s32.totalorder %s49, %s50
    %p59 = scmp.eq.s32.totalorder %s18, 0
    %p60 = por %p58, %p59
    %p61 = scmp.ne.s32.totalorder %s49, %s50
    %p62 = scmp.eq.s32.totalorder %s19, 1
    %p63 = por %p61, %p62
    %p65 = scmp.ne.s32.totalorder %s50, %s64
    %p66 = scmp.eq.s32.totalorder %s19, 0
    %p67 = por %p65, %p66
    %s69 = sadd.s32 %s68, 1
    %p72 = scmp.eq.s32.totalorder %s13, 1
    %p73 = scmp.ne.s32.totalorder %s68, %s70
    %p74 = scmp.eq.s32.totalorder %s13, 0
    %p75 = por %p73, %p74
    %p76 = scmp.ne.s32.totalorder %s68, %s70
    %p77 = scmp.eq.s32.totalorder %s18, 1
    %p78 = por %p76, %p77
    %p79 = scmp.ne.s32.totalorder %s70, %s71
    %p80 = scmp.eq.s32.totalorder %s18, 0
    %p81 = por %p79, %p80
    %p82 = scmp.ne.s32.totalorder %s70, %s71
    %p83 = scmp.eq.s32.totalorder %s19, 1
    %p84 = por %p82, %p83
    %p86 = scmp.ne.s32.totalorder %s71, %s85
    %p87 = scmp.eq.s32.totalorder %s19, 0
    %p88 = por %p86, %p87
    %s90 = sadd.s32 %s89, 1
    %p93 = scmp.eq.s32.totalorder %s13, 1
    %p94 = scmp.ne.s32.totalorder %s89, %s91
    %p95 = scmp.eq.s32.totalorder %s13, 0
    %p96 = por %p94, %p95
    %p97 = scmp.ne.s32.totalorder %s89, %s91
    %p98 = scmp.eq.s32.totalorder %s18, 1
    %p99 = por %p97, %p98
    %p100 = scmp.ne.s32.totalorder %s91, %s92
    %p101 = scmp.eq.s32.totalorder %s18, 0
    %p102 = por %p100, %p101
    %p103 = scmp.ne.s32.totalorder %s91, %s92
    %p104 = scmp.eq.s32.totalorder %s19, 1
    %p105 = por %p103, %p104
    %p107 = scmp.ne.s32.totalorder %s92, %s106
    %p108 = scmp.eq.s32.totalorder %s19, 0
    %p109 = por %p107, %p108
    %s111 = sadd.s32 %s110, 1
    %p114 = scmp.eq.s32.totalorder %s13, 1
    %p115 = scmp.ne.s32.totalorder %s110, %s112
    %p116 = scmp.eq.s32.totalorder %s13, 0
    %p117 = por %p115, %p116
    %p118 = scmp.ne.s32.totalorder %s110, %s112
    %p119 = scmp.eq.s32.totalorder %s18, 1
    %p120 = por %p118, %p119
    %p121 = scmp.ne.s32.totalorder %s112, %s113
    %p122 = scmp.eq.s32.totalorder %s18, 0
    %p123 = por %p121, %p122
    %p124 = scmp.ne.s32.totalorder %s112, %s113
    %p125 = scmp.eq.s32.totalorder %s19, 1
    %p126 = por %p124, %p125
    %p128 = scmp.ne.s32.totalorder %s113, %s127
    %p129 = scmp.eq.s32.totalorder %s19, 0
    %p130 = por %p128, %p129
    %s132 = sadd.s32 %s131, 1
    %p135 = scmp.eq.s32.totalorder %s13, 1
    %p136 = scmp.ne.s32.totalorder %s131, %s133
    %p137 = scmp.eq.s32.totalorder %s13, 0
    %p138 = por %p136, %p137
    %p139 = scmp.ne.s32.totalorder %s131, %s133
    %p140 = scmp.eq.s32.totalorder %s18, 1
    %p141 = por %p139, %p140
    %p142 = scmp.ne.s32.totalorder %s133, %s134
    %p143 = scmp.eq.s32.totalorder %s18, 0
    %p144 = por %p142, %p143
    %p145 = scmp.ne.s32.totalorder %s133, %s134
    %p146 = scmp.eq.s32.totalorder %s19, 1
    %p147 = por %p145, %p146
    %p149 = scmp.ne.s32.totalorder %s134, %s148
    %p150 = scmp.eq.s32.totalorder %s19, 0
    %p151 = por %p149, %p150
    %s153 = sadd.s32 %s152, 1
    %p156 = scmp.eq.s32.totalorder %s13, 1
    %p157 = scmp.ne.s32.totalorder %s152, %s154
    %p158 = scmp.eq.s32.totalorder %s13, 0
    %p159 = por %p157, %p158
    %p160 = scmp.ne.s32.totalorder %s152, %s154
    %p161 = scmp.eq.s32.totalorder %s18, 1
    %p162 = por %p160, %p161
    %p163 = scmp.ne.s32.totalorder %s154, %s155
    %p164 = scmp.eq.s32.totalorder %s18, 0
    %p165 = por %p163, %p164
    %p166 = scmp.ne.s32.totalorder %s154, %s155
    %p167 = scmp.eq.s32.totalorder %s19, 1
    %p168 = por %p166, %p167
    %p170 = scmp.ne.s32.totalorder %s155, %s169
    %p171 = scmp.eq.s32.totalorder %s19, 0
    %p172 = por %p170, %p171
    %s173 = ssub.s32 %s13, %s20
    %p174 = scmp.eq.s32.totalorder %s173, 0
    %s176 = sadd.s32 %s175, 1
    %s177 = scalar_select %p174, %s175, %s176
    %p180 = pneg %p174
    %p181 = scmp.eq.s32.totalorder %s13, 1
    %p182 = por %p180, %p181
    %p183 = scmp.ne.s32.totalorder %s175, %s178
    %p184 = scmp.eq.s32.totalorder %s13, 0
    %p185 = por %p183, %p184
    %p186 = scmp.ne.s32.totalorder %s175, %s178
    %p187 = scmp.eq.s32.totalorder %s18, 1
    %p188 = por %p186, %p187
    %p189 = scmp.ne.s32.totalorder %s178, %s179
    %p190 = scmp.eq.s32.totalorder %s18, 0
    %p191 = por %p189, %p190
    %p192 = scmp.ne.s32.totalorder %s178, %s179
    %p193 = scmp.eq.s32.totalorder %s19, 1
    %p194 = por %p192, %p193
    %p196 = scmp.ne.s32.totalorder %s179, %s195
    %p197 = scmp.eq.s32.totalorder %s19, 0
    %p198 = por %p196, %p197
    %p199 = scmp.le.s32.totalorder 1, %s13
    %p200 = scmp.lt.s32.totalorder %s13, 3
    %p201 = pnand %p199, %p200
    %p202 = pneg %p201
    // Predicated region
    $region9: #{super_resolution_forward.1} parent=5 // pred_check
      _
    $region10: #{super_resolution_forward.1} parent=5 // pred_check_branch
      %204 = sbr.rel (%p201) target = $region12
    $region11: #{super_resolution_forward.1} parent=5 // pred_region
      %s205 = ssub.s32 %s13, 1
      // Predicated region
      $region13: #{super_resolution_forward.1} parent=11 // pred_check
        %p206 = pneg %p60
      $region14: #{super_resolution_forward.1} parent=11 // pred_check_branch
        %208 = sbr.rel (%p206) target = $region16
      $region15: #{super_resolution_forward.1} parent=11 // pred_region
        _
      $region16: #{super_resolution_forward.1} parent=11 // pred_fallthru
        _
      // Predicated region
      $region17: #{super_resolution_forward.1} parent=11 // pred_check
        %p209 = pneg %p81
      $region18: #{super_resolution_forward.1} parent=11 // pred_check_branch
        %211 = sbr.rel (%p209) target = $region20
      $region19: #{super_resolution_forward.1} parent=11 // pred_region
        _
      $region20: #{super_resolution_forward.1} parent=11 // pred_fallthru
        _
      // Predicated region
      $region21: #{super_resolution_forward.1} parent=11 // pred_check
        %p212 = pneg %p102
      $region22: #{super_resolution_forward.1} parent=11 // pred_check_branch
        %214 = sbr.rel (%p212) target = $region24
      $region23: #{super_resolution_forward.1} parent=11 // pred_region
        _
      $region24: #{super_resolution_forward.1} parent=11 // pred_fallthru
        _
      // Predicated region
      $region25: #{super_resolution_forward.1} parent=11 // pred_check
        %p215 = pneg %p123
      $region26: #{super_resolution_forward.1} parent=11 // pred_check_branch
        %217 = sbr.rel (%p215) target = $region28
      $region27: #{super_resolution_forward.1} parent=11 // pred_region
        _
      $region28: #{super_resolution_forward.1} parent=11 // pred_fallthru
        _
      // Predicated region
      $region29: #{super_resolution_forward.1} parent=11 // pred_check
        %p218 = pneg %p144
      $region30: #{super_resolution_forward.1} parent=11 // pred_check_branch
        %220 = sbr.rel (%p218) target = $region32
      $region31: #{super_resolution_forward.1} parent=11 // pred_region
        _
      $region32: #{super_resolution_forward.1} parent=11 // pred_fallthru
        _
      // Predicated region
      $region33: #{super_resolution_forward.1} parent=11 // pred_check
        %p221 = pneg %p165
      $region34: #{super_resolution_forward.1} parent=11 // pred_check_branch
        %223 = sbr.rel (%p221) target = $region36
      $region35: #{super_resolution_forward.1} parent=11 // pred_region
        _
      $region36: #{super_resolution_forward.1} parent=11 // pred_fallthru
        _
    $region12: #{super_resolution_forward.1} parent=5 // pred_fallthru
      _
    %p224 = scmp.lt.s32.totalorder %s13, 2
    // Predicated region
    $region37: #{super_resolution_forward.1} parent=5 // pred_check
      %p225 = pneg %p224
    $region38: #{super_resolution_forward.1} parent=5 // pred_check_branch
      %227 = sbr.rel (%p225) target = $region40
    $region39: #{super_resolution_forward.1} parent=5 // pred_region
      // Predicated region
      $region41: #{super_resolution_forward.1} parent=39 // pred_check
        %p228 = pneg %p33
      $region42: #{super_resolution_forward.1} parent=39 // pred_check_branch
        %230 = sbr.rel (%p228) target = $region44
      $region43: #{super_resolution_forward.1} parent=39 // pred_region
        %p231 = scmp.lt.s32.totalorder %s13, 1
        %s232 = scalar_select %p231, %s13, 1
        %s233 = smul.addr %s232, 13
        %s234 = smul.addr %s233, 8
        %s235 = scalar_lea.vmem %s0, %s234
      $region44: #{super_resolution_forward.1} parent=39 // pred_fallthru
        _
    $region40: #{super_resolution_forward.1} parent=5 // pred_fallthru
      _
    %p236 = scmp.le.s32.totalorder 1, %s13
    %p237 = scmp.lt.s32.totalorder %s13, 3
    %p238 = pnand %p236, %p237
    %p239 = pneg %p238
    // Predicated region
    $region45: #{super_resolution_forward.1} parent=5 // pred_check
      _
    $region46: #{super_resolution_forward.1} parent=5 // pred_check_branch
      %241 = sbr.rel (%p238) target = $region48
    $region47: #{super_resolution_forward.1} parent=5 // pred_region
      %s242 = ssub.s32 %s13, 1
      %p243 = scmp.lt.s32.totalorder %s18, 1
      %s244 = scalar_select %p243, %s18, 1
      %s245 = smul.addr %s244, 13
      %s246 = smul.addr %s245, 8
      %s247 = scalar_lea.vmem %s0, %s246
      %p248 = pneg %p39
      %p249 = pneg %p36
      %p250 = pneg %p60
      %p251 = pneg %p57
      %p252 = pneg %p81
      %p253 = pneg %p78
      %p254 = pneg %p102
      %p255 = pneg %p99
      %p256 = pneg %p123
      %p257 = pneg %p120
      %p258 = pneg %p144
      %p259 = pneg %p141
      %p260 = pneg %p165
      %p261 = pneg %p162
      %p262 = pneg %p191
      %p263 = pneg %p188
      %p264 = scmp.lt.s32.totalorder %s18, 1
      %s265 = scalar_select %p264, %s18, 1
      %s266 = smul.addr %s265, 10
      %s267 = smul.addr %s266, 4
      %s268 = scalar_lea.vmem %s7, %s267
      %p269 = scmp.lt.s32.totalorder %s18, 1
      %s270 = scalar_select %p269, %s18, 1
      %s271 = smul.addr %s270, 13
      %s272 = smul.addr %s271, 8
      %s273 = scalar_lea.vmem %s0, %s272
      %p274 = scmp.lt.s32.totalorder %s18, 1
      %s275 = scalar_select %p274, %s18, 1
      %s276 = smul.addr %s275, 10
      %s277 = smul.addr %s276, 4
      %s278 = scalar_lea.vmem %s7, %s277
      %v279 = vld [vmem:[%s273] sm:$0xff]
      %v280 = vld [vmem:[%s273 + $0x8] sm:$0xff]
      %v281 = vld [vmem:[%s273 + $0x10] sm:$0xff]
      %v282 = vld [vmem:[%s273 + $0x18] sm:$0xff]
      %v283 = vld [vmem:[%s273 + $0x20] sm:$0xff]
      %v284 = vld [vmem:[%s273 + $0x28] sm:$0xff]
      %v285 = vld [vmem:[%s273 + $0x30] sm:$0xff]
      %v286 = vld [vmem:[%s273 + $0x38] sm:$0xff]
      %v287 = vld [vmem:[%s273 + $0x40] sm:$0xff]
      %v288 = vld [vmem:[%s273 + $0x48] sm:$0xff]
      %v289 = vld [vmem:[%s273 + $0x50] sm:$0xff]
      %v290 = vld [vmem:[%s273 + $0x58] sm:$0xff]
      %v291 = vld [vmem:[%s273 + $0x60] sm:$0xff]
      %292 = vst [vmem:[#allocation2] sm:$0xff] %v279
      %293 = vst [vmem:[#allocation2 + $0x8] sm:$0xff] %v280
      %294 = vst [vmem:[#allocation2 + $0x10] sm:$0xff] %v281
      %295 = vst [vmem:[#allocation2 + $0x18] sm:$0xff] %v282
      %296 = vst [vmem:[#allocation2 + $0x20] sm:$0xff] %v283
      %297 = vst [vmem:[#allocation2 + $0x28] sm:$0xff] %v284
      %298 = vst [vmem:[#allocation2 + $0x30] sm:$0xff] %v285
      %299 = vst [vmem:[#allocation2 + $0x38] sm:$0xff] %v286
      %300 = vst [vmem:[#allocation2 + $0x40] sm:$0xff] %v287
      %301 = vst [vmem:[#allocation2 + $0x48] sm:$0xff] %v288
      %313 = vrot.lane.b32.xlu0 %v279, 126
      %v314 = vpop.permute.xlu0 %313
      %315 = vrot.lane.b32.xlu0 %v280, 126
      %v316 = vpop.permute.xlu0 %315
      %317 = vrot.lane.b32.xlu0 %v281, 126
      %v318 = vpop.permute.xlu0 %317
      %319 = vrot.lane.b32.xlu0 %v282, 126
      %v320 = vpop.permute.xlu0 %319
      %321 = vrot.lane.b32.xlu0 %v283, 126
      %v322 = vpop.permute.xlu0 %321
      %323 = vrot.lane.b32.xlu0 %v284, 126
      %v324 = vpop.permute.xlu0 %323
      %325 = vrot.lane.b32.xlu0 %v285, 126
      %v326 = vpop.permute.xlu0 %325
      %327 = vrot.lane.b32.xlu0 %v286, 126
      %v328 = vpop.permute.xlu0 %327
      %329 = vrot.lane.b32.xlu0 %v287, 126
      %v330 = vpop.permute.xlu0 %329
      %331 = vrot.lane.b32.xlu0 %v288, 126
      %v332 = vpop.permute.xlu0 %331
      %333 = vrot.lane.b32.xlu0 %v289, 126
      %v334 = vpop.permute.xlu0 %333
      %vm335 = vcmask 1031168
      %v336 = vsel %vm335, %v314, %v316
      %v337 = vsel %vm335, %v316, %v318
      %v338 = vsel %vm335, %v318, %v320
      %v339 = vsel %vm335, %v320, %v322
      %v340 = vsel %vm335, %v322, %v324
      %v341 = vsel %vm335, %v324, %v326
      %v342 = vsel %vm335, %v326, %v328
      %v343 = vsel %vm335, %v328, %v330
      %v344 = vsel %vm335, %v330, %v332
      %v345 = vsel %vm335, %v332, %v334
      %356 = vst [vmem:[#allocation2 + $0x50] sm:$0xff] %v336
      %357 = vst [vmem:[#allocation2 + $0x58] sm:$0xff] %v337
      %358 = vst [vmem:[#allocation2 + $0x60] sm:$0xff] %v338
      %359 = vst [vmem:[#allocation2 + $0x68] sm:$0xff] %v339
      %360 = vst [vmem:[#allocation2 + $0x70] sm:$0xff] %v340
      %361 = vst [vmem:[#allocation2 + $0x78] sm:$0xff] %v341
      %362 = vst [vmem:[#allocation2 + $0x80] sm:$0xff] %v342
      %363 = vst [vmem:[#allocation2 + $0x88] sm:$0xff] %v343
      %364 = vst [vmem:[#allocation2 + $0x90] sm:$0xff] %v344
      %365 = vst [vmem:[#allocation2 + $0x98] sm:$0xff] %v345
      %366 = vrot.lane.b32.xlu0 %v279, 124
      %v367 = vpop.permute.xlu0 %366
      %368 = vrot.lane.b32.xlu0 %v280, 124
      %v369 = vpop.permute.xlu0 %368
      %370 = vrot.lane.b32.xlu0 %v281, 124
      %v371 = vpop.permute.xlu0 %370
      %372 = vrot.lane.b32.xlu0 %v282, 124
      %v373 = vpop.permute.xlu0 %372
      %374 = vrot.lane.b32.xlu0 %v283, 124
      %v375 = vpop.permute.xlu0 %374
      %376 = vrot.lane.b32.xlu0 %v284, 124
      %v377 = vpop.permute.xlu0 %376
      %378 = vrot.lane.b32.xlu0 %v285, 124
      %v379 = vpop.permute.xlu0 %378
      %380 = vrot.lane.b32.xlu0 %v286, 124
      %v381 = vpop.permute.xlu0 %380
      %382 = vrot.lane.b32.xlu0 %v287, 124
      %v383 = vpop.permute.xlu0 %382
      %384 = vrot.lane.b32.xlu0 %v288, 124
      %v385 = vpop.permute.xlu0 %384
      %386 = vrot.lane.b32.xlu0 %v289, 124
      %v387 = vpop.permute.xlu0 %386
      %vm388 = vcmask 1014784
      %v389 = vsel %vm388, %v367, %v369
      %v390 = vsel %vm388, %v369, %v371
      %v391 = vsel %vm388, %v371, %v373
      %v392 = vsel %vm388, %v373, %v375
      %v393 = vsel %vm388, %v375, %v377
      %v394 = vsel %vm388, %v377, %v379
      %v395 = vsel %vm388, %v379, %v381
      %v396 = vsel %vm388, %v381, %v383
      %v397 = vsel %vm388, %v383, %v385
      %v398 = vsel %vm388, %v385, %v387
      %409 = vst [vmem:[#allocation2 + $0xa0] sm:$0xff] %v389
      %410 = vst [vmem:[#allocation2 + $0xa8] sm:$0xff] %v390
      %411 = vst [vmem:[#allocation2 + $0xb0] sm:$0xff] %v391
      %412 = vst [vmem:[#allocation2 + $0xb8] sm:$0xff] %v392
      %413 = vst [vmem:[#allocation2 + $0xc0] sm:$0xff] %v393
      %414 = vst [vmem:[#allocation2 + $0xc8] sm:$0xff] %v394
      %415 = vst [vmem:[#allocation2 + $0xd0] sm:$0xff] %v395
      %416 = vst [vmem:[#allocation2 + $0xd8] sm:$0xff] %v396
      %417 = vst [vmem:[#allocation2 + $0xe0] sm:$0xff] %v397
      %418 = vst [vmem:[#allocation2 + $0xe8] sm:$0xff] %v398
      %419 = vrot.lane.b32.xlu0 %v279, 122
      %v420 = vpop.permute.xlu0 %419
      %421 = vrot.lane.b32.xlu0 %v280, 122
      %v422 = vpop.permute.xlu0 %421
      %423 = vrot.lane.b32.xlu0 %v281, 122
      %v424 = vpop.permute.xlu0 %423
      %425 = vrot.lane.b32.xlu0 %v282, 122
      %v426 = vpop.permute.xlu0 %425
      %427 = vrot.lane.b32.xlu0 %v283, 122
      %v428 = vpop.permute.xlu0 %427
      %429 = vrot.lane.b32.xlu0 %v284, 122
      %v430 = vpop.permute.xlu0 %429
      %431 = vrot.lane.b32.xlu0 %v285, 122
      %v432 = vpop.permute.xlu0 %431
      %433 = vrot.lane.b32.xlu0 %v286, 122
      %v434 = vpop.permute.xlu0 %433
      %435 = vrot.lane.b32.xlu0 %v287, 122
      %v436 = vpop.permute.xlu0 %435
      %437 = vrot.lane.b32.xlu0 %v288, 122
      %v438 = vpop.permute.xlu0 %437
      %439 = vrot.lane.b32.xlu0 %v289, 122
      %v440 = vpop.permute.xlu0 %439
      %vm441 = vcmask 998400
      %v442 = vsel %vm441, %v420, %v422
      %v443 = vsel %vm441, %v422, %v424
      %v444 = vsel %vm441, %v424, %v426
      %v445 = vsel %vm441, %v426, %v428
      %v446 = vsel %vm441, %v428, %v430
      %v447 = vsel %vm441, %v430, %v432
      %v448 = vsel %vm441, %v432, %v434
      %v449 = vsel %vm441, %v434, %v436
      %v450 = vsel %vm441, %v436, %v438
      %v451 = vsel %vm441, %v438, %v440
      %462 = vst [vmem:[#allocation2 + $0xf0] sm:$0xff] %v442
      %463 = vst [vmem:[#allocation2 + $0xf8] sm:$0xff] %v443
      %464 = vst [vmem:[#allocation2 + $0x100] sm:$0xff] %v444
      %465 = vst [vmem:[#allocation2 + $0x108] sm:$0xff] %v445
      %466 = vst [vmem:[#allocation2 + $0x110] sm:$0xff] %v446
      %467 = vst [vmem:[#allocation2 + $0x118] sm:$0xff] %v447
      %468 = vst [vmem:[#allocation2 + $0x120] sm:$0xff] %v448
      %469 = vst [vmem:[#allocation2 + $0x128] sm:$0xff] %v449
      %470 = vst [vmem:[#allocation2 + $0x130] sm:$0xff] %v450
      %471 = vst [vmem:[#allocation2 + $0x138] sm:$0xff] %v451
      %472 = vrot.lane.b32.xlu0 %v279, 120
      %v473 = vpop.permute.xlu0 %472
      %474 = vrot.lane.b32.xlu0 %v280, 120
      %v475 = vpop.permute.xlu0 %474
      %476 = vrot.lane.b32.xlu0 %v281, 120
      %v477 = vpop.permute.xlu0 %476
      %478 = vrot.lane.b32.xlu0 %v282, 120
      %v479 = vpop.permute.xlu0 %478
      %480 = vrot.lane.b32.xlu0 %v283, 120
      %v481 = vpop.permute.xlu0 %480
      %482 = vrot.lane.b32.xlu0 %v284, 120
      %v483 = vpop.permute.xlu0 %482
      %484 = vrot.lane.b32.xlu0 %v285, 120
      %v485 = vpop.permute.xlu0 %484
      %486 = vrot.lane.b32.xlu0 %v286, 120
      %v487 = vpop.permute.xlu0 %486
      %488 = vrot.lane.b32.xlu0 %v287, 120
      %v489 = vpop.permute.xlu0 %488
      %490 = vrot.lane.b32.xlu0 %v288, 120
      %v491 = vpop.permute.xlu0 %490
      %492 = vrot.lane.b32.xlu0 %v289, 120
      %v493 = vpop.permute.xlu0 %492
      %vm494 = vcmask 982016
      %v495 = vsel %vm494, %v473, %v475
      %v496 = vsel %vm494, %v475, %v477
      %v497 = vsel %vm494, %v477, %v479
      %v498 = vsel %vm494, %v479, %v481
      %v499 = vsel %vm494, %v481, %v483
      %v500 = vsel %vm494, %v483, %v485
      %v501 = vsel %vm494, %v485, %v487
      %v502 = vsel %vm494, %v487, %v489
      %v503 = vsel %vm494, %v489, %v491
      %v504 = vsel %vm494, %v491, %v493
      %515 = vst [vmem:[#allocation2 + $0x140] sm:$0xff] %v495
      %516 = vst [vmem:[#allocation2 + $0x148] sm:$0xff] %v496
      %517 = vst [vmem:[#allocation2 + $0x150] sm:$0xff] %v497
      %518 = vst [vmem:[#allocation2 + $0x158] sm:$0xff] %v498
      %519 = vst [vmem:[#allocation2 + $0x160] sm:$0xff] %v499
      %520 = vst [vmem:[#allocation2 + $0x168] sm:$0xff] %v500
      %521 = vst [vmem:[#allocation2 + $0x170] sm:$0xff] %v501
      %522 = vst [vmem:[#allocation2 + $0x178] sm:$0xff] %v502
      %523 = vst [vmem:[#allocation2 + $0x180] sm:$0xff] %v503
      %524 = vst [vmem:[#allocation2 + $0x188] sm:$0xff] %v504
      %525 = vrot.lane.b32.xlu0 %v279, 88
      %v526 = vpop.permute.xlu0 %525
      %527 = vrot.lane.b32.xlu0 %v280, 88
      %v528 = vpop.permute.xlu0 %527
      %529 = vrot.lane.b32.xlu0 %v281, 88
      %v530 = vpop.permute.xlu0 %529
      %531 = vrot.lane.b32.xlu0 %v282, 88
      %v532 = vpop.permute.xlu0 %531
      %533 = vrot.lane.b32.xlu0 %v283, 88
      %v534 = vpop.permute.xlu0 %533
      %535 = vrot.lane.b32.xlu0 %v284, 88
      %v536 = vpop.permute.xlu0 %535
      %537 = vrot.lane.b32.xlu0 %v285, 88
      %v538 = vpop.permute.xlu0 %537
      %539 = vrot.lane.b32.xlu0 %v286, 88
      %v540 = vpop.permute.xlu0 %539
      %541 = vrot.lane.b32.xlu0 %v287, 88
      %v542 = vpop.permute.xlu0 %541
      %543 = vrot.lane.b32.xlu0 %v288, 88
      %v544 = vpop.permute.xlu0 %543
      %545 = vrot.lane.b32.xlu0 %v289, 88
      %v546 = vpop.permute.xlu0 %545
      %vm547 = vcmask 719872
      %v548 = vsel %vm547, %v526, %v528
      %v549 = vsel %vm547, %v528, %v530
      %v550 = vsel %vm547, %v530, %v532
      %v551 = vsel %vm547, %v532, %v534
      %v552 = vsel %vm547, %v534, %v536
      %v553 = vsel %vm547, %v536, %v538
      %v554 = vsel %vm547, %v538, %v540
      %v555 = vsel %vm547, %v540, %v542
      %v556 = vsel %vm547, %v542, %v544
      %v557 = vsel %vm547, %v544, %v546
      %568 = vst [vmem:[#allocation2 + $0x190] sm:$0xff] %v548
      %569 = vst [vmem:[#allocation2 + $0x198] sm:$0xff] %v549
      %570 = vst [vmem:[#allocation2 + $0x1a0] sm:$0xff] %v550
      %571 = vst [vmem:[#allocation2 + $0x1a8] sm:$0xff] %v551
      %572 = vst [vmem:[#allocation2 + $0x1b0] sm:$0xff] %v552
      %573 = vst [vmem:[#allocation2 + $0x1b8] sm:$0xff] %v553
      %574 = vst [vmem:[#allocation2 + $0x1c0] sm:$0xff] %v554
      %575 = vst [vmem:[#allocation2 + $0x1c8] sm:$0xff] %v555
      %576 = vst [vmem:[#allocation2 + $0x1d0] sm:$0xff] %v556
      %577 = vst [vmem:[#allocation2 + $0x1d8] sm:$0xff] %v557
      %578 = vrot.lane.b32.xlu0 %v279, 86
      %v579 = vpop.permute.xlu0 %578
      %580 = vrot.lane.b32.xlu0 %v280, 86
      %v581 = vpop.permute.xlu0 %580
      %582 = vrot.lane.b32.xlu0 %v281, 86
      %v583 = vpop.permute.xlu0 %582
      %584 = vrot.lane.b32.xlu0 %v282, 86
      %v585 = vpop.permute.xlu0 %584
      %586 = vrot.lane.b32.xlu0 %v283, 86
      %v587 = vpop.permute.xlu0 %586
      %588 = vrot.lane.b32.xlu0 %v284, 86
      %v589 = vpop.permute.xlu0 %588
      %590 = vrot.lane.b32.xlu0 %v285, 86
      %v591 = vpop.permute.xlu0 %590
      %592 = vrot.lane.b32.xlu0 %v286, 86
      %v593 = vpop.permute.xlu0 %592
      %594 = vrot.lane.b32.xlu0 %v287, 86
      %v595 = vpop.permute.xlu0 %594
      %596 = vrot.lane.b32.xlu0 %v288, 86
      %v597 = vpop.permute.xlu0 %596
      %598 = vrot.lane.b32.xlu0 %v289, 86
      %v599 = vpop.permute.xlu0 %598
      %vm600 = vcmask 703488
      %v601 = vsel %vm600, %v579, %v581
      %v602 = vsel %vm600, %v581, %v583
      %v603 = vsel %vm600, %v583, %v585
      %v604 = vsel %vm600, %v585, %v587
      %v605 = vsel %vm600, %v587, %v589
      %v606 = vsel %vm600, %v589, %v591
      %v607 = vsel %vm600, %v591, %v593
      %v608 = vsel %vm600, %v593, %v595
      %v609 = vsel %vm600, %v595, %v597
      %v610 = vsel %vm600, %v597, %v599
      %621 = vst [vmem:[#allocation2 + $0x1e0] sm:$0xff] %v601
      %622 = vst [vmem:[#allocation2 + $0x1e8] sm:$0xff] %v602
      %623 = vst [vmem:[#allocation2 + $0x1f0] sm:$0xff] %v603
      %624 = vst [vmem:[#allocation2 + $0x1f8] sm:$0xff] %v604
      %625 = vst [vmem:[#allocation2 + $0x200] sm:$0xff] %v605
      %626 = vst [vmem:[#allocation2 + $0x208] sm:$0xff] %v606
      %627 = vst [vmem:[#allocation2 + $0x210] sm:$0xff] %v607
      %628 = vst [vmem:[#allocation2 + $0x218] sm:$0xff] %v608
      %629 = vst [vmem:[#allocation2 + $0x220] sm:$0xff] %v609
      %630 = vst [vmem:[#allocation2 + $0x228] sm:$0xff] %v610
      %631 = vrot.lane.b32.xlu0 %v279, 84
      %v632 = vpop.permute.xlu0 %631
      %633 = vrot.lane.b32.xlu0 %v280, 84
      %v634 = vpop.permute.xlu0 %633
      %635 = vrot.lane.b32.xlu0 %v281, 84
      %v636 = vpop.permute.xlu0 %635
      %637 = vrot.lane.b32.xlu0 %v282, 84
      %v638 = vpop.permute.xlu0 %637
      %639 = vrot.lane.b32.xlu0 %v283, 84
      %v640 = vpop.permute.xlu0 %639
      %641 = vrot.lane.b32.xlu0 %v284, 84
      %v642 = vpop.permute.xlu0 %641
      %643 = vrot.lane.b32.xlu0 %v285, 84
      %v644 = vpop.permute.xlu0 %643
      %645 = vrot.lane.b32.xlu0 %v286, 84
      %v646 = vpop.permute.xlu0 %645
      %647 = vrot.lane.b32.xlu0 %v287, 84
      %v648 = vpop.permute.xlu0 %647
      %649 = vrot.lane.b32.xlu0 %v288, 84
      %v650 = vpop.permute.xlu0 %649
      %651 = vrot.lane.b32.xlu0 %v289, 84
      %v652 = vpop.permute.xlu0 %651
      %vm653 = vcmask 687104
      %v654 = vsel %vm653, %v632, %v634
      %v655 = vsel %vm653, %v634, %v636
      %v656 = vsel %vm653, %v636, %v638
      %v657 = vsel %vm653, %v638, %v640
      %v658 = vsel %vm653, %v640, %v642
      %v659 = vsel %vm653, %v642, %v644
      %v660 = vsel %vm653, %v644, %v646
      %v661 = vsel %vm653, %v646, %v648
      %v662 = vsel %vm653, %v648, %v650
      %v663 = vsel %vm653, %v650, %v652
      %674 = vst [vmem:[#allocation2 + $0x230] sm:$0xff] %v654
      %675 = vst [vmem:[#allocation2 + $0x238] sm:$0xff] %v655
      %676 = vst [vmem:[#allocation2 + $0x240] sm:$0xff] %v656
      %677 = vst [vmem:[#allocation2 + $0x248] sm:$0xff] %v657
      %678 = vst [vmem:[#allocation2 + $0x250] sm:$0xff] %v658
      %679 = vst [vmem:[#allocation2 + $0x258] sm:$0xff] %v659
      %680 = vst [vmem:[#allocation2 + $0x260] sm:$0xff] %v660
      %681 = vst [vmem:[#allocation2 + $0x268] sm:$0xff] %v661
      %682 = vst [vmem:[#allocation2 + $0x270] sm:$0xff] %v662
      %683 = vst [vmem:[#allocation2 + $0x278] sm:$0xff] %v663
      %684 = vrot.lane.b32.xlu0 %v279, 82
      %v685 = vpop.permute.xlu0 %684
      %686 = vrot.lane.b32.xlu0 %v280, 82
      %v687 = vpop.permute.xlu0 %686
      %688 = vrot.lane.b32.xlu0 %v281, 82
      %v689 = vpop.permute.xlu0 %688
      %690 = vrot.lane.b32.xlu0 %v282, 82
      %v691 = vpop.permute.xlu0 %690
      %692 = vrot.lane.b32.xlu0 %v283, 82
      %v693 = vpop.permute.xlu0 %692
      %694 = vrot.lane.b32.xlu0 %v284, 82
      %v695 = vpop.permute.xlu0 %694
      %696 = vrot.lane.b32.xlu0 %v285, 82
      %v697 = vpop.permute.xlu0 %696
      %698 = vrot.lane.b32.xlu0 %v286, 82
      %v699 = vpop.permute.xlu0 %698
      %700 = vrot.lane.b32.xlu0 %v287, 82
      %v701 = vpop.permute.xlu0 %700
      %702 = vrot.lane.b32.xlu0 %v288, 82
      %v703 = vpop.permute.xlu0 %702
      %704 = vrot.lane.b32.xlu0 %v289, 82
      %v705 = vpop.permute.xlu0 %704
      %vm706 = vcmask 670720
      %v707 = vsel %vm706, %v685, %v687
      %v708 = vsel %vm706, %v687, %v689
      %v709 = vsel %vm706, %v689, %v691
      %v710 = vsel %vm706, %v691, %v693
      %v711 = vsel %vm706, %v693, %v695
      %v712 = vsel %vm706, %v695, %v697
      %v713 = vsel %vm706, %v697, %v699
      %v714 = vsel %vm706, %v699, %v701
      %v715 = vsel %vm706, %v701, %v703
      %v716 = vsel %vm706, %v703, %v705
      %727 = vst [vmem:[#allocation2 + $0x280] sm:$0xff] %v707
      %728 = vst [vmem:[#allocation2 + $0x288] sm:$0xff] %v708
      %729 = vst [vmem:[#allocation2 + $0x290] sm:$0xff] %v709
      %730 = vst [vmem:[#allocation2 + $0x298] sm:$0xff] %v710
      %731 = vst [vmem:[#allocation2 + $0x2a0] sm:$0xff] %v711
      %732 = vst [vmem:[#allocation2 + $0x2a8] sm:$0xff] %v712
      %733 = vst [vmem:[#allocation2 + $0x2b0] sm:$0xff] %v713
      %734 = vst [vmem:[#allocation2 + $0x2b8] sm:$0xff] %v714
      %735 = vst [vmem:[#allocation2 + $0x2c0] sm:$0xff] %v715
      %736 = vst [vmem:[#allocation2 + $0x2c8] sm:$0xff] %v716
      %737 = vrot.lane.b32.xlu0 %v279, 80
      %v738 = vpop.permute.xlu0 %737
      %739 = vrot.lane.b32.xlu0 %v280, 80
      %v740 = vpop.permute.xlu0 %739
      %741 = vrot.lane.b32.xlu0 %v281, 80
      %v742 = vpop.permute.xlu0 %741
      %743 = vrot.lane.b32.xlu0 %v282, 80
      %v744 = vpop.permute.xlu0 %743
      %745 = vrot.lane.b32.xlu0 %v283, 80
      %v746 = vpop.permute.xlu0 %745
      %747 = vrot.lane.b32.xlu0 %v284, 80
      %v748 = vpop.permute.xlu0 %747
      %749 = vrot.lane.b32.xlu0 %v285, 80
      %v750 = vpop.permute.xlu0 %749
      %751 = vrot.lane.b32.xlu0 %v286, 80
      %v752 = vpop.permute.xlu0 %751
      %753 = vrot.lane.b32.xlu0 %v287, 80
      %v754 = vpop.permute.xlu0 %753
      %755 = vrot.lane.b32.xlu0 %v288, 80
      %v756 = vpop.permute.xlu0 %755
      %757 = vrot.lane.b32.xlu0 %v289, 80
      %v758 = vpop.permute.xlu0 %757
      %vm759 = vcmask 654336
      %v760 = vsel %vm759, %v738, %v740
      %v761 = vsel %vm759, %v740, %v742
      %v762 = vsel %vm759, %v742, %v744
      %v763 = vsel %vm759, %v744, %v746
      %v764 = vsel %vm759, %v746, %v748
      %v765 = vsel %vm759, %v748, %v750
      %v766 = vsel %vm759, %v750, %v752
      %v767 = vsel %vm759, %v752, %v754
      %v768 = vsel %vm759, %v754, %v756
      %v769 = vsel %vm759, %v756, %v758
      %780 = vst [vmem:[#allocation2 + $0x2d0] sm:$0xff] %v760
      %781 = vst [vmem:[#allocation2 + $0x2d8] sm:$0xff] %v761
      %782 = vst [vmem:[#allocation2 + $0x2e0] sm:$0xff] %v762
      %783 = vst [vmem:[#allocation2 + $0x2e8] sm:$0xff] %v763
      %784 = vst [vmem:[#allocation2 + $0x2f0] sm:$0xff] %v764
      %785 = vst [vmem:[#allocation2 + $0x2f8] sm:$0xff] %v765
      %786 = vst [vmem:[#allocation2 + $0x300] sm:$0xff] %v766
      %787 = vst [vmem:[#allocation2 + $0x308] sm:$0xff] %v767
      %788 = vst [vmem:[#allocation2 + $0x310] sm:$0xff] %v768
      %789 = vst [vmem:[#allocation2 + $0x318] sm:$0xff] %v769
      %790 = vrot.lane.b32.xlu0 %v279, 48
      %v791 = vpop.permute.xlu0 %790
      %792 = vrot.lane.b32.xlu0 %v280, 48
      %v793 = vpop.permute.xlu0 %792
      %794 = vrot.lane.b32.xlu0 %v281, 48
      %v795 = vpop.permute.xlu0 %794
      %796 = vrot.lane.b32.xlu0 %v282, 48
      %v797 = vpop.permute.xlu0 %796
      %798 = vrot.lane.b32.xlu0 %v283, 48
      %v799 = vpop.permute.xlu0 %798
      %800 = vrot.lane.b32.xlu0 %v284, 48
      %v801 = vpop.permute.xlu0 %800
      %802 = vrot.lane.b32.xlu0 %v285, 48
      %v803 = vpop.permute.xlu0 %802
      %804 = vrot.lane.b32.xlu0 %v286, 48
      %v805 = vpop.permute.xlu0 %804
      %806 = vrot.lane.b32.xlu0 %v287, 48
      %v807 = vpop.permute.xlu0 %806
      %808 = vrot.lane.b32.xlu0 %v288, 48
      %v809 = vpop.permute.xlu0 %808
      %810 = vrot.lane.b32.xlu0 %v289, 48
      %v811 = vpop.permute.xlu0 %810
      %vm812 = vcmask 392192
      %v813 = vsel %vm812, %v791, %v793
      %v814 = vsel %vm812, %v793, %v795
      %v815 = vsel %vm812, %v795, %v797
      %v816 = vsel %vm812, %v797, %v799
      %v817 = vsel %vm812, %v799, %v801
      %v818 = vsel %vm812, %v801, %v803
      %v819 = vsel %vm812, %v803, %v805
      %v820 = vsel %vm812, %v805, %v807
      %v821 = vsel %vm812, %v807, %v809
      %v822 = vsel %vm812, %v809, %v811
      %833 = vst [vmem:[#allocation2 + $0x320] sm:$0xff] %v813
      %834 = vst [vmem:[#allocation2 + $0x328] sm:$0xff] %v814
      %835 = vst [vmem:[#allocation2 + $0x330] sm:$0xff] %v815
      %836 = vst [vmem:[#allocation2 + $0x338] sm:$0xff] %v816
      %837 = vst [vmem:[#allocation2 + $0x340] sm:$0xff] %v817
      %838 = vst [vmem:[#allocation2 + $0x348] sm:$0xff] %v818
      %839 = vst [vmem:[#allocation2 + $0x350] sm:$0xff] %v819
      %840 = vst [vmem:[#allocation2 + $0x358] sm:$0xff] %v820
      %841 = vst [vmem:[#allocation2 + $0x360] sm:$0xff] %v821
      %842 = vst [vmem:[#allocation2 + $0x368] sm:$0xff] %v822
      %843 = vrot.lane.b32.xlu0 %v279, 46
      %v844 = vpop.permute.xlu0 %843
      %845 = vrot.lane.b32.xlu0 %v280, 46
      %v846 = vpop.permute.xlu0 %845
      %847 = vrot.lane.b32.xlu0 %v281, 46
      %v848 = vpop.permute.xlu0 %847
      %849 = vrot.lane.b32.xlu0 %v282, 46
      %v850 = vpop.permute.xlu0 %849
      %851 = vrot.lane.b32.xlu0 %v283, 46
      %v852 = vpop.permute.xlu0 %851
      %853 = vrot.lane.b32.xlu0 %v284, 46
      %v854 = vpop.permute.xlu0 %853
      %855 = vrot.lane.b32.xlu0 %v285, 46
      %v856 = vpop.permute.xlu0 %855
      %857 = vrot.lane.b32.xlu0 %v286, 46
      %v858 = vpop.permute.xlu0 %857
      %859 = vrot.lane.b32.xlu0 %v287, 46
      %v860 = vpop.permute.xlu0 %859
      %861 = vrot.lane.b32.xlu0 %v288, 46
      %v862 = vpop.permute.xlu0 %861
      %863 = vrot.lane.b32.xlu0 %v289, 46
      %v864 = vpop.permute.xlu0 %863
      %vm865 = vcmask 375808
      %v866 = vsel %vm865, %v844, %v846
      %v867 = vsel %vm865, %v846, %v848
      %v868 = vsel %vm865, %v848, %v850
      %v869 = vsel %vm865, %v850, %v852
      %v870 = vsel %vm865, %v852, %v854
      %v871 = vsel %vm865, %v854, %v856
      %v872 = vsel %vm865, %v856, %v858
      %v873 = vsel %vm865, %v858, %v860
      %v874 = vsel %vm865, %v860, %v862
      %v875 = vsel %vm865, %v862, %v864
      %886 = vst [vmem:[#allocation2 + $0x370] sm:$0xff] %v866
      %887 = vst [vmem:[#allocation2 + $0x378] sm:$0xff] %v867
      %888 = vst [vmem:[#allocation2 + $0x380] sm:$0xff] %v868
      %889 = vst [vmem:[#allocation2 + $0x388] sm:$0xff] %v869
      %890 = vst [vmem:[#allocation2 + $0x390] sm:$0xff] %v870
      %891 = vst [vmem:[#allocation2 + $0x398] sm:$0xff] %v871
      %892 = vst [vmem:[#allocation2 + $0x3a0] sm:$0xff] %v872
      %893 = vst [vmem:[#allocation2 + $0x3a8] sm:$0xff] %v873
      %894 = vst [vmem:[#allocation2 + $0x3b0] sm:$0xff] %v874
      %895 = vst [vmem:[#allocation2 + $0x3b8] sm:$0xff] %v875
      %896 = vrot.lane.b32.xlu0 %v279, 44
      %v897 = vpop.permute.xlu0 %896
      %898 = vrot.lane.b32.xlu0 %v280, 44
      %v899 = vpop.permute.xlu0 %898
      %900 = vrot.lane.b32.xlu0 %v281, 44
      %v901 = vpop.permute.xlu0 %900
      %902 = vrot.lane.b32.xlu0 %v282, 44
      %v903 = vpop.permute.xlu0 %902
      %904 = vrot.lane.b32.xlu0 %v283, 44
      %v905 = vpop.permute.xlu0 %904
      %906 = vrot.lane.b32.xlu0 %v284, 44
      %v907 = vpop.permute.xlu0 %906
      %908 = vrot.lane.b32.xlu0 %v285, 44
      %v909 = vpop.permute.xlu0 %908
      %910 = vrot.lane.b32.xlu0 %v286, 44
      %v911 = vpop.permute.xlu0 %910
      %912 = vrot.lane.b32.xlu0 %v287, 44
      %v913 = vpop.permute.xlu0 %912
      %914 = vrot.lane.b32.xlu0 %v288, 44
      %v915 = vpop.permute.xlu0 %914
      %916 = vrot.lane.b32.xlu0 %v289, 44
      %v917 = vpop.permute.xlu0 %916
      %vm918 = vcmask 359424
      %v919 = vsel %vm918, %v897, %v899
      %v920 = vsel %vm918, %v899, %v901
      %v921 = vsel %vm918, %v901, %v903
      %v922 = vsel %vm918, %v903, %v905
      %v923 = vsel %vm918, %v905, %v907
      %v924 = vsel %vm918, %v907, %v909
      %v925 = vsel %vm918, %v909, %v911
      %v926 = vsel %vm918, %v911, %v913
      %v927 = vsel %vm918, %v913, %v915
      %v928 = vsel %vm918, %v915, %v917
      %939 = vst [vmem:[#allocation2 + $0x3c0] sm:$0xff] %v919
      %940 = vst [vmem:[#allocation2 + $0x3c8] sm:$0xff] %v920
      %941 = vst [vmem:[#allocation2 + $0x3d0] sm:$0xff] %v921
      %942 = vst [vmem:[#allocation2 + $0x3d8] sm:$0xff] %v922
      %943 = vst [vmem:[#allocation2 + $0x3e0] sm:$0xff] %v923
      %944 = vst [vmem:[#allocation2 + $0x3e8] sm:$0xff] %v924
      %945 = vst [vmem:[#allocation2 + $0x3f0] sm:$0xff] %v925
      %946 = vst [vmem:[#allocation2 + $0x3f8] sm:$0xff] %v926
      %947 = vst [vmem:[#allocation2 + $0x400] sm:$0xff] %v927
      %948 = vst [vmem:[#allocation2 + $0x408] sm:$0xff] %v928
      %949 = vrot.lane.b32.xlu0 %v279, 42
      %v950 = vpop.permute.xlu0 %949
      %951 = vrot.lane.b32.xlu0 %v280, 42
      %v952 = vpop.permute.xlu0 %951
      %953 = vrot.lane.b32.xlu0 %v281, 42
      %v954 = vpop.permute.xlu0 %953
      %955 = vrot.lane.b32.xlu0 %v282, 42
      %v956 = vpop.permute.xlu0 %955
      %957 = vrot.lane.b32.xlu0 %v283, 42
      %v958 = vpop.permute.xlu0 %957
      %959 = vrot.lane.b32.xlu0 %v284, 42
      %v960 = vpop.permute.xlu0 %959
      %961 = vrot.lane.b32.xlu0 %v285, 42
      %v962 = vpop.permute.xlu0 %961
      %963 = vrot.lane.b32.xlu0 %v286, 42
      %v964 = vpop.permute.xlu0 %963
      %965 = vrot.lane.b32.xlu0 %v287, 42
      %v966 = vpop.permute.xlu0 %965
      %967 = vrot.lane.b32.xlu0 %v288, 42
      %v968 = vpop.permute.xlu0 %967
      %969 = vrot.lane.b32.xlu0 %v289, 42
      %v970 = vpop.permute.xlu0 %969
      %vm971 = vcmask 343040
      %v972 = vsel %vm971, %v950, %v952
      %v973 = vsel %vm971, %v952, %v954
      %v974 = vsel %vm971, %v954, %v956
      %v975 = vsel %vm971, %v956, %v958
      %v976 = vsel %vm971, %v958, %v960
      %v977 = vsel %vm971, %v960, %v962
      %v978 = vsel %vm971, %v962, %v964
      %v979 = vsel %vm971, %v964, %v966
      %v980 = vsel %vm971, %v966, %v968
      %v981 = vsel %vm971, %v968, %v970
      %992 = vst [vmem:[#allocation2 + $0x410] sm:$0xff] %v972
      %993 = vst [vmem:[#allocation2 + $0x418] sm:$0xff] %v973
      %994 = vst [vmem:[#allocation2 + $0x420] sm:$0xff] %v974
      %995 = vst [vmem:[#allocation2 + $0x428] sm:$0xff] %v975
      %996 = vst [vmem:[#allocation2 + $0x430] sm:$0xff] %v976
      %997 = vst [vmem:[#allocation2 + $0x438] sm:$0xff] %v977
      %998 = vst [vmem:[#allocation2 + $0x440] sm:$0xff] %v978
      %999 = vst [vmem:[#allocation2 + $0x448] sm:$0xff] %v979
      %1000 = vst [vmem:[#allocation2 + $0x450] sm:$0xff] %v980
      %1001 = vst [vmem:[#allocation2 + $0x458] sm:$0xff] %v981
      %1002 = vrot.lane.b32.xlu0 %v279, 40
      %v1003 = vpop.permute.xlu0 %1002
      %1004 = vrot.lane.b32.xlu0 %v280, 40
      %v1005 = vpop.permute.xlu0 %1004
      %1006 = vrot.lane.b32.xlu0 %v281, 40
      %v1007 = vpop.permute.xlu0 %1006
      %1008 = vrot.lane.b32.xlu0 %v282, 40
      %v1009 = vpop.permute.xlu0 %1008
      %1010 = vrot.lane.b32.xlu0 %v283, 40
      %v1011 = vpop.permute.xlu0 %1010
      %1012 = vrot.lane.b32.xlu0 %v284, 40
      %v1013 = vpop.permute.xlu0 %1012
      %1014 = vrot.lane.b32.xlu0 %v285, 40
      %v1015 = vpop.permute.xlu0 %1014
      %1016 = vrot.lane.b32.xlu0 %v286, 40
      %v1017 = vpop.permute.xlu0 %1016
      %1018 = vrot.lane.b32.xlu0 %v287, 40
      %v1019 = vpop.permute.xlu0 %1018
      %1020 = vrot.lane.b32.xlu0 %v288, 40
      %v1021 = vpop.permute.xlu0 %1020
      %1022 = vrot.lane.b32.xlu0 %v289, 40
      %v1023 = vpop.permute.xlu0 %1022
      %vm1024 = vcmask 326656
      %v1025 = vsel %vm1024, %v1003, %v1005
      %v1026 = vsel %vm1024, %v1005, %v1007
      %v1027 = vsel %vm1024, %v1007, %v1009
      %v1028 = vsel %vm1024, %v1009, %v1011
      %v1029 = vsel %vm1024, %v1011, %v1013
      %v1030 = vsel %vm1024, %v1013, %v1015
      %v1031 = vsel %vm1024, %v1015, %v1017
      %v1032 = vsel %vm1024, %v1017, %v1019
      %v1033 = vsel %vm1024, %v1019, %v1021
      %v1034 = vsel %vm1024, %v1021, %v1023
      %1045 = vst [vmem:[#allocation2 + $0x460] sm:$0xff] %v1025
      %1046 = vst [vmem:[#allocation2 + $0x468] sm:$0xff] %v1026
      %1047 = vst [vmem:[#allocation2 + $0x470] sm:$0xff] %v1027
      %1048 = vst [vmem:[#allocation2 + $0x478] sm:$0xff] %v1028
      %1049 = vst [vmem:[#allocation2 + $0x480] sm:$0xff] %v1029
      %1050 = vst [vmem:[#allocation2 + $0x488] sm:$0xff] %v1030
      %1051 = vst [vmem:[#allocation2 + $0x490] sm:$0xff] %v1031
      %1052 = vst [vmem:[#allocation2 + $0x498] sm:$0xff] %v1032
      %1053 = vst [vmem:[#allocation2 + $0x4a0] sm:$0xff] %v1033
      %1054 = vst [vmem:[#allocation2 + $0x4a8] sm:$0xff] %v1034
      %1055 = vrot.lane.b32.xlu0 %v279, 8
      %v1056 = vpop.permute.xlu0 %1055
      %1057 = vrot.lane.b32.xlu0 %v280, 8
      %v1058 = vpop.permute.xlu0 %1057
      %1059 = vrot.lane.b32.xlu0 %v281, 8
      %v1060 = vpop.permute.xlu0 %1059
      %1061 = vrot.lane.b32.xlu0 %v282, 8
      %v1062 = vpop.permute.xlu0 %1061
      %1063 = vrot.lane.b32.xlu0 %v283, 8
      %v1064 = vpop.permute.xlu0 %1063
      %1065 = vrot.lane.b32.xlu0 %v284, 8
      %v1066 = vpop.permute.xlu0 %1065
      %1067 = vrot.lane.b32.xlu0 %v285, 8
      %v1068 = vpop.permute.xlu0 %1067
      %1069 = vrot.lane.b32.xlu0 %v286, 8
      %v1070 = vpop.permute.xlu0 %1069
      %1071 = vrot.lane.b32.xlu0 %v287, 8
      %v1072 = vpop.permute.xlu0 %1071
      %1073 = vrot.lane.b32.xlu0 %v288, 8
      %v1074 = vpop.permute.xlu0 %1073
      %1075 = vrot.lane.b32.xlu0 %v289, 8
      %v1076 = vpop.permute.xlu0 %1075
      %vm1077 = vcmask 64512
      %v1078 = vsel %vm1077, %v1056, %v1058
      %v1079 = vsel %vm1077, %v1058, %v1060
      %v1080 = vsel %vm1077, %v1060, %v1062
      %v1081 = vsel %vm1077, %v1062, %v1064
      %v1082 = vsel %vm1077, %v1064, %v1066
      %v1083 = vsel %vm1077, %v1066, %v1068
      %v1084 = vsel %vm1077, %v1068, %v1070
      %v1085 = vsel %vm1077, %v1070, %v1072
      %v1086 = vsel %vm1077, %v1072, %v1074
      %v1087 = vsel %vm1077, %v1074, %v1076
      %1098 = vst [vmem:[#allocation2 + $0x4b0] sm:$0xff] %v1078
      %1099 = vst [vmem:[#allocation2 + $0x4b8] sm:$0xff] %v1079
      %1100 = vst [vmem:[#allocation2 + $0x4c0] sm:$0xff] %v1080
      %1101 = vst [vmem:[#allocation2 + $0x4c8] sm:$0xff] %v1081
      %1102 = vst [vmem:[#allocation2 + $0x4d0] sm:$0xff] %v1082
      %1103 = vst [vmem:[#allocation2 + $0x4d8] sm:$0xff] %v1083
      %1104 = vst [vmem:[#allocation2 + $0x4e0] sm:$0xff] %v1084
      %1105 = vst [vmem:[#allocation2 + $0x4e8] sm:$0xff] %v1085
      %1106 = vst [vmem:[#allocation2 + $0x4f0] sm:$0xff] %v1086
      %1107 = vst [vmem:[#allocation2 + $0x4f8] sm:$0xff] %v1087
      %1108 = vrot.lane.b32.xlu0 %v279, 6
      %v1109 = vpop.permute.xlu0 %1108
      %1110 = vrot.lane.b32.xlu0 %v280, 6
      %v1111 = vpop.permute.xlu0 %1110
      %1112 = vrot.lane.b32.xlu0 %v281, 6
      %v1113 = vpop.permute.xlu0 %1112
      %1114 = vrot.lane.b32.xlu0 %v282, 6
      %v1115 = vpop.permute.xlu0 %1114
      %1116 = vrot.lane.b32.xlu0 %v283, 6
      %v1117 = vpop.permute.xlu0 %1116
      %1118 = vrot.lane.b32.xlu0 %v284, 6
      %v1119 = vpop.permute.xlu0 %1118
      %1120 = vrot.lane.b32.xlu0 %v285, 6
      %v1121 = vpop.permute.xlu0 %1120
      %1122 = vrot.lane.b32.xlu0 %v286, 6
      %v1123 = vpop.permute.xlu0 %1122
      %1124 = vrot.lane.b32.xlu0 %v287, 6
      %v1125 = vpop.permute.xlu0 %1124
      %1126 = vrot.lane.b32.xlu0 %v288, 6
      %v1127 = vpop.permute.xlu0 %1126
      %1128 = vrot.lane.b32.xlu0 %v289, 6
      %v1129 = vpop.permute.xlu0 %1128
      %vm1130 = vcmask 48128
      %v1131 = vsel %vm1130, %v1109, %v1111
      %v1132 = vsel %vm1130, %v1111, %v1113
      %v1133 = vsel %vm1130, %v1113, %v1115
      %v1134 = vsel %vm1130, %v1115, %v1117
      %v1135 = vsel %vm1130, %v1117, %v1119
      %v1136 = vsel %vm1130, %v1119, %v1121
      %v1137 = vsel %vm1130, %v1121, %v1123
      %v1138 = vsel %vm1130, %v1123, %v1125
      %v1139 = vsel %vm1130, %v1125, %v1127
      %v1140 = vsel %vm1130, %v1127, %v1129
      %1151 = vst [vmem:[#allocation2 + $0x500] sm:$0xff] %v1131
      %1152 = vst [vmem:[#allocation2 + $0x508] sm:$0xff] %v1132
      %1153 = vst [vmem:[#allocation2 + $0x510] sm:$0xff] %v1133
      %1154 = vst [vmem:[#allocation2 + $0x518] sm:$0xff] %v1134
      %1155 = vst [vmem:[#allocation2 + $0x520] sm:$0xff] %v1135
      %1156 = vst [vmem:[#allocation2 + $0x528] sm:$0xff] %v1136
      %1157 = vst [vmem:[#allocation2 + $0x530] sm:$0xff] %v1137
      %1158 = vst [vmem:[#allocation2 + $0x538] sm:$0xff] %v1138
      %1159 = vst [vmem:[#allocation2 + $0x540] sm:$0xff] %v1139
      %1160 = vst [vmem:[#allocation2 + $0x548] sm:$0xff] %v1140
      %1161 = vrot.lane.b32.xlu0 %v279, 4
      %v1162 = vpop.permute.xlu0 %1161
      %1163 = vrot.lane.b32.xlu0 %v280, 4
      %v1164 = vpop.permute.xlu0 %1163
      %1165 = vrot.lane.b32.xlu0 %v281, 4
      %v1166 = vpop.permute.xlu0 %1165
      %1167 = vrot.lane.b32.xlu0 %v282, 4
      %v1168 = vpop.permute.xlu0 %1167
      %1169 = vrot.lane.b32.xlu0 %v283, 4
      %v1170 = vpop.permute.xlu0 %1169
      %1171 = vrot.lane.b32.xlu0 %v284, 4
      %v1172 = vpop.permute.xlu0 %1171
      %1173 = vrot.lane.b32.xlu0 %v285, 4
      %v1174 = vpop.permute.xlu0 %1173
      %1175 = vrot.lane.b32.xlu0 %v286, 4
      %v1176 = vpop.permute.xlu0 %1175
      %1177 = vrot.lane.b32.xlu0 %v287, 4
      %v1178 = vpop.permute.xlu0 %1177
      %1179 = vrot.lane.b32.xlu0 %v288, 4
      %v1180 = vpop.permute.xlu0 %1179
      %1181 = vrot.lane.b32.xlu0 %v289, 4
      %v1182 = vpop.permute.xlu0 %1181
      %vm1183 = vcmask 31744
      %v1184 = vsel %vm1183, %v1162, %v1164
      %v1185 = vsel %vm1183, %v1164, %v1166
      %v1186 = vsel %vm1183, %v1166, %v1168
      %v1187 = vsel %vm1183, %v1168, %v1170
      %v1188 = vsel %vm1183, %v1170, %v1172
      %v1189 = vsel %vm1183, %v1172, %v1174
      %v1190 = vsel %vm1183, %v1174, %v1176
      %v1191 = vsel %vm1183, %v1176, %v1178
      %v1192 = vsel %vm1183, %v1178, %v1180
      %v1193 = vsel %vm1183, %v1180, %v1182
      %1204 = vst [vmem:[#allocation2 + $0x550] sm:$0xff] %v1184
      %1205 = vst [vmem:[#allocation2 + $0x558] sm:$0xff] %v1185
      %1206 = vst [vmem:[#allocation2 + $0x560] sm:$0xff] %v1186
      %1207 = vst [vmem:[#allocation2 + $0x568] sm:$0xff] %v1187
      %1208 = vst [vmem:[#allocation2 + $0x570] sm:$0xff] %v1188
      %1209 = vst [vmem:[#allocation2 + $0x578] sm:$0xff] %v1189
      %1210 = vst [vmem:[#allocation2 + $0x580] sm:$0xff] %v1190
      %1211 = vst [vmem:[#allocation2 + $0x588] sm:$0xff] %v1191
      %1212 = vst [vmem:[#allocation2 + $0x590] sm:$0xff] %v1192
      %1213 = vst [vmem:[#allocation2 + $0x598] sm:$0xff] %v1193
      %1214 = vrot.lane.b32.xlu0 %v279, 2
      %v1215 = vpop.permute.xlu0 %1214
      %1216 = vrot.lane.b32.xlu0 %v280, 2
      %v1217 = vpop.permute.xlu0 %1216
      %1218 = vrot.lane.b32.xlu0 %v281, 2
      %v1219 = vpop.permute.xlu0 %1218
      %1220 = vrot.lane.b32.xlu0 %v282, 2
      %v1221 = vpop.permute.xlu0 %1220
      %1222 = vrot.lane.b32.xlu0 %v283, 2
      %v1223 = vpop.permute.xlu0 %1222
      %1224 = vrot.lane.b32.xlu0 %v284, 2
      %v1225 = vpop.permute.xlu0 %1224
      %1226 = vrot.lane.b32.xlu0 %v285, 2
      %v1227 = vpop.permute.xlu0 %1226
      %1228 = vrot.lane.b32.xlu0 %v286, 2
      %v1229 = vpop.permute.xlu0 %1228
      %1230 = vrot.lane.b32.xlu0 %v287, 2
      %v1231 = vpop.permute.xlu0 %1230
      %1232 = vrot.lane.b32.xlu0 %v288, 2
      %v1233 = vpop.permute.xlu0 %1232
      %1234 = vrot.lane.b32.xlu0 %v289, 2
      %v1235 = vpop.permute.xlu0 %1234
      %vm1236 = vcmask 15360
      %v1237 = vsel %vm1236, %v1215, %v1217
      %v1238 = vsel %vm1236, %v1217, %v1219
      %v1239 = vsel %vm1236, %v1219, %v1221
      %v1240 = vsel %vm1236, %v1221, %v1223
      %v1241 = vsel %vm1236, %v1223, %v1225
      %v1242 = vsel %vm1236, %v1225, %v1227
      %v1243 = vsel %vm1236, %v1227, %v1229
      %v1244 = vsel %vm1236, %v1229, %v1231
      %v1245 = vsel %vm1236, %v1231, %v1233
      %v1246 = vsel %vm1236, %v1233, %v1235
      %1257 = vst [vmem:[#allocation2 + $0x5a0] sm:$0xff] %v1237
      %1258 = vst [vmem:[#allocation2 + $0x5a8] sm:$0xff] %v1238
      %1259 = vst [vmem:[#allocation2 + $0x5b0] sm:$0xff] %v1239
      %1260 = vst [vmem:[#allocation2 + $0x5b8] sm:$0xff] %v1240
      %1261 = vst [vmem:[#allocation2 + $0x5c0] sm:$0xff] %v1241
      %1262 = vst [vmem:[#allocation2 + $0x5c8] sm:$0xff] %v1242
      %1263 = vst [vmem:[#allocation2 + $0x5d0] sm:$0xff] %v1243
      %1264 = vst [vmem:[#allocation2 + $0x5d8] sm:$0xff] %v1244
      %1265 = vst [vmem:[#allocation2 + $0x5e0] sm:$0xff] %v1245
      %1266 = vst [vmem:[#allocation2 + $0x5e8] sm:$0xff] %v1246
      %1267 = vst [vmem:[#allocation2 + $0x5f0] sm:$0xff] %v280
      %1268 = vst [vmem:[#allocation2 + $0x5f8] sm:$0xff] %v281
      %1269 = vst [vmem:[#allocation2 + $0x600] sm:$0xff] %v282
      %1270 = vst [vmem:[#allocation2 + $0x608] sm:$0xff] %v283
      %1271 = vst [vmem:[#allocation2 + $0x610] sm:$0xff] %v284
      %1272 = vst [vmem:[#allocation2 + $0x618] sm:$0xff] %v285
      %1273 = vst [vmem:[#allocation2 + $0x620] sm:$0xff] %v286
      %1274 = vst [vmem:[#allocation2 + $0x628] sm:$0xff] %v287
      %1275 = vst [vmem:[#allocation2 + $0x630] sm:$0xff] %v288
      %1276 = vst [vmem:[#allocation2 + $0x638] sm:$0xff] %v289
      %1278 = vrot.lane.b32.xlu0 %v280, 96
      %v1279 = vpop.permute.xlu0 %1278
      %1280 = vrot.lane.b32.xlu0 %v281, 96
      %v1281 = vpop.permute.xlu0 %1280
      %1282 = vrot.lane.b32.xlu0 %v282, 96
      %v1283 = vpop.permute.xlu0 %1282
      %1284 = vrot.lane.b32.xlu0 %v283, 96
      %v1285 = vpop.permute.xlu0 %1284
      %1286 = vrot.lane.b32.xlu0 %v284, 96
      %v1287 = vpop.permute.xlu0 %1286
      %1288 = vrot.lane.b32.xlu0 %v285, 96
      %v1289 = vpop.permute.xlu0 %1288
      %1290 = vrot.lane.b32.xlu0 %v286, 96
      %v1291 = vpop.permute.xlu0 %1290
      %1292 = vrot.lane.b32.xlu0 %v287, 96
      %v1293 = vpop.permute.xlu0 %1292
      %1294 = vrot.lane.b32.xlu0 %v288, 96
      %v1295 = vpop.permute.xlu0 %1294
      %1296 = vrot.lane.b32.xlu0 %v289, 96
      %v1297 = vpop.permute.xlu0 %1296
      %1298 = vrot.lane.b32.xlu0 %v290, 96
      %v1299 = vpop.permute.xlu0 %1298
      %vm1300 = vcmask 785408
      %v1301 = vsel %vm1300, %v1279, %v1281
      %v1302 = vsel %vm1300, %v1281, %v1283
      %v1303 = vsel %vm1300, %v1283, %v1285
      %v1304 = vsel %vm1300, %v1285, %v1287
      %v1305 = vsel %vm1300, %v1287, %v1289
      %v1306 = vsel %vm1300, %v1289, %v1291
      %v1307 = vsel %vm1300, %v1291, %v1293
      %v1308 = vsel %vm1300, %v1293, %v1295
      %v1309 = vsel %vm1300, %v1295, %v1297
      %v1310 = vsel %vm1300, %v1297, %v1299
      %1321 = vst [vmem:[#allocation2 + $0x640] sm:$0xff] %v1301
      %1322 = vst [vmem:[#allocation2 + $0x648] sm:$0xff] %v1302
      %1323 = vst [vmem:[#allocation2 + $0x650] sm:$0xff] %v1303
      %1324 = vst [vmem:[#allocation2 + $0x658] sm:$0xff] %v1304
      %1325 = vst [vmem:[#allocation2 + $0x660] sm:$0xff] %v1305
      %1326 = vst [vmem:[#allocation2 + $0x668] sm:$0xff] %v1306
      %1327 = vst [vmem:[#allocation2 + $0x670] sm:$0xff] %v1307
      %1328 = vst [vmem:[#allocation2 + $0x678] sm:$0xff] %v1308
      %1329 = vst [vmem:[#allocation2 + $0x680] sm:$0xff] %v1309
      %1330 = vst [vmem:[#allocation2 + $0x688] sm:$0xff] %v1310
      %1331 = vrot.lane.b32.xlu0 %v280, 94
      %v1332 = vpop.permute.xlu0 %1331
      %1333 = vrot.lane.b32.xlu0 %v281, 94
      %v1334 = vpop.permute.xlu0 %1333
      %1335 = vrot.lane.b32.xlu0 %v282, 94
      %v1336 = vpop.permute.xlu0 %1335
      %1337 = vrot.lane.b32.xlu0 %v283, 94
      %v1338 = vpop.permute.xlu0 %1337
      %1339 = vrot.lane.b32.xlu0 %v284, 94
      %v1340 = vpop.permute.xlu0 %1339
      %1341 = vrot.lane.b32.xlu0 %v285, 94
      %v1342 = vpop.permute.xlu0 %1341
      %1343 = vrot.lane.b32.xlu0 %v286, 94
      %v1344 = vpop.permute.xlu0 %1343
      %1345 = vrot.lane.b32.xlu0 %v287, 94
      %v1346 = vpop.permute.xlu0 %1345
      %1347 = vrot.lane.b32.xlu0 %v288, 94
      %v1348 = vpop.permute.xlu0 %1347
      %1349 = vrot.lane.b32.xlu0 %v289, 94
      %v1350 = vpop.permute.xlu0 %1349
      %1351 = vrot.lane.b32.xlu0 %v290, 94
      %v1352 = vpop.permute.xlu0 %1351
      %vm1353 = vcmask 769024
      %v1354 = vsel %vm1353, %v1332, %v1334
      %v1355 = vsel %vm1353, %v1334, %v1336
      %v1356 = vsel %vm1353, %v1336, %v1338
      %v1357 = vsel %vm1353, %v1338, %v1340
      %v1358 = vsel %vm1353, %v1340, %v1342
      %v1359 = vsel %vm1353, %v1342, %v1344
      %v1360 = vsel %vm1353, %v1344, %v1346
      %v1361 = vsel %vm1353, %v1346, %v1348
      %v1362 = vsel %vm1353, %v1348, %v1350
      %v1363 = vsel %vm1353, %v1350, %v1352
      %1374 = vst [vmem:[#allocation2 + $0x690] sm:$0xff] %v1354
      %1375 = vst [vmem:[#allocation2 + $0x698] sm:$0xff] %v1355
      %1376 = vst [vmem:[#allocation2 + $0x6a0] sm:$0xff] %v1356
      %1377 = vst [vmem:[#allocation2 + $0x6a8] sm:$0xff] %v1357
      %1378 = vst [vmem:[#allocation2 + $0x6b0] sm:$0xff] %v1358
      %1379 = vst [vmem:[#allocation2 + $0x6b8] sm:$0xff] %v1359
      %1380 = vst [vmem:[#allocation2 + $0x6c0] sm:$0xff] %v1360
      %1381 = vst [vmem:[#allocation2 + $0x6c8] sm:$0xff] %v1361
      %1382 = vst [vmem:[#allocation2 + $0x6d0] sm:$0xff] %v1362
      %1383 = vst [vmem:[#allocation2 + $0x6d8] sm:$0xff] %v1363
      %1384 = vrot.lane.b32.xlu0 %v280, 92
      %v1385 = vpop.permute.xlu0 %1384
      %1386 = vrot.lane.b32.xlu0 %v281, 92
      %v1387 = vpop.permute.xlu0 %1386
      %1388 = vrot.lane.b32.xlu0 %v282, 92
      %v1389 = vpop.permute.xlu0 %1388
      %1390 = vrot.lane.b32.xlu0 %v283, 92
      %v1391 = vpop.permute.xlu0 %1390
      %1392 = vrot.lane.b32.xlu0 %v284, 92
      %v1393 = vpop.permute.xlu0 %1392
      %1394 = vrot.lane.b32.xlu0 %v285, 92
      %v1395 = vpop.permute.xlu0 %1394
      %1396 = vrot.lane.b32.xlu0 %v286, 92
      %v1397 = vpop.permute.xlu0 %1396
      %1398 = vrot.lane.b32.xlu0 %v287, 92
      %v1399 = vpop.permute.xlu0 %1398
      %1400 = vrot.lane.b32.xlu0 %v288, 92
      %v1401 = vpop.permute.xlu0 %1400
      %1402 = vrot.lane.b32.xlu0 %v289, 92
      %v1403 = vpop.permute.xlu0 %1402
      %1404 = vrot.lane.b32.xlu0 %v290, 92
      %v1405 = vpop.permute.xlu0 %1404
      %vm1406 = vcmask 752640
      %v1407 = vsel %vm1406, %v1385, %v1387
      %v1408 = vsel %vm1406, %v1387, %v1389
      %v1409 = vsel %vm1406, %v1389, %v1391
      %v1410 = vsel %vm1406, %v1391, %v1393
      %v1411 = vsel %vm1406, %v1393, %v1395
      %v1412 = vsel %vm1406, %v1395, %v1397
      %v1413 = vsel %vm1406, %v1397, %v1399
      %v1414 = vsel %vm1406, %v1399, %v1401
      %v1415 = vsel %vm1406, %v1401, %v1403
      %v1416 = vsel %vm1406, %v1403, %v1405
      %1427 = vst [vmem:[#allocation2 + $0x6e0] sm:$0xff] %v1407
      %1428 = vst [vmem:[#allocation2 + $0x6e8] sm:$0xff] %v1408
      %1429 = vst [vmem:[#allocation2 + $0x6f0] sm:$0xff] %v1409
      %1430 = vst [vmem:[#allocation2 + $0x6f8] sm:$0xff] %v1410
      %1431 = vst [vmem:[#allocation2 + $0x700] sm:$0xff] %v1411
      %1432 = vst [vmem:[#allocation2 + $0x708] sm:$0xff] %v1412
      %1433 = vst [vmem:[#allocation2 + $0x710] sm:$0xff] %v1413
      %1434 = vst [vmem:[#allocation2 + $0x718] sm:$0xff] %v1414
      %1435 = vst [vmem:[#allocation2 + $0x720] sm:$0xff] %v1415
      %1436 = vst [vmem:[#allocation2 + $0x728] sm:$0xff] %v1416
      %1437 = vrot.lane.b32.xlu0 %v280, 90
      %v1438 = vpop.permute.xlu0 %1437
      %1439 = vrot.lane.b32.xlu0 %v281, 90
      %v1440 = vpop.permute.xlu0 %1439
      %1441 = vrot.lane.b32.xlu0 %v282, 90
      %v1442 = vpop.permute.xlu0 %1441
      %1443 = vrot.lane.b32.xlu0 %v283, 90
      %v1444 = vpop.permute.xlu0 %1443
      %1445 = vrot.lane.b32.xlu0 %v284, 90
      %v1446 = vpop.permute.xlu0 %1445
      %1447 = vrot.lane.b32.xlu0 %v285, 90
      %v1448 = vpop.permute.xlu0 %1447
      %1449 = vrot.lane.b32.xlu0 %v286, 90
      %v1450 = vpop.permute.xlu0 %1449
      %1451 = vrot.lane.b32.xlu0 %v287, 90
      %v1452 = vpop.permute.xlu0 %1451
      %1453 = vrot.lane.b32.xlu0 %v288, 90
      %v1454 = vpop.permute.xlu0 %1453
      %1455 = vrot.lane.b32.xlu0 %v289, 90
      %v1456 = vpop.permute.xlu0 %1455
      %1457 = vrot.lane.b32.xlu0 %v290, 90
      %v1458 = vpop.permute.xlu0 %1457
      %vm1459 = vcmask 736256
      %v1460 = vsel %vm1459, %v1438, %v1440
      %v1461 = vsel %vm1459, %v1440, %v1442
      %v1462 = vsel %vm1459, %v1442, %v1444
      %v1463 = vsel %vm1459, %v1444, %v1446
      %v1464 = vsel %vm1459, %v1446, %v1448
      %v1465 = vsel %vm1459, %v1448, %v1450
      %v1466 = vsel %vm1459, %v1450, %v1452
      %v1467 = vsel %vm1459, %v1452, %v1454
      %v1468 = vsel %vm1459, %v1454, %v1456
      %v1469 = vsel %vm1459, %v1456, %v1458
      %1480 = vst [vmem:[#allocation2 + $0x730] sm:$0xff] %v1460
      %1481 = vst [vmem:[#allocation2 + $0x738] sm:$0xff] %v1461
      %1482 = vst [vmem:[#allocation2 + $0x740] sm:$0xff] %v1462
      %1483 = vst [vmem:[#allocation2 + $0x748] sm:$0xff] %v1463
      %1484 = vst [vmem:[#allocation2 + $0x750] sm:$0xff] %v1464
      %1485 = vst [vmem:[#allocation2 + $0x758] sm:$0xff] %v1465
      %1486 = vst [vmem:[#allocation2 + $0x760] sm:$0xff] %v1466
      %1487 = vst [vmem:[#allocation2 + $0x768] sm:$0xff] %v1467
      %1488 = vst [vmem:[#allocation2 + $0x770] sm:$0xff] %v1468
      %1489 = vst [vmem:[#allocation2 + $0x778] sm:$0xff] %v1469
      %1490 = vrot.lane.b32.xlu0 %v290, 88
      %v1491 = vpop.permute.xlu0 %1490
      %v1492 = vsel %vm547, %v546, %v1491
      %1494 = vst [vmem:[#allocation2 + $0x780] sm:$0xff] %v549
      %1495 = vst [vmem:[#allocation2 + $0x788] sm:$0xff] %v550
      %1496 = vst [vmem:[#allocation2 + $0x790] sm:$0xff] %v551
      %1497 = vst [vmem:[#allocation2 + $0x798] sm:$0xff] %v552
      %1498 = vst [vmem:[#allocation2 + $0x7a0] sm:$0xff] %v553
      %1499 = vst [vmem:[#allocation2 + $0x7a8] sm:$0xff] %v554
      %1500 = vst [vmem:[#allocation2 + $0x7b0] sm:$0xff] %v555
      %1501 = vst [vmem:[#allocation2 + $0x7b8] sm:$0xff] %v556
      %1502 = vst [vmem:[#allocation2 + $0x7c0] sm:$0xff] %v557
      %1503 = vst [vmem:[#allocation2 + $0x7c8] sm:$0xff] %v1492
      %1504 = vrot.lane.b32.xlu0 %v280, 56
      %v1505 = vpop.permute.xlu0 %1504
      %1506 = vrot.lane.b32.xlu0 %v281, 56
      %v1507 = vpop.permute.xlu0 %1506
      %1508 = vrot.lane.b32.xlu0 %v282, 56
      %v1509 = vpop.permute.xlu0 %1508
      %1510 = vrot.lane.b32.xlu0 %v283, 56
      %v1511 = vpop.permute.xlu0 %1510
      %1512 = vrot.lane.b32.xlu0 %v284, 56
      %v1513 = vpop.permute.xlu0 %1512
      %1514 = vrot.lane.b32.xlu0 %v285, 56
      %v1515 = vpop.permute.xlu0 %1514
      %1516 = vrot.lane.b32.xlu0 %v286, 56
      %v1517 = vpop.permute.xlu0 %1516
      %1518 = vrot.lane.b32.xlu0 %v287, 56
      %v1519 = vpop.permute.xlu0 %1518
      %1520 = vrot.lane.b32.xlu0 %v288, 56
      %v1521 = vpop.permute.xlu0 %1520
      %1522 = vrot.lane.b32.xlu0 %v289, 56
      %v1523 = vpop.permute.xlu0 %1522
      %1524 = vrot.lane.b32.xlu0 %v290, 56
      %v1525 = vpop.permute.xlu0 %1524
      %vm1526 = vcmask 457728
      %v1527 = vsel %vm1526, %v1505, %v1507
      %v1528 = vsel %vm1526, %v1507, %v1509
      %v1529 = vsel %vm1526, %v1509, %v1511
      %v1530 = vsel %vm1526, %v1511, %v1513
      %v1531 = vsel %vm1526, %v1513, %v1515
      %v1532 = vsel %vm1526, %v1515, %v1517
      %v1533 = vsel %vm1526, %v1517, %v1519
      %v1534 = vsel %vm1526, %v1519, %v1521
      %v1535 = vsel %vm1526, %v1521, %v1523
      %v1536 = vsel %vm1526, %v1523, %v1525
      %1547 = vst [vmem:[#allocation2 + $0x7d0] sm:$0xff] %v1527
      %1548 = vst [vmem:[#allocation2 + $0x7d8] sm:$0xff] %v1528
      %1549 = vst [vmem:[#allocation2 + $0x7e0] sm:$0xff] %v1529
      %1550 = vst [vmem:[#allocation2 + $0x7e8] sm:$0xff] %v1530
      %1551 = vst [vmem:[#allocation2 + $0x7f0] sm:$0xff] %v1531
      %1552 = vst [vmem:[#allocation2 + $0x7f8] sm:$0xff] %v1532
      %1553 = vst [vmem:[#allocation2 + $0x800] sm:$0xff] %v1533
      %1554 = vst [vmem:[#allocation2 + $0x808] sm:$0xff] %v1534
      %1555 = vst [vmem:[#allocation2 + $0x810] sm:$0xff] %v1535
      %1556 = vst [vmem:[#allocation2 + $0x818] sm:$0xff] %v1536
      %1557 = vrot.lane.b32.xlu0 %v280, 54
      %v1558 = vpop.permute.xlu0 %1557
      %1559 = vrot.lane.b32.xlu0 %v281, 54
      %v1560 = vpop.permute.xlu0 %1559
      %1561 = vrot.lane.b32.xlu0 %v282, 54
      %v1562 = vpop.permute.xlu0 %1561
      %1563 = vrot.lane.b32.xlu0 %v283, 54
      %v1564 = vpop.permute.xlu0 %1563
      %1565 = vrot.lane.b32.xlu0 %v284, 54
      %v1566 = vpop.permute.xlu0 %1565
      %1567 = vrot.lane.b32.xlu0 %v285, 54
      %v1568 = vpop.permute.xlu0 %1567
      %1569 = vrot.lane.b32.xlu0 %v286, 54
      %v1570 = vpop.permute.xlu0 %1569
      %1571 = vrot.lane.b32.xlu0 %v287, 54
      %v1572 = vpop.permute.xlu0 %1571
      %1573 = vrot.lane.b32.xlu0 %v288, 54
      %v1574 = vpop.permute.xlu0 %1573
      %1575 = vrot.lane.b32.xlu0 %v289, 54
      %v1576 = vpop.permute.xlu0 %1575
      %1577 = vrot.lane.b32.xlu0 %v290, 54
      %v1578 = vpop.permute.xlu0 %1577
      %vm1579 = vcmask 441344
      %v1580 = vsel %vm1579, %v1558, %v1560
      %v1581 = vsel %vm1579, %v1560, %v1562
      %v1582 = vsel %vm1579, %v1562, %v1564
      %v1583 = vsel %vm1579, %v1564, %v1566
      %v1584 = vsel %vm1579, %v1566, %v1568
      %v1585 = vsel %vm1579, %v1568, %v1570
      %v1586 = vsel %vm1579, %v1570, %v1572
      %v1587 = vsel %vm1579, %v1572, %v1574
      %v1588 = vsel %vm1579, %v1574, %v1576
      %v1589 = vsel %vm1579, %v1576, %v1578
      %1600 = vst [vmem:[#allocation2 + $0x820] sm:$0xff] %v1580
      %1601 = vst [vmem:[#allocation2 + $0x828] sm:$0xff] %v1581
      %1602 = vst [vmem:[#allocation2 + $0x830] sm:$0xff] %v1582
      %1603 = vst [vmem:[#allocation2 + $0x838] sm:$0xff] %v1583
      %1604 = vst [vmem:[#allocation2 + $0x840] sm:$0xff] %v1584
      %1605 = vst [vmem:[#allocation2 + $0x848] sm:$0xff] %v1585
      %1606 = vst [vmem:[#allocation2 + $0x850] sm:$0xff] %v1586
      %1607 = vst [vmem:[#allocation2 + $0x858] sm:$0xff] %v1587
      %1608 = vst [vmem:[#allocation2 + $0x860] sm:$0xff] %v1588
      %1609 = vst [vmem:[#allocation2 + $0x868] sm:$0xff] %v1589
      %1610 = vrot.lane.b32.xlu0 %v280, 52
      %v1611 = vpop.permute.xlu0 %1610
      %1612 = vrot.lane.b32.xlu0 %v281, 52
      %v1613 = vpop.permute.xlu0 %1612
      %1614 = vrot.lane.b32.xlu0 %v282, 52
      %v1615 = vpop.permute.xlu0 %1614
      %1616 = vrot.lane.b32.xlu0 %v283, 52
      %v1617 = vpop.permute.xlu0 %1616
      %1618 = vrot.lane.b32.xlu0 %v284, 52
      %v1619 = vpop.permute.xlu0 %1618
      %1620 = vrot.lane.b32.xlu0 %v285, 52
      %v1621 = vpop.permute.xlu0 %1620
      %1622 = vrot.lane.b32.xlu0 %v286, 52
      %v1623 = vpop.permute.xlu0 %1622
      %1624 = vrot.lane.b32.xlu0 %v287, 52
      %v1625 = vpop.permute.xlu0 %1624
      %1626 = vrot.lane.b32.xlu0 %v288, 52
      %v1627 = vpop.permute.xlu0 %1626
      %1628 = vrot.lane.b32.xlu0 %v289, 52
      %v1629 = vpop.permute.xlu0 %1628
      %1630 = vrot.lane.b32.xlu0 %v290, 52
      %v1631 = vpop.permute.xlu0 %1630
      %vm1632 = vcmask 424960
      %v1633 = vsel %vm1632, %v1611, %v1613
      %v1634 = vsel %vm1632, %v1613, %v1615
      %v1635 = vsel %vm1632, %v1615, %v1617
      %v1636 = vsel %vm1632, %v1617, %v1619
      %v1637 = vsel %vm1632, %v1619, %v1621
      %v1638 = vsel %vm1632, %v1621, %v1623
      %v1639 = vsel %vm1632, %v1623, %v1625
      %v1640 = vsel %vm1632, %v1625, %v1627
      %v1641 = vsel %vm1632, %v1627, %v1629
      %v1642 = vsel %vm1632, %v1629, %v1631
      %1653 = vst [vmem:[#allocation2 + $0x870] sm:$0xff] %v1633
      %1654 = vst [vmem:[#allocation2 + $0x878] sm:$0xff] %v1634
      %1655 = vst [vmem:[#allocation2 + $0x880] sm:$0xff] %v1635
      %1656 = vst [vmem:[#allocation2 + $0x888] sm:$0xff] %v1636
      %1657 = vst [vmem:[#allocation2 + $0x890] sm:$0xff] %v1637
      %1658 = vst [vmem:[#allocation2 + $0x898] sm:$0xff] %v1638
      %1659 = vst [vmem:[#allocation2 + $0x8a0] sm:$0xff] %v1639
      %1660 = vst [vmem:[#allocation2 + $0x8a8] sm:$0xff] %v1640
      %1661 = vst [vmem:[#allocation2 + $0x8b0] sm:$0xff] %v1641
      %1662 = vst [vmem:[#allocation2 + $0x8b8] sm:$0xff] %v1642
      %1663 = vrot.lane.b32.xlu0 %v280, 50
      %v1664 = vpop.permute.xlu0 %1663
      %1665 = vrot.lane.b32.xlu0 %v281, 50
      %v1666 = vpop.permute.xlu0 %1665
      %1667 = vrot.lane.b32.xlu0 %v282, 50
      %v1668 = vpop.permute.xlu0 %1667
      %1669 = vrot.lane.b32.xlu0 %v283, 50
      %v1670 = vpop.permute.xlu0 %1669
      %1671 = vrot.lane.b32.xlu0 %v284, 50
      %v1672 = vpop.permute.xlu0 %1671
      %1673 = vrot.lane.b32.xlu0 %v285, 50
      %v1674 = vpop.permute.xlu0 %1673
      %1675 = vrot.lane.b32.xlu0 %v286, 50
      %v1676 = vpop.permute.xlu0 %1675
      %1677 = vrot.lane.b32.xlu0 %v287, 50
      %v1678 = vpop.permute.xlu0 %1677
      %1679 = vrot.lane.b32.xlu0 %v288, 50
      %v1680 = vpop.permute.xlu0 %1679
      %1681 = vrot.lane.b32.xlu0 %v289, 50
      %v1682 = vpop.permute.xlu0 %1681
      %1683 = vrot.lane.b32.xlu0 %v290, 50
      %v1684 = vpop.permute.xlu0 %1683
      %vm1685 = vcmask 408576
      %v1686 = vsel %vm1685, %v1664, %v1666
      %v1687 = vsel %vm1685, %v1666, %v1668
      %v1688 = vsel %vm1685, %v1668, %v1670
      %v1689 = vsel %vm1685, %v1670, %v1672
      %v1690 = vsel %vm1685, %v1672, %v1674
      %v1691 = vsel %vm1685, %v1674, %v1676
      %v1692 = vsel %vm1685, %v1676, %v1678
      %v1693 = vsel %vm1685, %v1678, %v1680
      %v1694 = vsel %vm1685, %v1680, %v1682
      %v1695 = vsel %vm1685, %v1682, %v1684
      %1706 = vst [vmem:[#allocation2 + $0x8c0] sm:$0xff] %v1686
      %1707 = vst [vmem:[#allocation2 + $0x8c8] sm:$0xff] %v1687
      %1708 = vst [vmem:[#allocation2 + $0x8d0] sm:$0xff] %v1688
      %1709 = vst [vmem:[#allocation2 + $0x8d8] sm:$0xff] %v1689
      %1710 = vst [vmem:[#allocation2 + $0x8e0] sm:$0xff] %v1690
      %1711 = vst [vmem:[#allocation2 + $0x8e8] sm:$0xff] %v1691
      %1712 = vst [vmem:[#allocation2 + $0x8f0] sm:$0xff] %v1692
      %1713 = vst [vmem:[#allocation2 + $0x8f8] sm:$0xff] %v1693
      %1714 = vst [vmem:[#allocation2 + $0x900] sm:$0xff] %v1694
      %1715 = vst [vmem:[#allocation2 + $0x908] sm:$0xff] %v1695
      %1716 = vrot.lane.b32.xlu0 %v290, 48
      %v1717 = vpop.permute.xlu0 %1716
      %v1718 = vsel %vm812, %v811, %v1717
      %1720 = vst [vmem:[#allocation2 + $0x910] sm:$0xff] %v814
      %1721 = vst [vmem:[#allocation2 + $0x918] sm:$0xff] %v815
      %1722 = vst [vmem:[#allocation2 + $0x920] sm:$0xff] %v816
      %1723 = vst [vmem:[#allocation2 + $0x928] sm:$0xff] %v817
      %1724 = vst [vmem:[#allocation2 + $0x930] sm:$0xff] %v818
      %1725 = vst [vmem:[#allocation2 + $0x938] sm:$0xff] %v819
      %1726 = vst [vmem:[#allocation2 + $0x940] sm:$0xff] %v820
      %1727 = vst [vmem:[#allocation2 + $0x948] sm:$0xff] %v821
      %1728 = vst [vmem:[#allocation2 + $0x950] sm:$0xff] %v822
      %1729 = vst [vmem:[#allocation2 + $0x958] sm:$0xff] %v1718
      %1730 = vrot.lane.b32.xlu0 %v280, 16
      %v1731 = vpop.permute.xlu0 %1730
      %1732 = vrot.lane.b32.xlu0 %v281, 16
      %v1733 = vpop.permute.xlu0 %1732
      %1734 = vrot.lane.b32.xlu0 %v282, 16
      %v1735 = vpop.permute.xlu0 %1734
      %1736 = vrot.lane.b32.xlu0 %v283, 16
      %v1737 = vpop.permute.xlu0 %1736
      %1738 = vrot.lane.b32.xlu0 %v284, 16
      %v1739 = vpop.permute.xlu0 %1738
      %1740 = vrot.lane.b32.xlu0 %v285, 16
      %v1741 = vpop.permute.xlu0 %1740
      %1742 = vrot.lane.b32.xlu0 %v286, 16
      %v1743 = vpop.permute.xlu0 %1742
      %1744 = vrot.lane.b32.xlu0 %v287, 16
      %v1745 = vpop.permute.xlu0 %1744
      %1746 = vrot.lane.b32.xlu0 %v288, 16
      %v1747 = vpop.permute.xlu0 %1746
      %1748 = vrot.lane.b32.xlu0 %v289, 16
      %v1749 = vpop.permute.xlu0 %1748
      %1750 = vrot.lane.b32.xlu0 %v290, 16
      %v1751 = vpop.permute.xlu0 %1750
      %vm1752 = vcmask 130048
      %v1753 = vsel %vm1752, %v1731, %v1733
      %v1754 = vsel %vm1752, %v1733, %v1735
      %v1755 = vsel %vm1752, %v1735, %v1737
      %v1756 = vsel %vm1752, %v1737, %v1739
      %v1757 = vsel %vm1752, %v1739, %v1741
      %v1758 = vsel %vm1752, %v1741, %v1743
      %v1759 = vsel %vm1752, %v1743, %v1745
      %v1760 = vsel %vm1752, %v1745, %v1747
      %v1761 = vsel %vm1752, %v1747, %v1749
      %v1762 = vsel %vm1752, %v1749, %v1751
      %1773 = vst [vmem:[#allocation2 + $0x960] sm:$0xff] %v1753
      %1774 = vst [vmem:[#allocation2 + $0x968] sm:$0xff] %v1754
      %1775 = vst [vmem:[#allocation2 + $0x970] sm:$0xff] %v1755
      %1776 = vst [vmem:[#allocation2 + $0x978] sm:$0xff] %v1756
      %1777 = vst [vmem:[#allocation2 + $0x980] sm:$0xff] %v1757
      %1778 = vst [vmem:[#allocation2 + $0x988] sm:$0xff] %v1758
      %1779 = vst [vmem:[#allocation2 + $0x990] sm:$0xff] %v1759
      %1780 = vst [vmem:[#allocation2 + $0x998] sm:$0xff] %v1760
      %1781 = vst [vmem:[#allocation2 + $0x9a0] sm:$0xff] %v1761
      %1782 = vst [vmem:[#allocation2 + $0x9a8] sm:$0xff] %v1762
      %1783 = vrot.lane.b32.xlu0 %v280, 14
      %v1784 = vpop.permute.xlu0 %1783
      %1785 = vrot.lane.b32.xlu0 %v281, 14
      %v1786 = vpop.permute.xlu0 %1785
      %1787 = vrot.lane.b32.xlu0 %v282, 14
      %v1788 = vpop.permute.xlu0 %1787
      %1789 = vrot.lane.b32.xlu0 %v283, 14
      %v1790 = vpop.permute.xlu0 %1789
      %1791 = vrot.lane.b32.xlu0 %v284, 14
      %v1792 = vpop.permute.xlu0 %1791
      %1793 = vrot.lane.b32.xlu0 %v285, 14
      %v1794 = vpop.permute.xlu0 %1793
      %1795 = vrot.lane.b32.xlu0 %v286, 14
      %v1796 = vpop.permute.xlu0 %1795
      %1797 = vrot.lane.b32.xlu0 %v287, 14
      %v1798 = vpop.permute.xlu0 %1797
      %1799 = vrot.lane.b32.xlu0 %v288, 14
      %v1800 = vpop.permute.xlu0 %1799
      %1801 = vrot.lane.b32.xlu0 %v289, 14
      %v1802 = vpop.permute.xlu0 %1801
      %1803 = vrot.lane.b32.xlu0 %v290, 14
      %v1804 = vpop.permute.xlu0 %1803
      %vm1805 = vcmask 113664
      %v1806 = vsel %vm1805, %v1784, %v1786
      %v1807 = vsel %vm1805, %v1786, %v1788
      %v1808 = vsel %vm1805, %v1788, %v1790
      %v1809 = vsel %vm1805, %v1790, %v1792
      %v1810 = vsel %vm1805, %v1792, %v1794
      %v1811 = vsel %vm1805, %v1794, %v1796
      %v1812 = vsel %vm1805, %v1796, %v1798
      %v1813 = vsel %vm1805, %v1798, %v1800
      %v1814 = vsel %vm1805, %v1800, %v1802
      %v1815 = vsel %vm1805, %v1802, %v1804
      %1826 = vst [vmem:[#allocation2 + $0x9b0] sm:$0xff] %v1806
      %1827 = vst [vmem:[#allocation2 + $0x9b8] sm:$0xff] %v1807
      %1828 = vst [vmem:[#allocation2 + $0x9c0] sm:$0xff] %v1808
      %1829 = vst [vmem:[#allocation2 + $0x9c8] sm:$0xff] %v1809
      %1830 = vst [vmem:[#allocation2 + $0x9d0] sm:$0xff] %v1810
      %1831 = vst [vmem:[#allocation2 + $0x9d8] sm:$0xff] %v1811
      %1832 = vst [vmem:[#allocation2 + $0x9e0] sm:$0xff] %v1812
      %1833 = vst [vmem:[#allocation2 + $0x9e8] sm:$0xff] %v1813
      %1834 = vst [vmem:[#allocation2 + $0x9f0] sm:$0xff] %v1814
      %1835 = vst [vmem:[#allocation2 + $0x9f8] sm:$0xff] %v1815
      %1836 = vrot.lane.b32.xlu0 %v280, 12
      %v1837 = vpop.permute.xlu0 %1836
      %1838 = vrot.lane.b32.xlu0 %v281, 12
      %v1839 = vpop.permute.xlu0 %1838
      %1840 = vrot.lane.b32.xlu0 %v282, 12
      %v1841 = vpop.permute.xlu0 %1840
      %1842 = vrot.lane.b32.xlu0 %v283, 12
      %v1843 = vpop.permute.xlu0 %1842
      %1844 = vrot.lane.b32.xlu0 %v284, 12
      %v1845 = vpop.permute.xlu0 %1844
      %1846 = vrot.lane.b32.xlu0 %v285, 12
      %v1847 = vpop.permute.xlu0 %1846
      %1848 = vrot.lane.b32.xlu0 %v286, 12
      %v1849 = vpop.permute.xlu0 %1848
      %1850 = vrot.lane.b32.xlu0 %v287, 12
      %v1851 = vpop.permute.xlu0 %1850
      %1852 = vrot.lane.b32.xlu0 %v288, 12
      %v1853 = vpop.permute.xlu0 %1852
      %1854 = vrot.lane.b32.xlu0 %v289, 12
      %v1855 = vpop.permute.xlu0 %1854
      %1856 = vrot.lane.b32.xlu0 %v290, 12
      %v1857 = vpop.permute.xlu0 %1856
      %vm1858 = vcmask 97280
      %v1859 = vsel %vm1858, %v1837, %v1839
      %v1860 = vsel %vm1858, %v1839, %v1841
      %v1861 = vsel %vm1858, %v1841, %v1843
      %v1862 = vsel %vm1858, %v1843, %v1845
      %v1863 = vsel %vm1858, %v1845, %v1847
      %v1864 = vsel %vm1858, %v1847, %v1849
      %v1865 = vsel %vm1858, %v1849, %v1851
      %v1866 = vsel %vm1858, %v1851, %v1853
      %v1867 = vsel %vm1858, %v1853, %v1855
      %v1868 = vsel %vm1858, %v1855, %v1857
      %1879 = vst [vmem:[#allocation2 + $0xa00] sm:$0xff] %v1859
      %1880 = vst [vmem:[#allocation2 + $0xa08] sm:$0xff] %v1860
      %1881 = vst [vmem:[#allocation2 + $0xa10] sm:$0xff] %v1861
      %1882 = vst [vmem:[#allocation2 + $0xa18] sm:$0xff] %v1862
      %1883 = vst [vmem:[#allocation2 + $0xa20] sm:$0xff] %v1863
      %1884 = vst [vmem:[#allocation2 + $0xa28] sm:$0xff] %v1864
      %1885 = vst [vmem:[#allocation2 + $0xa30] sm:$0xff] %v1865
      %1886 = vst [vmem:[#allocation2 + $0xa38] sm:$0xff] %v1866
      %1887 = vst [vmem:[#allocation2 + $0xa40] sm:$0xff] %v1867
      %1888 = vst [vmem:[#allocation2 + $0xa48] sm:$0xff] %v1868
      %1889 = vrot.lane.b32.xlu0 %v280, 10
      %v1890 = vpop.permute.xlu0 %1889
      %1891 = vrot.lane.b32.xlu0 %v281, 10
      %v1892 = vpop.permute.xlu0 %1891
      %1893 = vrot.lane.b32.xlu0 %v282, 10
      %v1894 = vpop.permute.xlu0 %1893
      %1895 = vrot.lane.b32.xlu0 %v283, 10
      %v1896 = vpop.permute.xlu0 %1895
      %1897 = vrot.lane.b32.xlu0 %v284, 10
      %v1898 = vpop.permute.xlu0 %1897
      %1899 = vrot.lane.b32.xlu0 %v285, 10
      %v1900 = vpop.permute.xlu0 %1899
      %1901 = vrot.lane.b32.xlu0 %v286, 10
      %v1902 = vpop.permute.xlu0 %1901
      %1903 = vrot.lane.b32.xlu0 %v287, 10
      %v1904 = vpop.permute.xlu0 %1903
      %1905 = vrot.lane.b32.xlu0 %v288, 10
      %v1906 = vpop.permute.xlu0 %1905
      %1907 = vrot.lane.b32.xlu0 %v289, 10
      %v1908 = vpop.permute.xlu0 %1907
      %1909 = vrot.lane.b32.xlu0 %v290, 10
      %v1910 = vpop.permute.xlu0 %1909
      %vm1911 = vcmask 80896
      %v1912 = vsel %vm1911, %v1890, %v1892
      %v1913 = vsel %vm1911, %v1892, %v1894
      %v1914 = vsel %vm1911, %v1894, %v1896
      %v1915 = vsel %vm1911, %v1896, %v1898
      %v1916 = vsel %vm1911, %v1898, %v1900
      %v1917 = vsel %vm1911, %v1900, %v1902
      %v1918 = vsel %vm1911, %v1902, %v1904
      %v1919 = vsel %vm1911, %v1904, %v1906
      %v1920 = vsel %vm1911, %v1906, %v1908
      %v1921 = vsel %vm1911, %v1908, %v1910
      %1932 = vst [vmem:[#allocation2 + $0xa50] sm:$0xff] %v1912
      %1933 = vst [vmem:[#allocation2 + $0xa58] sm:$0xff] %v1913
      %1934 = vst [vmem:[#allocation2 + $0xa60] sm:$0xff] %v1914
      %1935 = vst [vmem:[#allocation2 + $0xa68] sm:$0xff] %v1915
      %1936 = vst [vmem:[#allocation2 + $0xa70] sm:$0xff] %v1916
      %1937 = vst [vmem:[#allocation2 + $0xa78] sm:$0xff] %v1917
      %1938 = vst [vmem:[#allocation2 + $0xa80] sm:$0xff] %v1918
      %1939 = vst [vmem:[#allocation2 + $0xa88] sm:$0xff] %v1919
      %1940 = vst [vmem:[#allocation2 + $0xa90] sm:$0xff] %v1920
      %1941 = vst [vmem:[#allocation2 + $0xa98] sm:$0xff] %v1921
      %1942 = vrot.lane.b32.xlu0 %v290, 8
      %v1943 = vpop.permute.xlu0 %1942
      %v1944 = vsel %vm1077, %v1076, %v1943
      %1946 = vst [vmem:[#allocation2 + $0xaa0] sm:$0xff] %v1079
      %1947 = vst [vmem:[#allocation2 + $0xaa8] sm:$0xff] %v1080
      %1948 = vst [vmem:[#allocation2 + $0xab0] sm:$0xff] %v1081
      %1949 = vst [vmem:[#allocation2 + $0xab8] sm:$0xff] %v1082
      %1950 = vst [vmem:[#allocation2 + $0xac0] sm:$0xff] %v1083
      %1951 = vst [vmem:[#allocation2 + $0xac8] sm:$0xff] %v1084
      %1952 = vst [vmem:[#allocation2 + $0xad0] sm:$0xff] %v1085
      %1953 = vst [vmem:[#allocation2 + $0xad8] sm:$0xff] %v1086
      %1954 = vst [vmem:[#allocation2 + $0xae0] sm:$0xff] %v1087
      %1955 = vst [vmem:[#allocation2 + $0xae8] sm:$0xff] %v1944
      %1957 = vrot.lane.b32.xlu0 %v281, 104
      %v1958 = vpop.permute.xlu0 %1957
      %1959 = vrot.lane.b32.xlu0 %v282, 104
      %v1960 = vpop.permute.xlu0 %1959
      %1961 = vrot.lane.b32.xlu0 %v283, 104
      %v1962 = vpop.permute.xlu0 %1961
      %1963 = vrot.lane.b32.xlu0 %v284, 104
      %v1964 = vpop.permute.xlu0 %1963
      %1965 = vrot.lane.b32.xlu0 %v285, 104
      %v1966 = vpop.permute.xlu0 %1965
      %1967 = vrot.lane.b32.xlu0 %v286, 104
      %v1968 = vpop.permute.xlu0 %1967
      %1969 = vrot.lane.b32.xlu0 %v287, 104
      %v1970 = vpop.permute.xlu0 %1969
      %1971 = vrot.lane.b32.xlu0 %v288, 104
      %v1972 = vpop.permute.xlu0 %1971
      %1973 = vrot.lane.b32.xlu0 %v289, 104
      %v1974 = vpop.permute.xlu0 %1973
      %1975 = vrot.lane.b32.xlu0 %v290, 104
      %v1976 = vpop.permute.xlu0 %1975
      %1977 = vrot.lane.b32.xlu0 %v291, 104
      %v1978 = vpop.permute.xlu0 %1977
      %vm1979 = vcmask 850944
      %v1980 = vsel %vm1979, %v1958, %v1960
      %v1981 = vsel %vm1979, %v1960, %v1962
      %v1982 = vsel %vm1979, %v1962, %v1964
      %v1983 = vsel %vm1979, %v1964, %v1966
      %v1984 = vsel %vm1979, %v1966, %v1968
      %v1985 = vsel %vm1979, %v1968, %v1970
      %v1986 = vsel %vm1979, %v1970, %v1972
      %v1987 = vsel %vm1979, %v1972, %v1974
      %v1988 = vsel %vm1979, %v1974, %v1976
      %v1989 = vsel %vm1979, %v1976, %v1978
      %2000 = vst [vmem:[#allocation2 + $0xaf0] sm:$0xff] %v1980
      %2001 = vst [vmem:[#allocation2 + $0xaf8] sm:$0xff] %v1981
      %2002 = vst [vmem:[#allocation2 + $0xb00] sm:$0xff] %v1982
      %2003 = vst [vmem:[#allocation2 + $0xb08] sm:$0xff] %v1983
      %2004 = vst [vmem:[#allocation2 + $0xb10] sm:$0xff] %v1984
      %2005 = vst [vmem:[#allocation2 + $0xb18] sm:$0xff] %v1985
      %2006 = vst [vmem:[#allocation2 + $0xb20] sm:$0xff] %v1986
      %2007 = vst [vmem:[#allocation2 + $0xb28] sm:$0xff] %v1987
      %2008 = vst [vmem:[#allocation2 + $0xb30] sm:$0xff] %v1988
      %2009 = vst [vmem:[#allocation2 + $0xb38] sm:$0xff] %v1989
      %2010 = vrot.lane.b32.xlu0 %v281, 102
      %v2011 = vpop.permute.xlu0 %2010
      %2012 = vrot.lane.b32.xlu0 %v282, 102
      %v2013 = vpop.permute.xlu0 %2012
      %2014 = vrot.lane.b32.xlu0 %v283, 102
      %v2015 = vpop.permute.xlu0 %2014
      %2016 = vrot.lane.b32.xlu0 %v284, 102
      %v2017 = vpop.permute.xlu0 %2016
      %2018 = vrot.lane.b32.xlu0 %v285, 102
      %v2019 = vpop.permute.xlu0 %2018
      %2020 = vrot.lane.b32.xlu0 %v286, 102
      %v2021 = vpop.permute.xlu0 %2020
      %2022 = vrot.lane.b32.xlu0 %v287, 102
      %v2023 = vpop.permute.xlu0 %2022
      %2024 = vrot.lane.b32.xlu0 %v288, 102
      %v2025 = vpop.permute.xlu0 %2024
      %2026 = vrot.lane.b32.xlu0 %v289, 102
      %v2027 = vpop.permute.xlu0 %2026
      %2028 = vrot.lane.b32.xlu0 %v290, 102
      %v2029 = vpop.permute.xlu0 %2028
      %2030 = vrot.lane.b32.xlu0 %v291, 102
      %v2031 = vpop.permute.xlu0 %2030
      %vm2032 = vcmask 834560
      %v2033 = vsel %vm2032, %v2011, %v2013
      %v2034 = vsel %vm2032, %v2013, %v2015
      %v2035 = vsel %vm2032, %v2015, %v2017
      %v2036 = vsel %vm2032, %v2017, %v2019
      %v2037 = vsel %vm2032, %v2019, %v2021
      %v2038 = vsel %vm2032, %v2021, %v2023
      %v2039 = vsel %vm2032, %v2023, %v2025
      %v2040 = vsel %vm2032, %v2025, %v2027
      %v2041 = vsel %vm2032, %v2027, %v2029
      %v2042 = vsel %vm2032, %v2029, %v2031
      %2053 = vst [vmem:[#allocation2 + $0xb40] sm:$0xff] %v2033
      %2054 = vst [vmem:[#allocation2 + $0xb48] sm:$0xff] %v2034
      %2055 = vst [vmem:[#allocation2 + $0xb50] sm:$0xff] %v2035
      %2056 = vst [vmem:[#allocation2 + $0xb58] sm:$0xff] %v2036
      %2057 = vst [vmem:[#allocation2 + $0xb60] sm:$0xff] %v2037
      %2058 = vst [vmem:[#allocation2 + $0xb68] sm:$0xff] %v2038
      %2059 = vst [vmem:[#allocation2 + $0xb70] sm:$0xff] %v2039
      %2060 = vst [vmem:[#allocation2 + $0xb78] sm:$0xff] %v2040
      %2061 = vst [vmem:[#allocation2 + $0xb80] sm:$0xff] %v2041
      %2062 = vst [vmem:[#allocation2 + $0xb88] sm:$0xff] %v2042
      %2063 = vrot.lane.b32.xlu0 %v281, 100
      %v2064 = vpop.permute.xlu0 %2063
      %2065 = vrot.lane.b32.xlu0 %v282, 100
      %v2066 = vpop.permute.xlu0 %2065
      %2067 = vrot.lane.b32.xlu0 %v283, 100
      %v2068 = vpop.permute.xlu0 %2067
      %2069 = vrot.lane.b32.xlu0 %v284, 100
      %v2070 = vpop.permute.xlu0 %2069
      %2071 = vrot.lane.b32.xlu0 %v285, 100
      %v2072 = vpop.permute.xlu0 %2071
      %2073 = vrot.lane.b32.xlu0 %v286, 100
      %v2074 = vpop.permute.xlu0 %2073
      %2075 = vrot.lane.b32.xlu0 %v287, 100
      %v2076 = vpop.permute.xlu0 %2075
      %2077 = vrot.lane.b32.xlu0 %v288, 100
      %v2078 = vpop.permute.xlu0 %2077
      %2079 = vrot.lane.b32.xlu0 %v289, 100
      %v2080 = vpop.permute.xlu0 %2079
      %2081 = vrot.lane.b32.xlu0 %v290, 100
      %v2082 = vpop.permute.xlu0 %2081
      %2083 = vrot.lane.b32.xlu0 %v291, 100
      %v2084 = vpop.permute.xlu0 %2083
      %vm2085 = vcmask 818176
      %v2086 = vsel %vm2085, %v2064, %v2066
      %v2087 = vsel %vm2085, %v2066, %v2068
      %v2088 = vsel %vm2085, %v2068, %v2070
      %v2089 = vsel %vm2085, %v2070, %v2072
      %v2090 = vsel %vm2085, %v2072, %v2074
      %v2091 = vsel %vm2085, %v2074, %v2076
      %v2092 = vsel %vm2085, %v2076, %v2078
      %v2093 = vsel %vm2085, %v2078, %v2080
      %v2094 = vsel %vm2085, %v2080, %v2082
      %v2095 = vsel %vm2085, %v2082, %v2084
      %2106 = vst [vmem:[#allocation2 + $0xb90] sm:$0xff] %v2086
      %2107 = vst [vmem:[#allocation2 + $0xb98] sm:$0xff] %v2087
      %2108 = vst [vmem:[#allocation2 + $0xba0] sm:$0xff] %v2088
      %2109 = vst [vmem:[#allocation2 + $0xba8] sm:$0xff] %v2089
      %2110 = vst [vmem:[#allocation2 + $0xbb0] sm:$0xff] %v2090
      %2111 = vst [vmem:[#allocation2 + $0xbb8] sm:$0xff] %v2091
      %2112 = vst [vmem:[#allocation2 + $0xbc0] sm:$0xff] %v2092
      %2113 = vst [vmem:[#allocation2 + $0xbc8] sm:$0xff] %v2093
      %2114 = vst [vmem:[#allocation2 + $0xbd0] sm:$0xff] %v2094
      %2115 = vst [vmem:[#allocation2 + $0xbd8] sm:$0xff] %v2095
      %2116 = vrot.lane.b32.xlu0 %v281, 98
      %v2117 = vpop.permute.xlu0 %2116
      %2118 = vrot.lane.b32.xlu0 %v282, 98
      %v2119 = vpop.permute.xlu0 %2118
      %2120 = vrot.lane.b32.xlu0 %v283, 98
      %v2121 = vpop.permute.xlu0 %2120
      %2122 = vrot.lane.b32.xlu0 %v284, 98
      %v2123 = vpop.permute.xlu0 %2122
      %2124 = vrot.lane.b32.xlu0 %v285, 98
      %v2125 = vpop.permute.xlu0 %2124
      %2126 = vrot.lane.b32.xlu0 %v286, 98
      %v2127 = vpop.permute.xlu0 %2126
      %2128 = vrot.lane.b32.xlu0 %v287, 98
      %v2129 = vpop.permute.xlu0 %2128
      %2130 = vrot.lane.b32.xlu0 %v288, 98
      %v2131 = vpop.permute.xlu0 %2130
      %2132 = vrot.lane.b32.xlu0 %v289, 98
      %v2133 = vpop.permute.xlu0 %2132
      %2134 = vrot.lane.b32.xlu0 %v290, 98
      %v2135 = vpop.permute.xlu0 %2134
      %2136 = vrot.lane.b32.xlu0 %v291, 98
      %v2137 = vpop.permute.xlu0 %2136
      %vm2138 = vcmask 801792
      %v2139 = vsel %vm2138, %v2117, %v2119
      %v2140 = vsel %vm2138, %v2119, %v2121
      %v2141 = vsel %vm2138, %v2121, %v2123
      %v2142 = vsel %vm2138, %v2123, %v2125
      %v2143 = vsel %vm2138, %v2125, %v2127
      %v2144 = vsel %vm2138, %v2127, %v2129
      %v2145 = vsel %vm2138, %v2129, %v2131
      %v2146 = vsel %vm2138, %v2131, %v2133
      %v2147 = vsel %vm2138, %v2133, %v2135
      %v2148 = vsel %vm2138, %v2135, %v2137
      %2159 = vst [vmem:[#allocation2 + $0xbe0] sm:$0xff] %v2139
      %2160 = vst [vmem:[#allocation2 + $0xbe8] sm:$0xff] %v2140
      %2161 = vst [vmem:[#allocation2 + $0xbf0] sm:$0xff] %v2141
      %2162 = vst [vmem:[#allocation2 + $0xbf8] sm:$0xff] %v2142
      %2163 = vst [vmem:[#allocation2 + $0xc00] sm:$0xff] %v2143
      %2164 = vst [vmem:[#allocation2 + $0xc08] sm:$0xff] %v2144
      %2165 = vst [vmem:[#allocation2 + $0xc10] sm:$0xff] %v2145
      %2166 = vst [vmem:[#allocation2 + $0xc18] sm:$0xff] %v2146
      %2167 = vst [vmem:[#allocation2 + $0xc20] sm:$0xff] %v2147
      %2168 = vst [vmem:[#allocation2 + $0xc28] sm:$0xff] %v2148
      %2169 = vrot.lane.b32.xlu0 %v291, 96
      %v2170 = vpop.permute.xlu0 %2169
      %v2171 = vsel %vm1300, %v1299, %v2170
      %2173 = vst [vmem:[#allocation2 + $0xc30] sm:$0xff] %v1302
      %2174 = vst [vmem:[#allocation2 + $0xc38] sm:$0xff] %v1303
      %2175 = vst [vmem:[#allocation2 + $0xc40] sm:$0xff] %v1304
      %2176 = vst [vmem:[#allocation2 + $0xc48] sm:$0xff] %v1305
      %2177 = vst [vmem:[#allocation2 + $0xc50] sm:$0xff] %v1306
      %2178 = vst [vmem:[#allocation2 + $0xc58] sm:$0xff] %v1307
      %2179 = vst [vmem:[#allocation2 + $0xc60] sm:$0xff] %v1308
      %2180 = vst [vmem:[#allocation2 + $0xc68] sm:$0xff] %v1309
      %2181 = vst [vmem:[#allocation2 + $0xc70] sm:$0xff] %v1310
      %2182 = vst [vmem:[#allocation2 + $0xc78] sm:$0xff] %v2171
      %2183 = vrot.lane.b32.xlu0 %v281, 64
      %v2184 = vpop.permute.xlu0 %2183
      %2185 = vrot.lane.b32.xlu0 %v282, 64
      %v2186 = vpop.permute.xlu0 %2185
      %2187 = vrot.lane.b32.xlu0 %v283, 64
      %v2188 = vpop.permute.xlu0 %2187
      %2189 = vrot.lane.b32.xlu0 %v284, 64
      %v2190 = vpop.permute.xlu0 %2189
      %2191 = vrot.lane.b32.xlu0 %v285, 64
      %v2192 = vpop.permute.xlu0 %2191
      %2193 = vrot.lane.b32.xlu0 %v286, 64
      %v2194 = vpop.permute.xlu0 %2193
      %2195 = vrot.lane.b32.xlu0 %v287, 64
      %v2196 = vpop.permute.xlu0 %2195
      %2197 = vrot.lane.b32.xlu0 %v288, 64
      %v2198 = vpop.permute.xlu0 %2197
      %2199 = vrot.lane.b32.xlu0 %v289, 64
      %v2200 = vpop.permute.xlu0 %2199
      %2201 = vrot.lane.b32.xlu0 %v290, 64
      %v2202 = vpop.permute.xlu0 %2201
      %2203 = vrot.lane.b32.xlu0 %v291, 64
      %v2204 = vpop.permute.xlu0 %2203
      %vm2205 = vcmask 523264
      %v2206 = vsel %vm2205, %v2184, %v2186
      %v2207 = vsel %vm2205, %v2186, %v2188
      %v2208 = vsel %vm2205, %v2188, %v2190
      %v2209 = vsel %vm2205, %v2190, %v2192
      %v2210 = vsel %vm2205, %v2192, %v2194
      %v2211 = vsel %vm2205, %v2194, %v2196
      %v2212 = vsel %vm2205, %v2196, %v2198
      %v2213 = vsel %vm2205, %v2198, %v2200
      %v2214 = vsel %vm2205, %v2200, %v2202
      %v2215 = vsel %vm2205, %v2202, %v2204
      %2226 = vst [vmem:[#allocation2 + $0xc80] sm:$0xff] %v2206
      %2227 = vst [vmem:[#allocation2 + $0xc88] sm:$0xff] %v2207
      %2228 = vst [vmem:[#allocation2 + $0xc90] sm:$0xff] %v2208
      %2229 = vst [vmem:[#allocation2 + $0xc98] sm:$0xff] %v2209
      %2230 = vst [vmem:[#allocation2 + $0xca0] sm:$0xff] %v2210
      %2231 = vst [vmem:[#allocation2 + $0xca8] sm:$0xff] %v2211
      %2232 = vst [vmem:[#allocation2 + $0xcb0] sm:$0xff] %v2212
      %2233 = vst [vmem:[#allocation2 + $0xcb8] sm:$0xff] %v2213
      %2234 = vst [vmem:[#allocation2 + $0xcc0] sm:$0xff] %v2214
      %2235 = vst [vmem:[#allocation2 + $0xcc8] sm:$0xff] %v2215
      %2236 = vrot.lane.b32.xlu0 %v281, 62
      %v2237 = vpop.permute.xlu0 %2236
      %2238 = vrot.lane.b32.xlu0 %v282, 62
      %v2239 = vpop.permute.xlu0 %2238
      %2240 = vrot.lane.b32.xlu0 %v283, 62
      %v2241 = vpop.permute.xlu0 %2240
      %2242 = vrot.lane.b32.xlu0 %v284, 62
      %v2243 = vpop.permute.xlu0 %2242
      %2244 = vrot.lane.b32.xlu0 %v285, 62
      %v2245 = vpop.permute.xlu0 %2244
      %2246 = vrot.lane.b32.xlu0 %v286, 62
      %v2247 = vpop.permute.xlu0 %2246
      %2248 = vrot.lane.b32.xlu0 %v287, 62
      %v2249 = vpop.permute.xlu0 %2248
      %2250 = vrot.lane.b32.xlu0 %v288, 62
      %v2251 = vpop.permute.xlu0 %2250
      %2252 = vrot.lane.b32.xlu0 %v289, 62
      %v2253 = vpop.permute.xlu0 %2252
      %2254 = vrot.lane.b32.xlu0 %v290, 62
      %v2255 = vpop.permute.xlu0 %2254
      %2256 = vrot.lane.b32.xlu0 %v291, 62
      %v2257 = vpop.permute.xlu0 %2256
      %vm2258 = vcmask 506880
      %v2259 = vsel %vm2258, %v2237, %v2239
      %v2260 = vsel %vm2258, %v2239, %v2241
      %v2261 = vsel %vm2258, %v2241, %v2243
      %v2262 = vsel %vm2258, %v2243, %v2245
      %v2263 = vsel %vm2258, %v2245, %v2247
      %v2264 = vsel %vm2258, %v2247, %v2249
      %v2265 = vsel %vm2258, %v2249, %v2251
      %v2266 = vsel %vm2258, %v2251, %v2253
      %v2267 = vsel %vm2258, %v2253, %v2255
      %v2268 = vsel %vm2258, %v2255, %v2257
      %2279 = vst [vmem:[#allocation2 + $0xcd0] sm:$0xff] %v2259
      %2280 = vst [vmem:[#allocation2 + $0xcd8] sm:$0xff] %v2260
      %2281 = vst [vmem:[#allocation2 + $0xce0] sm:$0xff] %v2261
      %2282 = vst [vmem:[#allocation2 + $0xce8] sm:$0xff] %v2262
      %2283 = vst [vmem:[#allocation2 + $0xcf0] sm:$0xff] %v2263
      %2284 = vst [vmem:[#allocation2 + $0xcf8] sm:$0xff] %v2264
      %2285 = vst [vmem:[#allocation2 + $0xd00] sm:$0xff] %v2265
      %2286 = vst [vmem:[#allocation2 + $0xd08] sm:$0xff] %v2266
      %2287 = vst [vmem:[#allocation2 + $0xd10] sm:$0xff] %v2267
      %2288 = vst [vmem:[#allocation2 + $0xd18] sm:$0xff] %v2268
      %2289 = vrot.lane.b32.xlu0 %v281, 60
      %v2290 = vpop.permute.xlu0 %2289
      %2291 = vrot.lane.b32.xlu0 %v282, 60
      %v2292 = vpop.permute.xlu0 %2291
      %2293 = vrot.lane.b32.xlu0 %v283, 60
      %v2294 = vpop.permute.xlu0 %2293
      %2295 = vrot.lane.b32.xlu0 %v284, 60
      %v2296 = vpop.permute.xlu0 %2295
      %2297 = vrot.lane.b32.xlu0 %v285, 60
      %v2298 = vpop.permute.xlu0 %2297
      %2299 = vrot.lane.b32.xlu0 %v286, 60
      %v2300 = vpop.permute.xlu0 %2299
      %2301 = vrot.lane.b32.xlu0 %v287, 60
      %v2302 = vpop.permute.xlu0 %2301
      %2303 = vrot.lane.b32.xlu0 %v288, 60
      %v2304 = vpop.permute.xlu0 %2303
      %2305 = vrot.lane.b32.xlu0 %v289, 60
      %v2306 = vpop.permute.xlu0 %2305
      %2307 = vrot.lane.b32.xlu0 %v290, 60
      %v2308 = vpop.permute.xlu0 %2307
      %2309 = vrot.lane.b32.xlu0 %v291, 60
      %v2310 = vpop.permute.xlu0 %2309
      %vm2311 = vcmask 490496
      %v2312 = vsel %vm2311, %v2290, %v2292
      %v2313 = vsel %vm2311, %v2292, %v2294
      %v2314 = vsel %vm2311, %v2294, %v2296
      %v2315 = vsel %vm2311, %v2296, %v2298
      %v2316 = vsel %vm2311, %v2298, %v2300
      %v2317 = vsel %vm2311, %v2300, %v2302
      %v2318 = vsel %vm2311, %v2302, %v2304
      %v2319 = vsel %vm2311, %v2304, %v2306
      %v2320 = vsel %vm2311, %v2306, %v2308
      %v2321 = vsel %vm2311, %v2308, %v2310
      %2332 = vst [vmem:[#allocation2 + $0xd20] sm:$0xff] %v2312
      %2333 = vst [vmem:[#allocation2 + $0xd28] sm:$0xff] %v2313
      %2334 = vst [vmem:[#allocation2 + $0xd30] sm:$0xff] %v2314
      %2335 = vst [vmem:[#allocation2 + $0xd38] sm:$0xff] %v2315
      %2336 = vst [vmem:[#allocation2 + $0xd40] sm:$0xff] %v2316
      %2337 = vst [vmem:[#allocation2 + $0xd48] sm:$0xff] %v2317
      %2338 = vst [vmem:[#allocation2 + $0xd50] sm:$0xff] %v2318
      %2339 = vst [vmem:[#allocation2 + $0xd58] sm:$0xff] %v2319
      %2340 = vst [vmem:[#allocation2 + $0xd60] sm:$0xff] %v2320
      %2341 = vst [vmem:[#allocation2 + $0xd68] sm:$0xff] %v2321
      %2342 = vrot.lane.b32.xlu0 %v281, 58
      %v2343 = vpop.permute.xlu0 %2342
      %2344 = vrot.lane.b32.xlu0 %v282, 58
      %v2345 = vpop.permute.xlu0 %2344
      %2346 = vrot.lane.b32.xlu0 %v283, 58
      %v2347 = vpop.permute.xlu0 %2346
      %2348 = vrot.lane.b32.xlu0 %v284, 58
      %v2349 = vpop.permute.xlu0 %2348
      %2350 = vrot.lane.b32.xlu0 %v285, 58
      %v2351 = vpop.permute.xlu0 %2350
      %2352 = vrot.lane.b32.xlu0 %v286, 58
      %v2353 = vpop.permute.xlu0 %2352
      %2354 = vrot.lane.b32.xlu0 %v287, 58
      %v2355 = vpop.permute.xlu0 %2354
      %2356 = vrot.lane.b32.xlu0 %v288, 58
      %v2357 = vpop.permute.xlu0 %2356
      %2358 = vrot.lane.b32.xlu0 %v289, 58
      %v2359 = vpop.permute.xlu0 %2358
      %2360 = vrot.lane.b32.xlu0 %v290, 58
      %v2361 = vpop.permute.xlu0 %2360
      %2362 = vrot.lane.b32.xlu0 %v291, 58
      %v2363 = vpop.permute.xlu0 %2362
      %vm2364 = vcmask 474112
      %v2365 = vsel %vm2364, %v2343, %v2345
      %v2366 = vsel %vm2364, %v2345, %v2347
      %v2367 = vsel %vm2364, %v2347, %v2349
      %v2368 = vsel %vm2364, %v2349, %v2351
      %v2369 = vsel %vm2364, %v2351, %v2353
      %v2370 = vsel %vm2364, %v2353, %v2355
      %v2371 = vsel %vm2364, %v2355, %v2357
      %v2372 = vsel %vm2364, %v2357, %v2359
      %v2373 = vsel %vm2364, %v2359, %v2361
      %v2374 = vsel %vm2364, %v2361, %v2363
      %2385 = vst [vmem:[#allocation2 + $0xd70] sm:$0xff] %v2365
      %2386 = vst [vmem:[#allocation2 + $0xd78] sm:$0xff] %v2366
      %2387 = vst [vmem:[#allocation2 + $0xd80] sm:$0xff] %v2367
      %2388 = vst [vmem:[#allocation2 + $0xd88] sm:$0xff] %v2368
      %2389 = vst [vmem:[#allocation2 + $0xd90] sm:$0xff] %v2369
      %2390 = vst [vmem:[#allocation2 + $0xd98] sm:$0xff] %v2370
      %2391 = vst [vmem:[#allocation2 + $0xda0] sm:$0xff] %v2371
      %2392 = vst [vmem:[#allocation2 + $0xda8] sm:$0xff] %v2372
      %2393 = vst [vmem:[#allocation2 + $0xdb0] sm:$0xff] %v2373
      %2394 = vst [vmem:[#allocation2 + $0xdb8] sm:$0xff] %v2374
      %2395 = vrot.lane.b32.xlu0 %v291, 56
      %v2396 = vpop.permute.xlu0 %2395
      %v2397 = vsel %vm1526, %v1525, %v2396
      %2399 = vst [vmem:[#allocation2 + $0xdc0] sm:$0xff] %v1528
      %2400 = vst [vmem:[#allocation2 + $0xdc8] sm:$0xff] %v1529
      %2401 = vst [vmem:[#allocation2 + $0xdd0] sm:$0xff] %v1530
      %2402 = vst [vmem:[#allocation2 + $0xdd8] sm:$0xff] %v1531
      %2403 = vst [vmem:[#allocation2 + $0xde0] sm:$0xff] %v1532
      %2404 = vst [vmem:[#allocation2 + $0xde8] sm:$0xff] %v1533
      %2405 = vst [vmem:[#allocation2 + $0xdf0] sm:$0xff] %v1534
      %2406 = vst [vmem:[#allocation2 + $0xdf8] sm:$0xff] %v1535
      %2407 = vst [vmem:[#allocation2 + $0xe00] sm:$0xff] %v1536
      %2408 = vst [vmem:[#allocation2 + $0xe08] sm:$0xff] %v2397
      %v2409 = vld [vmem:[%s1] sm:$0xff]
      %v2410 = vld [vmem:[%s1 + $0x8] sm:$0xff]
      %v2411 = vld [vmem:[%s1 + $0x10] sm:$0xff]
      %v2412 = vld [vmem:[%s1 + $0x18] sm:$0xff]
      %v2413 = vld [vmem:[%s1 + $0x20] sm:$0xff]
      %v2414 = vld [vmem:[%s1 + $0x28] sm:$0xff]
      %v2415 = vld [vmem:[%s1 + $0x30] sm:$0xff]
      %v2416 = vld [vmem:[%s1 + $0x38] sm:$0xff]
      %v2417 = vld [vmem:[%s1 + $0x40] sm:$0xff]
      %v2418 = vld [vmem:[%s1 + $0x48] sm:$0xff]
      %v2419 = vld [vmem:[%s1 + $0x50] sm:$0xff]
      %v2420 = vld [vmem:[%s1 + $0x58] sm:$0xff]
      %v2421 = vld [vmem:[%s1 + $0x60] sm:$0xff]
      %v2422 = vld [vmem:[%s1 + $0x68] sm:$0xff]
      %v2423 = vld [vmem:[%s1 + $0x70] sm:$0xff]
      %v2424 = vld [vmem:[%s1 + $0x78] sm:$0xff]
      %v2425 = vld [vmem:[%s1 + $0x80] sm:$0xff]
      %v2426 = vld [vmem:[%s1 + $0x88] sm:$0xff]
      %v2427 = vld [vmem:[%s1 + $0x90] sm:$0xff]
      %v2428 = vld [vmem:[%s1 + $0x98] sm:$0xff]
      %v2429 = vld [vmem:[%s1 + $0xa0] sm:$0xff]
      %v2430 = vld [vmem:[%s1 + $0xa8] sm:$0xff]
      %v2431 = vld [vmem:[%s1 + $0xb0] sm:$0xff]
      %v2432 = vld [vmem:[%s1 + $0xb8] sm:$0xff]
      %v2433 = vld [vmem:[#allocation2] sm:$0xff]
      %v2434 = vld [vmem:[#allocation2 + $0x8] sm:$0xff]
      %v2435 = vld [vmem:[#allocation2 + $0x10] sm:$0xff]
      %v2436 = vld [vmem:[#allocation2 + $0x18] sm:$0xff]
      %v2437 = vld [vmem:[#allocation2 + $0x20] sm:$0xff]
      %v2438 = vld [vmem:[#allocation2 + $0x28] sm:$0xff]
      %v2439 = vld [vmem:[#allocation2 + $0x30] sm:$0xff]
      %v2440 = vld [vmem:[#allocation2 + $0x38] sm:$0xff]
      %v2441 = vld [vmem:[#allocation2 + $0x40] sm:$0xff]
      %v2442 = vld [vmem:[#allocation2 + $0x48] sm:$0xff]
      %v2443 = vld [vmem:[#allocation2 + $0x50] sm:$0xff]
      %v2444 = vld [vmem:[#allocation2 + $0x58] sm:$0xff]
      %v2445 = vld [vmem:[#allocation2 + $0x60] sm:$0xff]
      %v2446 = vld [vmem:[#allocation2 + $0x68] sm:$0xff]
      %v2447 = vld [vmem:[#allocation2 + $0x70] sm:$0xff]
      %v2448 = vld [vmem:[#allocation2 + $0x78] sm:$0xff]
      %v2449 = vld [vmem:[#allocation2 + $0x80] sm:$0xff]
      %v2450 = vld [vmem:[#allocation2 + $0x88] sm:$0xff]
      %v2451 = vld [vmem:[#allocation2 + $0x90] sm:$0xff]
      %v2452 = vld [vmem:[#allocation2 + $0x98] sm:$0xff]
      %v2453 = vld [vmem:[#allocation2 + $0xa0] sm:$0xff]
      %v2454 = vld [vmem:[#allocation2 + $0xa8] sm:$0xff]
      %v2455 = vld [vmem:[#allocation2 + $0xb0] sm:$0xff]
      %v2456 = vld [vmem:[#allocation2 + $0xb8] sm:$0xff]
      %v2457 = vld [vmem:[#allocation2 + $0xc0] sm:$0xff]
      %v2458 = vld [vmem:[#allocation2 + $0xc8] sm:$0xff]
      %v2459 = vld [vmem:[#allocation2 + $0xd0] sm:$0xff]
      %v2460 = vld [vmem:[#allocation2 + $0xd8] sm:$0xff]
      %v2461 = vld [vmem:[#allocation2 + $0xe0] sm:$0xff]
      %v2462 = vld [vmem:[#allocation2 + $0xe8] sm:$0xff]
      %v2463 = vld [vmem:[#allocation2 + $0xf0] sm:$0xff]
      %v2464 = vld [vmem:[#allocation2 + $0xf8] sm:$0xff]
      %v2465 = vld [vmem:[#allocation2 + $0x100] sm:$0xff]
      %v2466 = vld [vmem:[#allocation2 + $0x108] sm:$0xff]
      %v2467 = vld [vmem:[#allocation2 + $0x110] sm:$0xff]
      %v2468 = vld [vmem:[#allocation2 + $0x118] sm:$0xff]
      %v2469 = vld [vmem:[#allocation2 + $0x120] sm:$0xff]
      %v2470 = vld [vmem:[#allocation2 + $0x128] sm:$0xff]
      %v2471 = vld [vmem:[#allocation2 + $0x130] sm:$0xff]
      %v2472 = vld [vmem:[#allocation2 + $0x138] sm:$0xff]
      %v2473 = vld [vmem:[#allocation2 + $0x140] sm:$0xff]
      %v2474 = vld [vmem:[#allocation2 + $0x148] sm:$0xff]
      %v2475 = vld [vmem:[#allocation2 + $0x150] sm:$0xff]
      %v2476 = vld [vmem:[#allocation2 + $0x158] sm:$0xff]
      %v2477 = vld [vmem:[#allocation2 + $0x160] sm:$0xff]
      %v2478 = vld [vmem:[#allocation2 + $0x168] sm:$0xff]
      %v2479 = vld [vmem:[#allocation2 + $0x170] sm:$0xff]
      %v2480 = vld [vmem:[#allocation2 + $0x178] sm:$0xff]
      %v2481 = vld [vmem:[#allocation2 + $0x180] sm:$0xff]
      %v2482 = vld [vmem:[#allocation2 + $0x188] sm:$0xff]
      %v2483 = vld [vmem:[#allocation2 + $0x190] sm:$0xff]
      %v2484 = vld [vmem:[#allocation2 + $0x198] sm:$0xff]
      %v2485 = vld [vmem:[#allocation2 + $0x1a0] sm:$0xff]
      %v2486 = vld [vmem:[#allocation2 + $0x1a8] sm:$0xff]
      %v2487 = vld [vmem:[#allocation2 + $0x1b0] sm:$0xff]
      %v2488 = vld [vmem:[#allocation2 + $0x1b8] sm:$0xff]
      %v2489 = vld [vmem:[#allocation2 + $0x1c0] sm:$0xff]
      %v2490 = vld [vmem:[#allocation2 + $0x1c8] sm:$0xff]
      %v2491 = vld [vmem:[#allocation2 + $0x1d0] sm:$0xff]
      %v2492 = vld [vmem:[#allocation2 + $0x1d8] sm:$0xff]
      %v2493 = vld [vmem:[#allocation2 + $0x1e0] sm:$0xff]
      %v2494 = vld [vmem:[#allocation2 + $0x1e8] sm:$0xff]
      %v2495 = vld [vmem:[#allocation2 + $0x1f0] sm:$0xff]
      %v2496 = vld [vmem:[#allocation2 + $0x1f8] sm:$0xff]
      %v2497 = vld [vmem:[#allocation2 + $0x200] sm:$0xff]
      %v2498 = vld [vmem:[#allocation2 + $0x208] sm:$0xff]
      %v2499 = vld [vmem:[#allocation2 + $0x210] sm:$0xff]
      %v2500 = vld [vmem:[#allocation2 + $0x218] sm:$0xff]
      %v2501 = vld [vmem:[#allocation2 + $0x220] sm:$0xff]
      %v2502 = vld [vmem:[#allocation2 + $0x228] sm:$0xff]
      %v2503 = vld [vmem:[#allocation2 + $0x230] sm:$0xff]
      %v2504 = vld [vmem:[#allocation2 + $0x238] sm:$0xff]
      %v2505 = vld [vmem:[#allocation2 + $0x240] sm:$0xff]
      %v2506 = vld [vmem:[#allocation2 + $0x248] sm:$0xff]
      %v2507 = vld [vmem:[#allocation2 + $0x250] sm:$0xff]
      %v2508 = vld [vmem:[#allocation2 + $0x258] sm:$0xff]
      %v2509 = vld [vmem:[#allocation2 + $0x260] sm:$0xff]
      %v2510 = vld [vmem:[#allocation2 + $0x268] sm:$0xff]
      %v2511 = vld [vmem:[#allocation2 + $0x270] sm:$0xff]
      %v2512 = vld [vmem:[#allocation2 + $0x278] sm:$0xff]
      %v2513 = vld [vmem:[#allocation2 + $0x280] sm:$0xff]
      %v2514 = vld [vmem:[#allocation2 + $0x288] sm:$0xff]
      %v2515 = vld [vmem:[#allocation2 + $0x290] sm:$0xff]
      %v2516 = vld [vmem:[#allocation2 + $0x298] sm:$0xff]
      %v2517 = vld [vmem:[#allocation2 + $0x2a0] sm:$0xff]
      %v2518 = vld [vmem:[#allocation2 + $0x2a8] sm:$0xff]
      %v2519 = vld [vmem:[#allocation2 + $0x2b0] sm:$0xff]
      %v2520 = vld [vmem:[#allocation2 + $0x2b8] sm:$0xff]
      %v2521 = vld [vmem:[#allocation2 + $0x2c0] sm:$0xff]
      %v2522 = vld [vmem:[#allocation2 + $0x2c8] sm:$0xff]
      %v2523 = vld [vmem:[#allocation2 + $0x2d0] sm:$0xff]
      %v2524 = vld [vmem:[#allocation2 + $0x2d8] sm:$0xff]
      %v2525 = vld [vmem:[#allocation2 + $0x2e0] sm:$0xff]
      %v2526 = vld [vmem:[#allocation2 + $0x2e8] sm:$0xff]
      %v2527 = vld [vmem:[#allocation2 + $0x2f0] sm:$0xff]
      %v2528 = vld [vmem:[#allocation2 + $0x2f8] sm:$0xff]
      %v2529 = vld [vmem:[#allocation2 + $0x300] sm:$0xff]
      %v2530 = vld [vmem:[#allocation2 + $0x308] sm:$0xff]
      %v2531 = vld [vmem:[#allocation2 + $0x310] sm:$0xff]
      %v2532 = vld [vmem:[#allocation2 + $0x318] sm:$0xff]
      %v2533 = vld [vmem:[#allocation2 + $0x320] sm:$0xff]
      %v2534 = vld [vmem:[#allocation2 + $0x328] sm:$0xff]
      %v2535 = vld [vmem:[#allocation2 + $0x330] sm:$0xff]
      %v2536 = vld [vmem:[#allocation2 + $0x338] sm:$0xff]
      %v2537 = vld [vmem:[#allocation2 + $0x340] sm:$0xff]
      %v2538 = vld [vmem:[#allocation2 + $0x348] sm:$0xff]
      %v2539 = vld [vmem:[#allocation2 + $0x350] sm:$0xff]
      %v2540 = vld [vmem:[#allocation2 + $0x358] sm:$0xff]
      %v2541 = vld [vmem:[#allocation2 + $0x360] sm:$0xff]
      %v2542 = vld [vmem:[#allocation2 + $0x368] sm:$0xff]
      %v2543 = vld [vmem:[#allocation2 + $0x370] sm:$0xff]
      %v2544 = vld [vmem:[#allocation2 + $0x378] sm:$0xff]
      %v2545 = vld [vmem:[#allocation2 + $0x380] sm:$0xff]
      %v2546 = vld [vmem:[#allocation2 + $0x388] sm:$0xff]
      %v2547 = vld [vmem:[#allocation2 + $0x390] sm:$0xff]
      %v2548 = vld [vmem:[#allocation2 + $0x398] sm:$0xff]
      %v2549 = vld [vmem:[#allocation2 + $0x3a0] sm:$0xff]
      %v2550 = vld [vmem:[#allocation2 + $0x3a8] sm:$0xff]
      %v2551 = vld [vmem:[#allocation2 + $0x3b0] sm:$0xff]
      %v2552 = vld [vmem:[#allocation2 + $0x3b8] sm:$0xff]
      %v2553 = vld [vmem:[#allocation2 + $0x3c0] sm:$0xff]
      %v2554 = vld [vmem:[#allocation2 + $0x3c8] sm:$0xff]
      %v2555 = vld [vmem:[#allocation2 + $0x3d0] sm:$0xff]
      %v2556 = vld [vmem:[#allocation2 + $0x3d8] sm:$0xff]
      %v2557 = vld [vmem:[#allocation2 + $0x3e0] sm:$0xff]
      %v2558 = vld [vmem:[#allocation2 + $0x3e8] sm:$0xff]
      %v2559 = vld [vmem:[#allocation2 + $0x3f0] sm:$0xff]
      %v2560 = vld [vmem:[#allocation2 + $0x3f8] sm:$0xff]
      %v2561 = vld [vmem:[#allocation2 + $0x400] sm:$0xff]
      %v2562 = vld [vmem:[#allocation2 + $0x408] sm:$0xff]
      %v2563 = vld [vmem:[#allocation2 + $0x410] sm:$0xff]
      %v2564 = vld [vmem:[#allocation2 + $0x418] sm:$0xff]
      %v2565 = vld [vmem:[#allocation2 + $0x420] sm:$0xff]
      %v2566 = vld [vmem:[#allocation2 + $0x428] sm:$0xff]
      %v2567 = vld [vmem:[#allocation2 + $0x430] sm:$0xff]
      %v2568 = vld [vmem:[#allocation2 + $0x438] sm:$0xff]
      %v2569 = vld [vmem:[#allocation2 + $0x440] sm:$0xff]
      %v2570 = vld [vmem:[#allocation2 + $0x448] sm:$0xff]
      %v2571 = vld [vmem:[#allocation2 + $0x450] sm:$0xff]
      %v2572 = vld [vmem:[#allocation2 + $0x458] sm:$0xff]
      %v2573 = vld [vmem:[#allocation2 + $0x460] sm:$0xff]
      %v2574 = vld [vmem:[#allocation2 + $0x468] sm:$0xff]
      %v2575 = vld [vmem:[#allocation2 + $0x470] sm:$0xff]
      %v2576 = vld [vmem:[#allocation2 + $0x478] sm:$0xff]
      %v2577 = vld [vmem:[#allocation2 + $0x480] sm:$0xff]
      %v2578 = vld [vmem:[#allocation2 + $0x488] sm:$0xff]
      %v2579 = vld [vmem:[#allocation2 + $0x490] sm:$0xff]
      %v2580 = vld [vmem:[#allocation2 + $0x498] sm:$0xff]
      %v2581 = vld [vmem:[#allocation2 + $0x4a0] sm:$0xff]
      %v2582 = vld [vmem:[#allocation2 + $0x4a8] sm:$0xff]
      %v2583 = vld [vmem:[#allocation2 + $0x4b0] sm:$0xff]
      %v2584 = vld [vmem:[#allocation2 + $0x4b8] sm:$0xff]
      %v2585 = vld [vmem:[#allocation2 + $0x4c0] sm:$0xff]
      %v2586 = vld [vmem:[#allocation2 + $0x4c8] sm:$0xff]
      %v2587 = vld [vmem:[#allocation2 + $0x4d0] sm:$0xff]
      %v2588 = vld [vmem:[#allocation2 + $0x4d8] sm:$0xff]
      %v2589 = vld [vmem:[#allocation2 + $0x4e0] sm:$0xff]
      %v2590 = vld [vmem:[#allocation2 + $0x4e8] sm:$0xff]
      %v2591 = vld [vmem:[#allocation2 + $0x4f0] sm:$0xff]
      %v2592 = vld [vmem:[#allocation2 + $0x4f8] sm:$0xff]
      %v2593 = vld [vmem:[#allocation2 + $0x500] sm:$0xff]
      %v2594 = vld [vmem:[#allocation2 + $0x508] sm:$0xff]
      %v2595 = vld [vmem:[#allocation2 + $0x510] sm:$0xff]
      %v2596 = vld [vmem:[#allocation2 + $0x518] sm:$0xff]
      %v2597 = vld [vmem:[#allocation2 + $0x520] sm:$0xff]
      %v2598 = vld [vmem:[#allocation2 + $0x528] sm:$0xff]
      %v2599 = vld [vmem:[#allocation2 + $0x530] sm:$0xff]
      %v2600 = vld [vmem:[#allocation2 + $0x538] sm:$0xff]
      %v2601 = vld [vmem:[#allocation2 + $0x540] sm:$0xff]
      %v2602 = vld [vmem:[#allocation2 + $0x548] sm:$0xff]
      %v2603 = vld [vmem:[#allocation2 + $0x550] sm:$0xff]
      %v2604 = vld [vmem:[#allocation2 + $0x558] sm:$0xff]
      %v2605 = vld [vmem:[#allocation2 + $0x560] sm:$0xff]
      %v2606 = vld [vmem:[#allocation2 + $0x568] sm:$0xff]
      %v2607 = vld [vmem:[#allocation2 + $0x570] sm:$0xff]
      %v2608 = vld [vmem:[#allocation2 + $0x578] sm:$0xff]
      %v2609 = vld [vmem:[#allocation2 + $0x580] sm:$0xff]
      %v2610 = vld [vmem:[#allocation2 + $0x588] sm:$0xff]
      %v2611 = vld [vmem:[#allocation2 + $0x590] sm:$0xff]
      %v2612 = vld [vmem:[#allocation2 + $0x598] sm:$0xff]
      %v2613 = vld [vmem:[#allocation2 + $0x5a0] sm:$0xff]
      %v2614 = vld [vmem:[#allocation2 + $0x5a8] sm:$0xff]
      %v2615 = vld [vmem:[#allocation2 + $0x5b0] sm:$0xff]
      %v2616 = vld [vmem:[#allocation2 + $0x5b8] sm:$0xff]
      %v2617 = vld [vmem:[#allocation2 + $0x5c0] sm:$0xff]
      %v2618 = vld [vmem:[#allocation2 + $0x5c8] sm:$0xff]
      %v2619 = vld [vmem:[#allocation2 + $0x5d0] sm:$0xff]
      %v2620 = vld [vmem:[#allocation2 + $0x5d8] sm:$0xff]
      %v2621 = vld [vmem:[#allocation2 + $0x5e0] sm:$0xff]
      %v2622 = vld [vmem:[#allocation2 + $0x5e8] sm:$0xff]
      %v2623 = vld [vmem:[#allocation2 + $0x5f0] sm:$0xff]
      %v2624 = vld [vmem:[#allocation2 + $0x5f8] sm:$0xff]
      %v2625 = vld [vmem:[#allocation2 + $0x600] sm:$0xff]
      %v2626 = vld [vmem:[#allocation2 + $0x608] sm:$0xff]
      %v2627 = vld [vmem:[#allocation2 + $0x610] sm:$0xff]
      %v2628 = vld [vmem:[#allocation2 + $0x618] sm:$0xff]
      %v2629 = vld [vmem:[#allocation2 + $0x620] sm:$0xff]
      %v2630 = vld [vmem:[#allocation2 + $0x628] sm:$0xff]
      %v2631 = vld [vmem:[#allocation2 + $0x630] sm:$0xff]
      %v2632 = vld [vmem:[#allocation2 + $0x638] sm:$0xff]
      %v2633 = vld [vmem:[#allocation2 + $0x640] sm:$0xff]
      %v2634 = vld [vmem:[#allocation2 + $0x648] sm:$0xff]
      %v2635 = vld [vmem:[#allocation2 + $0x650] sm:$0xff]
      %v2636 = vld [vmem:[#allocation2 + $0x658] sm:$0xff]
      %v2637 = vld [vmem:[#allocation2 + $0x660] sm:$0xff]
      %v2638 = vld [vmem:[#allocation2 + $0x668] sm:$0xff]
      %v2639 = vld [vmem:[#allocation2 + $0x670] sm:$0xff]
      %v2640 = vld [vmem:[#allocation2 + $0x678] sm:$0xff]
      %v2641 = vld [vmem:[#allocation2 + $0x680] sm:$0xff]
      %v2642 = vld [vmem:[#allocation2 + $0x688] sm:$0xff]
      %v2643 = vld [vmem:[#allocation2 + $0x690] sm:$0xff]
      %v2644 = vld [vmem:[#allocation2 + $0x698] sm:$0xff]
      %v2645 = vld [vmem:[#allocation2 + $0x6a0] sm:$0xff]
      %v2646 = vld [vmem:[#allocation2 + $0x6a8] sm:$0xff]
      %v2647 = vld [vmem:[#allocation2 + $0x6b0] sm:$0xff]
      %v2648 = vld [vmem:[#allocation2 + $0x6b8] sm:$0xff]
      %v2649 = vld [vmem:[#allocation2 + $0x6c0] sm:$0xff]
      %v2650 = vld [vmem:[#allocation2 + $0x6c8] sm:$0xff]
      %v2651 = vld [vmem:[#allocation2 + $0x6d0] sm:$0xff]
      %v2652 = vld [vmem:[#allocation2 + $0x6d8] sm:$0xff]
      %v2653 = vld [vmem:[#allocation2 + $0x6e0] sm:$0xff]
      %v2654 = vld [vmem:[#allocation2 + $0x6e8] sm:$0xff]
      %v2655 = vld [vmem:[#allocation2 + $0x6f0] sm:$0xff]
      %v2656 = vld [vmem:[#allocation2 + $0x6f8] sm:$0xff]
      %v2657 = vld [vmem:[#allocation2 + $0x700] sm:$0xff]
      %v2658 = vld [vmem:[#allocation2 + $0x708] sm:$0xff]
      %v2659 = vld [vmem:[#allocation2 + $0x710] sm:$0xff]
      %v2660 = vld [vmem:[#allocation2 + $0x718] sm:$0xff]
      %v2661 = vld [vmem:[#allocation2 + $0x720] sm:$0xff]
      %v2662 = vld [vmem:[#allocation2 + $0x728] sm:$0xff]
      %v2663 = vld [vmem:[#allocation2 + $0x730] sm:$0xff]
      %v2664 = vld [vmem:[#allocation2 + $0x738] sm:$0xff]
      %v2665 = vld [vmem:[#allocation2 + $0x740] sm:$0xff]
      %v2666 = vld [vmem:[#allocation2 + $0x748] sm:$0xff]
      %v2667 = vld [vmem:[#allocation2 + $0x750] sm:$0xff]
      %v2668 = vld [vmem:[#allocation2 + $0x758] sm:$0xff]
      %v2669 = vld [vmem:[#allocation2 + $0x760] sm:$0xff]
      %v2670 = vld [vmem:[#allocation2 + $0x768] sm:$0xff]
      %v2671 = vld [vmem:[#allocation2 + $0x770] sm:$0xff]
      %v2672 = vld [vmem:[#allocation2 + $0x778] sm:$0xff]
      %v2673 = vld [vmem:[#allocation2 + $0x780] sm:$0xff]
      %v2674 = vld [vmem:[#allocation2 + $0x788] sm:$0xff]
      %v2675 = vld [vmem:[#allocation2 + $0x790] sm:$0xff]
      %v2676 = vld [vmem:[#allocation2 + $0x798] sm:$0xff]
      %v2677 = vld [vmem:[#allocation2 + $0x7a0] sm:$0xff]
      %v2678 = vld [vmem:[#allocation2 + $0x7a8] sm:$0xff]
      %v2679 = vld [vmem:[#allocation2 + $0x7b0] sm:$0xff]
      %v2680 = vld [vmem:[#allocation2 + $0x7b8] sm:$0xff]
      %v2681 = vld [vmem:[#allocation2 + $0x7c0] sm:$0xff]
      %v2682 = vld [vmem:[#allocation2 + $0x7c8] sm:$0xff]
      %v2683 = vld [vmem:[#allocation2 + $0x7d0] sm:$0xff]
      %v2684 = vld [vmem:[#allocation2 + $0x7d8] sm:$0xff]
      %v2685 = vld [vmem:[#allocation2 + $0x7e0] sm:$0xff]
      %v2686 = vld [vmem:[#allocation2 + $0x7e8] sm:$0xff]
      %v2687 = vld [vmem:[#allocation2 + $0x7f0] sm:$0xff]
      %v2688 = vld [vmem:[#allocation2 + $0x7f8] sm:$0xff]
      %v2689 = vld [vmem:[#allocation2 + $0x800] sm:$0xff]
      %v2690 = vld [vmem:[#allocation2 + $0x808] sm:$0xff]
      %v2691 = vld [vmem:[#allocation2 + $0x810] sm:$0xff]
      %v2692 = vld [vmem:[#allocation2 + $0x818] sm:$0xff]
      %v2693 = vld [vmem:[#allocation2 + $0x820] sm:$0xff]
      %v2694 = vld [vmem:[#allocation2 + $0x828] sm:$0xff]
      %v2695 = vld [vmem:[#allocation2 + $0x830] sm:$0xff]
      %v2696 = vld [vmem:[#allocation2 + $0x838] sm:$0xff]
      %v2697 = vld [vmem:[#allocation2 + $0x840] sm:$0xff]
      %v2698 = vld [vmem:[#allocation2 + $0x848] sm:$0xff]
      %v2699 = vld [vmem:[#allocation2 + $0x850] sm:$0xff]
      %v2700 = vld [vmem:[#allocation2 + $0x858] sm:$0xff]
      %v2701 = vld [vmem:[#allocation2 + $0x860] sm:$0xff]
      %v2702 = vld [vmem:[#allocation2 + $0x868] sm:$0xff]
      %v2703 = vld [vmem:[#allocation2 + $0x870] sm:$0xff]
      %v2704 = vld [vmem:[#allocation2 + $0x878] sm:$0xff]
      %v2705 = vld [vmem:[#allocation2 + $0x880] sm:$0xff]
      %v2706 = vld [vmem:[#allocation2 + $0x888] sm:$0xff]
      %v2707 = vld [vmem:[#allocation2 + $0x890] sm:$0xff]
      %v2708 = vld [vmem:[#allocation2 + $0x898] sm:$0xff]
      %v2709 = vld [vmem:[#allocation2 + $0x8a0] sm:$0xff]
      %v2710 = vld [vmem:[#allocation2 + $0x8a8] sm:$0xff]
      %v2711 = vld [vmem:[#allocation2 + $0x8b0] sm:$0xff]
      %v2712 = vld [vmem:[#allocation2 + $0x8b8] sm:$0xff]
      %v2713 = vld [vmem:[#allocation2 + $0x8c0] sm:$0xff]
      %v2714 = vld [vmem:[#allocation2 + $0x8c8] sm:$0xff]
      %v2715 = vld [vmem:[#allocation2 + $0x8d0] sm:$0xff]
      %v2716 = vld [vmem:[#allocation2 + $0x8d8] sm:$0xff]
      %v2717 = vld [vmem:[#allocation2 + $0x8e0] sm:$0xff]
      %v2718 = vld [vmem:[#allocation2 + $0x8e8] sm:$0xff]
      %v2719 = vld [vmem:[#allocation2 + $0x8f0] sm:$0xff]
      %v2720 = vld [vmem:[#allocation2 + $0x8f8] sm:$0xff]
      %v2721 = vld [vmem:[#allocation2 + $0x900] sm:$0xff]
      %v2722 = vld [vmem:[#allocation2 + $0x908] sm:$0xff]
      %v2723 = vld [vmem:[#allocation2 + $0x910] sm:$0xff]
      %v2724 = vld [vmem:[#allocation2 + $0x918] sm:$0xff]
      %v2725 = vld [vmem:[#allocation2 + $0x920] sm:$0xff]
      %v2726 = vld [vmem:[#allocation2 + $0x928] sm:$0xff]
      %v2727 = vld [vmem:[#allocation2 + $0x930] sm:$0xff]
      %v2728 = vld [vmem:[#allocation2 + $0x938] sm:$0xff]
      %v2729 = vld [vmem:[#allocation2 + $0x940] sm:$0xff]
      %v2730 = vld [vmem:[#allocation2 + $0x948] sm:$0xff]
      %v2731 = vld [vmem:[#allocation2 + $0x950] sm:$0xff]
      %v2732 = vld [vmem:[#allocation2 + $0x958] sm:$0xff]
      %v2733 = vld [vmem:[#allocation2 + $0x960] sm:$0xff]
      %v2734 = vld [vmem:[#allocation2 + $0x968] sm:$0xff]
      %v2735 = vld [vmem:[#allocation2 + $0x970] sm:$0xff]
      %v2736 = vld [vmem:[#allocation2 + $0x978] sm:$0xff]
      %v2737 = vld [vmem:[#allocation2 + $0x980] sm:$0xff]
      %v2738 = vld [vmem:[#allocation2 + $0x988] sm:$0xff]
      %v2739 = vld [vmem:[#allocation2 + $0x990] sm:$0xff]
      %v2740 = vld [vmem:[#allocation2 + $0x998] sm:$0xff]
      %v2741 = vld [vmem:[#allocation2 + $0x9a0] sm:$0xff]
      %v2742 = vld [vmem:[#allocation2 + $0x9a8] sm:$0xff]
      %v2743 = vld [vmem:[#allocation2 + $0x9b0] sm:$0xff]
      %v2744 = vld [vmem:[#allocation2 + $0x9b8] sm:$0xff]
      %v2745 = vld [vmem:[#allocation2 + $0x9c0] sm:$0xff]
      %v2746 = vld [vmem:[#allocation2 + $0x9c8] sm:$0xff]
      %v2747 = vld [vmem:[#allocation2 + $0x9d0] sm:$0xff]
      %v2748 = vld [vmem:[#allocation2 + $0x9d8] sm:$0xff]
      %v2749 = vld [vmem:[#allocation2 + $0x9e0] sm:$0xff]
      %v2750 = vld [vmem:[#allocation2 + $0x9e8] sm:$0xff]
      %v2751 = vld [vmem:[#allocation2 + $0x9f0] sm:$0xff]
      %v2752 = vld [vmem:[#allocation2 + $0x9f8] sm:$0xff]
      %v2753 = vld [vmem:[#allocation2 + $0xa00] sm:$0xff]
      %v2754 = vld [vmem:[#allocation2 + $0xa08] sm:$0xff]
      %v2755 = vld [vmem:[#allocation2 + $0xa10] sm:$0xff]
      %v2756 = vld [vmem:[#allocation2 + $0xa18] sm:$0xff]
      %v2757 = vld [vmem:[#allocation2 + $0xa20] sm:$0xff]
      %v2758 = vld [vmem:[#allocation2 + $0xa28] sm:$0xff]
      %v2759 = vld [vmem:[#allocation2 + $0xa30] sm:$0xff]
      %v2760 = vld [vmem:[#allocation2 + $0xa38] sm:$0xff]
      %v2761 = vld [vmem:[#allocation2 + $0xa40] sm:$0xff]
      %v2762 = vld [vmem:[#allocation2 + $0xa48] sm:$0xff]
      %v2763 = vld [vmem:[#allocation2 + $0xa50] sm:$0xff]
      %v2764 = vld [vmem:[#allocation2 + $0xa58] sm:$0xff]
      %v2765 = vld [vmem:[#allocation2 + $0xa60] sm:$0xff]
      %v2766 = vld [vmem:[#allocation2 + $0xa68] sm:$0xff]
      %v2767 = vld [vmem:[#allocation2 + $0xa70] sm:$0xff]
      %v2768 = vld [vmem:[#allocation2 + $0xa78] sm:$0xff]
      %v2769 = vld [vmem:[#allocation2 + $0xa80] sm:$0xff]
      %v2770 = vld [vmem:[#allocation2 + $0xa88] sm:$0xff]
      %v2771 = vld [vmem:[#allocation2 + $0xa90] sm:$0xff]
      %v2772 = vld [vmem:[#allocation2 + $0xa98] sm:$0xff]
      %v2773 = vld [vmem:[#allocation2 + $0xaa0] sm:$0xff]
      %v2774 = vld [vmem:[#allocation2 + $0xaa8] sm:$0xff]
      %v2775 = vld [vmem:[#allocation2 + $0xab0] sm:$0xff]
      %v2776 = vld [vmem:[#allocation2 + $0xab8] sm:$0xff]
      %v2777 = vld [vmem:[#allocation2 + $0xac0] sm:$0xff]
      %v2778 = vld [vmem:[#allocation2 + $0xac8] sm:$0xff]
      %v2779 = vld [vmem:[#allocation2 + $0xad0] sm:$0xff]
      %v2780 = vld [vmem:[#allocation2 + $0xad8] sm:$0xff]
      %v2781 = vld [vmem:[#allocation2 + $0xae0] sm:$0xff]
      %v2782 = vld [vmem:[#allocation2 + $0xae8] sm:$0xff]
      %v2783 = vld [vmem:[#allocation2 + $0xaf0] sm:$0xff]
      %v2784 = vld [vmem:[#allocation2 + $0xaf8] sm:$0xff]
      %v2785 = vld [vmem:[#allocation2 + $0xb00] sm:$0xff]
      %v2786 = vld [vmem:[#allocation2 + $0xb08] sm:$0xff]
      %v2787 = vld [vmem:[#allocation2 + $0xb10] sm:$0xff]
      %v2788 = vld [vmem:[#allocation2 + $0xb18] sm:$0xff]
      %v2789 = vld [vmem:[#allocation2 + $0xb20] sm:$0xff]
      %v2790 = vld [vmem:[#allocation2 + $0xb28] sm:$0xff]
      %v2791 = vld [vmem:[#allocation2 + $0xb30] sm:$0xff]
      %v2792 = vld [vmem:[#allocation2 + $0xb38] sm:$0xff]
      %v2793 = vld [vmem:[#allocation2 + $0xb40] sm:$0xff]
      %v2794 = vld [vmem:[#allocation2 + $0xb48] sm:$0xff]
      %v2795 = vld [vmem:[#allocation2 + $0xb50] sm:$0xff]
      %v2796 = vld [vmem:[#allocation2 + $0xb58] sm:$0xff]
      %v2797 = vld [vmem:[#allocation2 + $0xb60] sm:$0xff]
      %v2798 = vld [vmem:[#allocation2 + $0xb68] sm:$0xff]
      %v2799 = vld [vmem:[#allocation2 + $0xb70] sm:$0xff]
      %v2800 = vld [vmem:[#allocation2 + $0xb78] sm:$0xff]
      %v2801 = vld [vmem:[#allocation2 + $0xb80] sm:$0xff]
      %v2802 = vld [vmem:[#allocation2 + $0xb88] sm:$0xff]
      %v2803 = vld [vmem:[#allocation2 + $0xb90] sm:$0xff]
      %v2804 = vld [vmem:[#allocation2 + $0xb98] sm:$0xff]
      %v2805 = vld [vmem:[#allocation2 + $0xba0] sm:$0xff]
      %v2806 = vld [vmem:[#allocation2 + $0xba8] sm:$0xff]
      %v2807 = vld [vmem:[#allocation2 + $0xbb0] sm:$0xff]
      %v2808 = vld [vmem:[#allocation2 + $0xbb8] sm:$0xff]
      %v2809 = vld [vmem:[#allocation2 + $0xbc0] sm:$0xff]
      %v2810 = vld [vmem:[#allocation2 + $0xbc8] sm:$0xff]
      %v2811 = vld [vmem:[#allocation2 + $0xbd0] sm:$0xff]
      %v2812 = vld [vmem:[#allocation2 + $0xbd8] sm:$0xff]
      %v2813 = vld [vmem:[#allocation2 + $0xbe0] sm:$0xff]
      %v2814 = vld [vmem:[#allocation2 + $0xbe8] sm:$0xff]
      %v2815 = vld [vmem:[#allocation2 + $0xbf0] sm:$0xff]
      %v2816 = vld [vmem:[#allocation2 + $0xbf8] sm:$0xff]
      %v2817 = vld [vmem:[#allocation2 + $0xc00] sm:$0xff]
      %v2818 = vld [vmem:[#allocation2 + $0xc08] sm:$0xff]
      %v2819 = vld [vmem:[#allocation2 + $0xc10] sm:$0xff]
      %v2820 = vld [vmem:[#allocation2 + $0xc18] sm:$0xff]
      %v2821 = vld [vmem:[#allocation2 + $0xc20] sm:$0xff]
      %v2822 = vld [vmem:[#allocation2 + $0xc28] sm:$0xff]
      %v2823 = vld [vmem:[#allocation2 + $0xc30] sm:$0xff]
      %v2824 = vld [vmem:[#allocation2 + $0xc38] sm:$0xff]
      %v2825 = vld [vmem:[#allocation2 + $0xc40] sm:$0xff]
      %v2826 = vld [vmem:[#allocation2 + $0xc48] sm:$0xff]
      %v2827 = vld [vmem:[#allocation2 + $0xc50] sm:$0xff]
      %v2828 = vld [vmem:[#allocation2 + $0xc58] sm:$0xff]
      %v2829 = vld [vmem:[#allocation2 + $0xc60] sm:$0xff]
      %v2830 = vld [vmem:[#allocation2 + $0xc68] sm:$0xff]
      %v2831 = vld [vmem:[#allocation2 + $0xc70] sm:$0xff]
      %v2832 = vld [vmem:[#allocation2 + $0xc78] sm:$0xff]
      %v2833 = vld [vmem:[#allocation2 + $0xc80] sm:$0xff]
      %v2834 = vld [vmem:[#allocation2 + $0xc88] sm:$0xff]
      %v2835 = vld [vmem:[#allocation2 + $0xc90] sm:$0xff]
      %v2836 = vld [vmem:[#allocation2 + $0xc98] sm:$0xff]
      %v2837 = vld [vmem:[#allocation2 + $0xca0] sm:$0xff]
      %v2838 = vld [vmem:[#allocation2 + $0xca8] sm:$0xff]
      %v2839 = vld [vmem:[#allocation2 + $0xcb0] sm:$0xff]
      %v2840 = vld [vmem:[#allocation2 + $0xcb8] sm:$0xff]
      %v2841 = vld [vmem:[#allocation2 + $0xcc0] sm:$0xff]
      %v2842 = vld [vmem:[#allocation2 + $0xcc8] sm:$0xff]
      %v2843 = vld [vmem:[#allocation2 + $0xcd0] sm:$0xff]
      %v2844 = vld [vmem:[#allocation2 + $0xcd8] sm:$0xff]
      %v2845 = vld [vmem:[#allocation2 + $0xce0] sm:$0xff]
      %v2846 = vld [vmem:[#allocation2 + $0xce8] sm:$0xff]
      %v2847 = vld [vmem:[#allocation2 + $0xcf0] sm:$0xff]
      %v2848 = vld [vmem:[#allocation2 + $0xcf8] sm:$0xff]
      %v2849 = vld [vmem:[#allocation2 + $0xd00] sm:$0xff]
      %v2850 = vld [vmem:[#allocation2 + $0xd08] sm:$0xff]
      %v2851 = vld [vmem:[#allocation2 + $0xd10] sm:$0xff]
      %v2852 = vld [vmem:[#allocation2 + $0xd18] sm:$0xff]
      %v2853 = vld [vmem:[#allocation2 + $0xd20] sm:$0xff]
      %v2854 = vld [vmem:[#allocation2 + $0xd28] sm:$0xff]
      %v2855 = vld [vmem:[#allocation2 + $0xd30] sm:$0xff]
      %v2856 = vld [vmem:[#allocation2 + $0xd38] sm:$0xff]
      %v2857 = vld [vmem:[#allocation2 + $0xd40] sm:$0xff]
      %v2858 = vld [vmem:[#allocation2 + $0xd48] sm:$0xff]
      %v2859 = vld [vmem:[#allocation2 + $0xd50] sm:$0xff]
      %v2860 = vld [vmem:[#allocation2 + $0xd58] sm:$0xff]
      %v2861 = vld [vmem:[#allocation2 + $0xd60] sm:$0xff]
      %v2862 = vld [vmem:[#allocation2 + $0xd68] sm:$0xff]
      %v2863 = vld [vmem:[#allocation2 + $0xd70] sm:$0xff]
      %v2864 = vld [vmem:[#allocation2 + $0xd78] sm:$0xff]
      %v2865 = vld [vmem:[#allocation2 + $0xd80] sm:$0xff]
      %v2866 = vld [vmem:[#allocation2 + $0xd88] sm:$0xff]
      %v2867 = vld [vmem:[#allocation2 + $0xd90] sm:$0xff]
      %v2868 = vld [vmem:[#allocation2 + $0xd98] sm:$0xff]
      %v2869 = vld [vmem:[#allocation2 + $0xda0] sm:$0xff]
      %v2870 = vld [vmem:[#allocation2 + $0xda8] sm:$0xff]
      %v2871 = vld [vmem:[#allocation2 + $0xdb0] sm:$0xff]
      %v2872 = vld [vmem:[#allocation2 + $0xdb8] sm:$0xff]
      %v2873 = vld [vmem:[#allocation2 + $0xdc0] sm:$0xff]
      %v2874 = vld [vmem:[#allocation2 + $0xdc8] sm:$0xff]
      %v2875 = vld [vmem:[#allocation2 + $0xdd0] sm:$0xff]
      %v2876 = vld [vmem:[#allocation2 + $0xdd8] sm:$0xff]
      %v2877 = vld [vmem:[#allocation2 + $0xde0] sm:$0xff]
      %v2878 = vld [vmem:[#allocation2 + $0xde8] sm:$0xff]
      %v2879 = vld [vmem:[#allocation2 + $0xdf0] sm:$0xff]
      %v2880 = vld [vmem:[#allocation2 + $0xdf8] sm:$0xff]
      %v2881 = vld [vmem:[#allocation2 + $0xe00] sm:$0xff]
      %v2882 = vld [vmem:[#allocation2 + $0xe08] sm:$0xff]
      %v2883 = vld [vmem:[%s2] sm:$0xff]
      %v2884 = vld [vmem:[%s2 + $0x8] sm:$0xff]
      %v2885 = vld [vmem:[%s2 + $0x10] sm:$0xff]
      %v2886 = vld [vmem:[%s2 + $0x18] sm:$0xff]
      %v2887 = vld [vmem:[%s2 + $0x20] sm:$0xff]
      %v2888 = vld [vmem:[%s2 + $0x28] sm:$0xff]
      %v2889 = vld [vmem:[%s2 + $0x30] sm:$0xff]
      %v2890 = vld [vmem:[%s2 + $0x38] sm:$0xff]
      %2892 = vset.pattern.permute.xlu0 0
      %2893 = vperm.xlu0 %2892, %v2883
      %v2894 = vpop.permute.xlu0 %2893
      %2897 = vset.pattern.permute.xlu0 0
      %2898 = vperm.xlu0 %2897, %v2884
      %v2899 = vpop.permute.xlu0 %2898
      %2902 = vset.pattern.permute.xlu0 0
      %2903 = vperm.xlu0 %2902, %v2885
      %v2904 = vpop.permute.xlu0 %2903
      %2907 = vset.pattern.permute.xlu0 0
      %2908 = vperm.xlu0 %2907, %v2886
      %v2909 = vpop.permute.xlu0 %2908
      %2912 = vset.pattern.permute.xlu0 0
      %2913 = vperm.xlu0 %2912, %v2887
      %v2914 = vpop.permute.xlu0 %2913
      %2917 = vset.pattern.permute.xlu0 0
      %2918 = vperm.xlu0 %2917, %v2888
      %v2919 = vpop.permute.xlu0 %2918
      %2922 = vset.pattern.permute.xlu0 0
      %2923 = vperm.xlu0 %2922, %v2889
      %v2924 = vpop.permute.xlu0 %2923
      %2927 = vset.pattern.permute.xlu0 0
      %2928 = vperm.xlu0 %2927, %v2890
      %v2929 = vpop.permute.xlu0 %2928
      %v2932 = vsel %vm1979, %v2411, 0
      %v2935 = vsel %vm1979, %v2414, 0
      %v2938 = vsel %vm1979, %v2417, 0
      %v2941 = vsel %vm1979, %v2420, 0
      %v2944 = vsel %vm1979, %v2423, 0
      %v2947 = vsel %vm1979, %v2426, 0
      %v2950 = vsel %vm1979, %v2429, 0
      %v2953 = vsel %vm1979, %v2432, 0
      %2955 = vmatprep.subr.mxu0 %v2434
      %2956 = vmatpush1.msra.mxu0 %v2433
      %2957 = vmatprep.subr.mxu0 %v2444
      %2958 = vmatpush1.msra.mxu0 %v2443
      %2959 = vmatprep.subr.mxu0 %v2454
      %2960 = vmatpush1.msra.mxu0 %v2453
      %2961 = vmatprep.subr.mxu0 %v2464
      %2962 = vmatpush1.msra.mxu0 %v2463
      %2963 = vmatprep.subr.mxu0 %v2474
      %2964 = vmatpush1.msra.mxu0 %v2473
      %2965 = vmatprep.subr.mxu0 %v2484
      %2966 = vmatpush1.msra.mxu0 %v2483
      %2967 = vmatprep.subr.mxu0 %v2494
      %2968 = vmatpush1.msra.mxu0 %v2493
      %2969 = vmatprep.subr.mxu0 %v2504
      %2970 = vmatpush1.msra.mxu0 %v2503
      %2971 = vmatprep.subr.mxu0 %v2514
      %2972 = vmatpush1.msra.mxu0 %v2513
      %2973 = vmatprep.subr.mxu0 %v2524
      %2974 = vmatpush1.msra.mxu0 %v2523
      %2975 = vmatprep.subr.mxu0 %v2534
      %2976 = vmatpush1.msra.mxu0 %v2533
      %2977 = vmatprep.subr.mxu0 %v2544
      %2978 = vmatpush1.msra.mxu0 %v2543
      %2979 = vmatprep.subr.mxu0 %v2554
      %2980 = vmatpush1.msra.mxu0 %v2553
      %2981 = vmatprep.subr.mxu0 %v2564
      %2982 = vmatpush1.msra.mxu0 %v2563
      %2983 = vmatprep.subr.mxu0 %v2574
      %2984 = vmatpush1.msra.mxu0 %v2573
      %2985 = vmatprep.subr.mxu0 %v2584
      %2986 = vmatpush1.msra.mxu0 %v2583
      %2987 = vmatprep.subr.mxu0 %v2594
      %2988 = vmatpush1.msra.mxu0 %v2593
      %2989 = vmatprep.subr.mxu0 %v2604
      %2990 = vmatpush1.msra.mxu0 %v2603
      %2991 = vmatprep.subr.mxu0 %v2614
      %2992 = vmatpush1.msra.mxu0 %v2613
      %2993 = vmatprep.subr.mxu0 %v2624
      %2994 = vmatpush1.msra.mxu0 %v2623
      %2995 = vmatprep.subr.mxu0 %v2634
      %2996 = vmatpush1.msra.mxu0 %v2633
      %2997 = vmatprep.subr.mxu0 %v2644
      %2998 = vmatpush1.msra.mxu0 %v2643
      %2999 = vmatprep.subr.mxu0 %v2654
      %3000 = vmatpush1.msra.mxu0 %v2653
      %3001 = vmatprep.subr.mxu0 %v2664
      %3002 = vmatpush1.msra.mxu0 %v2663
      %3003 = vmatprep.subr.mxu0 %v2674
      %3004 = vmatpush1.msra.mxu0 %v2673
      %3005 = vmatprep.subr.mxu0 %v2684
      %3006 = vmatpush1.msra.mxu0 %v2683
      %3007 = vmatprep.subr.mxu0 %v2694
      %3008 = vmatpush1.msra.mxu0 %v2693
      %3009 = vmatprep.subr.mxu0 %v2704
      %3010 = vmatpush1.msra.mxu0 %v2703
      %3011 = vmatprep.subr.mxu0 %v2714
      %3012 = vmatpush1.msra.mxu0 %v2713
      %3013 = vmatprep.subr.mxu0 %v2724
      %3014 = vmatpush1.msra.mxu0 %v2723
      %3015 = vmatprep.subr.mxu0 %v2734
      %3016 = vmatpush1.msra.mxu0 %v2733
      %3017 = vmatprep.subr.mxu0 %v2744
      %3018 = vmatpush1.msra.mxu0 %v2743
      %3019 = vmatprep.mubr.f32.mxu0 %v2410
      %3020 = vmatmul.mubr.f32.gmra.mrb[0].mxu0 %v2409
      %v3021 = vpop.f32.mrb[0].mxu0
      %v3022 = vadd.f32 %v2894, %v3021
      %v3023 = vpop.f32.mrb[0].mxu0
      %v3024 = vadd.f32 %v2894, %v3023
      %3025 = vmatprep.mubr.f32.mxu0 %v2413
      %3026 = vmatmul.mubr.f32.gmra.mrb[0].mxu0 %v2412
      %v3027 = vpop.f32.mrb[0].mxu0
      %v3028 = vadd.f32 %v2899, %v3027
      %v3029 = vpop.f32.mrb[0].mxu0
      %v3030 = vadd.f32 %v2899, %v3029
      %3031 = vmatprep.mubr.f32.mxu0 %v2416
      %3032 = vmatmul.mubr.f32.gmra.mrb[0].mxu0 %v2415
      %v3033 = vpop.f32.mrb[0].mxu0
      %v3034 = vadd.f32 %v2904, %v3033
      %v3035 = vpop.f32.mrb[0].mxu0
      %v3036 = vadd.f32 %v2904, %v3035
      %3037 = vmatprep.mubr.f32.mxu0 %v2419
      %3038 = vmatmul.mubr.f32.gmra.mrb[0].mxu0 %v2418
      %v3039 = vpop.f32.mrb[0].mxu0
      %v3040 = vadd.f32 %v2909, %v3039
      %v3041 = vpop.f32.mrb[0].mxu0
      %v3042 = vadd.f32 %v2909, %v3041
      %3043 = vmatprep.mubr.f32.mxu0 %v2422
      %3044 = vmatmul.mubr.f32.gmra.mrb[0].mxu0 %v2421
      %v3045 = vpop.f32.mrb[0].mxu0
      %v3046 = vadd.f32 %v2914, %v3045
      %v3047 = vpop.f32.mrb[0].mxu0
      %v3048 = vadd.f32 %v2914, %v3047
      %3049 = vmatprep.mubr.f32.mxu0 %v2425
      %3050 = vmatmul.mubr.f32.gmra.mrb[0].mxu0 %v2424
      %v3051 = vpop.f32.mrb[0].mxu0
      %v3052 = vadd.f32 %v2919, %v3051
      %v3053 = vpop.f32.mrb[0].mxu0
      %v3054 = vadd.f32 %v2919, %v3053
      %3055 = vmatprep.mubr.f32.mxu0 %v2428
      %3056 = vmatmul.mubr.f32.gmra.mrb[0].mxu0 %v2427
      %v3057 = vpop.f32.mrb[0].mxu0
      %v3058 = vadd.f32 %v2924, %v3057
      %v3059 = vpop.f32.mrb[0].mxu0
      %v3060 = vadd.f32 %v2924, %v3059
      %3061 = vmatprep.mubr.f32.mxu0 %v2431
      %3062 = vmatmul.mubr.f32.gmra.mrb[0].mxu0 %v2430
      %v3063 = vpop.f32.mrb[0].mxu0
      %v3064 = vadd.f32 %v2929, %v3063
      %v3065 = vpop.f32.mrb[0].mxu0
      %v3066 = vadd.f32 %v2929, %v3065
      %3067 = vdwg.mxu0
      %3068 = vmatprep.subr.mxu0 %v2754
      %3069 = vmatpush1.msra.mxu0 %v2753
      %3070 = vmatprep.subr.mxu0 %v2764
      %3071 = vmatpush1.msra.mxu0 %v2763
      %3072 = vmatprep.subr.mxu0 %v2774
      %3073 = vmatpush1.msra.mxu0 %v2773
      %3074 = vmatprep.subr.mxu0 %v2784
      %3075 = vmatpush1.msra.mxu0 %v2783
      %3076 = vmatprep.subr.mxu0 %v2794
      %3077 = vmatpush1.msra.mxu0 %v2793
      %3078 = vmatprep.subr.mxu0 %v2804
      %3079 = vmatpush1.msra.mxu0 %v2803
      %3080 = vmatprep.subr.mxu0 %v2814
      %3081 = vmatpush1.msra.mxu0 %v2813
      %3082 = vmatprep.subr.mxu0 %v2824
      %3083 = vmatpush1.msra.mxu0 %v2823
      %3084 = vmatprep.subr.mxu0 %v2834
      %3085 = vmatpush1.msra.mxu0 %v2833
      %3086 = vmatprep.subr.mxu0 %v2844
      %3087 = vmatpush1.msra.mxu0 %v2843
      %3088 = vmatprep.subr.mxu0 %v2854
      %3089 = vmatpush1.msra.mxu0 %v2853
      %3090 = vmatprep.subr.mxu0 %v2864
      %3091 = vmatpush1.msra.mxu0 %v2863
      %3092 = vmatprep.subr.mxu0 %v2874
      %3093 = vmatpush1.msra.mxu0 %v2873
      %3094 = vmatprep.subr.mxu0 0.0
      %3095 = vmatpush1.msra.mxu0 0.0
      %3096 = vmatprep.subr.mxu0 0.0
      %3097 = vmatpush1.msra.mxu0 0.0
      %3098 = vmatprep.subr.mxu0 0.0
      %3099 = vmatpush1.msra.mxu0 0.0
      %3100 = vmatprep.subr.mxu0 0.0
      %3101 = vmatpush1.msra.mxu0 0.0
      %3102 = vmatprep.subr.mxu0 0.0
      %3103 = vmatpush1.msra.mxu0 0.0
      %3104 = vmatprep.subr.mxu0 0.0
      %3105 = vmatpush1.msra.mxu0 0.0
      %3106 = vmatprep.subr.mxu0 0.0
      %3107 = vmatpush1.msra.mxu0 0.0
      %3108 = vmatprep.subr.mxu0 0.0
      %3109 = vmatpush1.msra.mxu0 0.0
      %3110 = vmatprep.subr.mxu0 0.0
      %3111 = vmatpush1.msra.mxu0 0.0
      %3112 = vmatprep.subr.mxu0 0.0
      %3113 = vmatpush1.msra.mxu0 0.0
      %3114 = vmatprep.subr.mxu0 0.0
      %3115 = vmatpush1.msra.mxu0 0.0
      %3116 = vmatprep.subr.mxu0 0.0
      %3117 = vmatpush1.msra.mxu0 0.0
      %3118 = vmatprep.subr.mxu0 0.0
      %3119 = vmatpush1.msra.mxu0 0.0
      %3120 = vmatprep.subr.mxu0 0.0
      %3121 = vmatpush1.msra.mxu0 0.0
      %3122 = vmatprep.subr.mxu0 0.0
      %3123 = vmatpush1.msra.mxu0 0.0
      %3124 = vmatprep.subr.mxu0 0.0
      %3125 = vmatpush1.msra.mxu0 0.0
      %3126 = vmatprep.subr.mxu0 0.0
      %3127 = vmatpush1.msra.mxu0 0.0
      %3128 = vmatprep.subr.mxu0 0.0
      %3129 = vmatpush1.msra.mxu0 0.0
      %3130 = vmatprep.subr.mxu0 0.0
      %3131 = vmatpush1.msra.mxu0 0.0
      %3132 = vmatprep.mubr.f32.mxu0 0.0
      %3133 = vmatmul.mubr.f32.gmra.mrb[0].mxu0 %v2932
      %v3134 = vpop.f32.mrb[0].mxu0
      %v3135 = vadd.f32 %v3022, %v3134
      %v3136 = vpop.f32.mrb[0].mxu0
      %v3137 = vadd.f32 %v3024, %v3136
      %3138 = vmatprep.mubr.f32.mxu0 0.0
      %3139 = vmatmul.mubr.f32.gmra.mrb[0].mxu0 %v2935
      %v3140 = vpop.f32.mrb[0].mxu0
      %v3141 = vadd.f32 %v3028, %v3140
      %v3142 = vpop.f32.mrb[0].mxu0
      %v3143 = vadd.f32 %v3030, %v3142
      %3144 = vmatprep.mubr.f32.mxu0 0.0
      %3145 = vmatmul.mubr.f32.gmra.mrb[0].mxu0 %v2938
      %v3146 = vpop.f32.mrb[0].mxu0
      %v3147 = vadd.f32 %v3034, %v3146
      %v3148 = vpop.f32.mrb[0].mxu0
      %v3149 = vadd.f32 %v3036, %v3148
      %3150 = vmatprep.mubr.f32.mxu0 0.0
      %3151 = vmatmul.mubr.f32.gmra.mrb[0].mxu0 %v2941
      %v3152 = vpop.f32.mrb[0].mxu0
      %v3153 = vadd.f32 %v3040, %v3152
      %v3154 = vpop.f32.mrb[0].mxu0
      %v3155 = vadd.f32 %v3042, %v3154
      %3156 = vmatprep.mubr.f32.mxu0 0.0
      %3157 = vmatmul.mubr.f32.gmra.mrb[0].mxu0 %v2944
      %v3158 = vpop.f32.mrb[0].mxu0
      %v3159 = vadd.f32 %v3046, %v3158
      %v3160 = vpop.f32.mrb[0].mxu0
      %v3161 = vadd.f32 %v3048, %v3160
      %3162 = vmatprep.mubr.f32.mxu0 0.0
      %3163 = vmatmul.mubr.f32.gmra.mrb[0].mxu0 %v2947
      %v3164 = vpop.f32.mrb[0].mxu0
      %v3165 = vadd.f32 %v3052, %v3164
      %v3166 = vpop.f32.mrb[0].mxu0
      %v3167 = vadd.f32 %v3054, %v3166
      %3168 = vmatprep.mubr.f32.mxu0 0.0
      %3169 = vmatmul.mubr.f32.gmra.mrb[0].mxu0 %v2950
      %v3170 = vpop.f32.mrb[0].mxu0
      %v3171 = vadd.f32 %v3058, %v3170
      %v3172 = vpop.f32.mrb[0].mxu0
      %v3173 = vadd.f32 %v3060, %v3172
      %3174 = vmatprep.mubr.f32.mxu0 0.0
      %3175 = vmatmul.mubr.f32.gmra.mrb[0].mxu0 %v2953
      %v3176 = vpop.f32.mrb[0].mxu0
      %v3177 = vadd.f32 %v3064, %v3176
      %v3178 = vpop.f32.mrb[0].mxu0
      %v3179 = vadd.f32 %v3066, %v3178
      %3180 = vdwg.mxu0
      %3181 = vmatprep.subr.mxu0 %v2436
      %3182 = vmatpush1.msra.mxu0 %v2435
      %3183 = vmatprep.subr.mxu0 %v2446
      %3184 = vmatpush1.msra.mxu0 %v2445
      %3185 = vmatprep.subr.mxu0 %v2456
      %3186 = vmatpush1.msra.mxu0 %v2455
      %3187 = vmatprep.subr.mxu0 %v2466
      %3188 = vmatpush1.msra.mxu0 %v2465
      %3189 = vmatprep.subr.mxu0 %v2476
      %3190 = vmatpush1.msra.mxu0 %v2475
      %3191 = vmatprep.subr.mxu0 %v2486
      %3192 = vmatpush1.msra.mxu0 %v2485
      %3193 = vmatprep.subr.mxu0 %v2496
      %3194 = vmatpush1.msra.mxu0 %v2495
      %3195 = vmatprep.subr.mxu0 %v2506
      %3196 = vmatpush1.msra.mxu0 %v2505
      %3197 = vmatprep.subr.mxu0 %v2516
      %3198 = vmatpush1.msra.mxu0 %v2515
      %3199 = vmatprep.subr.mxu0 %v2526
      %3200 = vmatpush1.msra.mxu0 %v2525
      %3201 = vmatprep.subr.mxu0 %v2536
      %3202 = vmatpush1.msra.mxu0 %v2535
      %3203 = vmatprep.subr.mxu0 %v2546
      %3204 = vmatpush1.msra.mxu0 %v2545
      %3205 = vmatprep.subr.mxu0 %v2556
      %3206 = vmatpush1.msra.mxu0 %v2555
      %3207 = vmatprep.subr.mxu0 %v2566
      %3208 = vmatpush1.msra.mxu0 %v2565
      %3209 = vmatprep.subr.mxu0 %v2576
      %3210 = vmatpush1.msra.mxu0 %v2575
      %3211 = vmatprep.subr.mxu0 %v2586
      %3212 = vmatpush1.msra.mxu0 %v2585
      %3213 = vmatprep.subr.mxu0 %v2596
      %3214 = vmatpush1.msra.mxu0 %v2595
      %3215 = vmatprep.subr.mxu0 %v2606
      %3216 = vmatpush1.msra.mxu0 %v2605
      %3217 = vmatprep.subr.mxu0 %v2616
      %3218 = vmatpush1.msra.mxu0 %v2615
      %3219 = vmatprep.subr.mxu0 %v2626
      %3220 = vmatpush1.msra.mxu0 %v2625
      %3221 = vmatprep.subr.mxu0 %v2636
      %3222 = vmatpush1.msra.mxu0 %v2635
      %3223 = vmatprep.subr.mxu0 %v2646
      %3224 = vmatpush1.msra.mxu0 %v2645
      %3225 = vmatprep.subr.mxu0 %v2656
      %3226 = vmatpush1.msra.mxu0 %v2655
      %3227 = vmatprep.subr.mxu0 %v2666
      %3228 = vmatpush1.msra.mxu0 %v2665
      %3229 = vmatprep.subr.mxu0 %v2676
      %3230 = vmatpush1.msra.mxu0 %v2675
      %3231 = vmatprep.subr.mxu0 %v2686
      %3232 = vmatpush1.msra.mxu0 %v2685
      %3233 = vmatprep.subr.mxu0 %v2696
      %3234 = vmatpush1.msra.mxu0 %v2695
      %3235 = vmatprep.subr.mxu0 %v2706
      %3236 = vmatpush1.msra.mxu0 %v2705
      %3237 = vmatprep.subr.mxu0 %v2716
      %3238 = vmatpush1.msra.mxu0 %v2715
      %3239 = vmatprep.subr.mxu0 %v2726
      %3240 = vmatpush1.msra.mxu0 %v2725
      %3241 = vmatprep.subr.mxu0 %v2736
      %3242 = vmatpush1.msra.mxu0 %v2735
      %3243 = vmatprep.subr.mxu0 %v2746
      %3244 = vmatpush1.msra.mxu0 %v2745
      %3245 = vmatprep.mubr.f32.mxu0 %v2410
      %3246 = vmatmul.mubr.f32.gmra.mrb[0].mxu0 %v2409
      %v3247 = vpop.f32.mrb[0].mxu0
      %v3248 = vadd.f32 %v2894, %v3247
      %v3249 = vpop.f32.mrb[0].mxu0
      %v3250 = vadd.f32 %v2894, %v3249
      %3251 = vmatprep.mubr.f32.mxu0 %v2413
      %3252 = vmatmul.mubr.f32.gmra.mrb[0].mxu0 %v2412
      %v3253 = vpop.f32.mrb[0].mxu0
      %v3254 = vadd.f32 %v2899, %v3253
      %v3255 = vpop.f32.mrb[0].mxu0
      %v3256 = vadd.f32 %v2899, %v3255
      %3257 = vmatprep.mubr.f32.mxu0 %v2416
      %3258 = vmatmul.mubr.f32.gmra.mrb[0].mxu0 %v2415
      %v3259 = vpop.f32.mrb[0].mxu0
      %v3260 = vadd.f32 %v2904, %v3259
      %v3261 = vpop.f32.mrb[0].mxu0
      %v3262 = vadd.f32 %v2904, %v3261
      %3263 = vmatprep.mubr.f32.mxu0 %v2419
      %3264 = vmatmul.mubr.f32.gmra.mrb[0].mxu0 %v2418
      %v3265 = vpop.f32.mrb[0].mxu0
      %v3266 = vadd.f32 %v2909, %v3265
      %v3267 = vpop.f32.mrb[0].mxu0
      %v3268 = vadd.f32 %v2909, %v3267
      %3269 = vmatprep.mubr.f32.mxu0 %v2422
      %3270 = vmatmul.mubr.f32.gmra.mrb[0].mxu0 %v2421
      %v3271 = vpop.f32.mrb[0].mxu0
      %v3272 = vadd.f32 %v2914, %v3271
      %v3273 = vpop.f32.mrb[0].mxu0
      %v3274 = vadd.f32 %v2914, %v3273
      %3275 = vmatprep.mubr.f32.mxu0 %v2425
      %3276 = vmatmul.mubr.f32.gmra.mrb[0].mxu0 %v2424
      %v3277 = vpop.f32.mrb[0].mxu0
      %v3278 = vadd.f32 %v2919, %v3277
      %v3279 = vpop.f32.mrb[0].mxu0
      %v3280 = vadd.f32 %v2919, %v3279
      %3281 = vmatprep.mubr.f32.mxu0 %v2428
      %3282 = vmatmul.mubr.f32.gmra.mrb[0].mxu0 %v2427
      %v3283 = vpop.f32.mrb[0].mxu0
      %v3284 = vadd.f32 %v2924, %v3283
      %v3285 = vpop.f32.mrb[0].mxu0
      %v3286 = vadd.f32 %v2924, %v3285
      %3287 = vmatprep.mubr.f32.mxu0 %v2431
      %3288 = vmatmul.mubr.f32.gmra.mrb[0].mxu0 %v2430
      %v3289 = vpop.f32.mrb[0].mxu0
      %v3290 = vadd.f32 %v2929, %v3289
      %v3291 = vpop.f32.mrb[0].mxu0
      %v3292 = vadd.f32 %v2929, %v3291
      %3293 = vdwg.mxu0
      %3294 = vmatprep.subr.mxu0 %v2756
      %3295 = vmatpush1.msra.mxu0 %v2755
      %3296 = vmatprep.subr.mxu0 %v2766
      %3297 = vmatpush1.msra.mxu0 %v2765
      %3298 = vmatprep.subr.mxu0 %v2776
      %3299 = vmatpush1.msra.mxu0 %v2775
      %3300 = vmatprep.subr.mxu0 %v2786
      %3301 = vmatpush1.msra.mxu0 %v2785
      %3302 = vmatprep.subr.mxu0 %v2796
      %3303 = vmatpush1.msra.mxu0 %v2795
      %3304 = vmatprep.subr.mxu0 %v2806
      %3305 = vmatpush1.msra.mxu0 %v2805
      %3306 = vmatprep.subr.mxu0 %v2816
      %3307 = vmatpush1.msra.mxu0 %v2815
      %3308 = vmatprep.subr.mxu0 %v2826
      %3309 = vmatpush1.msra.mxu0 %v2825
      %3310 = vmatprep.subr.mxu0 %v2836
      %3311 = vmatpush1.msra.mxu0 %v2835
      %3312 = vmatprep.subr.mxu0 %v2846
      %3313 = vmatpush1.msra.mxu0 %v2845
      %3314 = vmatprep.subr.mxu0 %v2856
      %3315 = vmatpush1.msra.mxu0 %v2855
      %3316 = vmatprep.subr.mxu0 %v2866
      %3317 = vmatpush1.msra.mxu0 %v2865
      %3318 = vmatprep.subr.mxu0 %v2876
      %3319 = vmatpush1.msra.mxu0 %v2875
      %3320 = vmatprep.subr.mxu0 0.0
      %3321 = vmatpush1.msra.mxu0 0.0
      %3322 = vmatprep.subr.mxu0 0.0
      %3323 = vmatpush1.msra.mxu0 0.0
      %3324 = vmatprep.subr.mxu0 0.0
      %3325 = vmatpush1.msra.mxu0 0.0
      %3326 = vmatprep.subr.mxu0 0.0
      %3327 = vmatpush1.msra.mxu0 0.0
      %3328 = vmatprep.subr.mxu0 0.0
      %3329 = vmatpush1.msra.mxu0 0.0
      %3330 = vmatprep.subr.mxu0 0.0
      %3331 = vmatpush1.msra.mxu0 0.0
      %3332 = vmatprep.subr.mxu0 0.0
      %3333 = vmatpush1.msra.mxu0 0.0
      %3334 = vmatprep.subr.mxu0 0.0
      %3335 = vmatpush1.msra.mxu0 0.0
      %3336 = vmatprep.subr.mxu0 0.0
      %3337 = vmatpush1.msra.mxu0 0.0
      %3338 = vmatprep.subr.mxu0 0.0
      %3339 = vmatpush1.msra.mxu0 0.0
      %3340 = vmatprep.subr.mxu0 0.0
      %3341 = vmatpush1.msra.mxu0 0.0
      %3342 = vmatprep.subr.mxu0 0.0
      %3343 = vmatpush1.msra.mxu0 0.0
      %3344 = vmatprep.subr.mxu0 0.0
      %3345 = vmatpush1.msra.mxu0 0.0
      %3346 = vmatprep.subr.mxu0 0.0
      %3347 = vmatpush1.msra.mxu0 0.0
      %3348 = vmatprep.subr.mxu0 0.0
      %3349 = vmatpush1.msra.mxu0 0.0
      %3350 = vmatprep.subr.mxu0 0.0
      %3351 = vmatpush1.msra.mxu0 0.0
      %3352 = vmatprep.subr.mxu0 0.0
      %3353 = vmatpush1.msra.mxu0 0.0
      %3354 = vmatprep.subr.mxu0 0.0
      %3355 = vmatpush1.msra.mxu0 0.0
      %3356 = vmatprep.subr.mxu0 0.0
      %3357 = vmatpush1.msra.mxu0 0.0
      %3358 = vmatprep.mubr.f32.mxu0 0.0
      %3359 = vmatmul.mubr.f32.gmra.mrb[0].mxu0 %v2932
      %v3360 = vpop.f32.mrb[0].mxu0
      %v3361 = vadd.f32 %v3248, %v3360
      %v3362 = vpop.f32.mrb[0].mxu0
      %v3363 = vadd.f32 %v3250, %v3362
      %3364 = vmatprep.mubr.f32.mxu0 0.0
      %3365 = vmatmul.mubr.f32.gmra.mrb[0].mxu0 %v2935
      %v3366 = vpop.f32.mrb[0].mxu0
      %v3367 = vadd.f32 %v3254, %v3366
      %v3368 = vpop.f32.mrb[0].mxu0
      %v3369 = vadd.f32 %v3256, %v3368
      %3370 = vmatprep.mubr.f32.mxu0 0.0
      %3371 = vmatmul.mubr.f32.gmra.mrb[0].mxu0 %v2938
      %v3372 = vpop.f32.mrb[0].mxu0
      %v3373 = vadd.f32 %v3260, %v3372
      %v3374 = vpop.f32.mrb[0].mxu0
      %v3375 = vadd.f32 %v3262, %v3374
      %3376 = vmatprep.mubr.f32.mxu0 0.0
      %3377 = vmatmul.mubr.f32.gmra.mrb[0].mxu0 %v2941
      %v3378 = vpop.f32.mrb[0].mxu0
      %v3379 = vadd.f32 %v3266, %v3378
      %v3380 = vpop.f32.mrb[0].mxu0
      %v3381 = vadd.f32 %v3268, %v3380
      %3382 = vmatprep.mubr.f32.mxu0 0.0
      %3383 = vmatmul.mubr.f32.gmra.mrb[0].mxu0 %v2944
      %v3384 = vpop.f32.mrb[0].mxu0
      %v3385 = vadd.f32 %v3272, %v3384
      %v3386 = vpop.f32.mrb[0].mxu0
      %v3387 = vadd.f32 %v3274, %v3386
      %3388 = vmatprep.mubr.f32.mxu0 0.0
      %3389 = vmatmul.mubr.f32.gmra.mrb[0].mxu0 %v2947
      %v3390 = vpop.f32.mrb[0].mxu0
      %v3391 = vadd.f32 %v3278, %v3390
      %v3392 = vpop.f32.mrb[0].mxu0
      %v3393 = vadd.f32 %v3280, %v3392
      %3394 = vmatprep.mubr.f32.mxu0 0.0
      %3395 = vmatmul.mubr.f32.gmra.mrb[0].mxu0 %v2950
      %v3396 = vpop.f32.mrb[0].mxu0
      %v3397 = vadd.f32 %v3284, %v3396
      %v3398 = vpop.f32.mrb[0].mxu0
      %v3399 = vadd.f32 %v3286, %v3398
      %3400 = vmatprep.mubr.f32.mxu0 0.0
      %3401 = vmatmul.mubr.f32.gmra.mrb[0].mxu0 %v2953
      %v3402 = vpop.f32.mrb[0].mxu0
      %v3403 = vadd.f32 %v3290, %v3402
      %v3404 = vpop.f32.mrb[0].mxu0
      %v3405 = vadd.f32 %v3292, %v3404
      %3406 = vdwg.mxu0
      %3407 = vmatprep.subr.mxu0 %v2438
      %3408 = vmatpush1.msra.mxu0 %v2437
      %3409 = vmatprep.subr.mxu0 %v2448
      %3410 = vmatpush1.msra.mxu0 %v2447
      %3411 = vmatprep.subr.mxu0 %v2458
      %3412 = vmatpush1.msra.mxu0 %v2457
      %3413 = vmatprep.subr.mxu0 %v2468
      %3414 = vmatpush1.msra.mxu0 %v2467
      %3415 = vmatprep.subr.mxu0 %v2478
      %3416 = vmatpush1.msra.mxu0 %v2477
      %3417 = vmatprep.subr.mxu0 %v2488
      %3418 = vmatpush1.msra.mxu0 %v2487
      %3419 = vmatprep.subr.mxu0 %v2498
      %3420 = vmatpush1.msra.mxu0 %v2497
      %3421 = vmatprep.subr.mxu0 %v2508
      %3422 = vmatpush1.msra.mxu0 %v2507
      %3423 = vmatprep.subr.mxu0 %v2518
      %3424 = vmatpush1.msra.mxu0 %v2517
      %3425 = vmatprep.subr.mxu0 %v2528
      %3426 = vmatpush1.msra.mxu0 %v2527
      %3427 = vmatprep.subr.mxu0 %v2538
      %3428 = vmatpush1.msra.mxu0 %v2537
      %3429 = vmatprep.subr.mxu0 %v2548
      %3430 = vmatpush1.msra.mxu0 %v2547
      %3431 = vmatprep.subr.mxu0 %v2558
      %3432 = vmatpush1.msra.mxu0 %v2557
      %3433 = vmatprep.subr.mxu0 %v2568
      %3434 = vmatpush1.msra.mxu0 %v2567
      %3435 = vmatprep.subr.mxu0 %v2578
      %3436 = vmatpush1.msra.mxu0 %v2577
      %3437 = vmatprep.subr.mxu0 %v2588
      %3438 = vmatpush1.msra.mxu0 %v2587
      %3439 = vmatprep.subr.mxu0 %v2598
      %3440 = vmatpush1.msra.mxu0 %v2597
      %3441 = vmatprep.subr.mxu0 %v2608
      %3442 = vmatpush1.msra.mxu0 %v2607
      %3443 = vmatprep.subr.mxu0 %v2618
      %3444 = vmatpush1.msra.mxu0 %v2617
      %3445 = vmatprep.subr.mxu0 %v2628
      %3446 = vmatpush1.msra.mxu0 %v2627
      %3447 = vmatprep.subr.mxu0 %v2638
      %3448 = vmatpush1.msra.mxu0 %v2637
      %3449 = vmatprep.subr.mxu0 %v2648
      %3450 = vmatpush1.msra.mxu0 %v2647
      %3451 = vmatprep.subr.mxu0 %v2658
      %3452 = vmatpush1.msra.mxu0 %v2657
      %3453 = vmatprep.subr.mxu0 %v2668
      %3454 = vmatpush1.msra.mxu0 %v2667
      %3455 = vmatprep.subr.mxu0 %v2678
      %3456 = vmatpush1.msra.mxu0 %v2677
      %3457 = vmatprep.subr.mxu0 %v2688
      %3458 = vmatpush1.msra.mxu0 %v2687
      %3459 = vmatprep.subr.mxu0 %v2698
      %3460 = vmatpush1.msra.mxu0 %v2697
      %3461 = vmatprep.subr.mxu0 %v2708
      %3462 = vmatpush1.msra.mxu0 %v2707
      %3463 = vmatprep.subr.mxu0 %v2718
      %3464 = vmatpush1.msra.mxu0 %v2717
      %3465 = vmatprep.subr.mxu0 %v2728
      %3466 = vmatpush1.msra.mxu0 %v2727
      %3467 = vmatprep.subr.mxu0 %v2738
      %3468 = vmatpush1.msra.mxu0 %v2737
      %3469 = vmatprep.subr.mxu0 %v2748
      %3470 = vmatpush1.msra.mxu0 %v2747
      %3471 = vmatprep.mubr.f32.mxu0 %v2410
      %3472 = vmatmul.mubr.f32.gmra.mrb[0].mxu0 %v2409
      %v3473 = vpop.f32.mrb[0].mxu0
      %v3474 = vadd.f32 %v2894, %v3473
      %v3475 = vpop.f32.mrb[0].mxu0
      %v3476 = vadd.f32 %v2894, %v3475
      %3477 = vmatprep.mubr.f32.mxu0 %v2413
      %3478 = vmatmul.mubr.f32.gmra.mrb[0].mxu0 %v2412
      %v3479 = vpop.f32.mrb[0].mxu0
      %v3480 = vadd.f32 %v2899, %v3479
      %v3481 = vpop.f32.mrb[0].mxu0
      %v3482 = vadd.f32 %v2899, %v3481
      %3483 = vmatprep.mubr.f32.mxu0 %v2416
      %3484 = vmatmul.mubr.f32.gmra.mrb[0].mxu0 %v2415
      %v3485 = vpop.f32.mrb[0].mxu0
      %v3486 = vadd.f32 %v2904, %v3485
      %v3487 = vpop.f32.mrb[0].mxu0
      %v3488 = vadd.f32 %v2904, %v3487
      %3489 = vmatprep.mubr.f32.mxu0 %v2419
      %3490 = vmatmul.mubr.f32.gmra.mrb[0].mxu0 %v2418
      %v3491 = vpop.f32.mrb[0].mxu0
      %v3492 = vadd.f32 %v2909, %v3491
      %v3493 = vpop.f32.mrb[0].mxu0
      %v3494 = vadd.f32 %v2909, %v3493
      %3495 = vmatprep.mubr.f32.mxu0 %v2422
      %3496 = vmatmul.mubr.f32.gmra.mrb[0].mxu0 %v2421
      %v3497 = vpop.f32.mrb[0].mxu0
      %v3498 = vadd.f32 %v2914, %v3497
      %v3499 = vpop.f32.mrb[0].mxu0
      %v3500 = vadd.f32 %v2914, %v3499
      %3501 = vmatprep.mubr.f32.mxu0 %v2425
      %3502 = vmatmul.mubr.f32.gmra.mrb[0].mxu0 %v2424
      %v3503 = vpop.f32.mrb[0].mxu0
      %v3504 = vadd.f32 %v2919, %v3503
      %v3505 = vpop.f32.mrb[0].mxu0
      %v3506 = vadd.f32 %v2919, %v3505
      %3507 = vmatprep.mubr.f32.mxu0 %v2428
      %3508 = vmatmul.mubr.f32.gmra.mrb[0].mxu0 %v2427
      %v3509 = vpop.f32.mrb[0].mxu0
      %v3510 = vadd.f32 %v2924, %v3509
      %v3511 = vpop.f32.mrb[0].mxu0
      %v3512 = vadd.f32 %v2924, %v3511
      %3513 = vmatprep.mubr.f32.mxu0 %v2431
      %3514 = vmatmul.mubr.f32.gmra.mrb[0].mxu0 %v2430
      %v3515 = vpop.f32.mrb[0].mxu0
      %v3516 = vadd.f32 %v2929, %v3515
      %v3517 = vpop.f32.mrb[0].mxu0
      %v3518 = vadd.f32 %v2929, %v3517
      %3519 = vdwg.mxu0
      %3520 = vmatprep.subr.mxu0 %v2758
      %3521 = vmatpush1.msra.mxu0 %v2757
      %3522 = vmatprep.subr.mxu0 %v2768
      %3523 = vmatpush1.msra.mxu0 %v2767
      %3524 = vmatprep.subr.mxu0 %v2778
      %3525 = vmatpush1.msra.mxu0 %v2777
      %3526 = vmatprep.subr.mxu0 %v2788
      %3527 = vmatpush1.msra.mxu0 %v2787
      %3528 = vmatprep.subr.mxu0 %v2798
      %3529 = vmatpush1.msra.mxu0 %v2797
      %3530 = vmatprep.subr.mxu0 %v2808
      %3531 = vmatpush1.msra.mxu0 %v2807
      %3532 = vmatprep.subr.mxu0 %v2818
      %3533 = vmatpush1.msra.mxu0 %v2817
      %3534 = vmatprep.subr.mxu0 %v2828
      %3535 = vmatpush1.msra.mxu0 %v2827
      %3536 = vmatprep.subr.mxu0 %v2838
      %3537 = vmatpush1.msra.mxu0 %v2837
      %3538 = vmatprep.subr.mxu0 %v2848
      %3539 = vmatpush1.msra.mxu0 %v2847
      %3540 = vmatprep.subr.mxu0 %v2858
      %3541 = vmatpush1.msra.mxu0 %v2857
      %3542 = vmatprep.subr.mxu0 %v2868
      %3543 = vmatpush1.msra.mxu0 %v2867
      %3544 = vmatprep.subr.mxu0 %v2878
      %3545 = vmatpush1.msra.mxu0 %v2877
      %3546 = vmatprep.subr.mxu0 0.0
      %3547 = vmatpush1.msra.mxu0 0.0
      %3548 = vmatprep.subr.mxu0 0.0
      %3549 = vmatpush1.msra.mxu0 0.0
      %3550 = vmatprep.subr.mxu0 0.0
      %3551 = vmatpush1.msra.mxu0 0.0
      %3552 = vmatprep.subr.mxu0 0.0
      %3553 = vmatpush1.msra.mxu0 0.0
      %3554 = vmatprep.subr.mxu0 0.0
      %3555 = vmatpush1.msra.mxu0 0.0
      %3556 = vmatprep.subr.mxu0 0.0
      %3557 = vmatpush1.msra.mxu0 0.0
      %3558 = vmatprep.subr.mxu0 0.0
      %3559 = vmatpush1.msra.mxu0 0.0
      %3560 = vmatprep.subr.mxu0 0.0
      %3561 = vmatpush1.msra.mxu0 0.0
      %3562 = vmatprep.subr.mxu0 0.0
      %3563 = vmatpush1.msra.mxu0 0.0
      %3564 = vmatprep.subr.mxu0 0.0
      %3565 = vmatpush1.msra.mxu0 0.0
      %3566 = vmatprep.subr.mxu0 0.0
      %3567 = vmatpush1.msra.mxu0 0.0
      %3568 = vmatprep.subr.mxu0 0.0
      %3569 = vmatpush1.msra.mxu0 0.0
      %3570 = vmatprep.subr.mxu0 0.0
      %3571 = vmatpush1.msra.mxu0 0.0
      %3572 = vmatprep.subr.mxu0 0.0
      %3573 = vmatpush1.msra.mxu0 0.0
      %3574 = vmatprep.subr.mxu0 0.0
      %3575 = vmatpush1.msra.mxu0 0.0
      %3576 = vmatprep.subr.mxu0 0.0
      %3577 = vmatpush1.msra.mxu0 0.0
      %3578 = vmatprep.subr.mxu0 0.0
      %3579 = vmatpush1.msra.mxu0 0.0
      %3580 = vmatprep.subr.mxu0 0.0
      %3581 = vmatpush1.msra.mxu0 0.0
      %3582 = vmatprep.subr.mxu0 0.0
      %3583 = vmatpush1.msra.mxu0 0.0
      %3584 = vmatprep.mubr.f32.mxu0 0.0
      %3585 = vmatmul.mubr.f32.gmra.mrb[0].mxu0 %v2932
      %v3586 = vpop.f32.mrb[0].mxu0
      %v3587 = vadd.f32 %v3474, %v3586
      %v3588 = vpop.f32.mrb[0].mxu0
      %v3589 = vadd.f32 %v3476, %v3588
      %3590 = vmatprep.mubr.f32.mxu0 0.0
      %3591 = vmatmul.mubr.f32.gmra.mrb[0].mxu0 %v2935
      %v3592 = vpop.f32.mrb[0].mxu0
      %v3593 = vadd.f32 %v3480, %v3592
      %v3594 = vpop.f32.mrb[0].mxu0
      %v3595 = vadd.f32 %v3482, %v3594
      %3596 = vmatprep.mubr.f32.mxu0 0.0
      %3597 = vmatmul.mubr.f32.gmra.mrb[0].mxu0 %v2938
      %v3598 = vpop.f32.mrb[0].mxu0
      %v3599 = vadd.f32 %v3486, %v3598
      %v3600 = vpop.f32.mrb[0].mxu0
      %v3601 = vadd.f32 %v3488, %v3600
      %3602 = vmatprep.mubr.f32.mxu0 0.0
      %3603 = vmatmul.mubr.f32.gmra.mrb[0].mxu0 %v2941
      %v3604 = vpop.f32.mrb[0].mxu0
      %v3605 = vadd.f32 %v3492, %v3604
      %v3606 = vpop.f32.mrb[0].mxu0
      %v3607 = vadd.f32 %v3494, %v3606
      %3608 = vmatprep.mubr.f32.mxu0 0.0
      %3609 = vmatmul.mubr.f32.gmra.mrb[0].mxu0 %v2944
      %v3610 = vpop.f32.mrb[0].mxu0
      %v3611 = vadd.f32 %v3498, %v3610
      %v3612 = vpop.f32.mrb[0].mxu0
      %v3613 = vadd.f32 %v3500, %v3612
      %3614 = vmatprep.mubr.f32.mxu0 0.0
      %3615 = vmatmul.mubr.f32.gmra.mrb[0].mxu0 %v2947
      %v3616 = vpop.f32.mrb[0].mxu0
      %v3617 = vadd.f32 %v3504, %v3616
      %v3618 = vpop.f32.mrb[0].mxu0
      %v3619 = vadd.f32 %v3506, %v3618
      %3620 = vmatprep.mubr.f32.mxu0 0.0
      %3621 = vmatmul.mubr.f32.gmra.mrb[0].mxu0 %v2950
      %v3622 = vpop.f32.mrb[0].mxu0
      %v3623 = vadd.f32 %v3510, %v3622
      %v3624 = vpop.f32.mrb[0].mxu0
      %v3625 = vadd.f32 %v3512, %v3624
      %3626 = vmatprep.mubr.f32.mxu0 0.0
      %3627 = vmatmul.mubr.f32.gmra.mrb[0].mxu0 %v2953
      %v3628 = vpop.f32.mrb[0].mxu0
      %v3629 = vadd.f32 %v3516, %v3628
      %v3630 = vpop.f32.mrb[0].mxu0
      %v3631 = vadd.f32 %v3518, %v3630
      %3632 = vdwg.mxu0
      %3633 = vmatprep.subr.mxu0 %v2440
      %3634 = vmatpush1.msra.mxu0 %v2439
      %3635 = vmatprep.subr.mxu0 %v2450
      %3636 = vmatpush1.msra.mxu0 %v2449
      %3637 = vmatprep.subr.mxu0 %v2460
      %3638 = vmatpush1.msra.mxu0 %v2459
      %3639 = vmatprep.subr.mxu0 %v2470
      %3640 = vmatpush1.msra.mxu0 %v2469
      %3641 = vmatprep.subr.mxu0 %v2480
      %3642 = vmatpush1.msra.mxu0 %v2479
      %3643 = vmatprep.subr.mxu0 %v2490
      %3644 = vmatpush1.msra.mxu0 %v2489
      %3645 = vmatprep.subr.mxu0 %v2500
      %3646 = vmatpush1.msra.mxu0 %v2499
      %3647 = vmatprep.subr.mxu0 %v2510
      %3648 = vmatpush1.msra.mxu0 %v2509
      %3649 = vmatprep.subr.mxu0 %v2520
      %3650 = vmatpush1.msra.mxu0 %v2519
      %3651 = vmatprep.subr.mxu0 %v2530
      %3652 = vmatpush1.msra.mxu0 %v2529
      %3653 = vmatprep.subr.mxu0 %v2540
      %3654 = vmatpush1.msra.mxu0 %v2539
      %3655 = vmatprep.subr.mxu0 %v2550
      %3656 = vmatpush1.msra.mxu0 %v2549
      %3657 = vmatprep.subr.mxu0 %v2560
      %3658 = vmatpush1.msra.mxu0 %v2559
      %3659 = vmatprep.subr.mxu0 %v2570
      %3660 = vmatpush1.msra.mxu0 %v2569
      %3661 = vmatprep.subr.mxu0 %v2580
      %3662 = vmatpush1.msra.mxu0 %v2579
      %3663 = vmatprep.subr.mxu0 %v2590
      %3664 = vmatpush1.msra.mxu0 %v2589
      %3665 = vmatprep.subr.mxu0 %v2600
      %3666 = vmatpush1.msra.mxu0 %v2599
      %3667 = vmatprep.subr.mxu0 %v2610
      %3668 = vmatpush1.msra.mxu0 %v2609
      %3669 = vmatprep.subr.mxu0 %v2620
      %3670 = vmatpush1.msra.mxu0 %v2619
      %3671 = vmatprep.subr.mxu0 %v2630
      %3672 = vmatpush1.msra.mxu0 %v2629
      %3673 = vmatprep.subr.mxu0 %v2640
      %3674 = vmatpush1.msra.mxu0 %v2639
      %3675 = vmatprep.subr.mxu0 %v2650
      %3676 = vmatpush1.msra.mxu0 %v2649
      %3677 = vmatprep.subr.mxu0 %v2660
      %3678 = vmatpush1.msra.mxu0 %v2659
      %3679 = vmatprep.subr.mxu0 %v2670
      %3680 = vmatpush1.msra.mxu0 %v2669
      %3681 = vmatprep.subr.mxu0 %v2680
      %3682 = vmatpush1.msra.mxu0 %v2679
      %3683 = vmatprep.subr.mxu0 %v2690
      %3684 = vmatpush1.msra.mxu0 %v2689
      %3685 = vmatprep.subr.mxu0 %v2700
      %3686 = vmatpush1.msra.mxu0 %v2699
      %3687 = vmatprep.subr.mxu0 %v2710
      %3688 = vmatpush1.msra.mxu0 %v2709
      %3689 = vmatprep.subr.mxu0 %v2720
      %3690 = vmatpush1.msra.mxu0 %v2719
      %3691 = vmatprep.subr.mxu0 %v2730
      %3692 = vmatpush1.msra.mxu0 %v2729
      %3693 = vmatprep.subr.mxu0 %v2740
      %3694 = vmatpush1.msra.mxu0 %v2739
      %3695 = vmatprep.subr.mxu0 %v2750
      %3696 = vmatpush1.msra.mxu0 %v2749
      %3697 = vmatprep.mubr.f32.mxu0 %v2410
      %3698 = vmatmul.mubr.f32.gmra.mrb[0].mxu0 %v2409
      %v3699 = vpop.f32.mrb[0].mxu0
      %v3700 = vadd.f32 %v2894, %v3699
      %v3701 = vpop.f32.mrb[0].mxu0
      %v3702 = vadd.f32 %v2894, %v3701
      %3703 = vmatprep.mubr.f32.mxu0 %v2413
      %3704 = vmatmul.mubr.f32.gmra.mrb[0].mxu0 %v2412
      %v3705 = vpop.f32.mrb[0].mxu0
      %v3706 = vadd.f32 %v2899, %v3705
      %v3707 = vpop.f32.mrb[0].mxu0
      %v3708 = vadd.f32 %v2899, %v3707
      %3709 = vmatprep.mubr.f32.mxu0 %v2416
      %3710 = vmatmul.mubr.f32.gmra.mrb[0].mxu0 %v2415
      %v3711 = vpop.f32.mrb[0].mxu0
      %v3712 = vadd.f32 %v2904, %v3711
      %v3713 = vpop.f32.mrb[0].mxu0
      %v3714 = vadd.f32 %v2904, %v3713
      %3715 = vmatprep.mubr.f32.mxu0 %v2419
      %3716 = vmatmul.mubr.f32.gmra.mrb[0].mxu0 %v2418
      %v3717 = vpop.f32.mrb[0].mxu0
      %v3718 = vadd.f32 %v2909, %v3717
      %v3719 = vpop.f32.mrb[0].mxu0
      %v3720 = vadd.f32 %v2909, %v3719
      %3721 = vmatprep.mubr.f32.mxu0 %v2422
      %3722 = vmatmul.mubr.f32.gmra.mrb[0].mxu0 %v2421
      %v3723 = vpop.f32.mrb[0].mxu0
      %v3724 = vadd.f32 %v2914, %v3723
      %v3725 = vpop.f32.mrb[0].mxu0
      %v3726 = vadd.f32 %v2914, %v3725
      %3727 = vmatprep.mubr.f32.mxu0 %v2425
      %3728 = vmatmul.mubr.f32.gmra.mrb[0].mxu0 %v2424
      %v3729 = vpop.f32.mrb[0].mxu0
      %v3730 = vadd.f32 %v2919, %v3729
      %v3731 = vpop.f32.mrb[0].mxu0
      %v3732 = vadd.f32 %v2919, %v3731
      %3733 = vmatprep.mubr.f32.mxu0 %v2428
      %3734 = vmatmul.mubr.f32.gmra.mrb[0].mxu0 %v2427
      %v3735 = vpop.f32.mrb[0].mxu0
      %v3736 = vadd.f32 %v2924, %v3735
      %v3737 = vpop.f32.mrb[0].mxu0
      %v3738 = vadd.f32 %v2924, %v3737
      %3739 = vmatprep.mubr.f32.mxu0 %v2431
      %3740 = vmatmul.mubr.f32.gmra.mrb[0].mxu0 %v2430
      %v3741 = vpop.f32.mrb[0].mxu0
      %v3742 = vadd.f32 %v2929, %v3741
      %v3743 = vpop.f32.mrb[0].mxu0
      %v3744 = vadd.f32 %v2929, %v3743
      %3745 = vdwg.mxu0
      %3746 = vmatprep.subr.mxu0 %v2760
      %3747 = vmatpush1.msra.mxu0 %v2759
      %3748 = vmatprep.subr.mxu0 %v2770
      %3749 = vmatpush1.msra.mxu0 %v2769
      %3750 = vmatprep.subr.mxu0 %v2780
      %3751 = vmatpush1.msra.mxu0 %v2779
      %3752 = vmatprep.subr.mxu0 %v2790
      %3753 = vmatpush1.msra.mxu0 %v2789
      %3754 = vmatprep.subr.mxu0 %v2800
      %3755 = vmatpush1.msra.mxu0 %v2799
      %3756 = vmatprep.subr.mxu0 %v2810
      %3757 = vmatpush1.msra.mxu0 %v2809
      %3758 = vmatprep.subr.mxu0 %v2820
      %3759 = vmatpush1.msra.mxu0 %v2819
      %3760 = vmatprep.subr.mxu0 %v2830
      %3761 = vmatpush1.msra.mxu0 %v2829
      %3762 = vmatprep.subr.mxu0 %v2840
      %3763 = vmatpush1.msra.mxu0 %v2839
      %3764 = vmatprep.subr.mxu0 %v2850
      %3765 = vmatpush1.msra.mxu0 %v2849
      %3766 = vmatprep.subr.mxu0 %v2860
      %3767 = vmatpush1.msra.mxu0 %v2859
      %3768 = vmatprep.subr.mxu0 %v2870
      %3769 = vmatpush1.msra.mxu0 %v2869
      %3770 = vmatprep.subr.mxu0 %v2880
      %3771 = vmatpush1.msra.mxu0 %v2879
      %3772 = vmatprep.subr.mxu0 0.0
      %3773 = vmatpush1.msra.mxu0 0.0
      %3774 = vmatprep.subr.mxu0 0.0
      %3775 = vmatpush1.msra.mxu0 0.0
      %3776 = vmatprep.subr.mxu0 0.0
      %3777 = vmatpush1.msra.mxu0 0.0
      %3778 = vmatprep.subr.mxu0 0.0
      %3779 = vmatpush1.msra.mxu0 0.0
      %3780 = vmatprep.subr.mxu0 0.0
      %3781 = vmatpush1.msra.mxu0 0.0
      %3782 = vmatprep.subr.mxu0 0.0
      %3783 = vmatpush1.msra.mxu0 0.0
      %3784 = vmatprep.subr.mxu0 0.0
      %3785 = vmatpush1.msra.mxu0 0.0
      %3786 = vmatprep.subr.mxu0 0.0
      %3787 = vmatpush1.msra.mxu0 0.0
      %3788 = vmatprep.subr.mxu0 0.0
      %3789 = vmatpush1.msra.mxu0 0.0
      %3790 = vmatprep.subr.mxu0 0.0
      %3791 = vmatpush1.msra.mxu0 0.0
      %3792 = vmatprep.subr.mxu0 0.0
      %3793 = vmatpush1.msra.mxu0 0.0
      %3794 = vmatprep.subr.mxu0 0.0
      %3795 = vmatpush1.msra.mxu0 0.0
      %3796 = vmatprep.subr.mxu0 0.0
      %3797 = vmatpush1.msra.mxu0 0.0
      %3798 = vmatprep.subr.mxu0 0.0
      %3799 = vmatpush1.msra.mxu0 0.0
      %3800 = vmatprep.subr.mxu0 0.0
      %3801 = vmatpush1.msra.mxu0 0.0
      %3802 = vmatprep.subr.mxu0 0.0
      %3803 = vmatpush1.msra.mxu0 0.0
      %3804 = vmatprep.subr.mxu0 0.0
      %3805 = vmatpush1.msra.mxu0 0.0
      %3806 = vmatprep.subr.mxu0 0.0
      %3807 = vmatpush1.msra.mxu0 0.0
      %3808 = vmatprep.subr.mxu0 0.0
      %3809 = vmatpush1.msra.mxu0 0.0
      %3810 = vmatprep.mubr.f32.mxu0 0.0
      %3811 = vmatmul.mubr.f32.gmra.mrb[0].mxu0 %v2932
      %v3812 = vpop.f32.mrb[0].mxu0
      %v3813 = vadd.f32 %v3700, %v3812
      %v3814 = vpop.f32.mrb[0].mxu0
      %v3815 = vadd.f32 %v3702, %v3814
      %3816 = vmatprep.mubr.f32.mxu0 0.0
      %3817 = vmatmul.mubr.f32.gmra.mrb[0].mxu0 %v2935
      %v3818 = vpop.f32.mrb[0].mxu0
      %v3819 = vadd.f32 %v3706, %v3818
      %v3820 = vpop.f32.mrb[0].mxu0
      %v3821 = vadd.f32 %v3708, %v3820
      %3822 = vmatprep.mubr.f32.mxu0 0.0
      %3823 = vmatmul.mubr.f32.gmra.mrb[0].mxu0 %v2938
      %v3824 = vpop.f32.mrb[0].mxu0
      %v3825 = vadd.f32 %v3712, %v3824
      %v3826 = vpop.f32.mrb[0].mxu0
      %v3827 = vadd.f32 %v3714, %v3826
      %3828 = vmatprep.mubr.f32.mxu0 0.0
      %3829 = vmatmul.mubr.f32.gmra.mrb[0].mxu0 %v2941
      %v3830 = vpop.f32.mrb[0].mxu0
      %v3831 = vadd.f32 %v3718, %v3830
      %v3832 = vpop.f32.mrb[0].mxu0
      %v3833 = vadd.f32 %v3720, %v3832
      %3834 = vmatprep.mubr.f32.mxu0 0.0
      %3835 = vmatmul.mubr.f32.gmra.mrb[0].mxu0 %v2944
      %v3836 = vpop.f32.mrb[0].mxu0
      %v3837 = vadd.f32 %v3724, %v3836
      %v3838 = vpop.f32.mrb[0].mxu0
      %v3839 = vadd.f32 %v3726, %v3838
      %3840 = vmatprep.mubr.f32.mxu0 0.0
      %3841 = vmatmul.mubr.f32.gmra.mrb[0].mxu0 %v2947
      %v3842 = vpop.f32.mrb[0].mxu0
      %v3843 = vadd.f32 %v3730, %v3842
      %v3844 = vpop.f32.mrb[0].mxu0
      %v3845 = vadd.f32 %v3732, %v3844
      %3846 = vmatprep.mubr.f32.mxu0 0.0
      %3847 = vmatmul.mubr.f32.gmra.mrb[0].mxu0 %v2950
      %v3848 = vpop.f32.mrb[0].mxu0
      %v3849 = vadd.f32 %v3736, %v3848
      %v3850 = vpop.f32.mrb[0].mxu0
      %v3851 = vadd.f32 %v3738, %v3850
      %3852 = vmatprep.mubr.f32.mxu0 0.0
      %3853 = vmatmul.mubr.f32.gmra.mrb[0].mxu0 %v2953
      %v3854 = vpop.f32.mrb[0].mxu0
      %v3855 = vadd.f32 %v3742, %v3854
      %v3856 = vpop.f32.mrb[0].mxu0
      %v3857 = vadd.f32 %v3744, %v3856
      %3858 = vdwg.mxu0
      %3859 = vmatprep.subr.mxu0 %v2442
      %3860 = vmatpush1.msra.mxu0 %v2441
      %3861 = vmatprep.subr.mxu0 %v2452
      %3862 = vmatpush1.msra.mxu0 %v2451
      %3863 = vmatprep.subr.mxu0 %v2462
      %3864 = vmatpush1.msra.mxu0 %v2461
      %3865 = vmatprep.subr.mxu0 %v2472
      %3866 = vmatpush1.msra.mxu0 %v2471
      %3867 = vmatprep.subr.mxu0 %v2482
      %3868 = vmatpush1.msra.mxu0 %v2481
      %3869 = vmatprep.subr.mxu0 %v2492
      %3870 = vmatpush1.msra.mxu0 %v2491
      %3871 = vmatprep.subr.mxu0 %v2502
      %3872 = vmatpush1.msra.mxu0 %v2501
      %3873 = vmatprep.subr.mxu0 %v2512
      %3874 = vmatpush1.msra.mxu0 %v2511
      %3875 = vmatprep.subr.mxu0 %v2522
      %3876 = vmatpush1.msra.mxu0 %v2521
      %3877 = vmatprep.subr.mxu0 %v2532
      %3878 = vmatpush1.msra.mxu0 %v2531
      %3879 = vmatprep.subr.mxu0 %v2542
      %3880 = vmatpush1.msra.mxu0 %v2541
      %3881 = vmatprep.subr.mxu0 %v2552
      %3882 = vmatpush1.msra.mxu0 %v2551
      %3883 = vmatprep.subr.mxu0 %v2562
      %3884 = vmatpush1.msra.mxu0 %v2561
      %3885 = vmatprep.subr.mxu0 %v2572
      %3886 = vmatpush1.msra.mxu0 %v2571
      %3887 = vmatprep.subr.mxu0 %v2582
      %3888 = vmatpush1.msra.mxu0 %v2581
      %3889 = vmatprep.subr.mxu0 %v2592
      %3890 = vmatpush1.msra.mxu0 %v2591
      %3891 = vmatprep.subr.mxu0 %v2602
      %3892 = vmatpush1.msra.mxu0 %v2601
      %3893 = vmatprep.subr.mxu0 %v2612
      %3894 = vmatpush1.msra.mxu0 %v2611
      %3895 = vmatprep.subr.mxu0 %v2622
      %3896 = vmatpush1.msra.mxu0 %v2621
      %3897 = vmatprep.subr.mxu0 %v2632
      %3898 = vmatpush1.msra.mxu0 %v2631
      %3899 = vmatprep.subr.mxu0 %v2642
      %3900 = vmatpush1.msra.mxu0 %v2641
      %3901 = vmatprep.subr.mxu0 %v2652
      %3902 = vmatpush1.msra.mxu0 %v2651
      %3903 = vmatprep.subr.mxu0 %v2662
      %3904 = vmatpush1.msra.mxu0 %v2661
      %3905 = vmatprep.subr.mxu0 %v2672
      %3906 = vmatpush1.msra.mxu0 %v2671
      %3907 = vmatprep.subr.mxu0 %v2682
      %3908 = vmatpush1.msra.mxu0 %v2681
      %3909 = vmatprep.subr.mxu0 %v2692
      %3910 = vmatpush1.msra.mxu0 %v2691
      %3911 = vmatprep.subr.mxu0 %v2702
      %3912 = vmatpush1.msra.mxu0 %v2701
      %3913 = vmatprep.subr.mxu0 %v2712
      %3914 = vmatpush1.msra.mxu0 %v2711
      %3915 = vmatprep.subr.mxu0 %v2722
      %3916 = vmatpush1.msra.mxu0 %v2721
      %3917 = vmatprep.subr.mxu0 %v2732
      %3918 = vmatpush1.msra.mxu0 %v2731
      %3919 = vmatprep.subr.mxu0 %v2742
      %3920 = vmatpush1.msra.mxu0 %v2741
      %3921 = vmatprep.subr.mxu0 %v2752
      %3922 = vmatpush1.msra.mxu0 %v2751
      %3923 = vmatprep.mubr.f32.mxu0 %v2410
      %3924 = vmatmul.mubr.f32.gmra.mrb[0].mxu0 %v2409
      %v3925 = vpop.f32.mrb[0].mxu0
      %v3926 = vadd.f32 %v2894, %v3925
      %v3927 = vpop.f32.mrb[0].mxu0
      %v3928 = vadd.f32 %v2894, %v3927
      %3929 = vmatprep.mubr.f32.mxu0 %v2413
      %3930 = vmatmul.mubr.f32.gmra.mrb[0].mxu0 %v2412
      %v3931 = vpop.f32.mrb[0].mxu0
      %v3932 = vadd.f32 %v2899, %v3931
      %v3933 = vpop.f32.mrb[0].mxu0
      %v3934 = vadd.f32 %v2899, %v3933
      %3935 = vmatprep.mubr.f32.mxu0 %v2416
      %3936 = vmatmul.mubr.f32.gmra.mrb[0].mxu0 %v2415
      %v3937 = vpop.f32.mrb[0].mxu0
      %v3938 = vadd.f32 %v2904, %v3937
      %v3939 = vpop.f32.mrb[0].mxu0
      %v3940 = vadd.f32 %v2904, %v3939
      %3941 = vmatprep.mubr.f32.mxu0 %v2419
      %3942 = vmatmul.mubr.f32.gmra.mrb[0].mxu0 %v2418
      %v3943 = vpop.f32.mrb[0].mxu0
      %v3944 = vadd.f32 %v2909, %v3943
      %v3945 = vpop.f32.mrb[0].mxu0
      %v3946 = vadd.f32 %v2909, %v3945
      %3947 = vmatprep.mubr.f32.mxu0 %v2422
      %3948 = vmatmul.mubr.f32.gmra.mrb[0].mxu0 %v2421
      %v3949 = vpop.f32.mrb[0].mxu0
      %v3950 = vadd.f32 %v2914, %v3949
      %v3951 = vpop.f32.mrb[0].mxu0
      %v3952 = vadd.f32 %v2914, %v3951
      %3953 = vmatprep.mubr.f32.mxu0 %v2425
      %3954 = vmatmul.mubr.f32.gmra.mrb[0].mxu0 %v2424
      %v3955 = vpop.f32.mrb[0].mxu0
      %v3956 = vadd.f32 %v2919, %v3955
      %v3957 = vpop.f32.mrb[0].mxu0
      %v3958 = vadd.f32 %v2919, %v3957
      %3959 = vmatprep.mubr.f32.mxu0 %v2428
      %3960 = vmatmul.mubr.f32.gmra.mrb[0].mxu0 %v2427
      %v3961 = vpop.f32.mrb[0].mxu0
      %v3962 = vadd.f32 %v2924, %v3961
      %v3963 = vpop.f32.mrb[0].mxu0
      %v3964 = vadd.f32 %v2924, %v3963
      %3965 = vmatprep.mubr.f32.mxu0 %v2431
      %3966 = vmatmul.mubr.f32.gmra.mrb[0].mxu0 %v2430
      %v3967 = vpop.f32.mrb[0].mxu0
      %v3968 = vadd.f32 %v2929, %v3967
      %v3969 = vpop.f32.mrb[0].mxu0
      %v3970 = vadd.f32 %v2929, %v3969
      %3971 = vdwg.mxu0
      %3972 = vmatprep.subr.mxu0 %v2762
      %3973 = vmatpush1.msra.mxu0 %v2761
      %3974 = vmatprep.subr.mxu0 %v2772
      %3975 = vmatpush1.msra.mxu0 %v2771
      %3976 = vmatprep.subr.mxu0 %v2782
      %3977 = vmatpush1.msra.mxu0 %v2781
      %3978 = vmatprep.subr.mxu0 %v2792
      %3979 = vmatpush1.msra.mxu0 %v2791
      %3980 = vmatprep.subr.mxu0 %v2802
      %3981 = vmatpush1.msra.mxu0 %v2801
      %3982 = vmatprep.subr.mxu0 %v2812
      %3983 = vmatpush1.msra.mxu0 %v2811
      %3984 = vmatprep.subr.mxu0 %v2822
      %3985 = vmatpush1.msra.mxu0 %v2821
      %3986 = vmatprep.subr.mxu0 %v2832
      %3987 = vmatpush1.msra.mxu0 %v2831
      %3988 = vmatprep.subr.mxu0 %v2842
      %3989 = vmatpush1.msra.mxu0 %v2841
      %3990 = vmatprep.subr.mxu0 %v2852
      %3991 = vmatpush1.msra.mxu0 %v2851
      %3992 = vmatprep.subr.mxu0 %v2862
      %3993 = vmatpush1.msra.mxu0 %v2861
      %3994 = vmatprep.subr.mxu0 %v2872
      %3995 = vmatpush1.msra.mxu0 %v2871
      %3996 = vmatprep.subr.mxu0 %v2882
      %3997 = vmatpush1.msra.mxu0 %v2881
      %3998 = vmatprep.subr.mxu0 0.0
      %3999 = vmatpush1.msra.mxu0 0.0
      %4000 = vmatprep.subr.mxu0 0.0
      %4001 = vmatpush1.msra.mxu0 0.0
      %4002 = vmatprep.subr.mxu0 0.0
      %4003 = vmatpush1.msra.mxu0 0.0
      %4004 = vmatprep.subr.mxu0 0.0
      %4005 = vmatpush1.msra.mxu0 0.0
      %4006 = vmatprep.subr.mxu0 0.0
      %4007 = vmatpush1.msra.mxu0 0.0
      %4008 = vmatprep.subr.mxu0 0.0
      %4009 = vmatpush1.msra.mxu0 0.0
      %4010 = vmatprep.subr.mxu0 0.0
      %4011 = vmatpush1.msra.mxu0 0.0
      %4012 = vmatprep.subr.mxu0 0.0
      %4013 = vmatpush1.msra.mxu0 0.0
      %4014 = vmatprep.subr.mxu0 0.0
      %4015 = vmatpush1.msra.mxu0 0.0
      %4016 = vmatprep.subr.mxu0 0.0
      %4017 = vmatpush1.msra.mxu0 0.0
      %4018 = vmatprep.subr.mxu0 0.0
      %4019 = vmatpush1.msra.mxu0 0.0
      %4020 = vmatprep.subr.mxu0 0.0
      %4021 = vmatpush1.msra.mxu0 0.0
      %4022 = vmatprep.subr.mxu0 0.0
      %4023 = vmatpush1.msra.mxu0 0.0
      %4024 = vmatprep.subr.mxu0 0.0
      %4025 = vmatpush1.msra.mxu0 0.0
      %4026 = vmatprep.subr.mxu0 0.0
      %4027 = vmatpush1.msra.mxu0 0.0
      %4028 = vmatprep.subr.mxu0 0.0
      %4029 = vmatpush1.msra.mxu0 0.0
      %4030 = vmatprep.subr.mxu0 0.0
      %4031 = vmatpush1.msra.mxu0 0.0
      %4032 = vmatprep.subr.mxu0 0.0
      %4033 = vmatpush1.msra.mxu0 0.0
      %4034 = vmatprep.subr.mxu0 0.0
      %4035 = vmatpush1.msra.mxu0 0.0
      %4036 = vmatprep.mubr.f32.mxu0 0.0
      %4037 = vmatmul.mubr.f32.gmra.mrb[0].mxu0 %v2932
      %v4038 = vpop.f32.mrb[0].mxu0
      %v4039 = vadd.f32 %v3926, %v4038
      %v4040 = vpop.f32.mrb[0].mxu0
      %v4041 = vadd.f32 %v3928, %v4040
      %4042 = vmatprep.mubr.f32.mxu0 0.0
      %4043 = vmatmul.mubr.f32.gmra.mrb[0].mxu0 %v2935
      %v4044 = vpop.f32.mrb[0].mxu0
      %v4045 = vadd.f32 %v3932, %v4044
      %v4046 = vpop.f32.mrb[0].mxu0
      %v4047 = vadd.f32 %v3934, %v4046
      %4048 = vmatprep.mubr.f32.mxu0 0.0
      %4049 = vmatmul.mubr.f32.gmra.mrb[0].mxu0 %v2938
      %v4050 = vpop.f32.mrb[0].mxu0
      %v4051 = vadd.f32 %v3938, %v4050
      %v4052 = vpop.f32.mrb[0].mxu0
      %v4053 = vadd.f32 %v3940, %v4052
      %4054 = vmatprep.mubr.f32.mxu0 0.0
      %4055 = vmatmul.mubr.f32.gmra.mrb[0].mxu0 %v2941
      %v4056 = vpop.f32.mrb[0].mxu0
      %v4057 = vadd.f32 %v3944, %v4056
      %v4058 = vpop.f32.mrb[0].mxu0
      %v4059 = vadd.f32 %v3946, %v4058
      %4060 = vmatprep.mubr.f32.mxu0 0.0
      %4061 = vmatmul.mubr.f32.gmra.mrb[0].mxu0 %v2944
      %v4062 = vpop.f32.mrb[0].mxu0
      %v4063 = vadd.f32 %v3950, %v4062
      %v4064 = vpop.f32.mrb[0].mxu0
      %v4065 = vadd.f32 %v3952, %v4064
      %4066 = vmatprep.mubr.f32.mxu0 0.0
      %4067 = vmatmul.mubr.f32.gmra.mrb[0].mxu0 %v2947
      %v4068 = vpop.f32.mrb[0].mxu0
      %v4069 = vadd.f32 %v3956, %v4068
      %v4070 = vpop.f32.mrb[0].mxu0
      %v4071 = vadd.f32 %v3958, %v4070
      %4072 = vmatprep.mubr.f32.mxu0 0.0
      %4073 = vmatmul.mubr.f32.gmra.mrb[0].mxu0 %v2950
      %v4074 = vpop.f32.mrb[0].mxu0
      %v4075 = vadd.f32 %v3962, %v4074
      %v4076 = vpop.f32.mrb[0].mxu0
      %v4077 = vadd.f32 %v3964, %v4076
      %4078 = vmatprep.mubr.f32.mxu0 0.0
      %4079 = vmatmul.mubr.f32.gmra.mrb[0].mxu0 %v2953
      %v4080 = vpop.f32.mrb[0].mxu0
      %v4081 = vadd.f32 %v3968, %v4080
      %v4082 = vpop.f32.mrb[0].mxu0
      %v4083 = vadd.f32 %v3970, %v4082
      %4084 = vdwg.mxu0
      %v4085 = vmax.f32 %v3135, 0.0
      %v4086 = vmax.f32 %v3137, 0.0
      %v4087 = vmax.f32 %v3361, 0.0
      %v4088 = vmax.f32 %v3363, 0.0
      %v4089 = vmax.f32 %v3587, 0.0
      %v4090 = vmax.f32 %v3589, 0.0
      %v4091 = vmax.f32 %v3813, 0.0
      %v4092 = vmax.f32 %v3815, 0.0
      %v4093 = vmax.f32 %v4039, 0.0
      %v4094 = vmax.f32 %v4041, 0.0
      %v4095 = vmax.f32 %v3141, 0.0
      %v4096 = vmax.f32 %v3143, 0.0
      %v4097 = vmax.f32 %v3367, 0.0
      %v4098 = vmax.f32 %v3369, 0.0
      %v4099 = vmax.f32 %v3593, 0.0
      %v4100 = vmax.f32 %v3595, 0.0
      %v4101 = vmax.f32 %v3819, 0.0
      %v4102 = vmax.f32 %v3821, 0.0
      %v4103 = vmax.f32 %v4045, 0.0
      %v4104 = vmax.f32 %v4047, 0.0
      %v4105 = vmax.f32 %v3147, 0.0
      %v4106 = vmax.f32 %v3149, 0.0
      %v4107 = vmax.f32 %v3373, 0.0
      %v4108 = vmax.f32 %v3375, 0.0
      %v4109 = vmax.f32 %v3599, 0.0
      %v4110 = vmax.f32 %v3601, 0.0
      %v4111 = vmax.f32 %v3825, 0.0
      %v4112 = vmax.f32 %v3827, 0.0
      %v4113 = vmax.f32 %v4051, 0.0
      %v4114 = vmax.f32 %v4053, 0.0
      %v4115 = vmax.f32 %v3153, 0.0
      %v4116 = vmax.f32 %v3155, 0.0
      %v4117 = vmax.f32 %v3379, 0.0
      %v4118 = vmax.f32 %v3381, 0.0
      %v4119 = vmax.f32 %v3605, 0.0
      %v4120 = vmax.f32 %v3607, 0.0
      %v4121 = vmax.f32 %v3831, 0.0
      %v4122 = vmax.f32 %v3833, 0.0
      %v4123 = vmax.f32 %v4057, 0.0
      %v4124 = vmax.f32 %v4059, 0.0
      %v4125 = vmax.f32 %v3159, 0.0
      %v4126 = vmax.f32 %v3161, 0.0
      %v4127 = vmax.f32 %v3385, 0.0
      %v4128 = vmax.f32 %v3387, 0.0
      %v4129 = vmax.f32 %v3611, 0.0
      %v4130 = vmax.f32 %v3613, 0.0
      %v4131 = vmax.f32 %v3837, 0.0
      %v4132 = vmax.f32 %v3839, 0.0
      %v4133 = vmax.f32 %v4063, 0.0
      %v4134 = vmax.f32 %v4065, 0.0
      %v4135 = vmax.f32 %v3165, 0.0
      %v4136 = vmax.f32 %v3167, 0.0
      %v4137 = vmax.f32 %v3391, 0.0
      %v4138 = vmax.f32 %v3393, 0.0
      %v4139 = vmax.f32 %v3617, 0.0
      %v4140 = vmax.f32 %v3619, 0.0
      %v4141 = vmax.f32 %v3843, 0.0
      %v4142 = vmax.f32 %v3845, 0.0
      %v4143 = vmax.f32 %v4069, 0.0
      %v4144 = vmax.f32 %v4071, 0.0
      %v4145 = vmax.f32 %v3171, 0.0
      %v4146 = vmax.f32 %v3173, 0.0
      %v4147 = vmax.f32 %v3397, 0.0
      %v4148 = vmax.f32 %v3399, 0.0
      %v4149 = vmax.f32 %v3623, 0.0
      %v4150 = vmax.f32 %v3625, 0.0
      %v4151 = vmax.f32 %v3849, 0.0
      %v4152 = vmax.f32 %v3851, 0.0
      %v4153 = vmax.f32 %v4075, 0.0
      %v4154 = vmax.f32 %v4077, 0.0
      %v4155 = vmax.f32 %v3177, 0.0
      %v4156 = vmax.f32 %v3179, 0.0
      %v4157 = vmax.f32 %v3403, 0.0
      %v4158 = vmax.f32 %v3405, 0.0
      %v4159 = vmax.f32 %v3629, 0.0
      %v4160 = vmax.f32 %v3631, 0.0
      %v4161 = vmax.f32 %v3855, 0.0
      %v4162 = vmax.f32 %v3857, 0.0
      %v4163 = vmax.f32 %v4081, 0.0
      %v4164 = vmax.f32 %v4083, 0.0
      %v4165 = vld [vmem:[%s3] sm:$0xff]
      %v4166 = vld [vmem:[%s3 + $0x8] sm:$0xff]
      %v4167 = vld [vmem:[%s3 + $0x10] sm:$0xff]
      %v4168 = vld [vmem:[%s3 + $0x18] sm:$0xff]
      %v4169 = vld [vmem:[%s4] sm:$0xff]
      %v4170 = vld [vmem:[%s4 + $0x8] sm:$0xff]
      %v4171 = vld [vmem:[%s4 + $0x10] sm:$0xff]
      %v4172 = vld [vmem:[%s4 + $0x18] sm:$0xff]
      %4174 = vset.pattern.permute.xlu0 0
      %4175 = vperm.xlu0 %4174, %v4169
      %v4176 = vpop.permute.xlu0 %4175
      %4179 = vset.pattern.permute.xlu0 0
      %4180 = vperm.xlu0 %4179, %v4170
      %v4181 = vpop.permute.xlu0 %4180
      %4184 = vset.pattern.permute.xlu0 0
      %4185 = vperm.xlu0 %4184, %v4171
      %v4186 = vpop.permute.xlu0 %4185
      %4189 = vset.pattern.permute.xlu0 0
      %4190 = vperm.xlu0 %4189, %v4172
      %v4191 = vpop.permute.xlu0 %4190
      %v4194 = vsel %vm2205, %v4165, 0
      %v4197 = vsel %vm2205, %v4166, 0
      %v4200 = vsel %vm2205, %v4167, 0
      %v4203 = vsel %vm2205, %v4168, 0
      %4205 = vmatprep.subr.mxu0 %v4086
      %4206 = vmatpush1.msra.mxu0 %v4085
      %4207 = vmatprep.subr.mxu0 %v4096
      %4208 = vmatpush1.msra.mxu0 %v4095
      %4209 = vmatprep.subr.mxu0 %v4106
      %4210 = vmatpush1.msra.mxu0 %v4105
      %4211 = vmatprep.subr.mxu0 %v4116
      %4212 = vmatpush1.msra.mxu0 %v4115
      %4213 = vmatprep.subr.mxu0 %v4126
      %4214 = vmatpush1.msra.mxu0 %v4125
      %4215 = vmatprep.subr.mxu0 %v4136
      %4216 = vmatpush1.msra.mxu0 %v4135
      %4217 = vmatprep.subr.mxu0 %v4146
      %4218 = vmatpush1.msra.mxu0 %v4145
      %4219 = vmatprep.subr.mxu0 %v4156
      %4220 = vmatpush1.msra.mxu0 %v4155
      %4221 = vmatprep.subr.mxu0 0.0
      %4222 = vmatpush1.msra.mxu0 0.0
      %4223 = vmatprep.subr.mxu0 0.0
      %4224 = vmatpush1.msra.mxu0 0.0
      %4225 = vmatprep.subr.mxu0 0.0
      %4226 = vmatpush1.msra.mxu0 0.0
      %4227 = vmatprep.subr.mxu0 0.0
      %4228 = vmatpush1.msra.mxu0 0.0
      %4229 = vmatprep.subr.mxu0 0.0
      %4230 = vmatpush1.msra.mxu0 0.0
      %4231 = vmatprep.subr.mxu0 0.0
      %4232 = vmatpush1.msra.mxu0 0.0
      %4233 = vmatprep.subr.mxu0 0.0
      %4234 = vmatpush1.msra.mxu0 0.0
      %4235 = vmatprep.subr.mxu0 0.0
      %4236 = vmatpush1.msra.mxu0 0.0
      %4237 = vmatprep.subr.mxu0 0.0
      %4238 = vmatpush1.msra.mxu0 0.0
      %4239 = vmatprep.subr.mxu0 0.0
      %4240 = vmatpush1.msra.mxu0 0.0
      %4241 = vmatprep.subr.mxu0 0.0
      %4242 = vmatpush1.msra.mxu0 0.0
      %4243 = vmatprep.subr.mxu0 0.0
      %4244 = vmatpush1.msra.mxu0 0.0
      %4245 = vmatprep.subr.mxu0 0.0
      %4246 = vmatpush1.msra.mxu0 0.0
      %4247 = vmatprep.subr.mxu0 0.0
      %4248 = vmatpush1.msra.mxu0 0.0
      %4249 = vmatprep.subr.mxu0 0.0
      %4250 = vmatpush1.msra.mxu0 0.0
      %4251 = vmatprep.subr.mxu0 0.0
      %4252 = vmatpush1.msra.mxu0 0.0
      %4253 = vmatprep.subr.mxu0 0.0
      %4254 = vmatpush1.msra.mxu0 0.0
      %4255 = vmatprep.subr.mxu0 0.0
      %4256 = vmatpush1.msra.mxu0 0.0
      %4257 = vmatprep.subr.mxu0 0.0
      %4258 = vmatpush1.msra.mxu0 0.0
      %4259 = vmatprep.subr.mxu0 0.0
      %4260 = vmatpush1.msra.mxu0 0.0
      %4261 = vmatprep.subr.mxu0 0.0
      %4262 = vmatpush1.msra.mxu0 0.0
      %4263 = vmatprep.subr.mxu0 0.0
      %4264 = vmatpush1.msra.mxu0 0.0
      %4265 = vmatprep.subr.mxu0 0.0
      %4266 = vmatpush1.msra.mxu0 0.0
      %4267 = vmatprep.subr.mxu0 0.0
      %4268 = vmatpush1.msra.mxu0 0.0
      %4269 = vmatprep.mubr.f32.mxu0 0.0
      %4270 = vmatmul.mubr.f32.gmra.mrb[0].mxu0 %v4194
      %v4271 = vpop.f32.mrb[0].mxu0
      %v4272 = vadd.f32 %v4176, %v4271
      %v4273 = vpop.f32.mrb[0].mxu0
      %v4274 = vadd.f32 %v4176, %v4273
      %4275 = vmatprep.mubr.f32.mxu0 0.0
      %4276 = vmatmul.mubr.f32.gmra.mrb[0].mxu0 %v4197
      %v4277 = vpop.f32.mrb[0].mxu0
      %v4278 = vadd.f32 %v4181, %v4277
      %v4279 = vpop.f32.mrb[0].mxu0
      %v4280 = vadd.f32 %v4181, %v4279
      %4281 = vmatprep.mubr.f32.mxu0 0.0
      %4282 = vmatmul.mubr.f32.gmra.mrb[0].mxu0 %v4200
      %v4283 = vpop.f32.mrb[0].mxu0
      %v4284 = vadd.f32 %v4186, %v4283
      %v4285 = vpop.f32.mrb[0].mxu0
      %v4286 = vadd.f32 %v4186, %v4285
      %4287 = vmatprep.mubr.f32.mxu0 0.0
      %4288 = vmatmul.mubr.f32.gmra.mrb[0].mxu0 %v4203
      %v4289 = vpop.f32.mrb[0].mxu0
      %v4290 = vadd.f32 %v4191, %v4289
      %v4291 = vpop.f32.mrb[0].mxu0
      %v4292 = vadd.f32 %v4191, %v4291
      %4293 = vdwg.mxu0
      %4294 = vmatprep.subr.mxu0 %v4088
      %4295 = vmatpush1.msra.mxu0 %v4087
      %4296 = vmatprep.subr.mxu0 %v4098
      %4297 = vmatpush1.msra.mxu0 %v4097
      %4298 = vmatprep.subr.mxu0 %v4108
      %4299 = vmatpush1.msra.mxu0 %v4107
      %4300 = vmatprep.subr.mxu0 %v4118
      %4301 = vmatpush1.msra.mxu0 %v4117
      %4302 = vmatprep.subr.mxu0 %v4128
      %4303 = vmatpush1.msra.mxu0 %v4127
      %4304 = vmatprep.subr.mxu0 %v4138
      %4305 = vmatpush1.msra.mxu0 %v4137
      %4306 = vmatprep.subr.mxu0 %v4148
      %4307 = vmatpush1.msra.mxu0 %v4147
      %4308 = vmatprep.subr.mxu0 %v4158
      %4309 = vmatpush1.msra.mxu0 %v4157
      %4310 = vmatprep.subr.mxu0 0.0
      %4311 = vmatpush1.msra.mxu0 0.0
      %4312 = vmatprep.subr.mxu0 0.0
      %4313 = vmatpush1.msra.mxu0 0.0
      %4314 = vmatprep.subr.mxu0 0.0
      %4315 = vmatpush1.msra.mxu0 0.0
      %4316 = vmatprep.subr.mxu0 0.0
      %4317 = vmatpush1.msra.mxu0 0.0
      %4318 = vmatprep.subr.mxu0 0.0
      %4319 = vmatpush1.msra.mxu0 0.0
      %4320 = vmatprep.subr.mxu0 0.0
      %4321 = vmatpush1.msra.mxu0 0.0
      %4322 = vmatprep.subr.mxu0 0.0
      %4323 = vmatpush1.msra.mxu0 0.0
      %4324 = vmatprep.subr.mxu0 0.0
      %4325 = vmatpush1.msra.mxu0 0.0
      %4326 = vmatprep.subr.mxu0 0.0
      %4327 = vmatpush1.msra.mxu0 0.0
      %4328 = vmatprep.subr.mxu0 0.0
      %4329 = vmatpush1.msra.mxu0 0.0
      %4330 = vmatprep.subr.mxu0 0.0
      %4331 = vmatpush1.msra.mxu0 0.0
      %4332 = vmatprep.subr.mxu0 0.0
      %4333 = vmatpush1.msra.mxu0 0.0
      %4334 = vmatprep.subr.mxu0 0.0
      %4335 = vmatpush1.msra.mxu0 0.0
      %4336 = vmatprep.subr.mxu0 0.0
      %4337 = vmatpush1.msra.mxu0 0.0
      %4338 = vmatprep.subr.mxu0 0.0
      %4339 = vmatpush1.msra.mxu0 0.0
      %4340 = vmatprep.subr.mxu0 0.0
      %4341 = vmatpush1.msra.mxu0 0.0
      %4342 = vmatprep.subr.mxu0 0.0
      %4343 = vmatpush1.msra.mxu0 0.0
      %4344 = vmatprep.subr.mxu0 0.0
      %4345 = vmatpush1.msra.mxu0 0.0
      %4346 = vmatprep.subr.mxu0 0.0
      %4347 = vmatpush1.msra.mxu0 0.0
      %4348 = vmatprep.subr.mxu0 0.0
      %4349 = vmatpush1.msra.mxu0 0.0
      %4350 = vmatprep.subr.mxu0 0.0
      %4351 = vmatpush1.msra.mxu0 0.0
      %4352 = vmatprep.subr.mxu0 0.0
      %4353 = vmatpush1.msra.mxu0 0.0
      %4354 = vmatprep.subr.mxu0 0.0
      %4355 = vmatpush1.msra.mxu0 0.0
      %4356 = vmatprep.subr.mxu0 0.0
      %4357 = vmatpush1.msra.mxu0 0.0
      %4358 = vmatprep.mubr.f32.mxu0 0.0
      %4359 = vmatmul.mubr.f32.gmra.mrb[0].mxu0 %v4194
      %v4360 = vpop.f32.mrb[0].mxu0
      %v4361 = vadd.f32 %v4176, %v4360
      %v4362 = vpop.f32.mrb[0].mxu0
      %v4363 = vadd.f32 %v4176, %v4362
      %4364 = vmatprep.mubr.f32.mxu0 0.0
      %4365 = vmatmul.mubr.f32.gmra.mrb[0].mxu0 %v4197
      %v4366 = vpop.f32.mrb[0].mxu0
      %v4367 = vadd.f32 %v4181, %v4366
      %v4368 = vpop.f32.mrb[0].mxu0
      %v4369 = vadd.f32 %v4181, %v4368
      %4370 = vmatprep.mubr.f32.mxu0 0.0
      %4371 = vmatmul.mubr.f32.gmra.mrb[0].mxu0 %v4200
      %v4372 = vpop.f32.mrb[0].mxu0
      %v4373 = vadd.f32 %v4186, %v4372
      %v4374 = vpop.f32.mrb[0].mxu0
      %v4375 = vadd.f32 %v4186, %v4374
      %4376 = vmatprep.mubr.f32.mxu0 0.0
      %4377 = vmatmul.mubr.f32.gmra.mrb[0].mxu0 %v4203
      %v4378 = vpop.f32.mrb[0].mxu0
      %v4379 = vadd.f32 %v4191, %v4378
      %v4380 = vpop.f32.mrb[0].mxu0
      %v4381 = vadd.f32 %v4191, %v4380
      %4382 = vdwg.mxu0
      %4383 = vmatprep.subr.mxu0 %v4090
      %4384 = vmatpush1.msra.mxu0 %v4089
      %4385 = vmatprep.subr.mxu0 %v4100
      %4386 = vmatpush1.msra.mxu0 %v4099
      %4387 = vmatprep.subr.mxu0 %v4110
      %4388 = vmatpush1.msra.mxu0 %v4109
      %4389 = vmatprep.subr.mxu0 %v4120
      %4390 = vmatpush1.msra.mxu0 %v4119
      %4391 = vmatprep.subr.mxu0 %v4130
      %4392 = vmatpush1.msra.mxu0 %v4129
      %4393 = vmatprep.subr.mxu0 %v4140
      %4394 = vmatpush1.msra.mxu0 %v4139
      %4395 = vmatprep.subr.mxu0 %v4150
      %4396 = vmatpush1.msra.mxu0 %v4149
      %4397 = vmatprep.subr.mxu0 %v4160
      %4398 = vmatpush1.msra.mxu0 %v4159
      %4399 = vmatprep.subr.mxu0 0.0
      %4400 = vmatpush1.msra.mxu0 0.0
      %4401 = vmatprep.subr.mxu0 0.0
      %4402 = vmatpush1.msra.mxu0 0.0
      %4403 = vmatprep.subr.mxu0 0.0
      %4404 = vmatpush1.msra.mxu0 0.0
      %4405 = vmatprep.subr.mxu0 0.0
      %4406 = vmatpush1.msra.mxu0 0.0
      %4407 = vmatprep.subr.mxu0 0.0
      %4408 = vmatpush1.msra.mxu0 0.0
      %4409 = vmatprep.subr.mxu0 0.0
      %4410 = vmatpush1.msra.mxu0 0.0
      %4411 = vmatprep.subr.mxu0 0.0
      %4412 = vmatpush1.msra.mxu0 0.0
      %4413 = vmatprep.subr.mxu0 0.0
      %4414 = vmatpush1.msra.mxu0 0.0
      %4415 = vmatprep.subr.mxu0 0.0
      %4416 = vmatpush1.msra.mxu0 0.0
      %4417 = vmatprep.subr.mxu0 0.0
      %4418 = vmatpush1.msra.mxu0 0.0
      %4419 = vmatprep.subr.mxu0 0.0
      %4420 = vmatpush1.msra.mxu0 0.0
      %4421 = vmatprep.subr.mxu0 0.0
      %4422 = vmatpush1.msra.mxu0 0.0
      %4423 = vmatprep.subr.mxu0 0.0
      %4424 = vmatpush1.msra.mxu0 0.0
      %4425 = vmatprep.subr.mxu0 0.0
      %4426 = vmatpush1.msra.mxu0 0.0
      %4427 = vmatprep.subr.mxu0 0.0
      %4428 = vmatpush1.msra.mxu0 0.0
      %4429 = vmatprep.subr.mxu0 0.0
      %4430 = vmatpush1.msra.mxu0 0.0
      %4431 = vmatprep.subr.mxu0 0.0
      %4432 = vmatpush1.msra.mxu0 0.0
      %4433 = vmatprep.subr.mxu0 0.0
      %4434 = vmatpush1.msra.mxu0 0.0
      %4435 = vmatprep.subr.mxu0 0.0
      %4436 = vmatpush1.msra.mxu0 0.0
      %4437 = vmatprep.subr.mxu0 0.0
      %4438 = vmatpush1.msra.mxu0 0.0
      %4439 = vmatprep.subr.mxu0 0.0
      %4440 = vmatpush1.msra.mxu0 0.0
      %4441 = vmatprep.subr.mxu0 0.0
      %4442 = vmatpush1.msra.mxu0 0.0
      %4443 = vmatprep.subr.mxu0 0.0
      %4444 = vmatpush1.msra.mxu0 0.0
      %4445 = vmatprep.subr.mxu0 0.0
      %4446 = vmatpush1.msra.mxu0 0.0
      %4447 = vmatprep.mubr.f32.mxu0 0.0
      %4448 = vmatmul.mubr.f32.gmra.mrb[0].mxu0 %v4194
      %v4449 = vpop.f32.mrb[0].mxu0
      %v4450 = vadd.f32 %v4176, %v4449
      %v4451 = vpop.f32.mrb[0].mxu0
      %v4452 = vadd.f32 %v4176, %v4451
      %4453 = vmatprep.mubr.f32.mxu0 0.0
      %4454 = vmatmul.mubr.f32.gmra.mrb[0].mxu0 %v4197
      %v4455 = vpop.f32.mrb[0].mxu0
      %v4456 = vadd.f32 %v4181, %v4455
      %v4457 = vpop.f32.mrb[0].mxu0
      %v4458 = vadd.f32 %v4181, %v4457
      %4459 = vmatprep.mubr.f32.mxu0 0.0
      %4460 = vmatmul.mubr.f32.gmra.mrb[0].mxu0 %v4200
      %v4461 = vpop.f32.mrb[0].mxu0
      %v4462 = vadd.f32 %v4186, %v4461
      %v4463 = vpop.f32.mrb[0].mxu0
      %v4464 = vadd.f32 %v4186, %v4463
      %4465 = vmatprep.mubr.f32.mxu0 0.0
      %4466 = vmatmul.mubr.f32.gmra.mrb[0].mxu0 %v4203
      %v4467 = vpop.f32.mrb[0].mxu0
      %v4468 = vadd.f32 %v4191, %v4467
      %v4469 = vpop.f32.mrb[0].mxu0
      %v4470 = vadd.f32 %v4191, %v4469
      %4471 = vdwg.mxu0
      %4472 = vmatprep.subr.mxu0 %v4092
      %4473 = vmatpush1.msra.mxu0 %v4091
      %4474 = vmatprep.subr.mxu0 %v4102
      %4475 = vmatpush1.msra.mxu0 %v4101
      %4476 = vmatprep.subr.mxu0 %v4112
      %4477 = vmatpush1.msra.mxu0 %v4111
      %4478 = vmatprep.subr.mxu0 %v4122
      %4479 = vmatpush1.msra.mxu0 %v4121
      %4480 = vmatprep.subr.mxu0 %v4132
      %4481 = vmatpush1.msra.mxu0 %v4131
      %4482 = vmatprep.subr.mxu0 %v4142
      %4483 = vmatpush1.msra.mxu0 %v4141
      %4484 = vmatprep.subr.mxu0 %v4152
      %4485 = vmatpush1.msra.mxu0 %v4151
      %4486 = vmatprep.subr.mxu0 %v4162
      %4487 = vmatpush1.msra.mxu0 %v4161
      %4488 = vmatprep.subr.mxu0 0.0
      %4489 = vmatpush1.msra.mxu0 0.0
      %4490 = vmatprep.subr.mxu0 0.0
      %4491 = vmatpush1.msra.mxu0 0.0
      %4492 = vmatprep.subr.mxu0 0.0
      %4493 = vmatpush1.msra.mxu0 0.0
      %4494 = vmatprep.subr.mxu0 0.0
      %4495 = vmatpush1.msra.mxu0 0.0
      %4496 = vmatprep.subr.mxu0 0.0
      %4497 = vmatpush1.msra.mxu0 0.0
      %4498 = vmatprep.subr.mxu0 0.0
      %4499 = vmatpush1.msra.mxu0 0.0
      %4500 = vmatprep.subr.mxu0 0.0
      %4501 = vmatpush1.msra.mxu0 0.0
      %4502 = vmatprep.subr.mxu0 0.0
      %4503 = vmatpush1.msra.mxu0 0.0
      %4504 = vmatprep.subr.mxu0 0.0
      %4505 = vmatpush1.msra.mxu0 0.0
      %4506 = vmatprep.subr.mxu0 0.0
      %4507 = vmatpush1.msra.mxu0 0.0
      %4508 = vmatprep.subr.mxu0 0.0
      %4509 = vmatpush1.msra.mxu0 0.0
      %4510 = vmatprep.subr.mxu0 0.0
      %4511 = vmatpush1.msra.mxu0 0.0
      %4512 = vmatprep.subr.mxu0 0.0
      %4513 = vmatpush1.msra.mxu0 0.0
      %4514 = vmatprep.subr.mxu0 0.0
      %4515 = vmatpush1.msra.mxu0 0.0
      %4516 = vmatprep.subr.mxu0 0.0
      %4517 = vmatpush1.msra.mxu0 0.0
      %4518 = vmatprep.subr.mxu0 0.0
      %4519 = vmatpush1.msra.mxu0 0.0
      %4520 = vmatprep.subr.mxu0 0.0
      %4521 = vmatpush1.msra.mxu0 0.0
      %4522 = vmatprep.subr.mxu0 0.0
      %4523 = vmatpush1.msra.mxu0 0.0
      %4524 = vmatprep.subr.mxu0 0.0
      %4525 = vmatpush1.msra.mxu0 0.0
      %4526 = vmatprep.subr.mxu0 0.0
      %4527 = vmatpush1.msra.mxu0 0.0
      %4528 = vmatprep.subr.mxu0 0.0
      %4529 = vmatpush1.msra.mxu0 0.0
      %4530 = vmatprep.subr.mxu0 0.0
      %4531 = vmatpush1.msra.mxu0 0.0
      %4532 = vmatprep.subr.mxu0 0.0
      %4533 = vmatpush1.msra.mxu0 0.0
      %4534 = vmatprep.subr.mxu0 0.0
      %4535 = vmatpush1.msra.mxu0 0.0
      %4536 = vmatprep.mubr.f32.mxu0 0.0
      %4537 = vmatmul.mubr.f32.gmra.mrb[0].mxu0 %v4194
      %v4538 = vpop.f32.mrb[0].mxu0
      %v4539 = vadd.f32 %v4176, %v4538
      %v4540 = vpop.f32.mrb[0].mxu0
      %v4541 = vadd.f32 %v4176, %v4540
      %4542 = vmatprep.mubr.f32.mxu0 0.0
      %4543 = vmatmul.mubr.f32.gmra.mrb[0].mxu0 %v4197
      %v4544 = vpop.f32.mrb[0].mxu0
      %v4545 = vadd.f32 %v4181, %v4544
      %v4546 = vpop.f32.mrb[0].mxu0
      %v4547 = vadd.f32 %v4181, %v4546
      %4548 = vmatprep.mubr.f32.mxu0 0.0
      %4549 = vmatmul.mubr.f32.gmra.mrb[0].mxu0 %v4200
      %v4550 = vpop.f32.mrb[0].mxu0
      %v4551 = vadd.f32 %v4186, %v4550
      %v4552 = vpop.f32.mrb[0].mxu0
      %v4553 = vadd.f32 %v4186, %v4552
      %4554 = vmatprep.mubr.f32.mxu0 0.0
      %4555 = vmatmul.mubr.f32.gmra.mrb[0].mxu0 %v4203
      %v4556 = vpop.f32.mrb[0].mxu0
      %v4557 = vadd.f32 %v4191, %v4556
      %v4558 = vpop.f32.mrb[0].mxu0
      %v4559 = vadd.f32 %v4191, %v4558
      %4560 = vdwg.mxu0
      %4561 = vmatprep.subr.mxu0 %v4094
      %4562 = vmatpush1.msra.mxu0 %v4093
      %4563 = vmatprep.subr.mxu0 %v4104
      %4564 = vmatpush1.msra.mxu0 %v4103
      %4565 = vmatprep.subr.mxu0 %v4114
      %4566 = vmatpush1.msra.mxu0 %v4113
      %4567 = vmatprep.subr.mxu0 %v4124
      %4568 = vmatpush1.msra.mxu0 %v4123
      %4569 = vmatprep.subr.mxu0 %v4134
      %4570 = vmatpush1.msra.mxu0 %v4133
      %4571 = vmatprep.subr.mxu0 %v4144
      %4572 = vmatpush1.msra.mxu0 %v4143
      %4573 = vmatprep.subr.mxu0 %v4154
      %4574 = vmatpush1.msra.mxu0 %v4153
      %4575 = vmatprep.subr.mxu0 %v4164
      %4576 = vmatpush1.msra.mxu0 %v4163
      %4577 = vmatprep.subr.mxu0 0.0
      %4578 = vmatpush1.msra.mxu0 0.0
      %4579 = vmatprep.subr.mxu0 0.0
      %4580 = vmatpush1.msra.mxu0 0.0
      %4581 = vmatprep.subr.mxu0 0.0
      %4582 = vmatpush1.msra.mxu0 0.0
      %4583 = vmatprep.subr.mxu0 0.0
      %4584 = vmatpush1.msra.mxu0 0.0
      %4585 = vmatprep.subr.mxu0 0.0
      %4586 = vmatpush1.msra.mxu0 0.0
      %4587 = vmatprep.subr.mxu0 0.0
      %4588 = vmatpush1.msra.mxu0 0.0
      %4589 = vmatprep.subr.mxu0 0.0
      %4590 = vmatpush1.msra.mxu0 0.0
      %4591 = vmatprep.subr.mxu0 0.0
      %4592 = vmatpush1.msra.mxu0 0.0
      %4593 = vmatprep.subr.mxu0 0.0
      %4594 = vmatpush1.msra.mxu0 0.0
      %4595 = vmatprep.subr.mxu0 0.0
      %4596 = vmatpush1.msra.mxu0 0.0
      %4597 = vmatprep.subr.mxu0 0.0
      %4598 = vmatpush1.msra.mxu0 0.0
      %4599 = vmatprep.subr.mxu0 0.0
      %4600 = vmatpush1.msra.mxu0 0.0
      %4601 = vmatprep.subr.mxu0 0.0
      %4602 = vmatpush1.msra.mxu0 0.0
      %4603 = vmatprep.subr.mxu0 0.0
      %4604 = vmatpush1.msra.mxu0 0.0
      %4605 = vmatprep.subr.mxu0 0.0
      %4606 = vmatpush1.msra.mxu0 0.0
      %4607 = vmatprep.subr.mxu0 0.0
      %4608 = vmatpush1.msra.mxu0 0.0
      %4609 = vmatprep.subr.mxu0 0.0
      %4610 = vmatpush1.msra.mxu0 0.0
      %4611 = vmatprep.subr.mxu0 0.0
      %4612 = vmatpush1.msra.mxu0 0.0
      %4613 = vmatprep.subr.mxu0 0.0
      %4614 = vmatpush1.msra.mxu0 0.0
      %4615 = vmatprep.subr.mxu0 0.0
      %4616 = vmatpush1.msra.mxu0 0.0
      %4617 = vmatprep.subr.mxu0 0.0
      %4618 = vmatpush1.msra.mxu0 0.0
      %4619 = vmatprep.subr.mxu0 0.0
      %4620 = vmatpush1.msra.mxu0 0.0
      %4621 = vmatprep.subr.mxu0 0.0
      %4622 = vmatpush1.msra.mxu0 0.0
      %4623 = vmatprep.subr.mxu0 0.0
      %4624 = vmatpush1.msra.mxu0 0.0
      %4625 = vmatprep.mubr.f32.mxu0 0.0
      %4626 = vmatmul.mubr.f32.gmra.mrb[0].mxu0 %v4194
      %v4627 = vpop.f32.mrb[0].mxu0
      %v4628 = vadd.f32 %v4176, %v4627
      %v4629 = vpop.f32.mrb[0].mxu0
      %v4630 = vadd.f32 %v4176, %v4629
      %4631 = vmatprep.mubr.f32.mxu0 0.0
      %4632 = vmatmul.mubr.f32.gmra.mrb[0].mxu0 %v4197
      %v4633 = vpop.f32.mrb[0].mxu0
      %v4634 = vadd.f32 %v4181, %v4633
      %v4635 = vpop.f32.mrb[0].mxu0
      %v4636 = vadd.f32 %v4181, %v4635
      %4637 = vmatprep.mubr.f32.mxu0 0.0
      %4638 = vmatmul.mubr.f32.gmra.mrb[0].mxu0 %v4200
      %v4639 = vpop.f32.mrb[0].mxu0
      %v4640 = vadd.f32 %v4186, %v4639
      %v4641 = vpop.f32.mrb[0].mxu0
      %v4642 = vadd.f32 %v4186, %v4641
      %4643 = vmatprep.mubr.f32.mxu0 0.0
      %4644 = vmatmul.mubr.f32.gmra.mrb[0].mxu0 %v4203
      %v4645 = vpop.f32.mrb[0].mxu0
      %v4646 = vadd.f32 %v4191, %v4645
      %v4647 = vpop.f32.mrb[0].mxu0
      %v4648 = vadd.f32 %v4191, %v4647
      %4649 = vdwg.mxu0
      %v4650 = vmax.f32 %v4272, 0.0
      %v4651 = vmax.f32 %v4274, 0.0
      %v4652 = vmax.f32 %v4361, 0.0
      %v4653 = vmax.f32 %v4363, 0.0
      %v4654 = vmax.f32 %v4450, 0.0
      %v4655 = vmax.f32 %v4452, 0.0
      %v4656 = vmax.f32 %v4539, 0.0
      %v4657 = vmax.f32 %v4541, 0.0
      %v4658 = vmax.f32 %v4628, 0.0
      %v4659 = vmax.f32 %v4630, 0.0
      %v4660 = vmax.f32 %v4278, 0.0
      %v4661 = vmax.f32 %v4280, 0.0
      %v4662 = vmax.f32 %v4367, 0.0
      %v4663 = vmax.f32 %v4369, 0.0
      %v4664 = vmax.f32 %v4456, 0.0
      %v4665 = vmax.f32 %v4458, 0.0
      %v4666 = vmax.f32 %v4545, 0.0
      %v4667 = vmax.f32 %v4547, 0.0
      %v4668 = vmax.f32 %v4634, 0.0
      %v4669 = vmax.f32 %v4636, 0.0
      %v4670 = vmax.f32 %v4284, 0.0
      %v4671 = vmax.f32 %v4286, 0.0
      %v4672 = vmax.f32 %v4373, 0.0
      %v4673 = vmax.f32 %v4375, 0.0
      %v4674 = vmax.f32 %v4462, 0.0
      %v4675 = vmax.f32 %v4464, 0.0
      %v4676 = vmax.f32 %v4551, 0.0
      %v4677 = vmax.f32 %v4553, 0.0
      %v4678 = vmax.f32 %v4640, 0.0
      %v4679 = vmax.f32 %v4642, 0.0
      %v4680 = vmax.f32 %v4290, 0.0
      %v4681 = vmax.f32 %v4292, 0.0
      %v4682 = vmax.f32 %v4379, 0.0
      %v4683 = vmax.f32 %v4381, 0.0
      %v4684 = vmax.f32 %v4468, 0.0
      %v4685 = vmax.f32 %v4470, 0.0
      %v4686 = vmax.f32 %v4557, 0.0
      %v4687 = vmax.f32 %v4559, 0.0
      %v4688 = vmax.f32 %v4646, 0.0
      %v4689 = vmax.f32 %v4648, 0.0
      %v4690 = vlaneseq
      %v4691 = vand.u32 %v4690, 127
      %v4692 = vadd.s32 %v4691, 128
      %v4693 = vadd.s32 %v4691, 256
      %v4694 = vadd.s32 %v4691, 384
      %v4695 = vadd.s32 %v4691, 512
      %v4696 = vadd.s32 %v4691, 640
      %v4697 = vadd.s32 %v4691, 768
      %v4698 = vadd.s32 %v4691, 896
      %v4699 = vadd.s32 %v4691, 1024
      %v4700 = vadd.s32 %v4691, 1152
      %vm4701 = vcmp.lt.s32.totalorder %v4691, 0
      %v4702 = vsub.s32 0, %v4691
      %v4703 = vsel %vm4701, %v4702, %v4691
      %v4704 = vmul.u32.u64.compose %v4703, 3435973837
      %v4705 = vextract.low.u32 %v4704
      %v4706 = vextract.high.u32 %v4704
      %v4707 = vshrl.u32 %v4706, 5
      %v4708 = vmul.u32 %v4707, 40
      %v4709 = vsub.s32 %v4703, %v4708
      %v4710 = vsub.s32 0, %v4709
      %v4711 = vsel %vm4701, %v4710, %v4709
      %vm4712 = vcmp.lt.s32.totalorder %v4692, 0
      %v4713 = vsub.s32 0, %v4692
      %v4714 = vsel %vm4712, %v4713, %v4692
      %v4715 = vmul.u32.u64.compose %v4714, 3435973837
      %v4716 = vextract.low.u32 %v4715
      %v4717 = vextract.high.u32 %v4715
      %v4718 = vshrl.u32 %v4717, 5
      %v4719 = vmul.u32 %v4718, 40
      %v4720 = vsub.s32 %v4714, %v4719
      %v4721 = vsub.s32 0, %v4720
      %v4722 = vsel %vm4712, %v4721, %v4720
      %vm4723 = vcmp.lt.s32.totalorder %v4693, 0
      %v4724 = vsub.s32 0, %v4693
      %v4725 = vsel %vm4723, %v4724, %v4693
      %v4726 = vmul.u32.u64.compose %v4725, 3435973837
      %v4727 = vextract.low.u32 %v4726
      %v4728 = vextract.high.u32 %v4726
      %v4729 = vshrl.u32 %v4728, 5
      %v4730 = vmul.u32 %v4729, 40
      %v4731 = vsub.s32 %v4725, %v4730
      %v4732 = vsub.s32 0, %v4731
      %v4733 = vsel %vm4723, %v4732, %v4731
      %vm4734 = vcmp.lt.s32.totalorder %v4694, 0
      %v4735 = vsub.s32 0, %v4694
      %v4736 = vsel %vm4734, %v4735, %v4694
      %v4737 = vmul.u32.u64.compose %v4736, 3435973837
      %v4738 = vextract.low.u32 %v4737
      %v4739 = vextract.high.u32 %v4737
      %v4740 = vshrl.u32 %v4739, 5
      %v4741 = vmul.u32 %v4740, 40
      %v4742 = vsub.s32 %v4736, %v4741
      %v4743 = vsub.s32 0, %v4742
      %v4744 = vsel %vm4734, %v4743, %v4742
      %vm4745 = vcmp.lt.s32.totalorder %v4695, 0
      %v4746 = vsub.s32 0, %v4695
      %v4747 = vsel %vm4745, %v4746, %v4695
      %v4748 = vmul.u32.u64.compose %v4747, 3435973837
      %v4749 = vextract.low.u32 %v4748
      %v4750 = vextract.high.u32 %v4748
      %v4751 = vshrl.u32 %v4750, 5
      %v4752 = vmul.u32 %v4751, 40
      %v4753 = vsub.s32 %v4747, %v4752
      %v4754 = vsub.s32 0, %v4753
      %v4755 = vsel %vm4745, %v4754, %v4753
      %vm4756 = vcmp.lt.s32.totalorder %v4696, 0
      %v4757 = vsub.s32 0, %v4696
      %v4758 = vsel %vm4756, %v4757, %v4696
      %v4759 = vmul.u32.u64.compose %v4758, 3435973837
      %v4760 = vextract.low.u32 %v4759
      %v4761 = vextract.high.u32 %v4759
      %v4762 = vshrl.u32 %v4761, 5
      %v4763 = vmul.u32 %v4762, 40
      %v4764 = vsub.s32 %v4758, %v4763
      %v4765 = vsub.s32 0, %v4764
      %v4766 = vsel %vm4756, %v4765, %v4764
      %vm4767 = vcmp.lt.s32.totalorder %v4697, 0
      %v4768 = vsub.s32 0, %v4697
      %v4769 = vsel %vm4767, %v4768, %v4697
      %v4770 = vmul.u32.u64.compose %v4769, 3435973837
      %v4771 = vextract.low.u32 %v4770
      %v4772 = vextract.high.u32 %v4770
      %v4773 = vshrl.u32 %v4772, 5
      %v4774 = vmul.u32 %v4773, 40
      %v4775 = vsub.s32 %v4769, %v4774
      %v4776 = vsub.s32 0, %v4775
      %v4777 = vsel %vm4767, %v4776, %v4775
      %vm4778 = vcmp.lt.s32.totalorder %v4698, 0
      %v4779 = vsub.s32 0, %v4698
      %v4780 = vsel %vm4778, %v4779, %v4698
      %v4781 = vmul.u32.u64.compose %v4780, 3435973837
      %v4782 = vextract.low.u32 %v4781
      %v4783 = vextract.high.u32 %v4781
      %v4784 = vshrl.u32 %v4783, 5
      %v4785 = vmul.u32 %v4784, 40
      %v4786 = vsub.s32 %v4780, %v4785
      %v4787 = vsub.s32 0, %v4786
      %v4788 = vsel %vm4778, %v4787, %v4786
      %vm4789 = vcmp.lt.s32.totalorder %v4699, 0
      %v4790 = vsub.s32 0, %v4699
      %v4791 = vsel %vm4789, %v4790, %v4699
      %v4792 = vmul.u32.u64.compose %v4791, 3435973837
      %v4793 = vextract.low.u32 %v4792
      %v4794 = vextract.high.u32 %v4792
      %v4795 = vshrl.u32 %v4794, 5
      %v4796 = vmul.u32 %v4795, 40
      %v4797 = vsub.s32 %v4791, %v4796
      %v4798 = vsub.s32 0, %v4797
      %v4799 = vsel %vm4789, %v4798, %v4797
      %vm4800 = vcmp.lt.s32.totalorder %v4700, 0
      %v4801 = vsub.s32 0, %v4700
      %v4802 = vsel %vm4800, %v4801, %v4700
      %v4803 = vmul.u32.u64.compose %v4802, 3435973837
      %v4804 = vextract.low.u32 %v4803
      %v4805 = vextract.high.u32 %v4803
      %v4806 = vshrl.u32 %v4805, 5
      %v4807 = vmul.u32 %v4806, 40
      %v4808 = vsub.s32 %v4802, %v4807
      %v4809 = vsub.s32 0, %v4808
      %v4810 = vsel %vm4800, %v4809, %v4808
      %vm4811 = vcmp.ne.s32.totalorder %v4711, 0
      %vm4812 = vcmp.ne.s32.totalorder %v4722, 0
      %vm4813 = vcmp.ne.s32.totalorder %v4733, 0
      %vm4814 = vcmp.ne.s32.totalorder %v4744, 0
      %vm4815 = vcmp.ne.s32.totalorder %v4755, 0
      %vm4816 = vcmp.ne.s32.totalorder %v4766, 0
      %vm4817 = vcmp.ne.s32.totalorder %v4777, 0
      %vm4818 = vcmp.ne.s32.totalorder %v4788, 0
      %vm4819 = vcmp.ne.s32.totalorder %v4799, 0
      %vm4820 = vcmp.ne.s32.totalorder %v4810, 0
      %vm4821 = vcmp.lt.s32.totalorder %v4711, 0
      %vm4822 = vcmp.lt.s32.totalorder %v4722, 0
      %vm4823 = vcmp.lt.s32.totalorder %v4733, 0
      %vm4824 = vcmp.lt.s32.totalorder %v4744, 0
      %vm4825 = vcmp.lt.s32.totalorder %v4755, 0
      %vm4826 = vcmp.lt.s32.totalorder %v4766, 0
      %vm4827 = vcmp.lt.s32.totalorder %v4777, 0
      %vm4828 = vcmp.lt.s32.totalorder %v4788, 0
      %vm4829 = vcmp.lt.s32.totalorder %v4799, 0
      %vm4830 = vcmp.lt.s32.totalorder %v4810, 0
      %vm4831 = vmand %vm4821, %vm4811
      %vm4832 = vmand %vm4822, %vm4812
      %vm4833 = vmand %vm4823, %vm4813
      %vm4834 = vmand %vm4824, %vm4814
      %vm4835 = vmand %vm4825, %vm4815
      %vm4836 = vmand %vm4826, %vm4816
      %vm4837 = vmand %vm4827, %vm4817
      %vm4838 = vmand %vm4828, %vm4818
      %vm4839 = vmand %vm4829, %vm4819
      %vm4840 = vmand %vm4830, %vm4820
      %v4841 = vadd.s32 %v4711, 40
      %v4842 = vadd.s32 %v4722, 40
      %v4843 = vadd.s32 %v4733, 40
      %v4844 = vadd.s32 %v4744, 40
      %v4845 = vadd.s32 %v4755, 40
      %v4846 = vadd.s32 %v4766, 40
      %v4847 = vadd.s32 %v4777, 40
      %v4848 = vadd.s32 %v4788, 40
      %v4849 = vadd.s32 %v4799, 40
      %v4850 = vadd.s32 %v4810, 40
      %v4851 = vsel %vm4831, %v4841, %v4711
      %v4852 = vsel %vm4832, %v4842, %v4722
      %v4853 = vsel %vm4833, %v4843, %v4733
      %v4854 = vsel %vm4834, %v4844, %v4744
      %v4855 = vsel %vm4835, %v4845, %v4755
      %v4856 = vsel %vm4836, %v4846, %v4766
      %v4857 = vsel %vm4837, %v4847, %v4777
      %v4858 = vsel %vm4838, %v4848, %v4788
      %v4859 = vsel %vm4839, %v4849, %v4799
      %v4860 = vsel %vm4840, %v4850, %v4810
      %vm4861 = vcmp.lt.s32.totalorder %v4851, 32
      %vm4862 = vcmp.lt.s32.totalorder %v4852, 32
      %vm4863 = vcmp.lt.s32.totalorder %v4853, 32
      %vm4864 = vcmp.lt.s32.totalorder %v4854, 32
      %vm4865 = vcmp.lt.s32.totalorder %v4855, 32
      %vm4866 = vcmp.lt.s32.totalorder %v4856, 32
      %vm4867 = vcmp.lt.s32.totalorder %v4857, 32
      %vm4868 = vcmp.lt.s32.totalorder %v4858, 32
      %vm4869 = vcmp.lt.s32.totalorder %v4859, 32
      %vm4870 = vcmp.lt.s32.totalorder %v4860, 32
      %v4871 = vsel %vm4861, %v4650, 0.0
      %v4872 = vsel %vm4862, %v4651, 0.0
      %v4873 = vsel %vm4863, %v4652, 0.0
      %v4874 = vsel %vm4864, %v4653, 0.0
      %v4875 = vsel %vm4865, %v4654, 0.0
      %v4876 = vsel %vm4866, %v4655, 0.0
      %v4877 = vsel %vm4867, %v4656, 0.0
      %v4878 = vsel %vm4868, %v4657, 0.0
      %v4879 = vsel %vm4869, %v4658, 0.0
      %v4880 = vsel %vm4870, %v4659, 0.0
      %v4881 = vsel %vm4861, %v4660, 0.0
      %v4882 = vsel %vm4862, %v4661, 0.0
      %v4883 = vsel %vm4863, %v4662, 0.0
      %v4884 = vsel %vm4864, %v4663, 0.0
      %v4885 = vsel %vm4865, %v4664, 0.0
      %v4886 = vsel %vm4866, %v4665, 0.0
      %v4887 = vsel %vm4867, %v4666, 0.0
      %v4888 = vsel %vm4868, %v4667, 0.0
      %v4889 = vsel %vm4869, %v4668, 0.0
      %v4890 = vsel %vm4870, %v4669, 0.0
      %v4891 = vsel %vm4861, %v4670, 0.0
      %v4892 = vsel %vm4862, %v4671, 0.0
      %v4893 = vsel %vm4863, %v4672, 0.0
      %v4894 = vsel %vm4864, %v4673, 0.0
      %v4895 = vsel %vm4865, %v4674, 0.0
      %v4896 = vsel %vm4866, %v4675, 0.0
      %v4897 = vsel %vm4867, %v4676, 0.0
      %v4898 = vsel %vm4868, %v4677, 0.0
      %v4899 = vsel %vm4869, %v4678, 0.0
      %v4900 = vsel %vm4870, %v4679, 0.0
      %v4901 = vsel %vm4861, %v4680, 0.0
      %v4902 = vsel %vm4862, %v4681, 0.0
      %v4903 = vsel %vm4863, %v4682, 0.0
      %v4904 = vsel %vm4864, %v4683, 0.0
      %v4905 = vsel %vm4865, %v4684, 0.0
      %v4906 = vsel %vm4866, %v4685, 0.0
      %v4907 = vsel %vm4867, %v4686, 0.0
      %v4908 = vsel %vm4868, %v4687, 0.0
      %v4909 = vsel %vm4869, %v4688, 0.0
      %v4910 = vsel %vm4870, %v4689, 0.0
      %v4911 = vld [vmem:[%s5] sm:$0xff]
      %v4912 = vld [vmem:[%s5 + $0x8] sm:$0xff]
      %v4913 = vld [vmem:[%s5 + $0x10] sm:$0xff]
      %v4914 = vld [vmem:[%s5 + $0x18] sm:$0xff]
      %v4915 = vld [vmem:[%s5 + $0x20] sm:$0xff]
      %v4916 = vld [vmem:[%s5 + $0x28] sm:$0xff]
      %v4917 = vld [vmem:[%s5 + $0x30] sm:$0xff]
      %v4918 = vld [vmem:[%s5 + $0x38] sm:$0xff]
      %v4919 = vld [vmem:[%s5 + $0x40] sm:$0xff]
      %v4920 = vld [vmem:[%s5 + $0x48] sm:$0xff]
      %v4921 = vld [vmem:[%s5 + $0x50] sm:$0xff]
      %v4922 = vld [vmem:[%s5 + $0x58] sm:$0xff]
      %v4923 = vld [vmem:[%s5 + $0x60] sm:$0xf]
      %vm4924 = vcmask 261120
      %v4926 = vsel %vm4924, %v4911, 0
      %v4929 = vsel %vm4924, %v4912, 0
      %v4932 = vsel %vm4924, %v4913, 0
      %v4935 = vsel %vm4924, %v4914, 0
      %v4938 = vsel %vm4924, %v4915, 0
      %v4941 = vsel %vm4924, %v4916, 0
      %v4944 = vsel %vm4924, %v4917, 0
      %v4947 = vsel %vm4924, %v4918, 0
      %v4950 = vsel %vm4924, %v4919, 0
      %v4953 = vsel %vm4924, %v4920, 0
      %v4956 = vsel %vm4924, %v4921, 0
      %v4959 = vsel %vm4924, %v4922, 0
      %v4962 = vsel %vm4924, %v4923, 0
      %4964 = vmatprep.subr.mxu0 %v4872
      %4965 = vmatpush1.msra.mxu0 %v4871
      %4966 = vmatprep.subr.mxu0 %v4882
      %4967 = vmatpush1.msra.mxu0 %v4881
      %4968 = vmatprep.subr.mxu0 %v4892
      %4969 = vmatpush1.msra.mxu0 %v4891
      %4970 = vmatprep.subr.mxu0 %v4902
      %4971 = vmatpush1.msra.mxu0 %v4901
      %4972 = vmatprep.subr.mxu0 0.0
      %4973 = vmatpush1.msra.mxu0 0.0
      %4974 = vmatprep.subr.mxu0 0.0
      %4975 = vmatpush1.msra.mxu0 0.0
      %4976 = vmatprep.subr.mxu0 0.0
      %4977 = vmatpush1.msra.mxu0 0.0
      %4978 = vmatprep.subr.mxu0 0.0
      %4979 = vmatpush1.msra.mxu0 0.0
      %4980 = vmatprep.subr.mxu0 0.0
      %4981 = vmatpush1.msra.mxu0 0.0
      %4982 = vmatprep.subr.mxu0 0.0
      %4983 = vmatpush1.msra.mxu0 0.0
      %4984 = vmatprep.subr.mxu0 0.0
      %4985 = vmatpush1.msra.mxu0 0.0
      %4986 = vmatprep.subr.mxu0 0.0
      %4987 = vmatpush1.msra.mxu0 0.0
      %4988 = vmatprep.subr.mxu0 0.0
      %4989 = vmatpush1.msra.mxu0 0.0
      %4990 = vmatprep.subr.mxu0 0.0
      %4991 = vmatpush1.msra.mxu0 0.0
      %4992 = vmatprep.subr.mxu0 0.0
      %4993 = vmatpush1.msra.mxu0 0.0
      %4994 = vmatprep.subr.mxu0 0.0
      %4995 = vmatpush1.msra.mxu0 0.0
      %4996 = vmatprep.subr.mxu0 0.0
      %4997 = vmatpush1.msra.mxu0 0.0
      %4998 = vmatprep.subr.mxu0 0.0
      %4999 = vmatpush1.msra.mxu0 0.0
      %5000 = vmatprep.subr.mxu0 0.0
      %5001 = vmatpush1.msra.mxu0 0.0
      %5002 = vmatprep.subr.mxu0 0.0
      %5003 = vmatpush1.msra.mxu0 0.0
      %5004 = vmatprep.subr.mxu0 0.0
      %5005 = vmatpush1.msra.mxu0 0.0
      %5006 = vmatprep.subr.mxu0 0.0
      %5007 = vmatpush1.msra.mxu0 0.0
      %5008 = vmatprep.subr.mxu0 0.0
      %5009 = vmatpush1.msra.mxu0 0.0
      %5010 = vmatprep.subr.mxu0 0.0
      %5011 = vmatpush1.msra.mxu0 0.0
      %5012 = vmatprep.subr.mxu0 0.0
      %5013 = vmatpush1.msra.mxu0 0.0
      %5014 = vmatprep.subr.mxu0 0.0
      %5015 = vmatpush1.msra.mxu0 0.0
      %5016 = vmatprep.subr.mxu0 0.0
      %5017 = vmatpush1.msra.mxu0 0.0
      %5018 = vmatprep.subr.mxu0 0.0
      %5019 = vmatpush1.msra.mxu0 0.0
      %5020 = vmatprep.subr.mxu0 0.0
      %5021 = vmatpush1.msra.mxu0 0.0
      %5022 = vmatprep.subr.mxu0 0.0
      %5023 = vmatpush1.msra.mxu0 0.0
      %5024 = vmatprep.subr.mxu0 0.0
      %5025 = vmatpush1.msra.mxu0 0.0
      %5026 = vmatprep.subr.mxu0 0.0
      %5027 = vmatpush1.msra.mxu0 0.0
      %5028 = vmatprep.mubr.f32.mxu0 0.0
      %5029 = vmatmul.mubr.f32.gmra.mrb[0].mxu0 %v4926
      %v5030 = vpop.f32.mrb[0].mxu0
      %v5031 = vadd.f32 0.0, %v5030
      %v5032 = vpop.f32.mrb[0].mxu0
      %v5033 = vadd.f32 0.0, %v5032
      %5034 = vmatprep.mubr.f32.mxu0 0.0
      %5035 = vmatmul.mubr.f32.gmra.mrb[0].mxu0 %v4929
      %v5036 = vpop.f32.mrb[0].mxu0
      %v5037 = vadd.f32 0.0, %v5036
      %v5038 = vpop.f32.mrb[0].mxu0
      %v5039 = vadd.f32 0.0, %v5038
      %5040 = vmatprep.mubr.f32.mxu0 0.0
      %5041 = vmatmul.mubr.f32.gmra.mrb[0].mxu0 %v4932
      %v5042 = vpop.f32.mrb[0].mxu0
      %v5043 = vadd.f32 0.0, %v5042
      %v5044 = vpop.f32.mrb[0].mxu0
      %v5045 = vadd.f32 0.0, %v5044
      %5046 = vmatprep.mubr.f32.mxu0 0.0
      %5047 = vmatmul.mubr.f32.gmra.mrb[0].mxu0 %v4935
      %v5048 = vpop.f32.mrb[0].mxu0
      %v5049 = vadd.f32 0.0, %v5048
      %v5050 = vpop.f32.mrb[0].mxu0
      %v5051 = vadd.f32 0.0, %v5050
      %5052 = vmatprep.mubr.f32.mxu0 0.0
      %5053 = vmatmul.mubr.f32.gmra.mrb[0].mxu0 %v4938
      %v5054 = vpop.f32.mrb[0].mxu0
      %v5055 = vadd.f32 0.0, %v5054
      %v5056 = vpop.f32.mrb[0].mxu0
      %v5057 = vadd.f32 0.0, %v5056
      %5058 = vmatprep.mubr.f32.mxu0 0.0
      %5059 = vmatmul.mubr.f32.gmra.mrb[0].mxu0 %v4941
      %v5060 = vpop.f32.mrb[0].mxu0
      %v5061 = vadd.f32 0.0, %v5060
      %v5062 = vpop.f32.mrb[0].mxu0
      %v5063 = vadd.f32 0.0, %v5062
      %5064 = vmatprep.mubr.f32.mxu0 0.0
      %5065 = vmatmul.mubr.f32.gmra.mrb[0].mxu0 %v4944
      %v5066 = vpop.f32.mrb[0].mxu0
      %v5067 = vadd.f32 0.0, %v5066
      %v5068 = vpop.f32.mrb[0].mxu0
      %v5069 = vadd.f32 0.0, %v5068
      %5070 = vmatprep.mubr.f32.mxu0 0.0
      %5071 = vmatmul.mubr.f32.gmra.mrb[0].mxu0 %v4947
      %v5072 = vpop.f32.mrb[0].mxu0
      %v5073 = vadd.f32 0.0, %v5072
      %v5074 = vpop.f32.mrb[0].mxu0
      %v5075 = vadd.f32 0.0, %v5074
      %5076 = vmatprep.mubr.f32.mxu0 0.0
      %5077 = vmatmul.mubr.f32.gmra.mrb[0].mxu0 %v4950
      %v5078 = vpop.f32.mrb[0].mxu0
      %v5079 = vadd.f32 0.0, %v5078
      %v5080 = vpop.f32.mrb[0].mxu0
      %v5081 = vadd.f32 0.0, %v5080
      %5082 = vmatprep.mubr.f32.mxu0 0.0
      %5083 = vmatmul.mubr.f32.gmra.mrb[0].mxu0 %v4953
      %v5084 = vpop.f32.mrb[0].mxu0
      %v5085 = vadd.f32 0.0, %v5084
      %v5086 = vpop.f32.mrb[0].mxu0
      %v5087 = vadd.f32 0.0, %v5086
      %5088 = vmatprep.mubr.f32.mxu0 0.0
      %5089 = vmatmul.mubr.f32.gmra.mrb[0].mxu0 %v4956
      %v5090 = vpop.f32.mrb[0].mxu0
      %v5091 = vadd.f32 0.0, %v5090
      %v5092 = vpop.f32.mrb[0].mxu0
      %v5093 = vadd.f32 0.0, %v5092
      %5094 = vmatprep.mubr.f32.mxu0 0.0
      %5095 = vmatmul.mubr.f32.gmra.mrb[0].mxu0 %v4959
      %v5096 = vpop.f32.mrb[0].mxu0
      %v5097 = vadd.f32 0.0, %v5096
      %v5098 = vpop.f32.mrb[0].mxu0
      %v5099 = vadd.f32 0.0, %v5098
      %5100 = vmatprep.mubr.f32.mxu0 0.0
      %5101 = vmatmul.mubr.f32.gmra.mrb[0].mxu0 %v4962
      %v5102 = vpop.f32.mrb[0].mxu0
      %v5103 = vadd.f32 0.0, %v5102
      %v5104 = vpop.f32.mrb[0].mxu0
      %v5105 = vadd.f32 0.0, %v5104
      %5106 = vdwg.mxu0
      %5107 = vmatprep.subr.mxu0 %v4874
      %5108 = vmatpush1.msra.mxu0 %v4873
      %5109 = vmatprep.subr.mxu0 %v4884
      %5110 = vmatpush1.msra.mxu0 %v4883
      %5111 = vmatprep.subr.mxu0 %v4894
      %5112 = vmatpush1.msra.mxu0 %v4893
      %5113 = vmatprep.subr.mxu0 %v4904
      %5114 = vmatpush1.msra.mxu0 %v4903
      %5115 = vmatprep.subr.mxu0 0.0
      %5116 = vmatpush1.msra.mxu0 0.0
      %5117 = vmatprep.subr.mxu0 0.0
      %5118 = vmatpush1.msra.mxu0 0.0
      %5119 = vmatprep.subr.mxu0 0.0
      %5120 = vmatpush1.msra.mxu0 0.0
      %5121 = vmatprep.subr.mxu0 0.0
      %5122 = vmatpush1.msra.mxu0 0.0
      %5123 = vmatprep.subr.mxu0 0.0
      %5124 = vmatpush1.msra.mxu0 0.0
      %5125 = vmatprep.subr.mxu0 0.0
      %5126 = vmatpush1.msra.mxu0 0.0
      %5127 = vmatprep.subr.mxu0 0.0
      %5128 = vmatpush1.msra.mxu0 0.0
      %5129 = vmatprep.subr.mxu0 0.0
      %5130 = vmatpush1.msra.mxu0 0.0
      %5131 = vmatprep.subr.mxu0 0.0
      %5132 = vmatpush1.msra.mxu0 0.0
      %5133 = vmatprep.subr.mxu0 0.0
      %5134 = vmatpush1.msra.mxu0 0.0
      %5135 = vmatprep.subr.mxu0 0.0
      %5136 = vmatpush1.msra.mxu0 0.0
      %5137 = vmatprep.subr.mxu0 0.0
      %5138 = vmatpush1.msra.mxu0 0.0
      %5139 = vmatprep.subr.mxu0 0.0
      %5140 = vmatpush1.msra.mxu0 0.0
      %5141 = vmatprep.subr.mxu0 0.0
      %5142 = vmatpush1.msra.mxu0 0.0
      %5143 = vmatprep.subr.mxu0 0.0
      %5144 = vmatpush1.msra.mxu0 0.0
      %5145 = vmatprep.subr.mxu0 0.0
      %5146 = vmatpush1.msra.mxu0 0.0
      %5147 = vmatprep.subr.mxu0 0.0
      %5148 = vmatpush1.msra.mxu0 0.0
      %5149 = vmatprep.subr.mxu0 0.0
      %5150 = vmatpush1.msra.mxu0 0.0
      %5151 = vmatprep.subr.mxu0 0.0
      %5152 = vmatpush1.msra.mxu0 0.0
      %5153 = vmatprep.subr.mxu0 0.0
      %5154 = vmatpush1.msra.mxu0 0.0
      %5155 = vmatprep.subr.mxu0 0.0
      %5156 = vmatpush1.msra.mxu0 0.0
      %5157 = vmatprep.subr.mxu0 0.0
      %5158 = vmatpush1.msra.mxu0 0.0
      %5159 = vmatprep.subr.mxu0 0.0
      %5160 = vmatpush1.msra.mxu0 0.0
      %5161 = vmatprep.subr.mxu0 0.0
      %5162 = vmatpush1.msra.mxu0 0.0
      %5163 = vmatprep.subr.mxu0 0.0
      %5164 = vmatpush1.msra.mxu0 0.0
      %5165 = vmatprep.subr.mxu0 0.0
      %5166 = vmatpush1.msra.mxu0 0.0
      %5167 = vmatprep.subr.mxu0 0.0
      %5168 = vmatpush1.msra.mxu0 0.0
      %5169 = vmatprep.subr.mxu0 0.0
      %5170 = vmatpush1.msra.mxu0 0.0
      %5171 = vmatprep.mubr.f32.mxu0 0.0
      %5172 = vmatmul.mubr.f32.gmra.mrb[0].mxu0 %v4926
      %v5173 = vpop.f32.mrb[0].mxu0
      %v5174 = vadd.f32 0.0, %v5173
      %v5175 = vpop.f32.mrb[0].mxu0
      %v5176 = vadd.f32 0.0, %v5175
      %5177 = vmatprep.mubr.f32.mxu0 0.0
      %5178 = vmatmul.mubr.f32.gmra.mrb[0].mxu0 %v4929
      %v5179 = vpop.f32.mrb[0].mxu0
      %v5180 = vadd.f32 0.0, %v5179
      %v5181 = vpop.f32.mrb[0].mxu0
      %v5182 = vadd.f32 0.0, %v5181
      %5183 = vmatprep.mubr.f32.mxu0 0.0
      %5184 = vmatmul.mubr.f32.gmra.mrb[0].mxu0 %v4932
      %v5185 = vpop.f32.mrb[0].mxu0
      %v5186 = vadd.f32 0.0, %v5185
      %v5187 = vpop.f32.mrb[0].mxu0
      %v5188 = vadd.f32 0.0, %v5187
      %5189 = vmatprep.mubr.f32.mxu0 0.0
      %5190 = vmatmul.mubr.f32.gmra.mrb[0].mxu0 %v4935
      %v5191 = vpop.f32.mrb[0].mxu0
      %v5192 = vadd.f32 0.0, %v5191
      %v5193 = vpop.f32.mrb[0].mxu0
      %v5194 = vadd.f32 0.0, %v5193
      %5195 = vmatprep.mubr.f32.mxu0 0.0
      %5196 = vmatmul.mubr.f32.gmra.mrb[0].mxu0 %v4938
      %v5197 = vpop.f32.mrb[0].mxu0
      %v5198 = vadd.f32 0.0, %v5197
      %v5199 = vpop.f32.mrb[0].mxu0
      %v5200 = vadd.f32 0.0, %v5199
      %5201 = vmatprep.mubr.f32.mxu0 0.0
      %5202 = vmatmul.mubr.f32.gmra.mrb[0].mxu0 %v4941
      %v5203 = vpop.f32.mrb[0].mxu0
      %v5204 = vadd.f32 0.0, %v5203
      %v5205 = vpop.f32.mrb[0].mxu0
      %v5206 = vadd.f32 0.0, %v5205
      %5207 = vmatprep.mubr.f32.mxu0 0.0
      %5208 = vmatmul.mubr.f32.gmra.mrb[0].mxu0 %v4944
      %v5209 = vpop.f32.mrb[0].mxu0
      %v5210 = vadd.f32 0.0, %v5209
      %v5211 = vpop.f32.mrb[0].mxu0
      %v5212 = vadd.f32 0.0, %v5211
      %5213 = vmatprep.mubr.f32.mxu0 0.0
      %5214 = vmatmul.mubr.f32.gmra.mrb[0].mxu0 %v4947
      %v5215 = vpop.f32.mrb[0].mxu0
      %v5216 = vadd.f32 0.0, %v5215
      %v5217 = vpop.f32.mrb[0].mxu0
      %v5218 = vadd.f32 0.0, %v5217
      %5219 = vmatprep.mubr.f32.mxu0 0.0
      %5220 = vmatmul.mubr.f32.gmra.mrb[0].mxu0 %v4950
      %v5221 = vpop.f32.mrb[0].mxu0
      %v5222 = vadd.f32 0.0, %v5221
      %v5223 = vpop.f32.mrb[0].mxu0
      %v5224 = vadd.f32 0.0, %v5223
      %5225 = vmatprep.mubr.f32.mxu0 0.0
      %5226 = vmatmul.mubr.f32.gmra.mrb[0].mxu0 %v4953
      %v5227 = vpop.f32.mrb[0].mxu0
      %v5228 = vadd.f32 0.0, %v5227
      %v5229 = vpop.f32.mrb[0].mxu0
      %v5230 = vadd.f32 0.0, %v5229
      %5231 = vmatprep.mubr.f32.mxu0 0.0
      %5232 = vmatmul.mubr.f32.gmra.mrb[0].mxu0 %v4956
      %v5233 = vpop.f32.mrb[0].mxu0
      %v5234 = vadd.f32 0.0, %v5233
      %v5235 = vpop.f32.mrb[0].mxu0
      %v5236 = vadd.f32 0.0, %v5235
      %5237 = vmatprep.mubr.f32.mxu0 0.0
      %5238 = vmatmul.mubr.f32.gmra.mrb[0].mxu0 %v4959
      %v5239 = vpop.f32.mrb[0].mxu0
      %v5240 = vadd.f32 0.0, %v5239
      %v5241 = vpop.f32.mrb[0].mxu0
      %v5242 = vadd.f32 0.0, %v5241
      %5243 = vmatprep.mubr.f32.mxu0 0.0
      %5244 = vmatmul.mubr.f32.gmra.mrb[0].mxu0 %v4962
      %v5245 = vpop.f32.mrb[0].mxu0
      %v5246 = vadd.f32 0.0, %v5245
      %v5247 = vpop.f32.mrb[0].mxu0
      %v5248 = vadd.f32 0.0, %v5247
      %5249 = vdwg.mxu0
      %5250 = vmatprep.subr.mxu0 %v4876
      %5251 = vmatpush1.msra.mxu0 %v4875
      %5252 = vmatprep.subr.mxu0 %v4886
      %5253 = vmatpush1.msra.mxu0 %v4885
      %5254 = vmatprep.subr.mxu0 %v4896
      %5255 = vmatpush1.msra.mxu0 %v4895
      %5256 = vmatprep.subr.mxu0 %v4906
      %5257 = vmatpush1.msra.mxu0 %v4905
      %5258 = vmatprep.subr.mxu0 0.0
      %5259 = vmatpush1.msra.mxu0 0.0
      %5260 = vmatprep.subr.mxu0 0.0
      %5261 = vmatpush1.msra.mxu0 0.0
      %5262 = vmatprep.subr.mxu0 0.0
      %5263 = vmatpush1.msra.mxu0 0.0
      %5264 = vmatprep.subr.mxu0 0.0
      %5265 = vmatpush1.msra.mxu0 0.0
      %5266 = vmatprep.subr.mxu0 0.0
      %5267 = vmatpush1.msra.mxu0 0.0
      %5268 = vmatprep.subr.mxu0 0.0
      %5269 = vmatpush1.msra.mxu0 0.0
      %5270 = vmatprep.subr.mxu0 0.0
      %5271 = vmatpush1.msra.mxu0 0.0
      %5272 = vmatprep.subr.mxu0 0.0
      %5273 = vmatpush1.msra.mxu0 0.0
      %5274 = vmatprep.subr.mxu0 0.0
      %5275 = vmatpush1.msra.mxu0 0.0
      %5276 = vmatprep.subr.mxu0 0.0
      %5277 = vmatpush1.msra.mxu0 0.0
      %5278 = vmatprep.subr.mxu0 0.0
      %5279 = vmatpush1.msra.mxu0 0.0
      %5280 = vmatprep.subr.mxu0 0.0
      %5281 = vmatpush1.msra.mxu0 0.0
      %5282 = vmatprep.subr.mxu0 0.0
      %5283 = vmatpush1.msra.mxu0 0.0
      %5284 = vmatprep.subr.mxu0 0.0
      %5285 = vmatpush1.msra.mxu0 0.0
      %5286 = vmatprep.subr.mxu0 0.0
      %5287 = vmatpush1.msra.mxu0 0.0
      %5288 = vmatprep.subr.mxu0 0.0
      %5289 = vmatpush1.msra.mxu0 0.0
      %5290 = vmatprep.subr.mxu0 0.0
      %5291 = vmatpush1.msra.mxu0 0.0
      %5292 = vmatprep.subr.mxu0 0.0
      %5293 = vmatpush1.msra.mxu0 0.0
      %5294 = vmatprep.subr.mxu0 0.0
      %5295 = vmatpush1.msra.mxu0 0.0
      %5296 = vmatprep.subr.mxu0 0.0
      %5297 = vmatpush1.msra.mxu0 0.0
      %5298 = vmatprep.subr.mxu0 0.0
      %5299 = vmatpush1.msra.mxu0 0.0
      %5300 = vmatprep.subr.mxu0 0.0
      %5301 = vmatpush1.msra.mxu0 0.0
      %5302 = vmatprep.subr.mxu0 0.0
      %5303 = vmatpush1.msra.mxu0 0.0
      %5304 = vmatprep.subr.mxu0 0.0
      %5305 = vmatpush1.msra.mxu0 0.0
      %5306 = vmatprep.subr.mxu0 0.0
      %5307 = vmatpush1.msra.mxu0 0.0
      %5308 = vmatprep.subr.mxu0 0.0
      %5309 = vmatpush1.msra.mxu0 0.0
      %5310 = vmatprep.subr.mxu0 0.0
      %5311 = vmatpush1.msra.mxu0 0.0
      %5312 = vmatprep.subr.mxu0 0.0
      %5313 = vmatpush1.msra.mxu0 0.0
      %5314 = vmatprep.mubr.f32.mxu0 0.0
      %5315 = vmatmul.mubr.f32.gmra.mrb[0].mxu0 %v4926
      %v5316 = vpop.f32.mrb[0].mxu0
      %v5317 = vadd.f32 0.0, %v5316
      %v5318 = vpop.f32.mrb[0].mxu0
      %v5319 = vadd.f32 0.0, %v5318
      %5320 = vmatprep.mubr.f32.mxu0 0.0
      %5321 = vmatmul.mubr.f32.gmra.mrb[0].mxu0 %v4929
      %v5322 = vpop.f32.mrb[0].mxu0
      %v5323 = vadd.f32 0.0, %v5322
      %v5324 = vpop.f32.mrb[0].mxu0
      %v5325 = vadd.f32 0.0, %v5324
      %5326 = vmatprep.mubr.f32.mxu0 0.0
      %5327 = vmatmul.mubr.f32.gmra.mrb[0].mxu0 %v4932
      %v5328 = vpop.f32.mrb[0].mxu0
      %v5329 = vadd.f32 0.0, %v5328
      %v5330 = vpop.f32.mrb[0].mxu0
      %v5331 = vadd.f32 0.0, %v5330
      %5332 = vmatprep.mubr.f32.mxu0 0.0
      %5333 = vmatmul.mubr.f32.gmra.mrb[0].mxu0 %v4935
      %v5334 = vpop.f32.mrb[0].mxu0
      %v5335 = vadd.f32 0.0, %v5334
      %v5336 = vpop.f32.mrb[0].mxu0
      %v5337 = vadd.f32 0.0, %v5336
      %5338 = vmatprep.mubr.f32.mxu0 0.0
      %5339 = vmatmul.mubr.f32.gmra.mrb[0].mxu0 %v4938
      %v5340 = vpop.f32.mrb[0].mxu0
      %v5341 = vadd.f32 0.0, %v5340
      %v5342 = vpop.f32.mrb[0].mxu0
      %v5343 = vadd.f32 0.0, %v5342
      %5344 = vmatprep.mubr.f32.mxu0 0.0
      %5345 = vmatmul.mubr.f32.gmra.mrb[0].mxu0 %v4941
      %v5346 = vpop.f32.mrb[0].mxu0
      %v5347 = vadd.f32 0.0, %v5346
      %v5348 = vpop.f32.mrb[0].mxu0
      %v5349 = vadd.f32 0.0, %v5348
      %5350 = vmatprep.mubr.f32.mxu0 0.0
      %5351 = vmatmul.mubr.f32.gmra.mrb[0].mxu0 %v4944
      %v5352 = vpop.f32.mrb[0].mxu0
      %v5353 = vadd.f32 0.0, %v5352
      %v5354 = vpop.f32.mrb[0].mxu0
      %v5355 = vadd.f32 0.0, %v5354
      %5356 = vmatprep.mubr.f32.mxu0 0.0
      %5357 = vmatmul.mubr.f32.gmra.mrb[0].mxu0 %v4947
      %v5358 = vpop.f32.mrb[0].mxu0
      %v5359 = vadd.f32 0.0, %v5358
      %v5360 = vpop.f32.mrb[0].mxu0
      %v5361 = vadd.f32 0.0, %v5360
      %5362 = vmatprep.mubr.f32.mxu0 0.0
      %5363 = vmatmul.mubr.f32.gmra.mrb[0].mxu0 %v4950
      %v5364 = vpop.f32.mrb[0].mxu0
      %v5365 = vadd.f32 0.0, %v5364
      %v5366 = vpop.f32.mrb[0].mxu0
      %v5367 = vadd.f32 0.0, %v5366
      %5368 = vmatprep.mubr.f32.mxu0 0.0
      %5369 = vmatmul.mubr.f32.gmra.mrb[0].mxu0 %v4953
      %v5370 = vpop.f32.mrb[0].mxu0
      %v5371 = vadd.f32 0.0, %v5370
      %v5372 = vpop.f32.mrb[0].mxu0
      %v5373 = vadd.f32 0.0, %v5372
      %5374 = vmatprep.mubr.f32.mxu0 0.0
      %5375 = vmatmul.mubr.f32.gmra.mrb[0].mxu0 %v4956
      %v5376 = vpop.f32.mrb[0].mxu0
      %v5377 = vadd.f32 0.0, %v5376
      %v5378 = vpop.f32.mrb[0].mxu0
      %v5379 = vadd.f32 0.0, %v5378
      %5380 = vmatprep.mubr.f32.mxu0 0.0
      %5381 = vmatmul.mubr.f32.gmra.mrb[0].mxu0 %v4959
      %v5382 = vpop.f32.mrb[0].mxu0
      %v5383 = vadd.f32 0.0, %v5382
      %v5384 = vpop.f32.mrb[0].mxu0
      %v5385 = vadd.f32 0.0, %v5384
      %5386 = vmatprep.mubr.f32.mxu0 0.0
      %5387 = vmatmul.mubr.f32.gmra.mrb[0].mxu0 %v4962
      %v5388 = vpop.f32.mrb[0].mxu0
      %v5389 = vadd.f32 0.0, %v5388
      %v5390 = vpop.f32.mrb[0].mxu0
      %v5391 = vadd.f32 0.0, %v5390
      %5392 = vdwg.mxu0
      %5393 = vmatprep.subr.mxu0 %v4878
      %5394 = vmatpush1.msra.mxu0 %v4877
      %5395 = vmatprep.subr.mxu0 %v4888
      %5396 = vmatpush1.msra.mxu0 %v4887
      %5397 = vmatprep.subr.mxu0 %v4898
      %5398 = vmatpush1.msra.mxu0 %v4897
      %5399 = vmatprep.subr.mxu0 %v4908
      %5400 = vmatpush1.msra.mxu0 %v4907
      %5401 = vmatprep.subr.mxu0 0.0
      %5402 = vmatpush1.msra.mxu0 0.0
      %5403 = vmatprep.subr.mxu0 0.0
      %5404 = vmatpush1.msra.mxu0 0.0
      %5405 = vmatprep.subr.mxu0 0.0
      %5406 = vmatpush1.msra.mxu0 0.0
      %5407 = vmatprep.subr.mxu0 0.0
      %5408 = vmatpush1.msra.mxu0 0.0
      %5409 = vmatprep.subr.mxu0 0.0
      %5410 = vmatpush1.msra.mxu0 0.0
      %5411 = vmatprep.subr.mxu0 0.0
      %5412 = vmatpush1.msra.mxu0 0.0
      %5413 = vmatprep.subr.mxu0 0.0
      %5414 = vmatpush1.msra.mxu0 0.0
      %5415 = vmatprep.subr.mxu0 0.0
      %5416 = vmatpush1.msra.mxu0 0.0
      %5417 = vmatprep.subr.mxu0 0.0
      %5418 = vmatpush1.msra.mxu0 0.0
      %5419 = vmatprep.subr.mxu0 0.0
      %5420 = vmatpush1.msra.mxu0 0.0
      %5421 = vmatprep.subr.mxu0 0.0
      %5422 = vmatpush1.msra.mxu0 0.0
      %5423 = vmatprep.subr.mxu0 0.0
      %5424 = vmatpush1.msra.mxu0 0.0
      %5425 = vmatprep.subr.mxu0 0.0
      %5426 = vmatpush1.msra.mxu0 0.0
      %5427 = vmatprep.subr.mxu0 0.0
      %5428 = vmatpush1.msra.mxu0 0.0
      %5429 = vmatprep.subr.mxu0 0.0
      %5430 = vmatpush1.msra.mxu0 0.0
      %5431 = vmatprep.subr.mxu0 0.0
      %5432 = vmatpush1.msra.mxu0 0.0
      %5433 = vmatprep.subr.mxu0 0.0
      %5434 = vmatpush1.msra.mxu0 0.0
      %5435 = vmatprep.subr.mxu0 0.0
      %5436 = vmatpush1.msra.mxu0 0.0
      %5437 = vmatprep.subr.mxu0 0.0
      %5438 = vmatpush1.msra.mxu0 0.0
      %5439 = vmatprep.subr.mxu0 0.0
      %5440 = vmatpush1.msra.mxu0 0.0
      %5441 = vmatprep.subr.mxu0 0.0
      %5442 = vmatpush1.msra.mxu0 0.0
      %5443 = vmatprep.subr.mxu0 0.0
      %5444 = vmatpush1.msra.mxu0 0.0
      %5445 = vmatprep.subr.mxu0 0.0
      %5446 = vmatpush1.msra.mxu0 0.0
      %5447 = vmatprep.subr.mxu0 0.0
      %5448 = vmatpush1.msra.mxu0 0.0
      %5449 = vmatprep.subr.mxu0 0.0
      %5450 = vmatpush1.msra.mxu0 0.0
      %5451 = vmatprep.subr.mxu0 0.0
      %5452 = vmatpush1.msra.mxu0 0.0
      %5453 = vmatprep.subr.mxu0 0.0
      %5454 = vmatpush1.msra.mxu0 0.0
      %5455 = vmatprep.subr.mxu0 0.0
      %5456 = vmatpush1.msra.mxu0 0.0
      %5457 = vmatprep.mubr.f32.mxu0 0.0
      %5458 = vmatmul.mubr.f32.gmra.mrb[0].mxu0 %v4926
      %v5459 = vpop.f32.mrb[0].mxu0
      %v5460 = vadd.f32 0.0, %v5459
      %v5461 = vpop.f32.mrb[0].mxu0
      %v5462 = vadd.f32 0.0, %v5461
      %5463 = vmatprep.mubr.f32.mxu0 0.0
      %5464 = vmatmul.mubr.f32.gmra.mrb[0].mxu0 %v4929
      %v5465 = vpop.f32.mrb[0].mxu0
      %v5466 = vadd.f32 0.0, %v5465
      %v5467 = vpop.f32.mrb[0].mxu0
      %v5468 = vadd.f32 0.0, %v5467
      %5469 = vmatprep.mubr.f32.mxu0 0.0
      %5470 = vmatmul.mubr.f32.gmra.mrb[0].mxu0 %v4932
      %v5471 = vpop.f32.mrb[0].mxu0
      %v5472 = vadd.f32 0.0, %v5471
      %v5473 = vpop.f32.mrb[0].mxu0
      %v5474 = vadd.f32 0.0, %v5473
      %5475 = vmatprep.mubr.f32.mxu0 0.0
      %5476 = vmatmul.mubr.f32.gmra.mrb[0].mxu0 %v4935
      %v5477 = vpop.f32.mrb[0].mxu0
      %v5478 = vadd.f32 0.0, %v5477
      %v5479 = vpop.f32.mrb[0].mxu0
      %v5480 = vadd.f32 0.0, %v5479
      %5481 = vmatprep.mubr.f32.mxu0 0.0
      %5482 = vmatmul.mubr.f32.gmra.mrb[0].mxu0 %v4938
      %v5483 = vpop.f32.mrb[0].mxu0
      %v5484 = vadd.f32 0.0, %v5483
      %v5485 = vpop.f32.mrb[0].mxu0
      %v5486 = vadd.f32 0.0, %v5485
      %5487 = vmatprep.mubr.f32.mxu0 0.0
      %5488 = vmatmul.mubr.f32.gmra.mrb[0].mxu0 %v4941
      %v5489 = vpop.f32.mrb[0].mxu0
      %v5490 = vadd.f32 0.0, %v5489
      %v5491 = vpop.f32.mrb[0].mxu0
      %v5492 = vadd.f32 0.0, %v5491
      %5493 = vmatprep.mubr.f32.mxu0 0.0
      %5494 = vmatmul.mubr.f32.gmra.mrb[0].mxu0 %v4944
      %v5495 = vpop.f32.mrb[0].mxu0
      %v5496 = vadd.f32 0.0, %v5495
      %v5497 = vpop.f32.mrb[0].mxu0
      %v5498 = vadd.f32 0.0, %v5497
      %5499 = vmatprep.mubr.f32.mxu0 0.0
      %5500 = vmatmul.mubr.f32.gmra.mrb[0].mxu0 %v4947
      %v5501 = vpop.f32.mrb[0].mxu0
      %v5502 = vadd.f32 0.0, %v5501
      %v5503 = vpop.f32.mrb[0].mxu0
      %v5504 = vadd.f32 0.0, %v5503
      %5505 = vmatprep.mubr.f32.mxu0 0.0
      %5506 = vmatmul.mubr.f32.gmra.mrb[0].mxu0 %v4950
      %v5507 = vpop.f32.mrb[0].mxu0
      %v5508 = vadd.f32 0.0, %v5507
      %v5509 = vpop.f32.mrb[0].mxu0
      %v5510 = vadd.f32 0.0, %v5509
      %5511 = vmatprep.mubr.f32.mxu0 0.0
      %5512 = vmatmul.mubr.f32.gmra.mrb[0].mxu0 %v4953
      %v5513 = vpop.f32.mrb[0].mxu0
      %v5514 = vadd.f32 0.0, %v5513
      %v5515 = vpop.f32.mrb[0].mxu0
      %v5516 = vadd.f32 0.0, %v5515
      %5517 = vmatprep.mubr.f32.mxu0 0.0
      %5518 = vmatmul.mubr.f32.gmra.mrb[0].mxu0 %v4956
      %v5519 = vpop.f32.mrb[0].mxu0
      %v5520 = vadd.f32 0.0, %v5519
      %v5521 = vpop.f32.mrb[0].mxu0
      %v5522 = vadd.f32 0.0, %v5521
      %5523 = vmatprep.mubr.f32.mxu0 0.0
      %5524 = vmatmul.mubr.f32.gmra.mrb[0].mxu0 %v4959
      %v5525 = vpop.f32.mrb[0].mxu0
      %v5526 = vadd.f32 0.0, %v5525
      %v5527 = vpop.f32.mrb[0].mxu0
      %v5528 = vadd.f32 0.0, %v5527
      %5529 = vmatprep.mubr.f32.mxu0 0.0
      %5530 = vmatmul.mubr.f32.gmra.mrb[0].mxu0 %v4962
      %v5531 = vpop.f32.mrb[0].mxu0
      %v5532 = vadd.f32 0.0, %v5531
      %v5533 = vpop.f32.mrb[0].mxu0
      %v5534 = vadd.f32 0.0, %v5533
      %5535 = vdwg.mxu0
      %5536 = vmatprep.subr.mxu0 %v4880
      %5537 = vmatpush1.msra.mxu0 %v4879
      %5538 = vmatprep.subr.mxu0 %v4890
      %5539 = vmatpush1.msra.mxu0 %v4889
      %5540 = vmatprep.subr.mxu0 %v4900
      %5541 = vmatpush1.msra.mxu0 %v4899
      %5542 = vmatprep.subr.mxu0 %v4910
      %5543 = vmatpush1.msra.mxu0 %v4909
      %5544 = vmatprep.subr.mxu0 0.0
      %5545 = vmatpush1.msra.mxu0 0.0
      %5546 = vmatprep.subr.mxu0 0.0
      %5547 = vmatpush1.msra.mxu0 0.0
      %5548 = vmatprep.subr.mxu0 0.0
      %5549 = vmatpush1.msra.mxu0 0.0
      %5550 = vmatprep.subr.mxu0 0.0
      %5551 = vmatpush1.msra.mxu0 0.0
      %5552 = vmatprep.subr.mxu0 0.0
      %5553 = vmatpush1.msra.mxu0 0.0
      %5554 = vmatprep.subr.mxu0 0.0
      %5555 = vmatpush1.msra.mxu0 0.0
      %5556 = vmatprep.subr.mxu0 0.0
      %5557 = vmatpush1.msra.mxu0 0.0
      %5558 = vmatprep.subr.mxu0 0.0
      %5559 = vmatpush1.msra.mxu0 0.0
      %5560 = vmatprep.subr.mxu0 0.0
      %5561 = vmatpush1.msra.mxu0 0.0
      %5562 = vmatprep.subr.mxu0 0.0
      %5563 = vmatpush1.msra.mxu0 0.0
      %5564 = vmatprep.subr.mxu0 0.0
      %5565 = vmatpush1.msra.mxu0 0.0
      %5566 = vmatprep.subr.mxu0 0.0
      %5567 = vmatpush1.msra.mxu0 0.0
      %5568 = vmatprep.subr.mxu0 0.0
      %5569 = vmatpush1.msra.mxu0 0.0
      %5570 = vmatprep.subr.mxu0 0.0
      %5571 = vmatpush1.msra.mxu0 0.0
      %5572 = vmatprep.subr.mxu0 0.0
      %5573 = vmatpush1.msra.mxu0 0.0
      %5574 = vmatprep.subr.mxu0 0.0
      %5575 = vmatpush1.msra.mxu0 0.0
      %5576 = vmatprep.subr.mxu0 0.0
      %5577 = vmatpush1.msra.mxu0 0.0
      %5578 = vmatprep.subr.mxu0 0.0
      %5579 = vmatpush1.msra.mxu0 0.0
      %5580 = vmatprep.subr.mxu0 0.0
      %5581 = vmatpush1.msra.mxu0 0.0
      %5582 = vmatprep.subr.mxu0 0.0
      %5583 = vmatpush1.msra.mxu0 0.0
      %5584 = vmatprep.subr.mxu0 0.0
      %5585 = vmatpush1.msra.mxu0 0.0
      %5586 = vmatprep.subr.mxu0 0.0
      %5587 = vmatpush1.msra.mxu0 0.0
      %5588 = vmatprep.subr.mxu0 0.0
      %5589 = vmatpush1.msra.mxu0 0.0
      %5590 = vmatprep.subr.mxu0 0.0
      %5591 = vmatpush1.msra.mxu0 0.0
      %5592 = vmatprep.subr.mxu0 0.0
      %5593 = vmatpush1.msra.mxu0 0.0
      %5594 = vmatprep.subr.mxu0 0.0
      %5595 = vmatpush1.msra.mxu0 0.0
      %5596 = vmatprep.subr.mxu0 0.0
      %5597 = vmatpush1.msra.mxu0 0.0
      %5598 = vmatprep.subr.mxu0 0.0
      %5599 = vmatpush1.msra.mxu0 0.0
      %5600 = vmatprep.mubr.f32.mxu0 0.0
      %5601 = vmatmul.mubr.f32.gmra.mrb[0].mxu0 %v4926
      %v5602 = vpop.f32.mrb[0].mxu0
      %v5603 = vadd.f32 0.0, %v5602
      %v5604 = vpop.f32.mrb[0].mxu0
      %v5605 = vadd.f32 0.0, %v5604
      %5606 = vmatprep.mubr.f32.mxu0 0.0
      %5607 = vmatmul.mubr.f32.gmra.mrb[0].mxu0 %v4929
      %v5608 = vpop.f32.mrb[0].mxu0
      %v5609 = vadd.f32 0.0, %v5608
      %v5610 = vpop.f32.mrb[0].mxu0
      %v5611 = vadd.f32 0.0, %v5610
      %5612 = vmatprep.mubr.f32.mxu0 0.0
      %5613 = vmatmul.mubr.f32.gmra.mrb[0].mxu0 %v4932
      %v5614 = vpop.f32.mrb[0].mxu0
      %v5615 = vadd.f32 0.0, %v5614
      %v5616 = vpop.f32.mrb[0].mxu0
      %v5617 = vadd.f32 0.0, %v5616
      %5618 = vmatprep.mubr.f32.mxu0 0.0
      %5619 = vmatmul.mubr.f32.gmra.mrb[0].mxu0 %v4935
      %v5620 = vpop.f32.mrb[0].mxu0
      %v5621 = vadd.f32 0.0, %v5620
      %v5622 = vpop.f32.mrb[0].mxu0
      %v5623 = vadd.f32 0.0, %v5622
      %5624 = vmatprep.mubr.f32.mxu0 0.0
      %5625 = vmatmul.mubr.f32.gmra.mrb[0].mxu0 %v4938
      %v5626 = vpop.f32.mrb[0].mxu0
      %v5627 = vadd.f32 0.0, %v5626
      %v5628 = vpop.f32.mrb[0].mxu0
      %v5629 = vadd.f32 0.0, %v5628
      %5630 = vmatprep.mubr.f32.mxu0 0.0
      %5631 = vmatmul.mubr.f32.gmra.mrb[0].mxu0 %v4941
      %v5632 = vpop.f32.mrb[0].mxu0
      %v5633 = vadd.f32 0.0, %v5632
      %v5634 = vpop.f32.mrb[0].mxu0
      %v5635 = vadd.f32 0.0, %v5634
      %5636 = vmatprep.mubr.f32.mxu0 0.0
      %5637 = vmatmul.mubr.f32.gmra.mrb[0].mxu0 %v4944
      %v5638 = vpop.f32.mrb[0].mxu0
      %v5639 = vadd.f32 0.0, %v5638
      %v5640 = vpop.f32.mrb[0].mxu0
      %v5641 = vadd.f32 0.0, %v5640
      %5642 = vmatprep.mubr.f32.mxu0 0.0
      %5643 = vmatmul.mubr.f32.gmra.mrb[0].mxu0 %v4947
      %v5644 = vpop.f32.mrb[0].mxu0
      %v5645 = vadd.f32 0.0, %v5644
      %v5646 = vpop.f32.mrb[0].mxu0
      %v5647 = vadd.f32 0.0, %v5646
      %5648 = vmatprep.mubr.f32.mxu0 0.0
      %5649 = vmatmul.mubr.f32.gmra.mrb[0].mxu0 %v4950
      %v5650 = vpop.f32.mrb[0].mxu0
      %v5651 = vadd.f32 0.0, %v5650
      %v5652 = vpop.f32.mrb[0].mxu0
      %v5653 = vadd.f32 0.0, %v5652
      %5654 = vmatprep.mubr.f32.mxu0 0.0
      %5655 = vmatmul.mubr.f32.gmra.mrb[0].mxu0 %v4953
      %v5656 = vpop.f32.mrb[0].mxu0
      %v5657 = vadd.f32 0.0, %v5656
      %v5658 = vpop.f32.mrb[0].mxu0
      %v5659 = vadd.f32 0.0, %v5658
      %5660 = vmatprep.mubr.f32.mxu0 0.0
      %5661 = vmatmul.mubr.f32.gmra.mrb[0].mxu0 %v4956
      %v5662 = vpop.f32.mrb[0].mxu0
      %v5663 = vadd.f32 0.0, %v5662
      %v5664 = vpop.f32.mrb[0].mxu0
      %v5665 = vadd.f32 0.0, %v5664
      %5666 = vmatprep.mubr.f32.mxu0 0.0
      %5667 = vmatmul.mubr.f32.gmra.mrb[0].mxu0 %v4959
      %v5668 = vpop.f32.mrb[0].mxu0
      %v5669 = vadd.f32 0.0, %v5668
      %v5670 = vpop.f32.mrb[0].mxu0
      %v5671 = vadd.f32 0.0, %v5670
      %5672 = vmatprep.mubr.f32.mxu0 0.0
      %5673 = vmatmul.mubr.f32.gmra.mrb[0].mxu0 %v4962
      %v5674 = vpop.f32.mrb[0].mxu0
      %v5675 = vadd.f32 0.0, %v5674
      %v5676 = vpop.f32.mrb[0].mxu0
      %v5677 = vadd.f32 0.0, %v5676
      %5678 = vdwg.mxu0
      %v5679 = vadd.f32 %v5031, 0.0
      %v5680 = vadd.f32 %v5033, 0.0
      %v5681 = vadd.f32 %v5174, 0.0
      %v5682 = vadd.f32 %v5176, 0.0
      %v5683 = vadd.f32 %v5317, 0.0
      %v5684 = vadd.f32 %v5319, 0.0
      %v5685 = vadd.f32 %v5460, 0.0
      %v5686 = vadd.f32 %v5462, 0.0
      %v5687 = vadd.f32 %v5603, 0.0
      %v5688 = vadd.f32 %v5605, 0.0
      %v5700 = vrot.slane 0.0, 4
      %v5701 = vrot.slane %v5031, 4
      %v5702 = vrot.slane %v5033, 4
      %v5703 = vrot.slane %v5174, 4
      %v5704 = vrot.slane %v5176, 4
      %v5705 = vrot.slane %v5317, 4
      %v5706 = vrot.slane %v5319, 4
      %v5707 = vrot.slane %v5460, 4
      %v5708 = vrot.slane %v5462, 4
      %v5709 = vrot.slane %v5603, 4
      %v5710 = vrot.slane %v5605, 4
      %5711 = vrot.lane.b32.xlu0 %v5700, 127
      %v5712 = vpop.permute.xlu0 %5711
      %5713 = vrot.lane.b32.xlu0 %v5701, 127
      %v5714 = vpop.permute.xlu0 %5713
      %5715 = vrot.lane.b32.xlu0 %v5702, 127
      %v5716 = vpop.permute.xlu0 %5715
      %5717 = vrot.lane.b32.xlu0 %v5703, 127
      %v5718 = vpop.permute.xlu0 %5717
      %5719 = vrot.lane.b32.xlu0 %v5704, 127
      %v5720 = vpop.permute.xlu0 %5719
      %5721 = vrot.lane.b32.xlu0 %v5705, 127
      %v5722 = vpop.permute.xlu0 %5721
      %5723 = vrot.lane.b32.xlu0 %v5706, 127
      %v5724 = vpop.permute.xlu0 %5723
      %5725 = vrot.lane.b32.xlu0 %v5707, 127
      %v5726 = vpop.permute.xlu0 %5725
      %5727 = vrot.lane.b32.xlu0 %v5708, 127
      %v5728 = vpop.permute.xlu0 %5727
      %5729 = vrot.lane.b32.xlu0 %v5709, 127
      %v5730 = vpop.permute.xlu0 %5729
      %5731 = vrot.lane.b32.xlu0 %v5710, 127
      %v5732 = vpop.permute.xlu0 %5731
      %vm5733 = vcmask 1039360
      %v5734 = vsel %vm5733, %v5712, %v5714
      %v5735 = vsel %vm5733, %v5714, %v5716
      %v5736 = vsel %vm5733, %v5716, %v5718
      %v5737 = vsel %vm5733, %v5718, %v5720
      %v5738 = vsel %vm5733, %v5720, %v5722
      %v5739 = vsel %vm5733, %v5722, %v5724
      %v5740 = vsel %vm5733, %v5724, %v5726
      %v5741 = vsel %vm5733, %v5726, %v5728
      %v5742 = vsel %vm5733, %v5728, %v5730
      %v5743 = vsel %vm5733, %v5730, %v5732
      %v5755 = vadd.f32 %v5734, 0.0
      %v5756 = vadd.f32 %v5679, %v5735
      %v5757 = vadd.f32 %v5680, %v5736
      %v5758 = vadd.f32 %v5681, %v5737
      %v5759 = vadd.f32 %v5682, %v5738
      %v5760 = vadd.f32 %v5683, %v5739
      %v5761 = vadd.f32 %v5684, %v5740
      %v5762 = vadd.f32 %v5685, %v5741
      %v5763 = vadd.f32 %v5686, %v5742
      %v5764 = vadd.f32 %v5687, %v5743
      %v5765 = vadd.f32 %v5688, %v5732
      %5776 = vrot.lane.b32.xlu0 0.0, 126
      %v5777 = vpop.permute.xlu0 %5776
      %5778 = vrot.lane.b32.xlu0 %v5037, 126
      %v5779 = vpop.permute.xlu0 %5778
      %5780 = vrot.lane.b32.xlu0 %v5039, 126
      %v5781 = vpop.permute.xlu0 %5780
      %5782 = vrot.lane.b32.xlu0 %v5180, 126
      %v5783 = vpop.permute.xlu0 %5782
      %5784 = vrot.lane.b32.xlu0 %v5182, 126
      %v5785 = vpop.permute.xlu0 %5784
      %5786 = vrot.lane.b32.xlu0 %v5323, 126
      %v5787 = vpop.permute.xlu0 %5786
      %5788 = vrot.lane.b32.xlu0 %v5325, 126
      %v5789 = vpop.permute.xlu0 %5788
      %5790 = vrot.lane.b32.xlu0 %v5466, 126
      %v5791 = vpop.permute.xlu0 %5790
      %5792 = vrot.lane.b32.xlu0 %v5468, 126
      %v5793 = vpop.permute.xlu0 %5792
      %5794 = vrot.lane.b32.xlu0 %v5609, 126
      %v5795 = vpop.permute.xlu0 %5794
      %5796 = vrot.lane.b32.xlu0 %v5611, 126
      %v5797 = vpop.permute.xlu0 %5796
      %v5798 = vsel %vm335, %v5777, %v5779
      %v5799 = vsel %vm335, %v5779, %v5781
      %v5800 = vsel %vm335, %v5781, %v5783
      %v5801 = vsel %vm335, %v5783, %v5785
      %v5802 = vsel %vm335, %v5785, %v5787
      %v5803 = vsel %vm335, %v5787, %v5789
      %v5804 = vsel %vm335, %v5789, %v5791
      %v5805 = vsel %vm335, %v5791, %v5793
      %v5806 = vsel %vm335, %v5793, %v5795
      %v5807 = vsel %vm335, %v5795, %v5797
      %v5819 = vadd.f32 %v5755, %v5798
      %v5820 = vadd.f32 %v5756, %v5799
      %v5821 = vadd.f32 %v5757, %v5800
      %v5822 = vadd.f32 %v5758, %v5801
      %v5823 = vadd.f32 %v5759, %v5802
      %v5824 = vadd.f32 %v5760, %v5803
      %v5825 = vadd.f32 %v5761, %v5804
      %v5826 = vadd.f32 %v5762, %v5805
      %v5827 = vadd.f32 %v5763, %v5806
      %v5828 = vadd.f32 %v5764, %v5807
      %v5829 = vadd.f32 %v5765, %v5797
      %v5830 = vrot.slane %v5037, 4
      %v5831 = vrot.slane %v5039, 4
      %v5832 = vrot.slane %v5180, 4
      %v5833 = vrot.slane %v5182, 4
      %v5834 = vrot.slane %v5323, 4
      %v5835 = vrot.slane %v5325, 4
      %v5836 = vrot.slane %v5466, 4
      %v5837 = vrot.slane %v5468, 4
      %v5838 = vrot.slane %v5609, 4
      %v5839 = vrot.slane %v5611, 4
      %5840 = vrot.lane.b32.xlu0 %v5700, 125
      %v5841 = vpop.permute.xlu0 %5840
      %5842 = vrot.lane.b32.xlu0 %v5830, 125
      %v5843 = vpop.permute.xlu0 %5842
      %5844 = vrot.lane.b32.xlu0 %v5831, 125
      %v5845 = vpop.permute.xlu0 %5844
      %5846 = vrot.lane.b32.xlu0 %v5832, 125
      %v5847 = vpop.permute.xlu0 %5846
      %5848 = vrot.lane.b32.xlu0 %v5833, 125
      %v5849 = vpop.permute.xlu0 %5848
      %5850 = vrot.lane.b32.xlu0 %v5834, 125
      %v5851 = vpop.permute.xlu0 %5850
      %5852 = vrot.lane.b32.xlu0 %v5835, 125
      %v5853 = vpop.permute.xlu0 %5852
      %5854 = vrot.lane.b32.xlu0 %v5836, 125
      %v5855 = vpop.permute.xlu0 %5854
      %5856 = vrot.lane.b32.xlu0 %v5837, 125
      %v5857 = vpop.permute.xlu0 %5856
      %5858 = vrot.lane.b32.xlu0 %v5838, 125
      %v5859 = vpop.permute.xlu0 %5858
      %5860 = vrot.lane.b32.xlu0 %v5839, 125
      %v5861 = vpop.permute.xlu0 %5860
      %vm5862 = vcmask 1022976
      %v5863 = vsel %vm5862, %v5841, %v5843
      %v5864 = vsel %vm5862, %v5843, %v5845
      %v5865 = vsel %vm5862, %v5845, %v5847
      %v5866 = vsel %vm5862, %v5847, %v5849
      %v5867 = vsel %vm5862, %v5849, %v5851
      %v5868 = vsel %vm5862, %v5851, %v5853
      %v5869 = vsel %vm5862, %v5853, %v5855
      %v5870 = vsel %vm5862, %v5855, %v5857
      %v5871 = vsel %vm5862, %v5857, %v5859
      %v5872 = vsel %vm5862, %v5859, %v5861
      %v5884 = vadd.f32 %v5819, %v5863
      %v5885 = vadd.f32 %v5820, %v5864
      %v5886 = vadd.f32 %v5821, %v5865
      %v5887 = vadd.f32 %v5822, %v5866
      %v5888 = vadd.f32 %v5823, %v5867
      %v5889 = vadd.f32 %v5824, %v5868
      %v5890 = vadd.f32 %v5825, %v5869
      %v5891 = vadd.f32 %v5826, %v5870
      %v5892 = vadd.f32 %v5827, %v5871
      %v5893 = vadd.f32 %v5828, %v5872
      %v5894 = vadd.f32 %v5829, %v5861
      %5905 = vrot.lane.b32.xlu0 0.0, 124
      %v5906 = vpop.permute.xlu0 %5905
      %5907 = vrot.lane.b32.xlu0 %v5043, 124
      %v5908 = vpop.permute.xlu0 %5907
      %5909 = vrot.lane.b32.xlu0 %v5045, 124
      %v5910 = vpop.permute.xlu0 %5909
      %5911 = vrot.lane.b32.xlu0 %v5186, 124
      %v5912 = vpop.permute.xlu0 %5911
      %5913 = vrot.lane.b32.xlu0 %v5188, 124
      %v5914 = vpop.permute.xlu0 %5913
      %5915 = vrot.lane.b32.xlu0 %v5329, 124
      %v5916 = vpop.permute.xlu0 %5915
      %5917 = vrot.lane.b32.xlu0 %v5331, 124
      %v5918 = vpop.permute.xlu0 %5917
      %5919 = vrot.lane.b32.xlu0 %v5472, 124
      %v5920 = vpop.permute.xlu0 %5919
      %5921 = vrot.lane.b32.xlu0 %v5474, 124
      %v5922 = vpop.permute.xlu0 %5921
      %5923 = vrot.lane.b32.xlu0 %v5615, 124
      %v5924 = vpop.permute.xlu0 %5923
      %5925 = vrot.lane.b32.xlu0 %v5617, 124
      %v5926 = vpop.permute.xlu0 %5925
      %v5927 = vsel %vm388, %v5906, %v5908
      %v5928 = vsel %vm388, %v5908, %v5910
      %v5929 = vsel %vm388, %v5910, %v5912
      %v5930 = vsel %vm388, %v5912, %v5914
      %v5931 = vsel %vm388, %v5914, %v5916
      %v5932 = vsel %vm388, %v5916, %v5918
      %v5933 = vsel %vm388, %v5918, %v5920
      %v5934 = vsel %vm388, %v5920, %v5922
      %v5935 = vsel %vm388, %v5922, %v5924
      %v5936 = vsel %vm388, %v5924, %v5926
      %v5948 = vadd.f32 %v5884, %v5927
      %v5949 = vadd.f32 %v5885, %v5928
      %v5950 = vadd.f32 %v5886, %v5929
      %v5951 = vadd.f32 %v5887, %v5930
      %v5952 = vadd.f32 %v5888, %v5931
      %v5953 = vadd.f32 %v5889, %v5932
      %v5954 = vadd.f32 %v5890, %v5933
      %v5955 = vadd.f32 %v5891, %v5934
      %v5956 = vadd.f32 %v5892, %v5935
      %v5957 = vadd.f32 %v5893, %v5936
      %v5958 = vadd.f32 %v5894, %v5926
      %v5959 = vrot.slane %v5043, 4
      %v5960 = vrot.slane %v5045, 4
      %v5961 = vrot.slane %v5186, 4
      %v5962 = vrot.slane %v5188, 4
      %v5963 = vrot.slane %v5329, 4
      %v5964 = vrot.slane %v5331, 4
      %v5965 = vrot.slane %v5472, 4
      %v5966 = vrot.slane %v5474, 4
      %v5967 = vrot.slane %v5615, 4
      %v5968 = vrot.slane %v5617, 4
      %5969 = vrot.lane.b32.xlu0 %v5700, 88
      %v5970 = vpop.permute.xlu0 %5969
      %5971 = vrot.lane.b32.xlu0 %v5959, 88
      %v5972 = vpop.permute.xlu0 %5971
      %5973 = vrot.lane.b32.xlu0 %v5960, 88
      %v5974 = vpop.permute.xlu0 %5973
      %5975 = vrot.lane.b32.xlu0 %v5961, 88
      %v5976 = vpop.permute.xlu0 %5975
      %5977 = vrot.lane.b32.xlu0 %v5962, 88
      %v5978 = vpop.permute.xlu0 %5977
      %5979 = vrot.lane.b32.xlu0 %v5963, 88
      %v5980 = vpop.permute.xlu0 %5979
      %5981 = vrot.lane.b32.xlu0 %v5964, 88
      %v5982 = vpop.permute.xlu0 %5981
      %5983 = vrot.lane.b32.xlu0 %v5965, 88
      %v5984 = vpop.permute.xlu0 %5983
      %5985 = vrot.lane.b32.xlu0 %v5966, 88
      %v5986 = vpop.permute.xlu0 %5985
      %5987 = vrot.lane.b32.xlu0 %v5967, 88
      %v5988 = vpop.permute.xlu0 %5987
      %5989 = vrot.lane.b32.xlu0 %v5968, 88
      %v5990 = vpop.permute.xlu0 %5989
      %v5991 = vsel %vm547, %v5970, %v5972
      %v5992 = vsel %vm547, %v5972, %v5974
      %v5993 = vsel %vm547, %v5974, %v5976
      %v5994 = vsel %vm547, %v5976, %v5978
      %v5995 = vsel %vm547, %v5978, %v5980
      %v5996 = vsel %vm547, %v5980, %v5982
      %v5997 = vsel %vm547, %v5982, %v5984
      %v5998 = vsel %vm547, %v5984, %v5986
      %v5999 = vsel %vm547, %v5986, %v5988
      %v6000 = vsel %vm547, %v5988, %v5990
      %v6012 = vadd.f32 %v5948, %v5991
      %v6013 = vadd.f32 %v5949, %v5992
      %v6014 = vadd.f32 %v5950, %v5993
      %v6015 = vadd.f32 %v5951, %v5994
      %v6016 = vadd.f32 %v5952, %v5995
      %v6017 = vadd.f32 %v5953, %v5996
      %v6018 = vadd.f32 %v5954, %v5997
      %v6019 = vadd.f32 %v5955, %v5998
      %v6020 = vadd.f32 %v5956, %v5999
      %v6021 = vadd.f32 %v5957, %v6000
      %v6022 = vadd.f32 %v5958, %v5990
      %6033 = vrot.lane.b32.xlu0 0.0, 87
      %v6034 = vpop.permute.xlu0 %6033
      %6035 = vrot.lane.b32.xlu0 %v5049, 87
      %v6036 = vpop.permute.xlu0 %6035
      %6037 = vrot.lane.b32.xlu0 %v5051, 87
      %v6038 = vpop.permute.xlu0 %6037
      %6039 = vrot.lane.b32.xlu0 %v5192, 87
      %v6040 = vpop.permute.xlu0 %6039
      %6041 = vrot.lane.b32.xlu0 %v5194, 87
      %v6042 = vpop.permute.xlu0 %6041
      %6043 = vrot.lane.b32.xlu0 %v5335, 87
      %v6044 = vpop.permute.xlu0 %6043
      %6045 = vrot.lane.b32.xlu0 %v5337, 87
      %v6046 = vpop.permute.xlu0 %6045
      %6047 = vrot.lane.b32.xlu0 %v5478, 87
      %v6048 = vpop.permute.xlu0 %6047
      %6049 = vrot.lane.b32.xlu0 %v5480, 87
      %v6050 = vpop.permute.xlu0 %6049
      %6051 = vrot.lane.b32.xlu0 %v5621, 87
      %v6052 = vpop.permute.xlu0 %6051
      %6053 = vrot.lane.b32.xlu0 %v5623, 87
      %v6054 = vpop.permute.xlu0 %6053
      %vm6055 = vcmask 711680
      %v6056 = vsel %vm6055, %v6034, %v6036
      %v6057 = vsel %vm6055, %v6036, %v6038
      %v6058 = vsel %vm6055, %v6038, %v6040
      %v6059 = vsel %vm6055, %v6040, %v6042
      %v6060 = vsel %vm6055, %v6042, %v6044
      %v6061 = vsel %vm6055, %v6044, %v6046
      %v6062 = vsel %vm6055, %v6046, %v6048
      %v6063 = vsel %vm6055, %v6048, %v6050
      %v6064 = vsel %vm6055, %v6050, %v6052
      %v6065 = vsel %vm6055, %v6052, %v6054
      %v6077 = vadd.f32 %v6012, %v6056
      %v6078 = vadd.f32 %v6013, %v6057
      %v6079 = vadd.f32 %v6014, %v6058
      %v6080 = vadd.f32 %v6015, %v6059
      %v6081 = vadd.f32 %v6016, %v6060
      %v6082 = vadd.f32 %v6017, %v6061
      %v6083 = vadd.f32 %v6018, %v6062
      %v6084 = vadd.f32 %v6019, %v6063
      %v6085 = vadd.f32 %v6020, %v6064
      %v6086 = vadd.f32 %v6021, %v6065
      %v6087 = vadd.f32 %v6022, %v6054
      %v6088 = vrot.slane %v5049, 4
      %v6089 = vrot.slane %v5051, 4
      %v6090 = vrot.slane %v5192, 4
      %v6091 = vrot.slane %v5194, 4
      %v6092 = vrot.slane %v5335, 4
      %v6093 = vrot.slane %v5337, 4
      %v6094 = vrot.slane %v5478, 4
      %v6095 = vrot.slane %v5480, 4
      %v6096 = vrot.slane %v5621, 4
      %v6097 = vrot.slane %v5623, 4
      %6098 = vrot.lane.b32.xlu0 %v5700, 86
      %v6099 = vpop.permute.xlu0 %6098
      %6100 = vrot.lane.b32.xlu0 %v6088, 86
      %v6101 = vpop.permute.xlu0 %6100
      %6102 = vrot.lane.b32.xlu0 %v6089, 86
      %v6103 = vpop.permute.xlu0 %6102
      %6104 = vrot.lane.b32.xlu0 %v6090, 86
      %v6105 = vpop.permute.xlu0 %6104
      %6106 = vrot.lane.b32.xlu0 %v6091, 86
      %v6107 = vpop.permute.xlu0 %6106
      %6108 = vrot.lane.b32.xlu0 %v6092, 86
      %v6109 = vpop.permute.xlu0 %6108
      %6110 = vrot.lane.b32.xlu0 %v6093, 86
      %v6111 = vpop.permute.xlu0 %6110
      %6112 = vrot.lane.b32.xlu0 %v6094, 86
      %v6113 = vpop.permute.xlu0 %6112
      %6114 = vrot.lane.b32.xlu0 %v6095, 86
      %v6115 = vpop.permute.xlu0 %6114
      %6116 = vrot.lane.b32.xlu0 %v6096, 86
      %v6117 = vpop.permute.xlu0 %6116
      %6118 = vrot.lane.b32.xlu0 %v6097, 86
      %v6119 = vpop.permute.xlu0 %6118
      %v6120 = vsel %vm600, %v6099, %v6101
      %v6121 = vsel %vm600, %v6101, %v6103
      %v6122 = vsel %vm600, %v6103, %v6105
      %v6123 = vsel %vm600, %v6105, %v6107
      %v6124 = vsel %vm600, %v6107, %v6109
      %v6125 = vsel %vm600, %v6109, %v6111
      %v6126 = vsel %vm600, %v6111, %v6113
      %v6127 = vsel %vm600, %v6113, %v6115
      %v6128 = vsel %vm600, %v6115, %v6117
      %v6129 = vsel %vm600, %v6117, %v6119
      %v6141 = vadd.f32 %v6077, %v6120
      %v6142 = vadd.f32 %v6078, %v6121
      %v6143 = vadd.f32 %v6079, %v6122
      %v6144 = vadd.f32 %v6080, %v6123
      %v6145 = vadd.f32 %v6081, %v6124
      %v6146 = vadd.f32 %v6082, %v6125
      %v6147 = vadd.f32 %v6083, %v6126
      %v6148 = vadd.f32 %v6084, %v6127
      %v6149 = vadd.f32 %v6085, %v6128
      %v6150 = vadd.f32 %v6086, %v6129
      %v6151 = vadd.f32 %v6087, %v6119
      %6162 = vrot.lane.b32.xlu0 0.0, 85
      %v6163 = vpop.permute.xlu0 %6162
      %6164 = vrot.lane.b32.xlu0 %v5055, 85
      %v6165 = vpop.permute.xlu0 %6164
      %6166 = vrot.lane.b32.xlu0 %v5057, 85
      %v6167 = vpop.permute.xlu0 %6166
      %6168 = vrot.lane.b32.xlu0 %v5198, 85
      %v6169 = vpop.permute.xlu0 %6168
      %6170 = vrot.lane.b32.xlu0 %v5200, 85
      %v6171 = vpop.permute.xlu0 %6170
      %6172 = vrot.lane.b32.xlu0 %v5341, 85
      %v6173 = vpop.permute.xlu0 %6172
      %6174 = vrot.lane.b32.xlu0 %v5343, 85
      %v6175 = vpop.permute.xlu0 %6174
      %6176 = vrot.lane.b32.xlu0 %v5484, 85
      %v6177 = vpop.permute.xlu0 %6176
      %6178 = vrot.lane.b32.xlu0 %v5486, 85
      %v6179 = vpop.permute.xlu0 %6178
      %6180 = vrot.lane.b32.xlu0 %v5627, 85
      %v6181 = vpop.permute.xlu0 %6180
      %6182 = vrot.lane.b32.xlu0 %v5629, 85
      %v6183 = vpop.permute.xlu0 %6182
      %vm6184 = vcmask 695296
      %v6185 = vsel %vm6184, %v6163, %v6165
      %v6186 = vsel %vm6184, %v6165, %v6167
      %v6187 = vsel %vm6184, %v6167, %v6169
      %v6188 = vsel %vm6184, %v6169, %v6171
      %v6189 = vsel %vm6184, %v6171, %v6173
      %v6190 = vsel %vm6184, %v6173, %v6175
      %v6191 = vsel %vm6184, %v6175, %v6177
      %v6192 = vsel %vm6184, %v6177, %v6179
      %v6193 = vsel %vm6184, %v6179, %v6181
      %v6194 = vsel %vm6184, %v6181, %v6183
      %v6206 = vadd.f32 %v6141, %v6185
      %v6207 = vadd.f32 %v6142, %v6186
      %v6208 = vadd.f32 %v6143, %v6187
      %v6209 = vadd.f32 %v6144, %v6188
      %v6210 = vadd.f32 %v6145, %v6189
      %v6211 = vadd.f32 %v6146, %v6190
      %v6212 = vadd.f32 %v6147, %v6191
      %v6213 = vadd.f32 %v6148, %v6192
      %v6214 = vadd.f32 %v6149, %v6193
      %v6215 = vadd.f32 %v6150, %v6194
      %v6216 = vadd.f32 %v6151, %v6183
      %v6217 = vrot.slane %v5055, 4
      %v6218 = vrot.slane %v5057, 4
      %v6219 = vrot.slane %v5198, 4
      %v6220 = vrot.slane %v5200, 4
      %v6221 = vrot.slane %v5341, 4
      %v6222 = vrot.slane %v5343, 4
      %v6223 = vrot.slane %v5484, 4
      %v6224 = vrot.slane %v5486, 4
      %v6225 = vrot.slane %v5627, 4
      %v6226 = vrot.slane %v5629, 4
      %6227 = vrot.lane.b32.xlu0 %v5700, 84
      %v6228 = vpop.permute.xlu0 %6227
      %6229 = vrot.lane.b32.xlu0 %v6217, 84
      %v6230 = vpop.permute.xlu0 %6229
      %6231 = vrot.lane.b32.xlu0 %v6218, 84
      %v6232 = vpop.permute.xlu0 %6231
      %6233 = vrot.lane.b32.xlu0 %v6219, 84
      %v6234 = vpop.permute.xlu0 %6233
      %6235 = vrot.lane.b32.xlu0 %v6220, 84
      %v6236 = vpop.permute.xlu0 %6235
      %6237 = vrot.lane.b32.xlu0 %v6221, 84
      %v6238 = vpop.permute.xlu0 %6237
      %6239 = vrot.lane.b32.xlu0 %v6222, 84
      %v6240 = vpop.permute.xlu0 %6239
      %6241 = vrot.lane.b32.xlu0 %v6223, 84
      %v6242 = vpop.permute.xlu0 %6241
      %6243 = vrot.lane.b32.xlu0 %v6224, 84
      %v6244 = vpop.permute.xlu0 %6243
      %6245 = vrot.lane.b32.xlu0 %v6225, 84
      %v6246 = vpop.permute.xlu0 %6245
      %6247 = vrot.lane.b32.xlu0 %v6226, 84
      %v6248 = vpop.permute.xlu0 %6247
      %v6249 = vsel %vm653, %v6228, %v6230
      %v6250 = vsel %vm653, %v6230, %v6232
      %v6251 = vsel %vm653, %v6232, %v6234
      %v6252 = vsel %vm653, %v6234, %v6236
      %v6253 = vsel %vm653, %v6236, %v6238
      %v6254 = vsel %vm653, %v6238, %v6240
      %v6255 = vsel %vm653, %v6240, %v6242
      %v6256 = vsel %vm653, %v6242, %v6244
      %v6257 = vsel %vm653, %v6244, %v6246
      %v6258 = vsel %vm653, %v6246, %v6248
      %v6270 = vadd.f32 %v6206, %v6249
      %v6271 = vadd.f32 %v6207, %v6250
      %v6272 = vadd.f32 %v6208, %v6251
      %v6273 = vadd.f32 %v6209, %v6252
      %v6274 = vadd.f32 %v6210, %v6253
      %v6275 = vadd.f32 %v6211, %v6254
      %v6276 = vadd.f32 %v6212, %v6255
      %v6277 = vadd.f32 %v6213, %v6256
      %v6278 = vadd.f32 %v6214, %v6257
      %v6279 = vadd.f32 %v6215, %v6258
      %v6280 = vadd.f32 %v6216, %v6248
      %6291 = vrot.lane.b32.xlu0 0.0, 48
      %v6292 = vpop.permute.xlu0 %6291
      %6293 = vrot.lane.b32.xlu0 %v5061, 48
      %v6294 = vpop.permute.xlu0 %6293
      %6295 = vrot.lane.b32.xlu0 %v5063, 48
      %v6296 = vpop.permute.xlu0 %6295
      %6297 = vrot.lane.b32.xlu0 %v5204, 48
      %v6298 = vpop.permute.xlu0 %6297
      %6299 = vrot.lane.b32.xlu0 %v5206, 48
      %v6300 = vpop.permute.xlu0 %6299
      %6301 = vrot.lane.b32.xlu0 %v5347, 48
      %v6302 = vpop.permute.xlu0 %6301
      %6303 = vrot.lane.b32.xlu0 %v5349, 48
      %v6304 = vpop.permute.xlu0 %6303
      %6305 = vrot.lane.b32.xlu0 %v5490, 48
      %v6306 = vpop.permute.xlu0 %6305
      %6307 = vrot.lane.b32.xlu0 %v5492, 48
      %v6308 = vpop.permute.xlu0 %6307
      %6309 = vrot.lane.b32.xlu0 %v5633, 48
      %v6310 = vpop.permute.xlu0 %6309
      %6311 = vrot.lane.b32.xlu0 %v5635, 48
      %v6312 = vpop.permute.xlu0 %6311
      %v6313 = vsel %vm812, %v6292, %v6294
      %v6314 = vsel %vm812, %v6294, %v6296
      %v6315 = vsel %vm812, %v6296, %v6298
      %v6316 = vsel %vm812, %v6298, %v6300
      %v6317 = vsel %vm812, %v6300, %v6302
      %v6318 = vsel %vm812, %v6302, %v6304
      %v6319 = vsel %vm812, %v6304, %v6306
      %v6320 = vsel %vm812, %v6306, %v6308
      %v6321 = vsel %vm812, %v6308, %v6310
      %v6322 = vsel %vm812, %v6310, %v6312
      %v6334 = vadd.f32 %v6270, %v6313
      %v6335 = vadd.f32 %v6271, %v6314
      %v6336 = vadd.f32 %v6272, %v6315
      %v6337 = vadd.f32 %v6273, %v6316
      %v6338 = vadd.f32 %v6274, %v6317
      %v6339 = vadd.f32 %v6275, %v6318
      %v6340 = vadd.f32 %v6276, %v6319
      %v6341 = vadd.f32 %v6277, %v6320
      %v6342 = vadd.f32 %v6278, %v6321
      %v6343 = vadd.f32 %v6279, %v6322
      %v6344 = vadd.f32 %v6280, %v6312
      %v6345 = vrot.slane %v5061, 4
      %v6346 = vrot.slane %v5063, 4
      %v6347 = vrot.slane %v5204, 4
      %v6348 = vrot.slane %v5206, 4
      %v6349 = vrot.slane %v5347, 4
      %v6350 = vrot.slane %v5349, 4
      %v6351 = vrot.slane %v5490, 4
      %v6352 = vrot.slane %v5492, 4
      %v6353 = vrot.slane %v5633, 4
      %v6354 = vrot.slane %v5635, 4
      %6355 = vrot.lane.b32.xlu0 %v5700, 47
      %v6356 = vpop.permute.xlu0 %6355
      %6357 = vrot.lane.b32.xlu0 %v6345, 47
      %v6358 = vpop.permute.xlu0 %6357
      %6359 = vrot.lane.b32.xlu0 %v6346, 47
      %v6360 = vpop.permute.xlu0 %6359
      %6361 = vrot.lane.b32.xlu0 %v6347, 47
      %v6362 = vpop.permute.xlu0 %6361
      %6363 = vrot.lane.b32.xlu0 %v6348, 47
      %v6364 = vpop.permute.xlu0 %6363
      %6365 = vrot.lane.b32.xlu0 %v6349, 47
      %v6366 = vpop.permute.xlu0 %6365
      %6367 = vrot.lane.b32.xlu0 %v6350, 47
      %v6368 = vpop.permute.xlu0 %6367
      %6369 = vrot.lane.b32.xlu0 %v6351, 47
      %v6370 = vpop.permute.xlu0 %6369
      %6371 = vrot.lane.b32.xlu0 %v6352, 47
      %v6372 = vpop.permute.xlu0 %6371
      %6373 = vrot.lane.b32.xlu0 %v6353, 47
      %v6374 = vpop.permute.xlu0 %6373
      %6375 = vrot.lane.b32.xlu0 %v6354, 47
      %v6376 = vpop.permute.xlu0 %6375
      %vm6377 = vcmask 384000
      %v6378 = vsel %vm6377, %v6356, %v6358
      %v6379 = vsel %vm6377, %v6358, %v6360
      %v6380 = vsel %vm6377, %v6360, %v6362
      %v6381 = vsel %vm6377, %v6362, %v6364
      %v6382 = vsel %vm6377, %v6364, %v6366
      %v6383 = vsel %vm6377, %v6366, %v6368
      %v6384 = vsel %vm6377, %v6368, %v6370
      %v6385 = vsel %vm6377, %v6370, %v6372
      %v6386 = vsel %vm6377, %v6372, %v6374
      %v6387 = vsel %vm6377, %v6374, %v6376
      %v6399 = vadd.f32 %v6334, %v6378
      %v6400 = vadd.f32 %v6335, %v6379
      %v6401 = vadd.f32 %v6336, %v6380
      %v6402 = vadd.f32 %v6337, %v6381
      %v6403 = vadd.f32 %v6338, %v6382
      %v6404 = vadd.f32 %v6339, %v6383
      %v6405 = vadd.f32 %v6340, %v6384
      %v6406 = vadd.f32 %v6341, %v6385
      %v6407 = vadd.f32 %v6342, %v6386
      %v6408 = vadd.f32 %v6343, %v6387
      %v6409 = vadd.f32 %v6344, %v6376
      %6420 = vrot.lane.b32.xlu0 %v5067, 46
      %v6421 = vpop.permute.xlu0 %6420
      %6422 = vrot.lane.b32.xlu0 %v5069, 46
      %v6423 = vpop.permute.xlu0 %6422
      %6424 = vrot.lane.b32.xlu0 %v5210, 46
      %v6425 = vpop.permute.xlu0 %6424
      %6426 = vrot.lane.b32.xlu0 %v5212, 46
      %v6427 = vpop.permute.xlu0 %6426
      %6428 = vrot.lane.b32.xlu0 %v5353, 46
      %v6429 = vpop.permute.xlu0 %6428
      %6430 = vrot.lane.b32.xlu0 %v5355, 46
      %v6431 = vpop.permute.xlu0 %6430
      %6432 = vrot.lane.b32.xlu0 %v5496, 46
      %v6433 = vpop.permute.xlu0 %6432
      %6434 = vrot.lane.b32.xlu0 %v5498, 46
      %v6435 = vpop.permute.xlu0 %6434
      %6436 = vrot.lane.b32.xlu0 %v5639, 46
      %v6437 = vpop.permute.xlu0 %6436
      %6438 = vrot.lane.b32.xlu0 %v5641, 46
      %v6439 = vpop.permute.xlu0 %6438
      %v6440 = vsel %vm865, %v6421, %v6423
      %v6441 = vsel %vm865, %v6423, %v6425
      %v6442 = vsel %vm865, %v6425, %v6427
      %v6443 = vsel %vm865, %v6427, %v6429
      %v6444 = vsel %vm865, %v6429, %v6431
      %v6445 = vsel %vm865, %v6431, %v6433
      %v6446 = vsel %vm865, %v6433, %v6435
      %v6447 = vsel %vm865, %v6435, %v6437
      %v6448 = vsel %vm865, %v6437, %v6439
      %v6460 = vadd.f32 %v6399, %v6421
      %v6461 = vadd.f32 %v6400, %v6440
      %v6462 = vadd.f32 %v6401, %v6441
      %v6463 = vadd.f32 %v6402, %v6442
      %v6464 = vadd.f32 %v6403, %v6443
      %v6465 = vadd.f32 %v6404, %v6444
      %v6466 = vadd.f32 %v6405, %v6445
      %v6467 = vadd.f32 %v6406, %v6446
      %v6468 = vadd.f32 %v6407, %v6447
      %v6469 = vadd.f32 %v6408, %v6448
      %v6470 = vadd.f32 %v6409, %v6439
      %v6471 = vrot.slane %v5067, 4
      %v6472 = vrot.slane %v5069, 4
      %v6473 = vrot.slane %v5210, 4
      %v6474 = vrot.slane %v5212, 4
      %v6475 = vrot.slane %v5353, 4
      %v6476 = vrot.slane %v5355, 4
      %v6477 = vrot.slane %v5496, 4
      %v6478 = vrot.slane %v5498, 4
      %v6479 = vrot.slane %v5639, 4
      %v6480 = vrot.slane %v5641, 4
      %6481 = vrot.lane.b32.xlu0 %v6471, 45
      %v6482 = vpop.permute.xlu0 %6481
      %6483 = vrot.lane.b32.xlu0 %v6472, 45
      %v6484 = vpop.permute.xlu0 %6483
      %6485 = vrot.lane.b32.xlu0 %v6473, 45
      %v6486 = vpop.permute.xlu0 %6485
      %6487 = vrot.lane.b32.xlu0 %v6474, 45
      %v6488 = vpop.permute.xlu0 %6487
      %6489 = vrot.lane.b32.xlu0 %v6475, 45
      %v6490 = vpop.permute.xlu0 %6489
      %6491 = vrot.lane.b32.xlu0 %v6476, 45
      %v6492 = vpop.permute.xlu0 %6491
      %6493 = vrot.lane.b32.xlu0 %v6477, 45
      %v6494 = vpop.permute.xlu0 %6493
      %6495 = vrot.lane.b32.xlu0 %v6478, 45
      %v6496 = vpop.permute.xlu0 %6495
      %6497 = vrot.lane.b32.xlu0 %v6479, 45
      %v6498 = vpop.permute.xlu0 %6497
      %6499 = vrot.lane.b32.xlu0 %v6480, 45
      %v6500 = vpop.permute.xlu0 %6499
      %6501 = vrot.lane.b32.xlu0 %v5700, 45
      %v6502 = vpop.permute.xlu0 %6501
      %vm6503 = vcmask 367616
      %v6504 = vsel %vm6503, %v6482, %v6484
      %v6505 = vsel %vm6503, %v6484, %v6486
      %v6506 = vsel %vm6503, %v6486, %v6488
      %v6507 = vsel %vm6503, %v6488, %v6490
      %v6508 = vsel %vm6503, %v6490, %v6492
      %v6509 = vsel %vm6503, %v6492, %v6494
      %v6510 = vsel %vm6503, %v6494, %v6496
      %v6511 = vsel %vm6503, %v6496, %v6498
      %v6512 = vsel %vm6503, %v6498, %v6500
      %v6513 = vsel %vm6503, %v6500, %v6502
      %v6525 = vadd.f32 %v6460, %v6482
      %v6526 = vadd.f32 %v6461, %v6504
      %v6527 = vadd.f32 %v6462, %v6505
      %v6528 = vadd.f32 %v6463, %v6506
      %v6529 = vadd.f32 %v6464, %v6507
      %v6530 = vadd.f32 %v6465, %v6508
      %v6531 = vadd.f32 %v6466, %v6509
      %v6532 = vadd.f32 %v6467, %v6510
      %v6533 = vadd.f32 %v6468, %v6511
      %v6534 = vadd.f32 %v6469, %v6512
      %v6535 = vadd.f32 %v6470, %v6513
      %6546 = vrot.lane.b32.xlu0 %v5073, 44
      %v6547 = vpop.permute.xlu0 %6546
      %6548 = vrot.lane.b32.xlu0 %v5075, 44
      %v6549 = vpop.permute.xlu0 %6548
      %6550 = vrot.lane.b32.xlu0 %v5216, 44
      %v6551 = vpop.permute.xlu0 %6550
      %6552 = vrot.lane.b32.xlu0 %v5218, 44
      %v6553 = vpop.permute.xlu0 %6552
      %6554 = vrot.lane.b32.xlu0 %v5359, 44
      %v6555 = vpop.permute.xlu0 %6554
      %6556 = vrot.lane.b32.xlu0 %v5361, 44
      %v6557 = vpop.permute.xlu0 %6556
      %6558 = vrot.lane.b32.xlu0 %v5502, 44
      %v6559 = vpop.permute.xlu0 %6558
      %6560 = vrot.lane.b32.xlu0 %v5504, 44
      %v6561 = vpop.permute.xlu0 %6560
      %6562 = vrot.lane.b32.xlu0 %v5645, 44
      %v6563 = vpop.permute.xlu0 %6562
      %6564 = vrot.lane.b32.xlu0 %v5647, 44
      %v6565 = vpop.permute.xlu0 %6564
      %6566 = vrot.lane.b32.xlu0 0.0, 44
      %v6567 = vpop.permute.xlu0 %6566
      %v6568 = vsel %vm918, %v6547, %v6549
      %v6569 = vsel %vm918, %v6549, %v6551
      %v6570 = vsel %vm918, %v6551, %v6553
      %v6571 = vsel %vm918, %v6553, %v6555
      %v6572 = vsel %vm918, %v6555, %v6557
      %v6573 = vsel %vm918, %v6557, %v6559
      %v6574 = vsel %vm918, %v6559, %v6561
      %v6575 = vsel %vm918, %v6561, %v6563
      %v6576 = vsel %vm918, %v6563, %v6565
      %v6577 = vsel %vm918, %v6565, %v6567
      %v6589 = vadd.f32 %v6525, %v6547
      %v6590 = vadd.f32 %v6526, %v6568
      %v6591 = vadd.f32 %v6527, %v6569
      %v6592 = vadd.f32 %v6528, %v6570
      %v6593 = vadd.f32 %v6529, %v6571
      %v6594 = vadd.f32 %v6530, %v6572
      %v6595 = vadd.f32 %v6531, %v6573
      %v6596 = vadd.f32 %v6532, %v6574
      %v6597 = vadd.f32 %v6533, %v6575
      %v6598 = vadd.f32 %v6534, %v6576
      %v6599 = vadd.f32 %v6535, %v6577
      %v6600 = vrot.slane %v5073, 4
      %v6601 = vrot.slane %v5075, 4
      %v6602 = vrot.slane %v5216, 4
      %v6603 = vrot.slane %v5218, 4
      %v6604 = vrot.slane %v5359, 4
      %v6605 = vrot.slane %v5361, 4
      %v6606 = vrot.slane %v5502, 4
      %v6607 = vrot.slane %v5504, 4
      %v6608 = vrot.slane %v5645, 4
      %v6609 = vrot.slane %v5647, 4
      %6610 = vrot.lane.b32.xlu0 %v6600, 8
      %v6611 = vpop.permute.xlu0 %6610
      %6612 = vrot.lane.b32.xlu0 %v6601, 8
      %v6613 = vpop.permute.xlu0 %6612
      %6614 = vrot.lane.b32.xlu0 %v6602, 8
      %v6615 = vpop.permute.xlu0 %6614
      %6616 = vrot.lane.b32.xlu0 %v6603, 8
      %v6617 = vpop.permute.xlu0 %6616
      %6618 = vrot.lane.b32.xlu0 %v6604, 8
      %v6619 = vpop.permute.xlu0 %6618
      %6620 = vrot.lane.b32.xlu0 %v6605, 8
      %v6621 = vpop.permute.xlu0 %6620
      %6622 = vrot.lane.b32.xlu0 %v6606, 8
      %v6623 = vpop.permute.xlu0 %6622
      %6624 = vrot.lane.b32.xlu0 %v6607, 8
      %v6625 = vpop.permute.xlu0 %6624
      %6626 = vrot.lane.b32.xlu0 %v6608, 8
      %v6627 = vpop.permute.xlu0 %6626
      %6628 = vrot.lane.b32.xlu0 %v6609, 8
      %v6629 = vpop.permute.xlu0 %6628
      %6630 = vrot.lane.b32.xlu0 %v5700, 8
      %v6631 = vpop.permute.xlu0 %6630
      %v6632 = vsel %vm1077, %v6611, %v6613
      %v6633 = vsel %vm1077, %v6613, %v6615
      %v6634 = vsel %vm1077, %v6615, %v6617
      %v6635 = vsel %vm1077, %v6617, %v6619
      %v6636 = vsel %vm1077, %v6619, %v6621
      %v6637 = vsel %vm1077, %v6621, %v6623
      %v6638 = vsel %vm1077, %v6623, %v6625
      %v6639 = vsel %vm1077, %v6625, %v6627
      %v6640 = vsel %vm1077, %v6627, %v6629
      %v6641 = vsel %vm1077, %v6629, %v6631
      %v6653 = vadd.f32 %v6589, %v6611
      %v6654 = vadd.f32 %v6590, %v6632
      %v6655 = vadd.f32 %v6591, %v6633
      %v6656 = vadd.f32 %v6592, %v6634
      %v6657 = vadd.f32 %v6593, %v6635
      %v6658 = vadd.f32 %v6594, %v6636
      %v6659 = vadd.f32 %v6595, %v6637
      %v6660 = vadd.f32 %v6596, %v6638
      %v6661 = vadd.f32 %v6597, %v6639
      %v6662 = vadd.f32 %v6598, %v6640
      %v6663 = vadd.f32 %v6599, %v6641
      %6674 = vrot.lane.b32.xlu0 %v5079, 7
      %v6675 = vpop.permute.xlu0 %6674
      %6676 = vrot.lane.b32.xlu0 %v5081, 7
      %v6677 = vpop.permute.xlu0 %6676
      %6678 = vrot.lane.b32.xlu0 %v5222, 7
      %v6679 = vpop.permute.xlu0 %6678
      %6680 = vrot.lane.b32.xlu0 %v5224, 7
      %v6681 = vpop.permute.xlu0 %6680
      %6682 = vrot.lane.b32.xlu0 %v5365, 7
      %v6683 = vpop.permute.xlu0 %6682
      %6684 = vrot.lane.b32.xlu0 %v5367, 7
      %v6685 = vpop.permute.xlu0 %6684
      %6686 = vrot.lane.b32.xlu0 %v5508, 7
      %v6687 = vpop.permute.xlu0 %6686
      %6688 = vrot.lane.b32.xlu0 %v5510, 7
      %v6689 = vpop.permute.xlu0 %6688
      %6690 = vrot.lane.b32.xlu0 %v5651, 7
      %v6691 = vpop.permute.xlu0 %6690
      %6692 = vrot.lane.b32.xlu0 %v5653, 7
      %v6693 = vpop.permute.xlu0 %6692
      %6694 = vrot.lane.b32.xlu0 0.0, 7
      %v6695 = vpop.permute.xlu0 %6694
      %vm6696 = vcmask 56320
      %v6697 = vsel %vm6696, %v6675, %v6677
      %v6698 = vsel %vm6696, %v6677, %v6679
      %v6699 = vsel %vm6696, %v6679, %v6681
      %v6700 = vsel %vm6696, %v6681, %v6683
      %v6701 = vsel %vm6696, %v6683, %v6685
      %v6702 = vsel %vm6696, %v6685, %v6687
      %v6703 = vsel %vm6696, %v6687, %v6689
      %v6704 = vsel %vm6696, %v6689, %v6691
      %v6705 = vsel %vm6696, %v6691, %v6693
      %v6706 = vsel %vm6696, %v6693, %v6695
      %v6718 = vadd.f32 %v6653, %v6675
      %v6719 = vadd.f32 %v6654, %v6697
      %v6720 = vadd.f32 %v6655, %v6698
      %v6721 = vadd.f32 %v6656, %v6699
      %v6722 = vadd.f32 %v6657, %v6700
      %v6723 = vadd.f32 %v6658, %v6701
      %v6724 = vadd.f32 %v6659, %v6702
      %v6725 = vadd.f32 %v6660, %v6703
      %v6726 = vadd.f32 %v6661, %v6704
      %v6727 = vadd.f32 %v6662, %v6705
      %v6728 = vadd.f32 %v6663, %v6706
      %v6729 = vrot.slane %v5079, 4
      %v6730 = vrot.slane %v5081, 4
      %v6731 = vrot.slane %v5222, 4
      %v6732 = vrot.slane %v5224, 4
      %v6733 = vrot.slane %v5365, 4
      %v6734 = vrot.slane %v5367, 4
      %v6735 = vrot.slane %v5508, 4
      %v6736 = vrot.slane %v5510, 4
      %v6737 = vrot.slane %v5651, 4
      %v6738 = vrot.slane %v5653, 4
      %6739 = vrot.lane.b32.xlu0 %v6729, 6
      %v6740 = vpop.permute.xlu0 %6739
      %6741 = vrot.lane.b32.xlu0 %v6730, 6
      %v6742 = vpop.permute.xlu0 %6741
      %6743 = vrot.lane.b32.xlu0 %v6731, 6
      %v6744 = vpop.permute.xlu0 %6743
      %6745 = vrot.lane.b32.xlu0 %v6732, 6
      %v6746 = vpop.permute.xlu0 %6745
      %6747 = vrot.lane.b32.xlu0 %v6733, 6
      %v6748 = vpop.permute.xlu0 %6747
      %6749 = vrot.lane.b32.xlu0 %v6734, 6
      %v6750 = vpop.permute.xlu0 %6749
      %6751 = vrot.lane.b32.xlu0 %v6735, 6
      %v6752 = vpop.permute.xlu0 %6751
      %6753 = vrot.lane.b32.xlu0 %v6736, 6
      %v6754 = vpop.permute.xlu0 %6753
      %6755 = vrot.lane.b32.xlu0 %v6737, 6
      %v6756 = vpop.permute.xlu0 %6755
      %6757 = vrot.lane.b32.xlu0 %v6738, 6
      %v6758 = vpop.permute.xlu0 %6757
      %6759 = vrot.lane.b32.xlu0 %v5700, 6
      %v6760 = vpop.permute.xlu0 %6759
      %v6761 = vsel %vm1130, %v6740, %v6742
      %v6762 = vsel %vm1130, %v6742, %v6744
      %v6763 = vsel %vm1130, %v6744, %v6746
      %v6764 = vsel %vm1130, %v6746, %v6748
      %v6765 = vsel %vm1130, %v6748, %v6750
      %v6766 = vsel %vm1130, %v6750, %v6752
      %v6767 = vsel %vm1130, %v6752, %v6754
      %v6768 = vsel %vm1130, %v6754, %v6756
      %v6769 = vsel %vm1130, %v6756, %v6758
      %v6770 = vsel %vm1130, %v6758, %v6760
      %v6782 = vadd.f32 %v6718, %v6740
      %v6783 = vadd.f32 %v6719, %v6761
      %v6784 = vadd.f32 %v6720, %v6762
      %v6785 = vadd.f32 %v6721, %v6763
      %v6786 = vadd.f32 %v6722, %v6764
      %v6787 = vadd.f32 %v6723, %v6765
      %v6788 = vadd.f32 %v6724, %v6766
      %v6789 = vadd.f32 %v6725, %v6767
      %v6790 = vadd.f32 %v6726, %v6768
      %v6791 = vadd.f32 %v6727, %v6769
      %v6792 = vadd.f32 %v6728, %v6770
      %6803 = vrot.lane.b32.xlu0 %v5085, 5
      %v6804 = vpop.permute.xlu0 %6803
      %6805 = vrot.lane.b32.xlu0 %v5087, 5
      %v6806 = vpop.permute.xlu0 %6805
      %6807 = vrot.lane.b32.xlu0 %v5228, 5
      %v6808 = vpop.permute.xlu0 %6807
      %6809 = vrot.lane.b32.xlu0 %v5230, 5
      %v6810 = vpop.permute.xlu0 %6809
      %6811 = vrot.lane.b32.xlu0 %v5371, 5
      %v6812 = vpop.permute.xlu0 %6811
      %6813 = vrot.lane.b32.xlu0 %v5373, 5
      %v6814 = vpop.permute.xlu0 %6813
      %6815 = vrot.lane.b32.xlu0 %v5514, 5
      %v6816 = vpop.permute.xlu0 %6815
      %6817 = vrot.lane.b32.xlu0 %v5516, 5
      %v6818 = vpop.permute.xlu0 %6817
      %6819 = vrot.lane.b32.xlu0 %v5657, 5
      %v6820 = vpop.permute.xlu0 %6819
      %6821 = vrot.lane.b32.xlu0 %v5659, 5
      %v6822 = vpop.permute.xlu0 %6821
      %6823 = vrot.lane.b32.xlu0 0.0, 5
      %v6824 = vpop.permute.xlu0 %6823
      %vm6825 = vcmask 39936
      %v6826 = vsel %vm6825, %v6804, %v6806
      %v6827 = vsel %vm6825, %v6806, %v6808
      %v6828 = vsel %vm6825, %v6808, %v6810
      %v6829 = vsel %vm6825, %v6810, %v6812
      %v6830 = vsel %vm6825, %v6812, %v6814
      %v6831 = vsel %vm6825, %v6814, %v6816
      %v6832 = vsel %vm6825, %v6816, %v6818
      %v6833 = vsel %vm6825, %v6818, %v6820
      %v6834 = vsel %vm6825, %v6820, %v6822
      %v6835 = vsel %vm6825, %v6822, %v6824
      %v6847 = vadd.f32 %v6782, %v6804
      %v6848 = vadd.f32 %v6783, %v6826
      %v6849 = vadd.f32 %v6784, %v6827
      %v6850 = vadd.f32 %v6785, %v6828
      %v6851 = vadd.f32 %v6786, %v6829
      %v6852 = vadd.f32 %v6787, %v6830
      %v6853 = vadd.f32 %v6788, %v6831
      %v6854 = vadd.f32 %v6789, %v6832
      %v6855 = vadd.f32 %v6790, %v6833
      %v6856 = vadd.f32 %v6791, %v6834
      %v6857 = vadd.f32 %v6792, %v6835
      %v6858 = vrot.slane %v5085, 4
      %v6859 = vrot.slane %v5087, 4
      %v6860 = vrot.slane %v5228, 4
      %v6861 = vrot.slane %v5230, 4
      %v6862 = vrot.slane %v5371, 4
      %v6863 = vrot.slane %v5373, 4
      %v6864 = vrot.slane %v5514, 4
      %v6865 = vrot.slane %v5516, 4
      %v6866 = vrot.slane %v5657, 4
      %v6867 = vrot.slane %v5659, 4
      %6868 = vrot.lane.b32.xlu0 %v6858, 4
      %v6869 = vpop.permute.xlu0 %6868
      %6870 = vrot.lane.b32.xlu0 %v6859, 4
      %v6871 = vpop.permute.xlu0 %6870
      %6872 = vrot.lane.b32.xlu0 %v6860, 4
      %v6873 = vpop.permute.xlu0 %6872
      %6874 = vrot.lane.b32.xlu0 %v6861, 4
      %v6875 = vpop.permute.xlu0 %6874
      %6876 = vrot.lane.b32.xlu0 %v6862, 4
      %v6877 = vpop.permute.xlu0 %6876
      %6878 = vrot.lane.b32.xlu0 %v6863, 4
      %v6879 = vpop.permute.xlu0 %6878
      %6880 = vrot.lane.b32.xlu0 %v6864, 4
      %v6881 = vpop.permute.xlu0 %6880
      %6882 = vrot.lane.b32.xlu0 %v6865, 4
      %v6883 = vpop.permute.xlu0 %6882
      %6884 = vrot.lane.b32.xlu0 %v6866, 4
      %v6885 = vpop.permute.xlu0 %6884
      %6886 = vrot.lane.b32.xlu0 %v6867, 4
      %v6887 = vpop.permute.xlu0 %6886
      %6888 = vrot.lane.b32.xlu0 %v5700, 4
      %v6889 = vpop.permute.xlu0 %6888
      %v6890 = vsel %vm1183, %v6869, %v6871
      %v6891 = vsel %vm1183, %v6871, %v6873
      %v6892 = vsel %vm1183, %v6873, %v6875
      %v6893 = vsel %vm1183, %v6875, %v6877
      %v6894 = vsel %vm1183, %v6877, %v6879
      %v6895 = vsel %vm1183, %v6879, %v6881
      %v6896 = vsel %vm1183, %v6881, %v6883
      %v6897 = vsel %vm1183, %v6883, %v6885
      %v6898 = vsel %vm1183, %v6885, %v6887
      %v6899 = vsel %vm1183, %v6887, %v6889
      %v6911 = vadd.f32 %v6847, %v6869
      %v6912 = vadd.f32 %v6848, %v6890
      %v6913 = vadd.f32 %v6849, %v6891
      %v6914 = vadd.f32 %v6850, %v6892
      %v6915 = vadd.f32 %v6851, %v6893
      %v6916 = vadd.f32 %v6852, %v6894
      %v6917 = vadd.f32 %v6853, %v6895
      %v6918 = vadd.f32 %v6854, %v6896
      %v6919 = vadd.f32 %v6855, %v6897
      %v6920 = vadd.f32 %v6856, %v6898
      %v6921 = vadd.f32 %v6857, %v6899
      %6932 = vrot.lane.b32.xlu0 %v5091, 96
      %v6933 = vpop.permute.xlu0 %6932
      %6934 = vrot.lane.b32.xlu0 %v5093, 96
      %v6935 = vpop.permute.xlu0 %6934
      %6936 = vrot.lane.b32.xlu0 %v5234, 96
      %v6937 = vpop.permute.xlu0 %6936
      %6938 = vrot.lane.b32.xlu0 %v5236, 96
      %v6939 = vpop.permute.xlu0 %6938
      %6940 = vrot.lane.b32.xlu0 %v5377, 96
      %v6941 = vpop.permute.xlu0 %6940
      %6942 = vrot.lane.b32.xlu0 %v5379, 96
      %v6943 = vpop.permute.xlu0 %6942
      %6944 = vrot.lane.b32.xlu0 %v5520, 96
      %v6945 = vpop.permute.xlu0 %6944
      %6946 = vrot.lane.b32.xlu0 %v5522, 96
      %v6947 = vpop.permute.xlu0 %6946
      %6948 = vrot.lane.b32.xlu0 %v5663, 96
      %v6949 = vpop.permute.xlu0 %6948
      %6950 = vrot.lane.b32.xlu0 %v5665, 96
      %v6951 = vpop.permute.xlu0 %6950
      %6952 = vrot.lane.b32.xlu0 0.0, 96
      %v6953 = vpop.permute.xlu0 %6952
      %v6954 = vsel %vm1300, %v6933, %v6935
      %v6955 = vsel %vm1300, %v6935, %v6937
      %v6956 = vsel %vm1300, %v6937, %v6939
      %v6957 = vsel %vm1300, %v6939, %v6941
      %v6958 = vsel %vm1300, %v6941, %v6943
      %v6959 = vsel %vm1300, %v6943, %v6945
      %v6960 = vsel %vm1300, %v6945, %v6947
      %v6961 = vsel %vm1300, %v6947, %v6949
      %v6962 = vsel %vm1300, %v6949, %v6951
      %v6963 = vsel %vm1300, %v6951, %v6953
      %v6975 = vadd.f32 %v6911, %v6954
      %v6976 = vadd.f32 %v6912, %v6955
      %v6977 = vadd.f32 %v6913, %v6956
      %v6978 = vadd.f32 %v6914, %v6957
      %v6979 = vadd.f32 %v6915, %v6958
      %v6980 = vadd.f32 %v6916, %v6959
      %v6981 = vadd.f32 %v6917, %v6960
      %v6982 = vadd.f32 %v6918, %v6961
      %v6983 = vadd.f32 %v6919, %v6962
      %v6984 = vadd.f32 %v6920, %v6963
      %v6985 = vadd.f32 %v6921, %v6953
      %v6986 = vrot.slane %v5091, 4
      %v6987 = vrot.slane %v5093, 4
      %v6988 = vrot.slane %v5234, 4
      %v6989 = vrot.slane %v5236, 4
      %v6990 = vrot.slane %v5377, 4
      %v6991 = vrot.slane %v5379, 4
      %v6992 = vrot.slane %v5520, 4
      %v6993 = vrot.slane %v5522, 4
      %v6994 = vrot.slane %v5663, 4
      %v6995 = vrot.slane %v5665, 4
      %6996 = vrot.lane.b32.xlu0 %v6986, 95
      %v6997 = vpop.permute.xlu0 %6996
      %6998 = vrot.lane.b32.xlu0 %v6987, 95
      %v6999 = vpop.permute.xlu0 %6998
      %7000 = vrot.lane.b32.xlu0 %v6988, 95
      %v7001 = vpop.permute.xlu0 %7000
      %7002 = vrot.lane.b32.xlu0 %v6989, 95
      %v7003 = vpop.permute.xlu0 %7002
      %7004 = vrot.lane.b32.xlu0 %v6990, 95
      %v7005 = vpop.permute.xlu0 %7004
      %7006 = vrot.lane.b32.xlu0 %v6991, 95
      %v7007 = vpop.permute.xlu0 %7006
      %7008 = vrot.lane.b32.xlu0 %v6992, 95
      %v7009 = vpop.permute.xlu0 %7008
      %7010 = vrot.lane.b32.xlu0 %v6993, 95
      %v7011 = vpop.permute.xlu0 %7010
      %7012 = vrot.lane.b32.xlu0 %v6994, 95
      %v7013 = vpop.permute.xlu0 %7012
      %7014 = vrot.lane.b32.xlu0 %v6995, 95
      %v7015 = vpop.permute.xlu0 %7014
      %7016 = vrot.lane.b32.xlu0 %v5700, 95
      %v7017 = vpop.permute.xlu0 %7016
      %vm7018 = vcmask 777216
      %v7019 = vsel %vm7018, %v6997, %v6999
      %v7020 = vsel %vm7018, %v6999, %v7001
      %v7021 = vsel %vm7018, %v7001, %v7003
      %v7022 = vsel %vm7018, %v7003, %v7005
      %v7023 = vsel %vm7018, %v7005, %v7007
      %v7024 = vsel %vm7018, %v7007, %v7009
      %v7025 = vsel %vm7018, %v7009, %v7011
      %v7026 = vsel %vm7018, %v7011, %v7013
      %v7027 = vsel %vm7018, %v7013, %v7015
      %v7028 = vsel %vm7018, %v7015, %v7017
      %v7040 = vadd.f32 %v6975, %v7019
      %v7041 = vadd.f32 %v6976, %v7020
      %v7042 = vadd.f32 %v6977, %v7021
      %v7043 = vadd.f32 %v6978, %v7022
      %v7044 = vadd.f32 %v6979, %v7023
      %v7045 = vadd.f32 %v6980, %v7024
      %v7046 = vadd.f32 %v6981, %v7025
      %v7047 = vadd.f32 %v6982, %v7026
      %v7048 = vadd.f32 %v6983, %v7027
      %v7049 = vadd.f32 %v6984, %v7028
      %v7050 = vadd.f32 %v6985, %v7017
      %7061 = vrot.lane.b32.xlu0 %v5097, 94
      %v7062 = vpop.permute.xlu0 %7061
      %7063 = vrot.lane.b32.xlu0 %v5099, 94
      %v7064 = vpop.permute.xlu0 %7063
      %7065 = vrot.lane.b32.xlu0 %v5240, 94
      %v7066 = vpop.permute.xlu0 %7065
      %7067 = vrot.lane.b32.xlu0 %v5242, 94
      %v7068 = vpop.permute.xlu0 %7067
      %7069 = vrot.lane.b32.xlu0 %v5383, 94
      %v7070 = vpop.permute.xlu0 %7069
      %7071 = vrot.lane.b32.xlu0 %v5385, 94
      %v7072 = vpop.permute.xlu0 %7071
      %7073 = vrot.lane.b32.xlu0 %v5526, 94
      %v7074 = vpop.permute.xlu0 %7073
      %7075 = vrot.lane.b32.xlu0 %v5528, 94
      %v7076 = vpop.permute.xlu0 %7075
      %7077 = vrot.lane.b32.xlu0 %v5669, 94
      %v7078 = vpop.permute.xlu0 %7077
      %7079 = vrot.lane.b32.xlu0 %v5671, 94
      %v7080 = vpop.permute.xlu0 %7079
      %7081 = vrot.lane.b32.xlu0 0.0, 94
      %v7082 = vpop.permute.xlu0 %7081
      %v7083 = vsel %vm1353, %v7062, %v7064
      %v7084 = vsel %vm1353, %v7064, %v7066
      %v7085 = vsel %vm1353, %v7066, %v7068
      %v7086 = vsel %vm1353, %v7068, %v7070
      %v7087 = vsel %vm1353, %v7070, %v7072
      %v7088 = vsel %vm1353, %v7072, %v7074
      %v7089 = vsel %vm1353, %v7074, %v7076
      %v7090 = vsel %vm1353, %v7076, %v7078
      %v7091 = vsel %vm1353, %v7078, %v7080
      %v7092 = vsel %vm1353, %v7080, %v7082
      %v7104 = vadd.f32 %v7040, %v7083
      %v7105 = vadd.f32 %v7041, %v7084
      %v7106 = vadd.f32 %v7042, %v7085
      %v7107 = vadd.f32 %v7043, %v7086
      %v7108 = vadd.f32 %v7044, %v7087
      %v7109 = vadd.f32 %v7045, %v7088
      %v7110 = vadd.f32 %v7046, %v7089
      %v7111 = vadd.f32 %v7047, %v7090
      %v7112 = vadd.f32 %v7048, %v7091
      %v7113 = vadd.f32 %v7049, %v7092
      %v7114 = vadd.f32 %v7050, %v7082
      %v7115 = vrot.slane %v5097, 4
      %v7116 = vrot.slane %v5099, 4
      %v7117 = vrot.slane %v5240, 4
      %v7118 = vrot.slane %v5242, 4
      %v7119 = vrot.slane %v5383, 4
      %v7120 = vrot.slane %v5385, 4
      %v7121 = vrot.slane %v5526, 4
      %v7122 = vrot.slane %v5528, 4
      %v7123 = vrot.slane %v5669, 4
      %v7124 = vrot.slane %v5671, 4
      %7125 = vrot.lane.b32.xlu0 %v7115, 93
      %v7126 = vpop.permute.xlu0 %7125
      %7127 = vrot.lane.b32.xlu0 %v7116, 93
      %v7128 = vpop.permute.xlu0 %7127
      %7129 = vrot.lane.b32.xlu0 %v7117, 93
      %v7130 = vpop.permute.xlu0 %7129
      %7131 = vrot.lane.b32.xlu0 %v7118, 93
      %v7132 = vpop.permute.xlu0 %7131
      %7133 = vrot.lane.b32.xlu0 %v7119, 93
      %v7134 = vpop.permute.xlu0 %7133
      %7135 = vrot.lane.b32.xlu0 %v7120, 93
      %v7136 = vpop.permute.xlu0 %7135
      %7137 = vrot.lane.b32.xlu0 %v7121, 93
      %v7138 = vpop.permute.xlu0 %7137
      %7139 = vrot.lane.b32.xlu0 %v7122, 93
      %v7140 = vpop.permute.xlu0 %7139
      %7141 = vrot.lane.b32.xlu0 %v7123, 93
      %v7142 = vpop.permute.xlu0 %7141
      %7143 = vrot.lane.b32.xlu0 %v7124, 93
      %v7144 = vpop.permute.xlu0 %7143
      %7145 = vrot.lane.b32.xlu0 %v5700, 93
      %v7146 = vpop.permute.xlu0 %7145
      %vm7147 = vcmask 760832
      %v7148 = vsel %vm7147, %v7126, %v7128
      %v7149 = vsel %vm7147, %v7128, %v7130
      %v7150 = vsel %vm7147, %v7130, %v7132
      %v7151 = vsel %vm7147, %v7132, %v7134
      %v7152 = vsel %vm7147, %v7134, %v7136
      %v7153 = vsel %vm7147, %v7136, %v7138
      %v7154 = vsel %vm7147, %v7138, %v7140
      %v7155 = vsel %vm7147, %v7140, %v7142
      %v7156 = vsel %vm7147, %v7142, %v7144
      %v7157 = vsel %vm7147, %v7144, %v7146
      %v7169 = vadd.f32 %v7104, %v7148
      %v7170 = vadd.f32 %v7105, %v7149
      %v7171 = vadd.f32 %v7106, %v7150
      %v7172 = vadd.f32 %v7107, %v7151
      %v7173 = vadd.f32 %v7108, %v7152
      %v7174 = vadd.f32 %v7109, %v7153
      %v7175 = vadd.f32 %v7110, %v7154
      %v7176 = vadd.f32 %v7111, %v7155
      %v7177 = vadd.f32 %v7112, %v7156
      %v7178 = vadd.f32 %v7113, %v7157
      %v7179 = vadd.f32 %v7114, %v7146
      %7190 = vrot.lane.b32.xlu0 %v5103, 92
      %v7191 = vpop.permute.xlu0 %7190
      %7192 = vrot.lane.b32.xlu0 %v5105, 92
      %v7193 = vpop.permute.xlu0 %7192
      %7194 = vrot.lane.b32.xlu0 %v5246, 92
      %v7195 = vpop.permute.xlu0 %7194
      %7196 = vrot.lane.b32.xlu0 %v5248, 92
      %v7197 = vpop.permute.xlu0 %7196
      %7198 = vrot.lane.b32.xlu0 %v5389, 92
      %v7199 = vpop.permute.xlu0 %7198
      %7200 = vrot.lane.b32.xlu0 %v5391, 92
      %v7201 = vpop.permute.xlu0 %7200
      %7202 = vrot.lane.b32.xlu0 %v5532, 92
      %v7203 = vpop.permute.xlu0 %7202
      %7204 = vrot.lane.b32.xlu0 %v5534, 92
      %v7205 = vpop.permute.xlu0 %7204
      %7206 = vrot.lane.b32.xlu0 %v5675, 92
      %v7207 = vpop.permute.xlu0 %7206
      %7208 = vrot.lane.b32.xlu0 %v5677, 92
      %v7209 = vpop.permute.xlu0 %7208
      %7210 = vrot.lane.b32.xlu0 0.0, 92
      %v7211 = vpop.permute.xlu0 %7210
      %v7212 = vsel %vm1406, %v7191, %v7193
      %v7213 = vsel %vm1406, %v7193, %v7195
      %v7214 = vsel %vm1406, %v7195, %v7197
      %v7215 = vsel %vm1406, %v7197, %v7199
      %v7216 = vsel %vm1406, %v7199, %v7201
      %v7217 = vsel %vm1406, %v7201, %v7203
      %v7218 = vsel %vm1406, %v7203, %v7205
      %v7219 = vsel %vm1406, %v7205, %v7207
      %v7220 = vsel %vm1406, %v7207, %v7209
      %v7221 = vsel %vm1406, %v7209, %v7211
      %v7233 = vadd.f32 %v7169, %v7212
      %v7234 = vadd.f32 %v7170, %v7213
      %v7235 = vadd.f32 %v7171, %v7214
      %v7236 = vadd.f32 %v7172, %v7215
      %v7237 = vadd.f32 %v7173, %v7216
      %v7238 = vadd.f32 %v7174, %v7217
      %v7239 = vadd.f32 %v7175, %v7218
      %v7240 = vadd.f32 %v7176, %v7219
      %v7241 = vadd.f32 %v7177, %v7220
      %v7242 = vadd.f32 %v7178, %v7221
      %v7243 = vadd.f32 %v7179, %v7211
      %v7244 = vld [vmem:[%s6] sm:$0x7]
      %7246 = vset.pattern.permute.xlu0 0
      %7247 = vperm.xlu0 %7246, %v7244
      %v7248 = vpop.permute.xlu0 %7247
      %v7250 = vadd.f32 %v7233, %v7248
      %v7251 = vadd.f32 %v7234, %v7248
      %v7252 = vadd.f32 %v7235, %v7248
      %v7253 = vadd.f32 %v7236, %v7248
      %v7254 = vadd.f32 %v7237, %v7248
      %v7255 = vadd.f32 %v7238, %v7248
      %v7256 = vadd.f32 %v7239, %v7248
      %v7257 = vadd.f32 %v7240, %v7248
      %v7258 = vadd.f32 %v7241, %v7248
      %v7259 = vadd.f32 %v7242, %v7248
      %v7260 = vadd.f32 %v7243, %v7248
      %v7272 = vcombine.low %v7250, %v7251
      %v7273 = vcombine.low %v7252, %v7253
      %v7274 = vcombine.low %v7254, %v7255
      %v7275 = vcombine.low %v7256, %v7257
      %v7276 = vcombine.low %v7258, %v7259
      %7277 = vrot.lane.b32.xlu0 %v7272, 82
      %v7278 = vpop.permute.xlu0 %7277
      %7279 = vrot.lane.b32.xlu0 %v7273, 82
      %v7280 = vpop.permute.xlu0 %7279
      %7281 = vrot.lane.b32.xlu0 %v7274, 82
      %v7282 = vpop.permute.xlu0 %7281
      %7283 = vrot.lane.b32.xlu0 %v7275, 82
      %v7284 = vpop.permute.xlu0 %7283
      %7285 = vrot.lane.b32.xlu0 %v7276, 82
      %v7286 = vpop.permute.xlu0 %7285
      %7287 = vrot.lane.b32.xlu0 %v7260, 82
      %v7288 = vpop.permute.xlu0 %7287
      %v7289 = vrot.slane %v7278, 4
      %v7290 = vrot.slane %v7280, 4
      %v7291 = vrot.slane %v7282, 4
      %v7292 = vrot.slane %v7284, 4
      %v7293 = vrot.slane %v7286, 4
      %v7294 = vrot.slane %v7288, 4
      %vm7295 = vcmask 1043456
      %v7296 = vsel %vm7295, %v7289, %v7290
      %v7297 = vsel %vm706, %v7278, %v7296
      %v7298 = vsel %vm7295, %v7290, %v7291
      %v7299 = vsel %vm706, %v7280, %v7298
      %v7300 = vsel %vm7295, %v7291, %v7292
      %v7301 = vsel %vm706, %v7282, %v7300
      %v7302 = vsel %vm7295, %v7292, %v7293
      %v7303 = vsel %vm706, %v7284, %v7302
      %v7304 = vsel %vm7295, %v7293, %v7294
      %v7305 = vsel %vm706, %v7286, %v7304
      %7311 = vst [vmem:[%s278] sm:$0x77] %v7297
      %7312 = vst [vmem:[%s278 + $0x8] sm:$0x77] %v7299
      %7313 = vst [vmem:[%s278 + $0x10] sm:$0x77] %v7301
      %7314 = vst [vmem:[%s278 + $0x18] sm:$0x77] %v7303
      %7315 = vst [vmem:[%s278 + $0x20] sm:$0x77] %v7305
      %p7316 = scmp.lt.s32.totalorder %s18, 1
      %s7317 = scalar_select %p7316, %s18, 1
      %s7318 = smul.addr %s7317, 10
      %s7319 = smul.addr %s7318, 4
      %s7320 = scalar_lea.vmem %s7, %s7319
      // Predicated region
      $region49: #{super_resolution_forward.1} parent=47 // pred_check
        %p7321 = pneg %p188
      $region50: #{super_resolution_forward.1} parent=47 // pred_check_branch
        %7323 = sbr.rel (%p7321) target = $region52
      $region51: #{super_resolution_forward.1} parent=47 // pred_region
        _
      $region52: #{super_resolution_forward.1} parent=47 // pred_fallthru
        _
    $region48: #{super_resolution_forward.1} parent=5 // pred_fallthru
      _
    %p7324 = scmp.le.s32.totalorder 2, %s13
    // Predicated region
    $region53: #{super_resolution_forward.1} parent=5 // pred_check
      %p7325 = pneg %p7324
    $region54: #{super_resolution_forward.1} parent=5 // pred_check_branch
      %7327 = sbr.rel (%p7325) target = $region56
    $region55: #{super_resolution_forward.1} parent=5 // pred_region
      %s7328 = ssub.s32 %s13, 2
      // Predicated region
      $region57: #{super_resolution_forward.1} parent=55 // pred_check
        %p7329 = pneg %p194
      $region58: #{super_resolution_forward.1} parent=55 // pred_check_branch
        %7331 = sbr.rel (%p7329) target = $region60
      $region59: #{super_resolution_forward.1} parent=55 // pred_region
        %p7332 = scmp.lt.s32.totalorder %s19, 1
        %s7333 = scalar_select %p7332, %s19, 1
        %s7334 = smul.addr %s7333, 10
        %s7335 = smul.addr %s7334, 4
        %s7336 = scalar_lea.vmem %s7, %s7335
      $region60: #{super_resolution_forward.1} parent=55 // pred_fallthru
        _
    $region56: #{super_resolution_forward.1} parent=5 // pred_fallthru
      _
  $region6: #{super_resolution_forward.1} parent=0 // loop_footer
    %s17 = sadd.s32 1, %s13
  $region7: #{super_resolution_forward.1} parent=0 // loop_footer_branch
    %12 = sbr.rel target = $region3
  $region8: #{super_resolution_forward.1} parent=0 // loop_exit
    _

</llo_original>
